<compile_context>
chip_gen: v6e
topology: v6e:2x2x1
jax: 0.10.0
libtpu: 0.0.40
codegen_flags: <defaults>
</compile_context>

<pallas_src>
import functools
import math

import jax
import jax.numpy as jnp
from jax.experimental import pallas as pl
from jax.experimental.pallas import tpu as pltpu

# ----------------------------- config -------------------------------------
B = 2                 # batch
C_IN = 3              # input image channels
H = W = 16            # input spatial size
STEM_K = 4            # backbone stem conv kernel == stride
C_BACK = 16           # backbone output channels
D_MODEL = 32          # transformer hidden size
N_HEADS = 4
D_HEAD = D_MODEL // N_HEADS
FFN_DIM = 64
NUM_QUERIES = 8
NUM_LABELS = 11       # len(id2label)
NUM_CLASSES = NUM_LABELS + 1   # + "no object" class, as in DETR
LN_EPS = 1e-5

HF = H // STEM_K
WF = W // STEM_K
P_TOK = HF * WF                       # 16 encoder tokens
PATCH_DIM = STEM_K * STEM_K * C_IN    # 48
OUT_DIM = NUM_CLASSES + 4             # logits (12) + boxes (4) packed slab
ATTN_SCALE = 1.0 / math.sqrt(D_HEAD)


# --------------------------- in-kernel helpers ------------------------------
def _layernorm(x, g, b):
    mean = jnp.mean(x, axis=-1, keepdims=True)
    var = jnp.mean((x - mean) ** 2, axis=-1, keepdims=True)
    inv = jax.lax.rsqrt(var + LN_EPS)
    return (x - mean) * inv * g + b


def _attention(q, k, v):
    """q: [Tq, D_MODEL], k/v: [Tk, D_MODEL]. Static loop over heads on lane
    slices; no transposes, softmax reciprocal on the EUP."""
    outs = []
    for h in range(N_HEADS):
        lo, hi = h * D_HEAD, (h + 1) * D_HEAD
        qh, kh, vh = q[:, lo:hi], k[:, lo:hi], v[:, lo:hi]
        s = jax.lax.dot_general(
            qh, kh, (((1,), (1,)), ((), ())),
            preferred_element_type=jnp.float32) * ATTN_SCALE
        m = jnp.max(s, axis=-1, keepdims=True)
        p = jnp.exp(s - m)
        denom = jnp.sum(p, axis=-1, keepdims=True)
        p = p * pl.reciprocal(denom, approx=True)
        outs.append(jnp.dot(p, vh, preferred_element_type=jnp.float32))
    return jnp.concatenate(outs, axis=-1)


def _mm(x, w, b):
    return jnp.dot(x, w, preferred_element_type=jnp.float32) + b


# ------------------------------ fused kernel --------------------------------
def _detr_kernel(
    # per-batch inputs
    patches_ref, pos_ref, qpos_ref,
    # stem / input projection
    stem_w, stem_b, proj_w, proj_b,
    # encoder layer
    e_qk_w, e_qk_b, e_v_w, e_v_b, e_o_w, e_o_b,
    e_ln1_g, e_ln1_b, e_fc1_w, e_fc1_b, e_fc2_w, e_fc2_b, e_ln2_g, e_ln2_b,
    # decoder self-attention
    d_qk_w, d_qk_b, d_v_w, d_v_b, d_o_w, d_o_b, d_ln1_g, d_ln1_b,
    # decoder cross-attention
    c_q_w, c_q_b, c_k_w, c_k_b, c_v_w, c_v_b, c_o_w, c_o_b, d_ln2_g, d_ln2_b,
    # decoder FFN
    d_fc1_w, d_fc1_b, d_fc2_w, d_fc2_b, d_ln3_g, d_ln3_b,
    # final decoder layernorm
    dec_ln_g, dec_ln_b,
    # detection heads
    cls_w, cls_b, bb1_w, bb1_b, bb2_w, bb2_b, bb3_w, bb3_b,
    # output
    out_ref,
):
    # ---- backbone stem (strided conv as matmul) + 1x1 input projection ----
    patches = patches_ref[0]                                      # [P_TOK, 48]
    feat = jnp.maximum(_mm(patches, stem_w[...], stem_b[...]), 0.0)
    src = _mm(feat, proj_w[...], proj_b[...])                     # [P_TOK, D]
    pos = pos_ref[0]                                              # [P_TOK, D]

    # ---- encoder layer (pre-added pos on q/k; fused QK projection) ----
    hp = src + pos
    qk = _mm(hp, e_qk_w[...], e_qk_b[...])                        # [P_TOK, 2D]
    q, k = qk[:, :D_MODEL], qk[:, D_MODEL:]
    v = _mm(src, e_v_w[...], e_v_b[...])
    attn = _mm(_attention(q, k, v), e_o_w[...], e_o_b[...])
    h1 = _layernorm(src + attn, e_ln1_g[...], e_ln1_b[...])
    ffn = jnp.maximum(_mm(h1, e_fc1_w[...], e_fc1_b[...]), 0.0)
    ffn = _mm(ffn, e_fc2_w[...], e_fc2_b[...])
    enc = _layernorm(h1 + ffn, e_ln2_g[...], e_ln2_b[...])        # [P_TOK, D]

    # ---- decoder layer (object queries start at zero) ----
    qpos = qpos_ref[...]                                          # [NQ, D]
    hidden = jnp.zeros((NUM_QUERIES, D_MODEL), jnp.float32)

    # self-attention over queries
    hq = hidden + qpos
    qk = _mm(hq, d_qk_w[...], d_qk_b[...])
    q, k = qk[:, :D_MODEL], qk[:, D_MODEL:]
    v = _mm(hidden, d_v_w[...], d_v_b[...])
    attn = _mm(_attention(q, k, v), d_o_w[...], d_o_b[...])
    h1 = _layernorm(hidden + attn, d_ln1_g[...], d_ln1_b[...])

    # cross-attention into encoder memory
    q = _mm(h1 + qpos, c_q_w[...], c_q_b[...])
    k = _mm(enc + pos, c_k_w[...], c_k_b[...])
    v = _mm(enc, c_v_w[...], c_v_b[...])
    attn = _mm(_attention(q, k, v), c_o_w[...], c_o_b[...])
    h2 = _layernorm(h1 + attn, d_ln2_g[...], d_ln2_b[...])

    # FFN
    ffn = jnp.maximum(_mm(h2, d_fc1_w[...], d_fc1_b[...]), 0.0)
    ffn = _mm(ffn, d_fc2_w[...], d_fc2_b[...])
    h3 = _layernorm(h2 + ffn, d_ln3_g[...], d_ln3_b[...])
    dec = _layernorm(h3, dec_ln_g[...], dec_ln_b[...])            # [NQ, D]

    # ---- detection heads (packed [NQ, NUM_CLASSES+4] output slab) ----
    logits = _mm(dec, cls_w[...], cls_b[...])                     # [NQ, 12]
    bb = jnp.maximum(_mm(dec, bb1_w[...], bb1_b[...]), 0.0)
    bb = jnp.maximum(_mm(bb, bb2_w[...], bb2_b[...]), 0.0)
    boxes = jax.nn.sigmoid(_mm(bb, bb3_w[...], bb3_b[...]))       # [NQ, 4]
    out_ref[0] = jnp.concatenate([logits, boxes], axis=-1)


# --------------------------- JAX-side glue ----------------------------------
def sine_position_embedding(b, hf, wf, d_model):
    """DETR sine positional embedding with all-ones mask (pixel_mask=None)."""
    mask = jnp.ones((b, hf, wf), jnp.float32)
    y_embed = jnp.cumsum(mask, axis=1)
    x_embed = jnp.cumsum(mask, axis=2)
    eps = 1e-6
    scale = 2.0 * math.pi
    y_embed = y_embed / (y_embed[:, -1:, :] + eps) * scale
    x_embed = x_embed / (x_embed[:, :, -1:] + eps) * scale
    half = d_model // 2
    dim_t = jnp.arange(half, dtype=jnp.float32)
    dim_t = 10000.0 ** (2.0 * jnp.floor(dim_t / 2.0) / half)
    pos_x = x_embed[..., None] / dim_t
    pos_y = y_embed[..., None] / dim_t
    pos_x = jnp.stack(
        [jnp.sin(pos_x[..., 0::2]), jnp.cos(pos_x[..., 1::2])], axis=4
    ).reshape(b, hf, wf, half)
    pos_y = jnp.stack(
        [jnp.sin(pos_y[..., 0::2]), jnp.cos(pos_y[..., 1::2])], axis=4
    ).reshape(b, hf, wf, half)
    pos = jnp.concatenate([pos_y, pos_x], axis=3)     # [B, Hf, Wf, D]
    return pos.reshape(b, hf * wf, d_model)


def _flatten_params(p):
    """Weight list in the exact order expected by _detr_kernel (all 2-D)."""
    def v2(a):
        return a.reshape(1, -1)
    e, d = p["enc"], p["dec"]
    return [
        p["stem_w"], v2(p["stem_b"]), p["proj_w"], v2(p["proj_b"]),
        e["qk_w"], v2(e["qk_b"]), e["v_w"], v2(e["v_b"]),
        e["o_w"], v2(e["o_b"]), v2(e["ln1_g"]), v2(e["ln1_b"]),
        e["fc1_w"], v2(e["fc1_b"]), e["fc2_w"], v2(e["fc2_b"]),
        v2(e["ln2_g"]), v2(e["ln2_b"]),
        d["qk_w"], v2(d["qk_b"]), d["v_w"], v2(d["v_b"]),
        d["o_w"], v2(d["o_b"]), v2(d["ln1_g"]), v2(d["ln1_b"]),
        d["cq_w"], v2(d["cq_b"]), d["ck_w"], v2(d["ck_b"]),
        d["cv_w"], v2(d["cv_b"]), d["co_w"], v2(d["co_b"]),
        v2(d["ln2_g"]), v2(d["ln2_b"]),
        d["fc1_w"], v2(d["fc1_b"]), d["fc2_w"], v2(d["fc2_b"]),
        v2(d["ln3_g"]), v2(d["ln3_b"]),
        v2(p["dec_ln_g"]), v2(p["dec_ln_b"]),
        p["cls_w"], v2(p["cls_b"]),
        p["bbox_w1"], v2(p["bbox_b1"]), p["bbox_w2"], v2(p["bbox_b2"]),
        p["bbox_w3"], v2(p["bbox_b3"]),
    ]


def detr_forward(params, pixel_values):
    """pixel_values: [B, C, H, W] (NCHW). Returns (logits, pred_boxes)."""
    b = pixel_values.shape[0]
    x = jnp.transpose(pixel_values, (0, 2, 3, 1))     # NHWC

    # im2col patch extraction for the strided stem conv (glue)
    patches = (
        x.reshape(b, HF, STEM_K, WF, STEM_K, C_IN)
        .transpose(0, 1, 3, 2, 4, 5)
        .reshape(b, P_TOK, PATCH_DIM)
    )
    pos = sine_position_embedding(b, HF, WF, D_MODEL)            # [B, P_TOK, D]

    weights = _flatten_params(params)
    weight_specs = [pl.BlockSpec(w.shape, lambda i: (0, 0)) for w in weights]

    out = pl.pallas_call(
        _detr_kernel,
        out_shape=jax.ShapeDtypeStruct((b, NUM_QUERIES, OUT_DIM), jnp.float32),
        grid=(b,),
        in_specs=[
            pl.BlockSpec((1, P_TOK, PATCH_DIM), lambda i: (i, 0, 0)),
            pl.BlockSpec((1, P_TOK, D_MODEL), lambda i: (i, 0, 0)),
            pl.BlockSpec((NUM_QUERIES, D_MODEL), lambda i: (0, 0)),
        ] + weight_specs,
        out_specs=pl.BlockSpec((1, NUM_QUERIES, OUT_DIM), lambda i: (i, 0, 0)),
        compiler_params=pltpu.CompilerParams(dimension_semantics=("parallel",)),
    )(patches, pos, params["query_embed"], *weights)

    logits = out[..., :NUM_CLASSES]
    boxes = out[..., NUM_CLASSES:]
    return logits, boxes


# ------------------------------ param init ----------------------------------
def init_params(key):
    keys = iter(jax.random.split(key, 64))

    def w(shape, scale=0.02):
        return scale * jax.random.normal(next(keys), shape, jnp.float32)

    def zeros(shape):
        return jnp.zeros(shape, jnp.float32)

    def ones(shape):
        return jnp.ones(shape, jnp.float32)

    def enc_params():
        return {
            # q/k projections fused along the output (lane) axis
            "qk_w": w((D_MODEL, 2 * D_MODEL)), "qk_b": zeros((2 * D_MODEL,)),
            "v_w": w((D_MODEL, D_MODEL)), "v_b": zeros((D_MODEL,)),
            "o_w": w((D_MODEL, D_MODEL)), "o_b": zeros((D_MODEL,)),
            "ln1_g": ones((D_MODEL,)), "ln1_b": zeros((D_MODEL,)),
            "fc1_w": w((D_MODEL, FFN_DIM)), "fc1_b": zeros((FFN_DIM,)),
            "fc2_w": w((FFN_DIM, D_MODEL)), "fc2_b": zeros((D_MODEL,)),
            "ln2_g": ones((D_MODEL,)), "ln2_b": zeros((D_MODEL,)),
        }

    def dec_params():
        return {
            "qk_w": w((D_MODEL, 2 * D_MODEL)), "qk_b": zeros((2 * D_MODEL,)),
            "v_w": w((D_MODEL, D_MODEL)), "v_b": zeros((D_MODEL,)),
            "o_w": w((D_MODEL, D_MODEL)), "o_b": zeros((D_MODEL,)),
            "ln1_g": ones((D_MODEL,)), "ln1_b": zeros((D_MODEL,)),
            "cq_w": w((D_MODEL, D_MODEL)), "cq_b": zeros((D_MODEL,)),
            "ck_w": w((D_MODEL, D_MODEL)), "ck_b": zeros((D_MODEL,)),
            "cv_w": w((D_MODEL, D_MODEL)), "cv_b": zeros((D_MODEL,)),
            "co_w": w((D_MODEL, D_MODEL)), "co_b": zeros((D_MODEL,)),
            "ln2_g": ones((D_MODEL,)), "ln2_b": zeros((D_MODEL,)),
            "fc1_w": w((D_MODEL, FFN_DIM)), "fc1_b": zeros((FFN_DIM,)),
            "fc2_w": w((FFN_DIM, D_MODEL)), "fc2_b": zeros((D_MODEL,)),
            "ln3_g": ones((D_MODEL,)), "ln3_b": zeros((D_MODEL,)),
        }

    return {
        "stem_w": w((PATCH_DIM, C_BACK)), "stem_b": zeros((C_BACK,)),
        "proj_w": w((C_BACK, D_MODEL)), "proj_b": zeros((D_MODEL,)),
        "enc": enc_params(),
        "dec": dec_params(),
        "dec_ln_g": ones((D_MODEL,)), "dec_ln_b": zeros((D_MODEL,)),
        "query_embed": w((NUM_QUERIES, D_MODEL)),
        "cls_w": w((D_MODEL, NUM_CLASSES)), "cls_b": zeros((NUM_CLASSES,)),
        "bbox_w1": w((D_MODEL, D_MODEL)), "bbox_b1": zeros((D_MODEL,)),
        "bbox_w2": w((D_MODEL, D_MODEL)), "bbox_b2": zeros((D_MODEL,)),
        "bbox_w3": w((D_MODEL, 4)), "bbox_b3": zeros((4,)),
    }


# -------------------------------- main --------------------------------------
if __name__ == "__main__":
    root = jax.random.PRNGKey(0)
    pkey, xkey = jax.random.split(root)
    params = init_params(pkey)
    pixel_values = jax.random.normal(xkey, (B, C_IN, H, W), jnp.float32)

    fwd = jax.jit(functools.partial(detr_forward, params))
    logits, pred_boxes = fwd(pixel_values)
    jax.block_until_ready((logits, pred_boxes))

    assert logits.shape == (B, NUM_QUERIES, NUM_CLASSES), logits.shape
    assert pred_boxes.shape == (B, NUM_QUERIES, 4), pred_boxes.shape
    assert bool(jnp.all(jnp.isfinite(logits))) and bool(jnp.all(jnp.isfinite(pred_boxes)))
    print("KERNEL_OK")
</pallas_src>

<mosaic_0001>
module attributes {stable_mosaic.version = 11 : i64} {
  func.func @_detr_kernel(%arg0: i32, %arg1: memref<1x16x48xf32, #tpu.memory_space<vmem>>, %arg2: memref<1x16x32xf32, #tpu.memory_space<vmem>>, %arg3: memref<8x32xf32, #tpu.memory_space<vmem>>, %arg4: memref<48x16xf32, #tpu.memory_space<vmem>>, %arg5: memref<1x16xf32, #tpu.memory_space<vmem>>, %arg6: memref<16x32xf32, #tpu.memory_space<vmem>>, %arg7: memref<1x32xf32, #tpu.memory_space<vmem>>, %arg8: memref<32x64xf32, #tpu.memory_space<vmem>>, %arg9: memref<1x64xf32, #tpu.memory_space<vmem>>, %arg10: memref<32x32xf32, #tpu.memory_space<vmem>>, %arg11: memref<1x32xf32, #tpu.memory_space<vmem>>, %arg12: memref<32x32xf32, #tpu.memory_space<vmem>>, %arg13: memref<1x32xf32, #tpu.memory_space<vmem>>, %arg14: memref<1x32xf32, #tpu.memory_space<vmem>>, %arg15: memref<1x32xf32, #tpu.memory_space<vmem>>, %arg16: memref<32x64xf32, #tpu.memory_space<vmem>>, %arg17: memref<1x64xf32, #tpu.memory_space<vmem>>, %arg18: memref<64x32xf32, #tpu.memory_space<vmem>>, %arg19: memref<1x32xf32, #tpu.memory_space<vmem>>, %arg20: memref<1x32xf32, #tpu.memory_space<vmem>>, %arg21: memref<1x32xf32, #tpu.memory_space<vmem>>, %arg22: memref<32x64xf32, #tpu.memory_space<vmem>>, %arg23: memref<1x64xf32, #tpu.memory_space<vmem>>, %arg24: memref<32x32xf32, #tpu.memory_space<vmem>>, %arg25: memref<1x32xf32, #tpu.memory_space<vmem>>, %arg26: memref<32x32xf32, #tpu.memory_space<vmem>>, %arg27: memref<1x32xf32, #tpu.memory_space<vmem>>, %arg28: memref<1x32xf32, #tpu.memory_space<vmem>>, %arg29: memref<1x32xf32, #tpu.memory_space<vmem>>, %arg30: memref<32x32xf32, #tpu.memory_space<vmem>>, %arg31: memref<1x32xf32, #tpu.memory_space<vmem>>, %arg32: memref<32x32xf32, #tpu.memory_space<vmem>>, %arg33: memref<1x32xf32, #tpu.memory_space<vmem>>, %arg34: memref<32x32xf32, #tpu.memory_space<vmem>>, %arg35: memref<1x32xf32, #tpu.memory_space<vmem>>, %arg36: memref<32x32xf32, #tpu.memory_space<vmem>>, %arg37: memref<1x32xf32, #tpu.memory_space<vmem>>, %arg38: memref<1x32xf32, #tpu.memory_space<vmem>>, %arg39: memref<1x32xf32, #tpu.memory_space<vmem>>, %arg40: memref<32x64xf32, #tpu.memory_space<vmem>>, %arg41: memref<1x64xf32, #tpu.memory_space<vmem>>, %arg42: memref<64x32xf32, #tpu.memory_space<vmem>>, %arg43: memref<1x32xf32, #tpu.memory_space<vmem>>, %arg44: memref<1x32xf32, #tpu.memory_space<vmem>>, %arg45: memref<1x32xf32, #tpu.memory_space<vmem>>, %arg46: memref<1x32xf32, #tpu.memory_space<vmem>>, %arg47: memref<1x32xf32, #tpu.memory_space<vmem>>, %arg48: memref<32x12xf32, #tpu.memory_space<vmem>>, %arg49: memref<1x12xf32, #tpu.memory_space<vmem>>, %arg50: memref<32x32xf32, #tpu.memory_space<vmem>>, %arg51: memref<1x32xf32, #tpu.memory_space<vmem>>, %arg52: memref<32x32xf32, #tpu.memory_space<vmem>>, %arg53: memref<1x32xf32, #tpu.memory_space<vmem>>, %arg54: memref<32x4xf32, #tpu.memory_space<vmem>>, %arg55: memref<1x4xf32, #tpu.memory_space<vmem>>, %arg56: memref<1x8x16xf32, #tpu.memory_space<vmem>>) attributes {dimension_semantics = [#tpu.dimension_semantics<parallel>], iteration_bounds = array<i64: 2>, scalar_prefetch = 0 : i64, scratch_operands = 0 : i64, tpu.core_type = #tpu.core_type<tc>, window_params = [{transform_indices = @transform_0, window_bounds = array<i64: 1, 16, 48>}, {transform_indices = @transform_1, window_bounds = array<i64: 1, 16, 32>}, {pipeline_mode = #tpu.pipeline_mode<synchronous>, transform_indices = @transform_2, window_bounds = array<i64: 8, 32>}, {pipeline_mode = #tpu.pipeline_mode<synchronous>, transform_indices = @transform_3, window_bounds = array<i64: 48, 16>}, {pipeline_mode = #tpu.pipeline_mode<synchronous>, transform_indices = @transform_4, window_bounds = array<i64: 1, 16>}, {pipeline_mode = #tpu.pipeline_mode<synchronous>, transform_indices = @transform_5, window_bounds = array<i64: 16, 32>}, {pipeline_mode = #tpu.pipeline_mode<synchronous>, transform_indices = @transform_6, window_bounds = array<i64: 1, 32>}, {pipeline_mode = #tpu.pipeline_mode<synchronous>, transform_indices = @transform_7, window_bounds = array<i64: 32, 64>}, {pipeline_mode = #tpu.pipeline_mode<synchronous>, transform_indices = @transform_8, window_bounds = array<i64: 1, 64>}, {pipeline_mode = #tpu.pipeline_mode<synchronous>, transform_indices = @transform_9, window_bounds = array<i64: 32, 32>}, {pipeline_mode = #tpu.pipeline_mode<synchronous>, transform_indices = @transform_10, window_bounds = array<i64: 1, 32>}, {pipeline_mode = #tpu.pipeline_mode<synchronous>, transform_indices = @transform_11, window_bounds = array<i64: 32, 32>}, {pipeline_mode = #tpu.pipeline_mode<synchronous>, transform_indices = @transform_12, window_bounds = array<i64: 1, 32>}, {pipeline_mode = #tpu.pipeline_mode<synchronous>, transform_indices = @transform_13, window_bounds = array<i64: 1, 32>}, {pipeline_mode = #tpu.pipeline_mode<synchronous>, transform_indices = @transform_14, window_bounds = array<i64: 1, 32>}, {pipeline_mode = #tpu.pipeline_mode<synchronous>, transform_indices = @transform_15, window_bounds = array<i64: 32, 64>}, {pipeline_mode = #tpu.pipeline_mode<synchronous>, transform_indices = @transform_16, window_bounds = array<i64: 1, 64>}, {pipeline_mode = #tpu.pipeline_mode<synchronous>, transform_indices = @transform_17, window_bounds = array<i64: 64, 32>}, {pipeline_mode = #tpu.pipeline_mode<synchronous>, transform_indices = @transform_18, window_bounds = array<i64: 1, 32>}, {pipeline_mode = #tpu.pipeline_mode<synchronous>, transform_indices = @transform_19, window_bounds = array<i64: 1, 32>}, {pipeline_mode = #tpu.pipeline_mode<synchronous>, transform_indices = @transform_20, window_bounds = array<i64: 1, 32>}, {pipeline_mode = #tpu.pipeline_mode<synchronous>, transform_indices = @transform_21, window_bounds = array<i64: 32, 64>}, {pipeline_mode = #tpu.pipeline_mode<synchronous>, transform_indices = @transform_22, window_bounds = array<i64: 1, 64>}, {pipeline_mode = #tpu.pipeline_mode<synchronous>, transform_indices = @transform_23, window_bounds = array<i64: 32, 32>}, {pipeline_mode = #tpu.pipeline_mode<synchronous>, transform_indices = @transform_24, window_bounds = array<i64: 1, 32>}, {pipeline_mode = #tpu.pipeline_mode<synchronous>, transform_indices = @transform_25, window_bounds = array<i64: 32, 32>}, {pipeline_mode = #tpu.pipeline_mode<synchronous>, transform_indices = @transform_26, window_bounds = array<i64: 1, 32>}, {pipeline_mode = #tpu.pipeline_mode<synchronous>, transform_indices = @transform_27, window_bounds = array<i64: 1, 32>}, {pipeline_mode = #tpu.pipeline_mode<synchronous>, transform_indices = @transform_28, window_bounds = array<i64: 1, 32>}, {pipeline_mode = #tpu.pipeline_mode<synchronous>, transform_indices = @transform_29, window_bounds = array<i64: 32, 32>}, {pipeline_mode = #tpu.pipeline_mode<synchronous>, transform_indices = @transform_30, window_bounds = array<i64: 1, 32>}, {pipeline_mode = #tpu.pipeline_mode<synchronous>, transform_indices = @transform_31, window_bounds = array<i64: 32, 32>}, {pipeline_mode = #tpu.pipeline_mode<synchronous>, transform_indices = @transform_32, window_bounds = array<i64: 1, 32>}, {pipeline_mode = #tpu.pipeline_mode<synchronous>, transform_indices = @transform_33, window_bounds = array<i64: 32, 32>}, {pipeline_mode = #tpu.pipeline_mode<synchronous>, transform_indices = @transform_34, window_bounds = array<i64: 1, 32>}, {pipeline_mode = #tpu.pipeline_mode<synchronous>, transform_indices = @transform_35, window_bounds = array<i64: 32, 32>}, {pipeline_mode = #tpu.pipeline_mode<synchronous>, transform_indices = @transform_36, window_bounds = array<i64: 1, 32>}, {pipeline_mode = #tpu.pipeline_mode<synchronous>, transform_indices = @transform_37, window_bounds = array<i64: 1, 32>}, {pipeline_mode = #tpu.pipeline_mode<synchronous>, transform_indices = @transform_38, window_bounds = array<i64: 1, 32>}, {pipeline_mode = #tpu.pipeline_mode<synchronous>, transform_indices = @transform_39, window_bounds = array<i64: 32, 64>}, {pipeline_mode = #tpu.pipeline_mode<synchronous>, transform_indices = @transform_40, window_bounds = array<i64: 1, 64>}, {pipeline_mode = #tpu.pipeline_mode<synchronous>, transform_indices = @transform_41, window_bounds = array<i64: 64, 32>}, {pipeline_mode = #tpu.pipeline_mode<synchronous>, transform_indices = @transform_42, window_bounds = array<i64: 1, 32>}, {pipeline_mode = #tpu.pipeline_mode<synchronous>, transform_indices = @transform_43, window_bounds = array<i64: 1, 32>}, {pipeline_mode = #tpu.pipeline_mode<synchronous>, transform_indices = @transform_44, window_bounds = array<i64: 1, 32>}, {pipeline_mode = #tpu.pipeline_mode<synchronous>, transform_indices = @transform_45, window_bounds = array<i64: 1, 32>}, {pipeline_mode = #tpu.pipeline_mode<synchronous>, transform_indices = @transform_46, window_bounds = array<i64: 1, 32>}, {pipeline_mode = #tpu.pipeline_mode<synchronous>, transform_indices = @transform_47, window_bounds = array<i64: 32, 12>}, {pipeline_mode = #tpu.pipeline_mode<synchronous>, transform_indices = @transform_48, window_bounds = array<i64: 1, 12>}, {pipeline_mode = #tpu.pipeline_mode<synchronous>, transform_indices = @transform_49, window_bounds = array<i64: 32, 32>}, {pipeline_mode = #tpu.pipeline_mode<synchronous>, transform_indices = @transform_50, window_bounds = array<i64: 1, 32>}, {pipeline_mode = #tpu.pipeline_mode<synchronous>, transform_indices = @transform_51, window_bounds = array<i64: 32, 32>}, {pipeline_mode = #tpu.pipeline_mode<synchronous>, transform_indices = @transform_52, window_bounds = array<i64: 1, 32>}, {pipeline_mode = #tpu.pipeline_mode<synchronous>, transform_indices = @transform_53, window_bounds = array<i64: 32, 4>}, {pipeline_mode = #tpu.pipeline_mode<synchronous>, transform_indices = @transform_54, window_bounds = array<i64: 1, 4>}, {transform_indices = @transform_55, window_bounds = array<i64: 1, 8, 16>}]} {
    %c0 = arith.constant 0 : index
    %c0_0 = arith.constant 0 : index
    %c0_1 = arith.constant 0 : index
    %0 = vector.load %arg1[%c0, %c0_0, %c0_1] : memref<1x16x48xf32, #tpu.memory_space<vmem>>, vector<1x16x48xf32>
    %1 = vector.shape_cast %0 : vector<1x16x48xf32> to vector<16x48xf32>
    %c0_2 = arith.constant 0 : index
    %c0_3 = arith.constant 0 : index
    %2 = vector.load %arg4[%c0_2, %c0_3] : memref<48x16xf32, #tpu.memory_space<vmem>>, vector<48x16xf32>
    %c0_4 = arith.constant 0 : index
    %c0_5 = arith.constant 0 : index
    %3 = vector.load %arg5[%c0_4, %c0_5] : memref<1x16xf32, #tpu.memory_space<vmem>>, vector<1x16xf32>
    %cst = arith.constant dense<0.000000e+00> : vector<16x16xf32>
    %4 = tpu.matmul %1, %2, %cst {dimension_numbers = #tpu.dot_dimension_numbers<[1], [0], [0], [1], [0, 0, 1, 1], [], []>} : vector<16x48xf32>, vector<48x16xf32>, vector<16x16xf32> -> vector<16x16xf32>
    %5 = vector.broadcast %3 : vector<1x16xf32> to vector<16x16xf32>
    %6 = arith.addf %4, %5 : vector<16x16xf32>
    %cst_6 = arith.constant 0.000000e+00 : f32
    %7 = vector.broadcast %cst_6 : f32 to vector<16x16xf32>
    %8 = arith.maximumf %6, %7 : vector<16x16xf32>
    %c0_7 = arith.constant 0 : index
    %c0_8 = arith.constant 0 : index
    %9 = vector.load %arg6[%c0_7, %c0_8] : memref<16x32xf32, #tpu.memory_space<vmem>>, vector<16x32xf32>
    %c0_9 = arith.constant 0 : index
    %c0_10 = arith.constant 0 : index
    %10 = vector.load %arg7[%c0_9, %c0_10] : memref<1x32xf32, #tpu.memory_space<vmem>>, vector<1x32xf32>
    %cst_11 = arith.constant dense<0.000000e+00> : vector<16x32xf32>
    %11 = tpu.matmul %8, %9, %cst_11 {dimension_numbers = #tpu.dot_dimension_numbers<[1], [0], [0], [1], [0, 0, 1, 1], [], []>} : vector<16x16xf32>, vector<16x32xf32>, vector<16x32xf32> -> vector<16x32xf32>
    %12 = vector.broadcast %10 : vector<1x32xf32> to vector<16x32xf32>
    %13 = arith.addf %11, %12 : vector<16x32xf32>
    %c0_12 = arith.constant 0 : index
    %c0_13 = arith.constant 0 : index
    %c0_14 = arith.constant 0 : index
    %14 = vector.load %arg2[%c0_12, %c0_13, %c0_14] : memref<1x16x32xf32, #tpu.memory_space<vmem>>, vector<1x16x32xf32>
    %15 = vector.shape_cast %14 : vector<1x16x32xf32> to vector<16x32xf32>
    %16 = arith.addf %13, %15 : vector<16x32xf32>
    %c0_15 = arith.constant 0 : index
    %c0_16 = arith.constant 0 : index
    %17 = vector.load %arg8[%c0_15, %c0_16] : memref<32x64xf32, #tpu.memory_space<vmem>>, vector<32x64xf32>
    %c0_17 = arith.constant 0 : index
    %c0_18 = arith.constant 0 : index
    %18 = vector.load %arg9[%c0_17, %c0_18] : memref<1x64xf32, #tpu.memory_space<vmem>>, vector<1x64xf32>
    %cst_19 = arith.constant dense<0.000000e+00> : vector<16x64xf32>
    %19 = tpu.matmul %16, %17, %cst_19 {dimension_numbers = #tpu.dot_dimension_numbers<[1], [0], [0], [1], [0, 0, 1, 1], [], []>} : vector<16x32xf32>, vector<32x64xf32>, vector<16x64xf32> -> vector<16x64xf32>
    %20 = vector.broadcast %18 : vector<1x64xf32> to vector<16x64xf32>
    %21 = arith.addf %19, %20 : vector<16x64xf32>
    %22 = vector.extract_strided_slice %21 {offsets = [0, 0], sizes = [16, 32], strides = [1, 1]} : vector<16x64xf32> to vector<16x32xf32>
    %23 = vector.extract_strided_slice %21 {offsets = [0, 32], sizes = [16, 32], strides = [1, 1]} : vector<16x64xf32> to vector<16x32xf32>
    %c0_20 = arith.constant 0 : index
    %c0_21 = arith.constant 0 : index
    %24 = vector.load %arg10[%c0_20, %c0_21] : memref<32x32xf32, #tpu.memory_space<vmem>>, vector<32x32xf32>
    %c0_22 = arith.constant 0 : index
    %c0_23 = arith.constant 0 : index
    %25 = vector.load %arg11[%c0_22, %c0_23] : memref<1x32xf32, #tpu.memory_space<vmem>>, vector<1x32xf32>
    %cst_24 = arith.constant dense<0.000000e+00> : vector<16x32xf32>
    %26 = tpu.matmul %13, %24, %cst_24 {dimension_numbers = #tpu.dot_dimension_numbers<[1], [0], [0], [1], [0, 0, 1, 1], [], []>} : vector<16x32xf32>, vector<32x32xf32>, vector<16x32xf32> -> vector<16x32xf32>
    %27 = vector.broadcast %25 : vector<1x32xf32> to vector<16x32xf32>
    %28 = arith.addf %26, %27 : vector<16x32xf32>
    %29 = vector.extract_strided_slice %22 {offsets = [0, 0], sizes = [16, 8], strides = [1, 1]} : vector<16x32xf32> to vector<16x8xf32>
    %30 = vector.extract_strided_slice %23 {offsets = [0, 0], sizes = [16, 8], strides = [1, 1]} : vector<16x32xf32> to vector<16x8xf32>
    %31 = vector.extract_strided_slice %28 {offsets = [0, 0], sizes = [16, 8], strides = [1, 1]} : vector<16x32xf32> to vector<16x8xf32>
    %cst_25 = arith.constant dense<0.000000e+00> : vector<16x16xf32>
    %32 = tpu.matmul %29, %30, %cst_25 {dimension_numbers = #tpu.dot_dimension_numbers<[1], [1], [0], [0], [0, 0, 1, 0], [], []>} : vector<16x8xf32>, vector<16x8xf32>, vector<16x16xf32> -> vector<16x16xf32>
    %cst_26 = arith.constant 0.353553385 : f32
    %33 = vector.broadcast %cst_26 : f32 to vector<16x16xf32>
    %34 = arith.mulf %32, %33 : vector<16x16xf32>
    %cst_27 = arith.constant dense<0xFF800000> : vector<16xf32>
    %35 = vector.multi_reduction <maximumf>, %34, %cst_27 [1] : vector<16x16xf32> to vector<16xf32>
    %36 = vector.shape_cast %35 : vector<16xf32> to vector<16x1xf32>
    %37 = vector.broadcast %36 : vector<16x1xf32> to vector<16x16xf32>
    %38 = arith.subf %34, %37 : vector<16x16xf32>
    %39 = math.exp %38 : vector<16x16xf32>
    %cst_28 = arith.constant dense<0.000000e+00> : vector<16xf32>
    %40 = vector.multi_reduction <add>, %39, %cst_28 [1] : vector<16x16xf32> to vector<16xf32>
    %41 = vector.shape_cast %40 : vector<16xf32> to vector<16x1xf32>
    %42 = tpu.reciprocal %41 {approx = true} : vector<16x1xf32> -> vector<16x1xf32>
    %43 = vector.broadcast %42 : vector<16x1xf32> to vector<16x16xf32>
    %44 = arith.mulf %39, %43 : vector<16x16xf32>
    %cst_29 = arith.constant dense<0.000000e+00> : vector<16x8xf32>
    %45 = tpu.matmul %44, %31, %cst_29 {dimension_numbers = #tpu.dot_dimension_numbers<[1], [0], [0], [1], [0, 0, 1, 1], [], []>} : vector<16x16xf32>, vector<16x8xf32>, vector<16x8xf32> -> vector<16x8xf32>
    %46 = vector.extract_strided_slice %22 {offsets = [0, 8], sizes = [16, 8], strides = [1, 1]} : vector<16x32xf32> to vector<16x8xf32>
    %47 = vector.extract_strided_slice %23 {offsets = [0, 8], sizes = [16, 8], strides = [1, 1]} : vector<16x32xf32> to vector<16x8xf32>
    %48 = vector.extract_strided_slice %28 {offsets = [0, 8], sizes = [16, 8], strides = [1, 1]} : vector<16x32xf32> to vector<16x8xf32>
    %cst_30 = arith.constant dense<0.000000e+00> : vector<16x16xf32>
    %49 = tpu.matmul %46, %47, %cst_30 {dimension_numbers = #tpu.dot_dimension_numbers<[1], [1], [0], [0], [0, 0, 1, 0], [], []>} : vector<16x8xf32>, vector<16x8xf32>, vector<16x16xf32> -> vector<16x16xf32>
    %cst_31 = arith.constant 0.353553385 : f32
    %50 = vector.broadcast %cst_31 : f32 to vector<16x16xf32>
    %51 = arith.mulf %49, %50 : vector<16x16xf32>
    %cst_32 = arith.constant dense<0xFF800000> : vector<16xf32>
    %52 = vector.multi_reduction <maximumf>, %51, %cst_32 [1] : vector<16x16xf32> to vector<16xf32>
    %53 = vector.shape_cast %52 : vector<16xf32> to vector<16x1xf32>
    %54 = vector.broadcast %53 : vector<16x1xf32> to vector<16x16xf32>
    %55 = arith.subf %51, %54 : vector<16x16xf32>
    %56 = math.exp %55 : vector<16x16xf32>
    %cst_33 = arith.constant dense<0.000000e+00> : vector<16xf32>
    %57 = vector.multi_reduction <add>, %56, %cst_33 [1] : vector<16x16xf32> to vector<16xf32>
    %58 = vector.shape_cast %57 : vector<16xf32> to vector<16x1xf32>
    %59 = tpu.reciprocal %58 {approx = true} : vector<16x1xf32> -> vector<16x1xf32>
    %60 = vector.broadcast %59 : vector<16x1xf32> to vector<16x16xf32>
    %61 = arith.mulf %56, %60 : vector<16x16xf32>
    %cst_34 = arith.constant dense<0.000000e+00> : vector<16x8xf32>
    %62 = tpu.matmul %61, %48, %cst_34 {dimension_numbers = #tpu.dot_dimension_numbers<[1], [0], [0], [1], [0, 0, 1, 1], [], []>} : vector<16x16xf32>, vector<16x8xf32>, vector<16x8xf32> -> vector<16x8xf32>
    %63 = vector.extract_strided_slice %22 {offsets = [0, 16], sizes = [16, 8], strides = [1, 1]} : vector<16x32xf32> to vector<16x8xf32>
    %64 = vector.extract_strided_slice %23 {offsets = [0, 16], sizes = [16, 8], strides = [1, 1]} : vector<16x32xf32> to vector<16x8xf32>
    %65 = vector.extract_strided_slice %28 {offsets = [0, 16], sizes = [16, 8], strides = [1, 1]} : vector<16x32xf32> to vector<16x8xf32>
    %cst_35 = arith.constant dense<0.000000e+00> : vector<16x16xf32>
    %66 = tpu.matmul %63, %64, %cst_35 {dimension_numbers = #tpu.dot_dimension_numbers<[1], [1], [0], [0], [0, 0, 1, 0], [], []>} : vector<16x8xf32>, vector<16x8xf32>, vector<16x16xf32> -> vector<16x16xf32>
    %cst_36 = arith.constant 0.353553385 : f32
    %67 = vector.broadcast %cst_36 : f32 to vector<16x16xf32>
    %68 = arith.mulf %66, %67 : vector<16x16xf32>
    %cst_37 = arith.constant dense<0xFF800000> : vector<16xf32>
    %69 = vector.multi_reduction <maximumf>, %68, %cst_37 [1] : vector<16x16xf32> to vector<16xf32>
    %70 = vector.shape_cast %69 : vector<16xf32> to vector<16x1xf32>
    %71 = vector.broadcast %70 : vector<16x1xf32> to vector<16x16xf32>
    %72 = arith.subf %68, %71 : vector<16x16xf32>
    %73 = math.exp %72 : vector<16x16xf32>
    %cst_38 = arith.constant dense<0.000000e+00> : vector<16xf32>
    %74 = vector.multi_reduction <add>, %73, %cst_38 [1] : vector<16x16xf32> to vector<16xf32>
    %75 = vector.shape_cast %74 : vector<16xf32> to vector<16x1xf32>
    %76 = tpu.reciprocal %75 {approx = true} : vector<16x1xf32> -> vector<16x1xf32>
    %77 = vector.broadcast %76 : vector<16x1xf32> to vector<16x16xf32>
    %78 = arith.mulf %73, %77 : vector<16x16xf32>
    %cst_39 = arith.constant dense<0.000000e+00> : vector<16x8xf32>
    %79 = tpu.matmul %78, %65, %cst_39 {dimension_numbers = #tpu.dot_dimension_numbers<[1], [0], [0], [1], [0, 0, 1, 1], [], []>} : vector<16x16xf32>, vector<16x8xf32>, vector<16x8xf32> -> vector<16x8xf32>
    %80 = vector.extract_strided_slice %22 {offsets = [0, 24], sizes = [16, 8], strides = [1, 1]} : vector<16x32xf32> to vector<16x8xf32>
    %81 = vector.extract_strided_slice %23 {offsets = [0, 24], sizes = [16, 8], strides = [1, 1]} : vector<16x32xf32> to vector<16x8xf32>
    %82 = vector.extract_strided_slice %28 {offsets = [0, 24], sizes = [16, 8], strides = [1, 1]} : vector<16x32xf32> to vector<16x8xf32>
    %cst_40 = arith.constant dense<0.000000e+00> : vector<16x16xf32>
    %83 = tpu.matmul %80, %81, %cst_40 {dimension_numbers = #tpu.dot_dimension_numbers<[1], [1], [0], [0], [0, 0, 1, 0], [], []>} : vector<16x8xf32>, vector<16x8xf32>, vector<16x16xf32> -> vector<16x16xf32>
    %cst_41 = arith.constant 0.353553385 : f32
    %84 = vector.broadcast %cst_41 : f32 to vector<16x16xf32>
    %85 = arith.mulf %83, %84 : vector<16x16xf32>
    %cst_42 = arith.constant dense<0xFF800000> : vector<16xf32>
    %86 = vector.multi_reduction <maximumf>, %85, %cst_42 [1] : vector<16x16xf32> to vector<16xf32>
    %87 = vector.shape_cast %86 : vector<16xf32> to vector<16x1xf32>
    %88 = vector.broadcast %87 : vector<16x1xf32> to vector<16x16xf32>
    %89 = arith.subf %85, %88 : vector<16x16xf32>
    %90 = math.exp %89 : vector<16x16xf32>
    %cst_43 = arith.constant dense<0.000000e+00> : vector<16xf32>
    %91 = vector.multi_reduction <add>, %90, %cst_43 [1] : vector<16x16xf32> to vector<16xf32>
    %92 = vector.shape_cast %91 : vector<16xf32> to vector<16x1xf32>
    %93 = tpu.reciprocal %92 {approx = true} : vector<16x1xf32> -> vector<16x1xf32>
    %94 = vector.broadcast %93 : vector<16x1xf32> to vector<16x16xf32>
    %95 = arith.mulf %90, %94 : vector<16x16xf32>
    %cst_44 = arith.constant dense<0.000000e+00> : vector<16x8xf32>
    %96 = tpu.matmul %95, %82, %cst_44 {dimension_numbers = #tpu.dot_dimension_numbers<[1], [0], [0], [1], [0, 0, 1, 1], [], []>} : vector<16x16xf32>, vector<16x8xf32>, vector<16x8xf32> -> vector<16x8xf32>
    %97 = tpu.concatenate %45, %62, %79, %96 in 1 : vector<16x8xf32>, vector<16x8xf32>, vector<16x8xf32>, vector<16x8xf32> -> vector<16x32xf32>
    %c0_45 = arith.constant 0 : index
    %c0_46 = arith.constant 0 : index
    %98 = vector.load %arg12[%c0_45, %c0_46] : memref<32x32xf32, #tpu.memory_space<vmem>>, vector<32x32xf32>
    %c0_47 = arith.constant 0 : index
    %c0_48 = arith.constant 0 : index
    %99 = vector.load %arg13[%c0_47, %c0_48] : memref<1x32xf32, #tpu.memory_space<vmem>>, vector<1x32xf32>
    %cst_49 = arith.constant dense<0.000000e+00> : vector<16x32xf32>
    %100 = tpu.matmul %97, %98, %cst_49 {dimension_numbers = #tpu.dot_dimension_numbers<[1], [0], [0], [1], [0, 0, 1, 1], [], []>} : vector<16x32xf32>, vector<32x32xf32>, vector<16x32xf32> -> vector<16x32xf32>
    %101 = vector.broadcast %99 : vector<1x32xf32> to vector<16x32xf32>
    %102 = arith.addf %100, %101 : vector<16x32xf32>
    %103 = arith.addf %13, %102 : vector<16x32xf32>
    %c0_50 = arith.constant 0 : index
    %c0_51 = arith.constant 0 : index
    %104 = vector.load %arg14[%c0_50, %c0_51] : memref<1x32xf32, #tpu.memory_space<vmem>>, vector<1x32xf32>
    %c0_52 = arith.constant 0 : index
    %c0_53 = arith.constant 0 : index
    %105 = vector.load %arg15[%c0_52, %c0_53] : memref<1x32xf32, #tpu.memory_space<vmem>>, vector<1x32xf32>
    %cst_54 = arith.constant dense<0.000000e+00> : vector<16xf32>
    %106 = vector.multi_reduction <add>, %103, %cst_54 [1] : vector<16x32xf32> to vector<16xf32>
    %107 = vector.shape_cast %106 : vector<16xf32> to vector<16x1xf32>
    %cst_55 = arith.constant 3.200000e+01 : f32
    %108 = vector.broadcast %cst_55 : f32 to vector<16x1xf32>
    %109 = arith.divf %107, %108 : vector<16x1xf32>
    %110 = vector.broadcast %109 : vector<16x1xf32> to vector<16x32xf32>
    %111 = arith.subf %103, %110 : vector<16x32xf32>
    %112 = arith.mulf %111, %111 : vector<16x32xf32>
    %cst_56 = arith.constant dense<0.000000e+00> : vector<16xf32>
    %113 = vector.multi_reduction <add>, %112, %cst_56 [1] : vector<16x32xf32> to vector<16xf32>
    %114 = vector.shape_cast %113 : vector<16xf32> to vector<16x1xf32>
    %cst_57 = arith.constant 3.200000e+01 : f32
    %115 = vector.broadcast %cst_57 : f32 to vector<16x1xf32>
    %116 = arith.divf %114, %115 : vector<16x1xf32>
    %cst_58 = arith.constant 9.99999974E-6 : f32
    %117 = vector.broadcast %cst_58 : f32 to vector<16x1xf32>
    %118 = arith.addf %116, %117 : vector<16x1xf32>
    %119 = math.rsqrt %118 : vector<16x1xf32>
    %120 = vector.broadcast %109 : vector<16x1xf32> to vector<16x32xf32>
    %121 = arith.subf %103, %120 : vector<16x32xf32>
    %122 = vector.broadcast %119 : vector<16x1xf32> to vector<16x32xf32>
    %123 = arith.mulf %121, %122 : vector<16x32xf32>
    %124 = vector.broadcast %104 : vector<1x32xf32> to vector<16x32xf32>
    %125 = arith.mulf %123, %124 : vector<16x32xf32>
    %126 = vector.broadcast %105 : vector<1x32xf32> to vector<16x32xf32>
    %127 = arith.addf %125, %126 : vector<16x32xf32>
    %c0_59 = arith.constant 0 : index
    %c0_60 = arith.constant 0 : index
    %128 = vector.load %arg16[%c0_59, %c0_60] : memref<32x64xf32, #tpu.memory_space<vmem>>, vector<32x64xf32>
    %c0_61 = arith.constant 0 : index
    %c0_62 = arith.constant 0 : index
    %129 = vector.load %arg17[%c0_61, %c0_62] : memref<1x64xf32, #tpu.memory_space<vmem>>, vector<1x64xf32>
    %cst_63 = arith.constant dense<0.000000e+00> : vector<16x64xf32>
    %130 = tpu.matmul %127, %128, %cst_63 {dimension_numbers = #tpu.dot_dimension_numbers<[1], [0], [0], [1], [0, 0, 1, 1], [], []>} : vector<16x32xf32>, vector<32x64xf32>, vector<16x64xf32> -> vector<16x64xf32>
    %131 = vector.broadcast %129 : vector<1x64xf32> to vector<16x64xf32>
    %132 = arith.addf %130, %131 : vector<16x64xf32>
    %cst_64 = arith.constant 0.000000e+00 : f32
    %133 = vector.broadcast %cst_64 : f32 to vector<16x64xf32>
    %134 = arith.maximumf %132, %133 : vector<16x64xf32>
    %c0_65 = arith.constant 0 : index
    %c0_66 = arith.constant 0 : index
    %135 = vector.load %arg18[%c0_65, %c0_66] : memref<64x32xf32, #tpu.memory_space<vmem>>, vector<64x32xf32>
    %c0_67 = arith.constant 0 : index
    %c0_68 = arith.constant 0 : index
    %136 = vector.load %arg19[%c0_67, %c0_68] : memref<1x32xf32, #tpu.memory_space<vmem>>, vector<1x32xf32>
    %cst_69 = arith.constant dense<0.000000e+00> : vector<16x32xf32>
    %137 = tpu.matmul %134, %135, %cst_69 {dimension_numbers = #tpu.dot_dimension_numbers<[1], [0], [0], [1], [0, 0, 1, 1], [], []>} : vector<16x64xf32>, vector<64x32xf32>, vector<16x32xf32> -> vector<16x32xf32>
    %138 = vector.broadcast %136 : vector<1x32xf32> to vector<16x32xf32>
    %139 = arith.addf %137, %138 : vector<16x32xf32>
    %140 = arith.addf %127, %139 : vector<16x32xf32>
    %c0_70 = arith.constant 0 : index
    %c0_71 = arith.constant 0 : index
    %141 = vector.load %arg20[%c0_70, %c0_71] : memref<1x32xf32, #tpu.memory_space<vmem>>, vector<1x32xf32>
    %c0_72 = arith.constant 0 : index
    %c0_73 = arith.constant 0 : index
    %142 = vector.load %arg21[%c0_72, %c0_73] : memref<1x32xf32, #tpu.memory_space<vmem>>, vector<1x32xf32>
    %cst_74 = arith.constant dense<0.000000e+00> : vector<16xf32>
    %143 = vector.multi_reduction <add>, %140, %cst_74 [1] : vector<16x32xf32> to vector<16xf32>
    %144 = vector.shape_cast %143 : vector<16xf32> to vector<16x1xf32>
    %cst_75 = arith.constant 3.200000e+01 : f32
    %145 = vector.broadcast %cst_75 : f32 to vector<16x1xf32>
    %146 = arith.divf %144, %145 : vector<16x1xf32>
    %147 = vector.broadcast %146 : vector<16x1xf32> to vector<16x32xf32>
    %148 = arith.subf %140, %147 : vector<16x32xf32>
    %149 = arith.mulf %148, %148 : vector<16x32xf32>
    %cst_76 = arith.constant dense<0.000000e+00> : vector<16xf32>
    %150 = vector.multi_reduction <add>, %149, %cst_76 [1] : vector<16x32xf32> to vector<16xf32>
    %151 = vector.shape_cast %150 : vector<16xf32> to vector<16x1xf32>
    %cst_77 = arith.constant 3.200000e+01 : f32
    %152 = vector.broadcast %cst_77 : f32 to vector<16x1xf32>
    %153 = arith.divf %151, %152 : vector<16x1xf32>
    %cst_78 = arith.constant 9.99999974E-6 : f32
    %154 = vector.broadcast %cst_78 : f32 to vector<16x1xf32>
    %155 = arith.addf %153, %154 : vector<16x1xf32>
    %156 = math.rsqrt %155 : vector<16x1xf32>
    %157 = vector.broadcast %146 : vector<16x1xf32> to vector<16x32xf32>
    %158 = arith.subf %140, %157 : vector<16x32xf32>
    %159 = vector.broadcast %156 : vector<16x1xf32> to vector<16x32xf32>
    %160 = arith.mulf %158, %159 : vector<16x32xf32>
    %161 = vector.broadcast %141 : vector<1x32xf32> to vector<16x32xf32>
    %162 = arith.mulf %160, %161 : vector<16x32xf32>
    %163 = vector.broadcast %142 : vector<1x32xf32> to vector<16x32xf32>
    %164 = arith.addf %162, %163 : vector<16x32xf32>
    %c0_79 = arith.constant 0 : index
    %c0_80 = arith.constant 0 : index
    %165 = vector.load %arg3[%c0_79, %c0_80] : memref<8x32xf32, #tpu.memory_space<vmem>>, vector<8x32xf32>
    %cst_81 = arith.constant 0.000000e+00 : f32
    %166 = vector.broadcast %cst_81 : f32 to vector<8x32xf32>
    %167 = arith.addf %166, %165 : vector<8x32xf32>
    %c0_82 = arith.constant 0 : index
    %c0_83 = arith.constant 0 : index
    %168 = vector.load %arg22[%c0_82, %c0_83] : memref<32x64xf32, #tpu.memory_space<vmem>>, vector<32x64xf32>
    %c0_84 = arith.constant 0 : index
    %c0_85 = arith.constant 0 : index
    %169 = vector.load %arg23[%c0_84, %c0_85] : memref<1x64xf32, #tpu.memory_space<vmem>>, vector<1x64xf32>
    %cst_86 = arith.constant dense<0.000000e+00> : vector<8x64xf32>
    %170 = tpu.matmul %167, %168, %cst_86 {dimension_numbers = #tpu.dot_dimension_numbers<[1], [0], [0], [1], [0, 0, 1, 1], [], []>} : vector<8x32xf32>, vector<32x64xf32>, vector<8x64xf32> -> vector<8x64xf32>
    %171 = vector.broadcast %169 : vector<1x64xf32> to vector<8x64xf32>
    %172 = arith.addf %170, %171 : vector<8x64xf32>
    %173 = vector.extract_strided_slice %172 {offsets = [0, 0], sizes = [8, 32], strides = [1, 1]} : vector<8x64xf32> to vector<8x32xf32>
    %174 = vector.extract_strided_slice %172 {offsets = [0, 32], sizes = [8, 32], strides = [1, 1]} : vector<8x64xf32> to vector<8x32xf32>
    %c0_87 = arith.constant 0 : index
    %c0_88 = arith.constant 0 : index
    %175 = vector.load %arg24[%c0_87, %c0_88] : memref<32x32xf32, #tpu.memory_space<vmem>>, vector<32x32xf32>
    %c0_89 = arith.constant 0 : index
    %c0_90 = arith.constant 0 : index
    %176 = vector.load %arg25[%c0_89, %c0_90] : memref<1x32xf32, #tpu.memory_space<vmem>>, vector<1x32xf32>
    %cst_91 = arith.constant dense<0.000000e+00> : vector<8x32xf32>
    %177 = tpu.matmul %166, %175, %cst_91 {dimension_numbers = #tpu.dot_dimension_numbers<[1], [0], [0], [1], [0, 0, 1, 1], [], []>} : vector<8x32xf32>, vector<32x32xf32>, vector<8x32xf32> -> vector<8x32xf32>
    %178 = vector.broadcast %176 : vector<1x32xf32> to vector<8x32xf32>
    %179 = arith.addf %177, %178 : vector<8x32xf32>
    %180 = vector.extract_strided_slice %173 {offsets = [0, 0], sizes = [8, 8], strides = [1, 1]} : vector<8x32xf32> to vector<8x8xf32>
    %181 = vector.extract_strided_slice %174 {offsets = [0, 0], sizes = [8, 8], strides = [1, 1]} : vector<8x32xf32> to vector<8x8xf32>
    %182 = vector.extract_strided_slice %179 {offsets = [0, 0], sizes = [8, 8], strides = [1, 1]} : vector<8x32xf32> to vector<8x8xf32>
    %cst_92 = arith.constant dense<0.000000e+00> : vector<8x8xf32>
    %183 = tpu.matmul %180, %181, %cst_92 {dimension_numbers = #tpu.dot_dimension_numbers<[1], [1], [0], [0], [0, 0, 1, 0], [], []>} : vector<8x8xf32>, vector<8x8xf32>, vector<8x8xf32> -> vector<8x8xf32>
    %cst_93 = arith.constant 0.353553385 : f32
    %184 = vector.broadcast %cst_93 : f32 to vector<8x8xf32>
    %185 = arith.mulf %183, %184 : vector<8x8xf32>
    %cst_94 = arith.constant dense<0xFF800000> : vector<8xf32>
    %186 = vector.multi_reduction <maximumf>, %185, %cst_94 [1] : vector<8x8xf32> to vector<8xf32>
    %187 = vector.shape_cast %186 : vector<8xf32> to vector<8x1xf32>
    %188 = vector.broadcast %187 : vector<8x1xf32> to vector<8x8xf32>
    %189 = arith.subf %185, %188 : vector<8x8xf32>
    %190 = math.exp %189 : vector<8x8xf32>
    %cst_95 = arith.constant dense<0.000000e+00> : vector<8xf32>
    %191 = vector.multi_reduction <add>, %190, %cst_95 [1] : vector<8x8xf32> to vector<8xf32>
    %192 = vector.shape_cast %191 : vector<8xf32> to vector<8x1xf32>
    %193 = tpu.reciprocal %192 {approx = true} : vector<8x1xf32> -> vector<8x1xf32>
    %194 = vector.broadcast %193 : vector<8x1xf32> to vector<8x8xf32>
    %195 = arith.mulf %190, %194 : vector<8x8xf32>
    %cst_96 = arith.constant dense<0.000000e+00> : vector<8x8xf32>
    %196 = tpu.matmul %195, %182, %cst_96 {dimension_numbers = #tpu.dot_dimension_numbers<[1], [0], [0], [1], [0, 0, 1, 1], [], []>} : vector<8x8xf32>, vector<8x8xf32>, vector<8x8xf32> -> vector<8x8xf32>
    %197 = vector.extract_strided_slice %173 {offsets = [0, 8], sizes = [8, 8], strides = [1, 1]} : vector<8x32xf32> to vector<8x8xf32>
    %198 = vector.extract_strided_slice %174 {offsets = [0, 8], sizes = [8, 8], strides = [1, 1]} : vector<8x32xf32> to vector<8x8xf32>
    %199 = vector.extract_strided_slice %179 {offsets = [0, 8], sizes = [8, 8], strides = [1, 1]} : vector<8x32xf32> to vector<8x8xf32>
    %cst_97 = arith.constant dense<0.000000e+00> : vector<8x8xf32>
    %200 = tpu.matmul %197, %198, %cst_97 {dimension_numbers = #tpu.dot_dimension_numbers<[1], [1], [0], [0], [0, 0, 1, 0], [], []>} : vector<8x8xf32>, vector<8x8xf32>, vector<8x8xf32> -> vector<8x8xf32>
    %cst_98 = arith.constant 0.353553385 : f32
    %201 = vector.broadcast %cst_98 : f32 to vector<8x8xf32>
    %202 = arith.mulf %200, %201 : vector<8x8xf32>
    %cst_99 = arith.constant dense<0xFF800000> : vector<8xf32>
    %203 = vector.multi_reduction <maximumf>, %202, %cst_99 [1] : vector<8x8xf32> to vector<8xf32>
    %204 = vector.shape_cast %203 : vector<8xf32> to vector<8x1xf32>
    %205 = vector.broadcast %204 : vector<8x1xf32> to vector<8x8xf32>
    %206 = arith.subf %202, %205 : vector<8x8xf32>
    %207 = math.exp %206 : vector<8x8xf32>
    %cst_100 = arith.constant dense<0.000000e+00> : vector<8xf32>
    %208 = vector.multi_reduction <add>, %207, %cst_100 [1] : vector<8x8xf32> to vector<8xf32>
    %209 = vector.shape_cast %208 : vector<8xf32> to vector<8x1xf32>
    %210 = tpu.reciprocal %209 {approx = true} : vector<8x1xf32> -> vector<8x1xf32>
    %211 = vector.broadcast %210 : vector<8x1xf32> to vector<8x8xf32>
    %212 = arith.mulf %207, %211 : vector<8x8xf32>
    %cst_101 = arith.constant dense<0.000000e+00> : vector<8x8xf32>
    %213 = tpu.matmul %212, %199, %cst_101 {dimension_numbers = #tpu.dot_dimension_numbers<[1], [0], [0], [1], [0, 0, 1, 1], [], []>} : vector<8x8xf32>, vector<8x8xf32>, vector<8x8xf32> -> vector<8x8xf32>
    %214 = vector.extract_strided_slice %173 {offsets = [0, 16], sizes = [8, 8], strides = [1, 1]} : vector<8x32xf32> to vector<8x8xf32>
    %215 = vector.extract_strided_slice %174 {offsets = [0, 16], sizes = [8, 8], strides = [1, 1]} : vector<8x32xf32> to vector<8x8xf32>
    %216 = vector.extract_strided_slice %179 {offsets = [0, 16], sizes = [8, 8], strides = [1, 1]} : vector<8x32xf32> to vector<8x8xf32>
    %cst_102 = arith.constant dense<0.000000e+00> : vector<8x8xf32>
    %217 = tpu.matmul %214, %215, %cst_102 {dimension_numbers = #tpu.dot_dimension_numbers<[1], [1], [0], [0], [0, 0, 1, 0], [], []>} : vector<8x8xf32>, vector<8x8xf32>, vector<8x8xf32> -> vector<8x8xf32>
    %cst_103 = arith.constant 0.353553385 : f32
    %218 = vector.broadcast %cst_103 : f32 to vector<8x8xf32>
    %219 = arith.mulf %217, %218 : vector<8x8xf32>
    %cst_104 = arith.constant dense<0xFF800000> : vector<8xf32>
    %220 = vector.multi_reduction <maximumf>, %219, %cst_104 [1] : vector<8x8xf32> to vector<8xf32>
    %221 = vector.shape_cast %220 : vector<8xf32> to vector<8x1xf32>
    %222 = vector.broadcast %221 : vector<8x1xf32> to vector<8x8xf32>
    %223 = arith.subf %219, %222 : vector<8x8xf32>
    %224 = math.exp %223 : vector<8x8xf32>
    %cst_105 = arith.constant dense<0.000000e+00> : vector<8xf32>
    %225 = vector.multi_reduction <add>, %224, %cst_105 [1] : vector<8x8xf32> to vector<8xf32>
    %226 = vector.shape_cast %225 : vector<8xf32> to vector<8x1xf32>
    %227 = tpu.reciprocal %226 {approx = true} : vector<8x1xf32> -> vector<8x1xf32>
    %228 = vector.broadcast %227 : vector<8x1xf32> to vector<8x8xf32>
    %229 = arith.mulf %224, %228 : vector<8x8xf32>
    %cst_106 = arith.constant dense<0.000000e+00> : vector<8x8xf32>
    %230 = tpu.matmul %229, %216, %cst_106 {dimension_numbers = #tpu.dot_dimension_numbers<[1], [0], [0], [1], [0, 0, 1, 1], [], []>} : vector<8x8xf32>, vector<8x8xf32>, vector<8x8xf32> -> vector<8x8xf32>
    %231 = vector.extract_strided_slice %173 {offsets = [0, 24], sizes = [8, 8], strides = [1, 1]} : vector<8x32xf32> to vector<8x8xf32>
    %232 = vector.extract_strided_slice %174 {offsets = [0, 24], sizes = [8, 8], strides = [1, 1]} : vector<8x32xf32> to vector<8x8xf32>
    %233 = vector.extract_strided_slice %179 {offsets = [0, 24], sizes = [8, 8], strides = [1, 1]} : vector<8x32xf32> to vector<8x8xf32>
    %cst_107 = arith.constant dense<0.000000e+00> : vector<8x8xf32>
    %234 = tpu.matmul %231, %232, %cst_107 {dimension_numbers = #tpu.dot_dimension_numbers<[1], [1], [0], [0], [0, 0, 1, 0], [], []>} : vector<8x8xf32>, vector<8x8xf32>, vector<8x8xf32> -> vector<8x8xf32>
    %cst_108 = arith.constant 0.353553385 : f32
    %235 = vector.broadcast %cst_108 : f32 to vector<8x8xf32>
    %236 = arith.mulf %234, %235 : vector<8x8xf32>
    %cst_109 = arith.constant dense<0xFF800000> : vector<8xf32>
    %237 = vector.multi_reduction <maximumf>, %236, %cst_109 [1] : vector<8x8xf32> to vector<8xf32>
    %238 = vector.shape_cast %237 : vector<8xf32> to vector<8x1xf32>
    %239 = vector.broadcast %238 : vector<8x1xf32> to vector<8x8xf32>
    %240 = arith.subf %236, %239 : vector<8x8xf32>
    %241 = math.exp %240 : vector<8x8xf32>
    %cst_110 = arith.constant dense<0.000000e+00> : vector<8xf32>
    %242 = vector.multi_reduction <add>, %241, %cst_110 [1] : vector<8x8xf32> to vector<8xf32>
    %243 = vector.shape_cast %242 : vector<8xf32> to vector<8x1xf32>
    %244 = tpu.reciprocal %243 {approx = true} : vector<8x1xf32> -> vector<8x1xf32>
    %245 = vector.broadcast %244 : vector<8x1xf32> to vector<8x8xf32>
    %246 = arith.mulf %241, %245 : vector<8x8xf32>
    %cst_111 = arith.constant dense<0.000000e+00> : vector<8x8xf32>
    %247 = tpu.matmul %246, %233, %cst_111 {dimension_numbers = #tpu.dot_dimension_numbers<[1], [0], [0], [1], [0, 0, 1, 1], [], []>} : vector<8x8xf32>, vector<8x8xf32>, vector<8x8xf32> -> vector<8x8xf32>
    %248 = tpu.concatenate %196, %213, %230, %247 in 1 : vector<8x8xf32>, vector<8x8xf32>, vector<8x8xf32>, vector<8x8xf32> -> vector<8x32xf32>
    %c0_112 = arith.constant 0 : index
    %c0_113 = arith.constant 0 : index
    %249 = vector.load %arg26[%c0_112, %c0_113] : memref<32x32xf32, #tpu.memory_space<vmem>>, vector<32x32xf32>
    %c0_114 = arith.constant 0 : index
    %c0_115 = arith.constant 0 : index
    %250 = vector.load %arg27[%c0_114, %c0_115] : memref<1x32xf32, #tpu.memory_space<vmem>>, vector<1x32xf32>
    %cst_116 = arith.constant dense<0.000000e+00> : vector<8x32xf32>
    %251 = tpu.matmul %248, %249, %cst_116 {dimension_numbers = #tpu.dot_dimension_numbers<[1], [0], [0], [1], [0, 0, 1, 1], [], []>} : vector<8x32xf32>, vector<32x32xf32>, vector<8x32xf32> -> vector<8x32xf32>
    %252 = vector.broadcast %250 : vector<1x32xf32> to vector<8x32xf32>
    %253 = arith.addf %251, %252 : vector<8x32xf32>
    %254 = arith.addf %166, %253 : vector<8x32xf32>
    %c0_117 = arith.constant 0 : index
    %c0_118 = arith.constant 0 : index
    %255 = vector.load %arg28[%c0_117, %c0_118] : memref<1x32xf32, #tpu.memory_space<vmem>>, vector<1x32xf32>
    %c0_119 = arith.constant 0 : index
    %c0_120 = arith.constant 0 : index
    %256 = vector.load %arg29[%c0_119, %c0_120] : memref<1x32xf32, #tpu.memory_space<vmem>>, vector<1x32xf32>
    %cst_121 = arith.constant dense<0.000000e+00> : vector<8xf32>
    %257 = vector.multi_reduction <add>, %254, %cst_121 [1] : vector<8x32xf32> to vector<8xf32>
    %258 = vector.shape_cast %257 : vector<8xf32> to vector<8x1xf32>
    %cst_122 = arith.constant 3.200000e+01 : f32
    %259 = vector.broadcast %cst_122 : f32 to vector<8x1xf32>
    %260 = arith.divf %258, %259 : vector<8x1xf32>
    %261 = vector.broadcast %260 : vector<8x1xf32> to vector<8x32xf32>
    %262 = arith.subf %254, %261 : vector<8x32xf32>
    %263 = arith.mulf %262, %262 : vector<8x32xf32>
    %cst_123 = arith.constant dense<0.000000e+00> : vector<8xf32>
    %264 = vector.multi_reduction <add>, %263, %cst_123 [1] : vector<8x32xf32> to vector<8xf32>
    %265 = vector.shape_cast %264 : vector<8xf32> to vector<8x1xf32>
    %cst_124 = arith.constant 3.200000e+01 : f32
    %266 = vector.broadcast %cst_124 : f32 to vector<8x1xf32>
    %267 = arith.divf %265, %266 : vector<8x1xf32>
    %cst_125 = arith.constant 9.99999974E-6 : f32
    %268 = vector.broadcast %cst_125 : f32 to vector<8x1xf32>
    %269 = arith.addf %267, %268 : vector<8x1xf32>
    %270 = math.rsqrt %269 : vector<8x1xf32>
    %271 = vector.broadcast %260 : vector<8x1xf32> to vector<8x32xf32>
    %272 = arith.subf %254, %271 : vector<8x32xf32>
    %273 = vector.broadcast %270 : vector<8x1xf32> to vector<8x32xf32>
    %274 = arith.mulf %272, %273 : vector<8x32xf32>
    %275 = vector.broadcast %255 : vector<1x32xf32> to vector<8x32xf32>
    %276 = arith.mulf %274, %275 : vector<8x32xf32>
    %277 = vector.broadcast %256 : vector<1x32xf32> to vector<8x32xf32>
    %278 = arith.addf %276, %277 : vector<8x32xf32>
    %279 = arith.addf %278, %165 : vector<8x32xf32>
    %c0_126 = arith.constant 0 : index
    %c0_127 = arith.constant 0 : index
    %280 = vector.load %arg30[%c0_126, %c0_127] : memref<32x32xf32, #tpu.memory_space<vmem>>, vector<32x32xf32>
    %c0_128 = arith.constant 0 : index
    %c0_129 = arith.constant 0 : index
    %281 = vector.load %arg31[%c0_128, %c0_129] : memref<1x32xf32, #tpu.memory_space<vmem>>, vector<1x32xf32>
    %cst_130 = arith.constant dense<0.000000e+00> : vector<8x32xf32>
    %282 = tpu.matmul %279, %280, %cst_130 {dimension_numbers = #tpu.dot_dimension_numbers<[1], [0], [0], [1], [0, 0, 1, 1], [], []>} : vector<8x32xf32>, vector<32x32xf32>, vector<8x32xf32> -> vector<8x32xf32>
    %283 = vector.broadcast %281 : vector<1x32xf32> to vector<8x32xf32>
    %284 = arith.addf %282, %283 : vector<8x32xf32>
    %285 = arith.addf %164, %15 : vector<16x32xf32>
    %c0_131 = arith.constant 0 : index
    %c0_132 = arith.constant 0 : index
    %286 = vector.load %arg32[%c0_131, %c0_132] : memref<32x32xf32, #tpu.memory_space<vmem>>, vector<32x32xf32>
    %c0_133 = arith.constant 0 : index
    %c0_134 = arith.constant 0 : index
    %287 = vector.load %arg33[%c0_133, %c0_134] : memref<1x32xf32, #tpu.memory_space<vmem>>, vector<1x32xf32>
    %cst_135 = arith.constant dense<0.000000e+00> : vector<16x32xf32>
    %288 = tpu.matmul %285, %286, %cst_135 {dimension_numbers = #tpu.dot_dimension_numbers<[1], [0], [0], [1], [0, 0, 1, 1], [], []>} : vector<16x32xf32>, vector<32x32xf32>, vector<16x32xf32> -> vector<16x32xf32>
    %289 = vector.broadcast %287 : vector<1x32xf32> to vector<16x32xf32>
    %290 = arith.addf %288, %289 : vector<16x32xf32>
    %c0_136 = arith.constant 0 : index
    %c0_137 = arith.constant 0 : index
    %291 = vector.load %arg34[%c0_136, %c0_137] : memref<32x32xf32, #tpu.memory_space<vmem>>, vector<32x32xf32>
    %c0_138 = arith.constant 0 : index
    %c0_139 = arith.constant 0 : index
    %292 = vector.load %arg35[%c0_138, %c0_139] : memref<1x32xf32, #tpu.memory_space<vmem>>, vector<1x32xf32>
    %cst_140 = arith.constant dense<0.000000e+00> : vector<16x32xf32>
    %293 = tpu.matmul %164, %291, %cst_140 {dimension_numbers = #tpu.dot_dimension_numbers<[1], [0], [0], [1], [0, 0, 1, 1], [], []>} : vector<16x32xf32>, vector<32x32xf32>, vector<16x32xf32> -> vector<16x32xf32>
    %294 = vector.broadcast %292 : vector<1x32xf32> to vector<16x32xf32>
    %295 = arith.addf %293, %294 : vector<16x32xf32>
    %296 = vector.extract_strided_slice %284 {offsets = [0, 0], sizes = [8, 8], strides = [1, 1]} : vector<8x32xf32> to vector<8x8xf32>
    %297 = vector.extract_strided_slice %290 {offsets = [0, 0], sizes = [16, 8], strides = [1, 1]} : vector<16x32xf32> to vector<16x8xf32>
    %298 = vector.extract_strided_slice %295 {offsets = [0, 0], sizes = [16, 8], strides = [1, 1]} : vector<16x32xf32> to vector<16x8xf32>
    %cst_141 = arith.constant dense<0.000000e+00> : vector<8x16xf32>
    %299 = tpu.matmul %296, %297, %cst_141 {dimension_numbers = #tpu.dot_dimension_numbers<[1], [1], [0], [0], [0, 0, 1, 0], [], []>} : vector<8x8xf32>, vector<16x8xf32>, vector<8x16xf32> -> vector<8x16xf32>
    %cst_142 = arith.constant 0.353553385 : f32
    %300 = vector.broadcast %cst_142 : f32 to vector<8x16xf32>
    %301 = arith.mulf %299, %300 : vector<8x16xf32>
    %cst_143 = arith.constant dense<0xFF800000> : vector<8xf32>
    %302 = vector.multi_reduction <maximumf>, %301, %cst_143 [1] : vector<8x16xf32> to vector<8xf32>
    %303 = vector.shape_cast %302 : vector<8xf32> to vector<8x1xf32>
    %304 = vector.broadcast %303 : vector<8x1xf32> to vector<8x16xf32>
    %305 = arith.subf %301, %304 : vector<8x16xf32>
    %306 = math.exp %305 : vector<8x16xf32>
    %cst_144 = arith.constant dense<0.000000e+00> : vector<8xf32>
    %307 = vector.multi_reduction <add>, %306, %cst_144 [1] : vector<8x16xf32> to vector<8xf32>
    %308 = vector.shape_cast %307 : vector<8xf32> to vector<8x1xf32>
    %309 = tpu.reciprocal %308 {approx = true} : vector<8x1xf32> -> vector<8x1xf32>
    %310 = vector.broadcast %309 : vector<8x1xf32> to vector<8x16xf32>
    %311 = arith.mulf %306, %310 : vector<8x16xf32>
    %cst_145 = arith.constant dense<0.000000e+00> : vector<8x8xf32>
    %312 = tpu.matmul %311, %298, %cst_145 {dimension_numbers = #tpu.dot_dimension_numbers<[1], [0], [0], [1], [0, 0, 1, 1], [], []>} : vector<8x16xf32>, vector<16x8xf32>, vector<8x8xf32> -> vector<8x8xf32>
    %313 = vector.extract_strided_slice %284 {offsets = [0, 8], sizes = [8, 8], strides = [1, 1]} : vector<8x32xf32> to vector<8x8xf32>
    %314 = vector.extract_strided_slice %290 {offsets = [0, 8], sizes = [16, 8], strides = [1, 1]} : vector<16x32xf32> to vector<16x8xf32>
    %315 = vector.extract_strided_slice %295 {offsets = [0, 8], sizes = [16, 8], strides = [1, 1]} : vector<16x32xf32> to vector<16x8xf32>
    %cst_146 = arith.constant dense<0.000000e+00> : vector<8x16xf32>
    %316 = tpu.matmul %313, %314, %cst_146 {dimension_numbers = #tpu.dot_dimension_numbers<[1], [1], [0], [0], [0, 0, 1, 0], [], []>} : vector<8x8xf32>, vector<16x8xf32>, vector<8x16xf32> -> vector<8x16xf32>
    %cst_147 = arith.constant 0.353553385 : f32
    %317 = vector.broadcast %cst_147 : f32 to vector<8x16xf32>
    %318 = arith.mulf %316, %317 : vector<8x16xf32>
    %cst_148 = arith.constant dense<0xFF800000> : vector<8xf32>
    %319 = vector.multi_reduction <maximumf>, %318, %cst_148 [1] : vector<8x16xf32> to vector<8xf32>
    %320 = vector.shape_cast %319 : vector<8xf32> to vector<8x1xf32>
    %321 = vector.broadcast %320 : vector<8x1xf32> to vector<8x16xf32>
    %322 = arith.subf %318, %321 : vector<8x16xf32>
    %323 = math.exp %322 : vector<8x16xf32>
    %cst_149 = arith.constant dense<0.000000e+00> : vector<8xf32>
    %324 = vector.multi_reduction <add>, %323, %cst_149 [1] : vector<8x16xf32> to vector<8xf32>
    %325 = vector.shape_cast %324 : vector<8xf32> to vector<8x1xf32>
    %326 = tpu.reciprocal %325 {approx = true} : vector<8x1xf32> -> vector<8x1xf32>
    %327 = vector.broadcast %326 : vector<8x1xf32> to vector<8x16xf32>
    %328 = arith.mulf %323, %327 : vector<8x16xf32>
    %cst_150 = arith.constant dense<0.000000e+00> : vector<8x8xf32>
    %329 = tpu.matmul %328, %315, %cst_150 {dimension_numbers = #tpu.dot_dimension_numbers<[1], [0], [0], [1], [0, 0, 1, 1], [], []>} : vector<8x16xf32>, vector<16x8xf32>, vector<8x8xf32> -> vector<8x8xf32>
    %330 = vector.extract_strided_slice %284 {offsets = [0, 16], sizes = [8, 8], strides = [1, 1]} : vector<8x32xf32> to vector<8x8xf32>
    %331 = vector.extract_strided_slice %290 {offsets = [0, 16], sizes = [16, 8], strides = [1, 1]} : vector<16x32xf32> to vector<16x8xf32>
    %332 = vector.extract_strided_slice %295 {offsets = [0, 16], sizes = [16, 8], strides = [1, 1]} : vector<16x32xf32> to vector<16x8xf32>
    %cst_151 = arith.constant dense<0.000000e+00> : vector<8x16xf32>
    %333 = tpu.matmul %330, %331, %cst_151 {dimension_numbers = #tpu.dot_dimension_numbers<[1], [1], [0], [0], [0, 0, 1, 0], [], []>} : vector<8x8xf32>, vector<16x8xf32>, vector<8x16xf32> -> vector<8x16xf32>
    %cst_152 = arith.constant 0.353553385 : f32
    %334 = vector.broadcast %cst_152 : f32 to vector<8x16xf32>
    %335 = arith.mulf %333, %334 : vector<8x16xf32>
    %cst_153 = arith.constant dense<0xFF800000> : vector<8xf32>
    %336 = vector.multi_reduction <maximumf>, %335, %cst_153 [1] : vector<8x16xf32> to vector<8xf32>
    %337 = vector.shape_cast %336 : vector<8xf32> to vector<8x1xf32>
    %338 = vector.broadcast %337 : vector<8x1xf32> to vector<8x16xf32>
    %339 = arith.subf %335, %338 : vector<8x16xf32>
    %340 = math.exp %339 : vector<8x16xf32>
    %cst_154 = arith.constant dense<0.000000e+00> : vector<8xf32>
    %341 = vector.multi_reduction <add>, %340, %cst_154 [1] : vector<8x16xf32> to vector<8xf32>
    %342 = vector.shape_cast %341 : vector<8xf32> to vector<8x1xf32>
    %343 = tpu.reciprocal %342 {approx = true} : vector<8x1xf32> -> vector<8x1xf32>
    %344 = vector.broadcast %343 : vector<8x1xf32> to vector<8x16xf32>
    %345 = arith.mulf %340, %344 : vector<8x16xf32>
    %cst_155 = arith.constant dense<0.000000e+00> : vector<8x8xf32>
    %346 = tpu.matmul %345, %332, %cst_155 {dimension_numbers = #tpu.dot_dimension_numbers<[1], [0], [0], [1], [0, 0, 1, 1], [], []>} : vector<8x16xf32>, vector<16x8xf32>, vector<8x8xf32> -> vector<8x8xf32>
    %347 = vector.extract_strided_slice %284 {offsets = [0, 24], sizes = [8, 8], strides = [1, 1]} : vector<8x32xf32> to vector<8x8xf32>
    %348 = vector.extract_strided_slice %290 {offsets = [0, 24], sizes = [16, 8], strides = [1, 1]} : vector<16x32xf32> to vector<16x8xf32>
    %349 = vector.extract_strided_slice %295 {offsets = [0, 24], sizes = [16, 8], strides = [1, 1]} : vector<16x32xf32> to vector<16x8xf32>
    %cst_156 = arith.constant dense<0.000000e+00> : vector<8x16xf32>
    %350 = tpu.matmul %347, %348, %cst_156 {dimension_numbers = #tpu.dot_dimension_numbers<[1], [1], [0], [0], [0, 0, 1, 0], [], []>} : vector<8x8xf32>, vector<16x8xf32>, vector<8x16xf32> -> vector<8x16xf32>
    %cst_157 = arith.constant 0.353553385 : f32
    %351 = vector.broadcast %cst_157 : f32 to vector<8x16xf32>
    %352 = arith.mulf %350, %351 : vector<8x16xf32>
    %cst_158 = arith.constant dense<0xFF800000> : vector<8xf32>
    %353 = vector.multi_reduction <maximumf>, %352, %cst_158 [1] : vector<8x16xf32> to vector<8xf32>
    %354 = vector.shape_cast %353 : vector<8xf32> to vector<8x1xf32>
    %355 = vector.broadcast %354 : vector<8x1xf32> to vector<8x16xf32>
    %356 = arith.subf %352, %355 : vector<8x16xf32>
    %357 = math.exp %356 : vector<8x16xf32>
    %cst_159 = arith.constant dense<0.000000e+00> : vector<8xf32>
    %358 = vector.multi_reduction <add>, %357, %cst_159 [1] : vector<8x16xf32> to vector<8xf32>
    %359 = vector.shape_cast %358 : vector<8xf32> to vector<8x1xf32>
    %360 = tpu.reciprocal %359 {approx = true} : vector<8x1xf32> -> vector<8x1xf32>
    %361 = vector.broadcast %360 : vector<8x1xf32> to vector<8x16xf32>
    %362 = arith.mulf %357, %361 : vector<8x16xf32>
    %cst_160 = arith.constant dense<0.000000e+00> : vector<8x8xf32>
    %363 = tpu.matmul %362, %349, %cst_160 {dimension_numbers = #tpu.dot_dimension_numbers<[1], [0], [0], [1], [0, 0, 1, 1], [], []>} : vector<8x16xf32>, vector<16x8xf32>, vector<8x8xf32> -> vector<8x8xf32>
    %364 = tpu.concatenate %312, %329, %346, %363 in 1 : vector<8x8xf32>, vector<8x8xf32>, vector<8x8xf32>, vector<8x8xf32> -> vector<8x32xf32>
    %c0_161 = arith.constant 0 : index
    %c0_162 = arith.constant 0 : index
    %365 = vector.load %arg36[%c0_161, %c0_162] : memref<32x32xf32, #tpu.memory_space<vmem>>, vector<32x32xf32>
    %c0_163 = arith.constant 0 : index
    %c0_164 = arith.constant 0 : index
    %366 = vector.load %arg37[%c0_163, %c0_164] : memref<1x32xf32, #tpu.memory_space<vmem>>, vector<1x32xf32>
    %cst_165 = arith.constant dense<0.000000e+00> : vector<8x32xf32>
    %367 = tpu.matmul %364, %365, %cst_165 {dimension_numbers = #tpu.dot_dimension_numbers<[1], [0], [0], [1], [0, 0, 1, 1], [], []>} : vector<8x32xf32>, vector<32x32xf32>, vector<8x32xf32> -> vector<8x32xf32>
    %368 = vector.broadcast %366 : vector<1x32xf32> to vector<8x32xf32>
    %369 = arith.addf %367, %368 : vector<8x32xf32>
    %370 = arith.addf %278, %369 : vector<8x32xf32>
    %c0_166 = arith.constant 0 : index
    %c0_167 = arith.constant 0 : index
    %371 = vector.load %arg38[%c0_166, %c0_167] : memref<1x32xf32, #tpu.memory_space<vmem>>, vector<1x32xf32>
    %c0_168 = arith.constant 0 : index
    %c0_169 = arith.constant 0 : index
    %372 = vector.load %arg39[%c0_168, %c0_169] : memref<1x32xf32, #tpu.memory_space<vmem>>, vector<1x32xf32>
    %cst_170 = arith.constant dense<0.000000e+00> : vector<8xf32>
    %373 = vector.multi_reduction <add>, %370, %cst_170 [1] : vector<8x32xf32> to vector<8xf32>
    %374 = vector.shape_cast %373 : vector<8xf32> to vector<8x1xf32>
    %cst_171 = arith.constant 3.200000e+01 : f32
    %375 = vector.broadcast %cst_171 : f32 to vector<8x1xf32>
    %376 = arith.divf %374, %375 : vector<8x1xf32>
    %377 = vector.broadcast %376 : vector<8x1xf32> to vector<8x32xf32>
    %378 = arith.subf %370, %377 : vector<8x32xf32>
    %379 = arith.mulf %378, %378 : vector<8x32xf32>
    %cst_172 = arith.constant dense<0.000000e+00> : vector<8xf32>
    %380 = vector.multi_reduction <add>, %379, %cst_172 [1] : vector<8x32xf32> to vector<8xf32>
    %381 = vector.shape_cast %380 : vector<8xf32> to vector<8x1xf32>
    %cst_173 = arith.constant 3.200000e+01 : f32
    %382 = vector.broadcast %cst_173 : f32 to vector<8x1xf32>
    %383 = arith.divf %381, %382 : vector<8x1xf32>
    %cst_174 = arith.constant 9.99999974E-6 : f32
    %384 = vector.broadcast %cst_174 : f32 to vector<8x1xf32>
    %385 = arith.addf %383, %384 : vector<8x1xf32>
    %386 = math.rsqrt %385 : vector<8x1xf32>
    %387 = vector.broadcast %376 : vector<8x1xf32> to vector<8x32xf32>
    %388 = arith.subf %370, %387 : vector<8x32xf32>
    %389 = vector.broadcast %386 : vector<8x1xf32> to vector<8x32xf32>
    %390 = arith.mulf %388, %389 : vector<8x32xf32>
    %391 = vector.broadcast %371 : vector<1x32xf32> to vector<8x32xf32>
    %392 = arith.mulf %390, %391 : vector<8x32xf32>
    %393 = vector.broadcast %372 : vector<1x32xf32> to vector<8x32xf32>
    %394 = arith.addf %392, %393 : vector<8x32xf32>
    %c0_175 = arith.constant 0 : index
    %c0_176 = arith.constant 0 : index
    %395 = vector.load %arg40[%c0_175, %c0_176] : memref<32x64xf32, #tpu.memory_space<vmem>>, vector<32x64xf32>
    %c0_177 = arith.constant 0 : index
    %c0_178 = arith.constant 0 : index
    %396 = vector.load %arg41[%c0_177, %c0_178] : memref<1x64xf32, #tpu.memory_space<vmem>>, vector<1x64xf32>
    %cst_179 = arith.constant dense<0.000000e+00> : vector<8x64xf32>
    %397 = tpu.matmul %394, %395, %cst_179 {dimension_numbers = #tpu.dot_dimension_numbers<[1], [0], [0], [1], [0, 0, 1, 1], [], []>} : vector<8x32xf32>, vector<32x64xf32>, vector<8x64xf32> -> vector<8x64xf32>
    %398 = vector.broadcast %396 : vector<1x64xf32> to vector<8x64xf32>
    %399 = arith.addf %397, %398 : vector<8x64xf32>
    %cst_180 = arith.constant 0.000000e+00 : f32
    %400 = vector.broadcast %cst_180 : f32 to vector<8x64xf32>
    %401 = arith.maximumf %399, %400 : vector<8x64xf32>
    %c0_181 = arith.constant 0 : index
    %c0_182 = arith.constant 0 : index
    %402 = vector.load %arg42[%c0_181, %c0_182] : memref<64x32xf32, #tpu.memory_space<vmem>>, vector<64x32xf32>
    %c0_183 = arith.constant 0 : index
    %c0_184 = arith.constant 0 : index
    %403 = vector.load %arg43[%c0_183, %c0_184] : memref<1x32xf32, #tpu.memory_space<vmem>>, vector<1x32xf32>
    %cst_185 = arith.constant dense<0.000000e+00> : vector<8x32xf32>
    %404 = tpu.matmul %401, %402, %cst_185 {dimension_numbers = #tpu.dot_dimension_numbers<[1], [0], [0], [1], [0, 0, 1, 1], [], []>} : vector<8x64xf32>, vector<64x32xf32>, vector<8x32xf32> -> vector<8x32xf32>
    %405 = vector.broadcast %403 : vector<1x32xf32> to vector<8x32xf32>
    %406 = arith.addf %404, %405 : vector<8x32xf32>
    %407 = arith.addf %394, %406 : vector<8x32xf32>
    %c0_186 = arith.constant 0 : index
    %c0_187 = arith.constant 0 : index
    %408 = vector.load %arg44[%c0_186, %c0_187] : memref<1x32xf32, #tpu.memory_space<vmem>>, vector<1x32xf32>
    %c0_188 = arith.constant 0 : index
    %c0_189 = arith.constant 0 : index
    %409 = vector.load %arg45[%c0_188, %c0_189] : memref<1x32xf32, #tpu.memory_space<vmem>>, vector<1x32xf32>
    %cst_190 = arith.constant dense<0.000000e+00> : vector<8xf32>
    %410 = vector.multi_reduction <add>, %407, %cst_190 [1] : vector<8x32xf32> to vector<8xf32>
    %411 = vector.shape_cast %410 : vector<8xf32> to vector<8x1xf32>
    %cst_191 = arith.constant 3.200000e+01 : f32
    %412 = vector.broadcast %cst_191 : f32 to vector<8x1xf32>
    %413 = arith.divf %411, %412 : vector<8x1xf32>
    %414 = vector.broadcast %413 : vector<8x1xf32> to vector<8x32xf32>
    %415 = arith.subf %407, %414 : vector<8x32xf32>
    %416 = arith.mulf %415, %415 : vector<8x32xf32>
    %cst_192 = arith.constant dense<0.000000e+00> : vector<8xf32>
    %417 = vector.multi_reduction <add>, %416, %cst_192 [1] : vector<8x32xf32> to vector<8xf32>
    %418 = vector.shape_cast %417 : vector<8xf32> to vector<8x1xf32>
    %cst_193 = arith.constant 3.200000e+01 : f32
    %419 = vector.broadcast %cst_193 : f32 to vector<8x1xf32>
    %420 = arith.divf %418, %419 : vector<8x1xf32>
    %cst_194 = arith.constant 9.99999974E-6 : f32
    %421 = vector.broadcast %cst_194 : f32 to vector<8x1xf32>
    %422 = arith.addf %420, %421 : vector<8x1xf32>
    %423 = math.rsqrt %422 : vector<8x1xf32>
    %424 = vector.broadcast %413 : vector<8x1xf32> to vector<8x32xf32>
    %425 = arith.subf %407, %424 : vector<8x32xf32>
    %426 = vector.broadcast %423 : vector<8x1xf32> to vector<8x32xf32>
    %427 = arith.mulf %425, %426 : vector<8x32xf32>
    %428 = vector.broadcast %408 : vector<1x32xf32> to vector<8x32xf32>
    %429 = arith.mulf %427, %428 : vector<8x32xf32>
    %430 = vector.broadcast %409 : vector<1x32xf32> to vector<8x32xf32>
    %431 = arith.addf %429, %430 : vector<8x32xf32>
    %c0_195 = arith.constant 0 : index
    %c0_196 = arith.constant 0 : index
    %432 = vector.load %arg46[%c0_195, %c0_196] : memref<1x32xf32, #tpu.memory_space<vmem>>, vector<1x32xf32>
    %c0_197 = arith.constant 0 : index
    %c0_198 = arith.constant 0 : index
    %433 = vector.load %arg47[%c0_197, %c0_198] : memref<1x32xf32, #tpu.memory_space<vmem>>, vector<1x32xf32>
    %cst_199 = arith.constant dense<0.000000e+00> : vector<8xf32>
    %434 = vector.multi_reduction <add>, %431, %cst_199 [1] : vector<8x32xf32> to vector<8xf32>
    %435 = vector.shape_cast %434 : vector<8xf32> to vector<8x1xf32>
    %cst_200 = arith.constant 3.200000e+01 : f32
    %436 = vector.broadcast %cst_200 : f32 to vector<8x1xf32>
    %437 = arith.divf %435, %436 : vector<8x1xf32>
    %438 = vector.broadcast %437 : vector<8x1xf32> to vector<8x32xf32>
    %439 = arith.subf %431, %438 : vector<8x32xf32>
    %440 = arith.mulf %439, %439 : vector<8x32xf32>
    %cst_201 = arith.constant dense<0.000000e+00> : vector<8xf32>
    %441 = vector.multi_reduction <add>, %440, %cst_201 [1] : vector<8x32xf32> to vector<8xf32>
    %442 = vector.shape_cast %441 : vector<8xf32> to vector<8x1xf32>
    %cst_202 = arith.constant 3.200000e+01 : f32
    %443 = vector.broadcast %cst_202 : f32 to vector<8x1xf32>
    %444 = arith.divf %442, %443 : vector<8x1xf32>
    %cst_203 = arith.constant 9.99999974E-6 : f32
    %445 = vector.broadcast %cst_203 : f32 to vector<8x1xf32>
    %446 = arith.addf %444, %445 : vector<8x1xf32>
    %447 = math.rsqrt %446 : vector<8x1xf32>
    %448 = vector.broadcast %437 : vector<8x1xf32> to vector<8x32xf32>
    %449 = arith.subf %431, %448 : vector<8x32xf32>
    %450 = vector.broadcast %447 : vector<8x1xf32> to vector<8x32xf32>
    %451 = arith.mulf %449, %450 : vector<8x32xf32>
    %452 = vector.broadcast %432 : vector<1x32xf32> to vector<8x32xf32>
    %453 = arith.mulf %451, %452 : vector<8x32xf32>
    %454 = vector.broadcast %433 : vector<1x32xf32> to vector<8x32xf32>
    %455 = arith.addf %453, %454 : vector<8x32xf32>
    %c0_204 = arith.constant 0 : index
    %c0_205 = arith.constant 0 : index
    %456 = vector.load %arg48[%c0_204, %c0_205] : memref<32x12xf32, #tpu.memory_space<vmem>>, vector<32x12xf32>
    %c0_206 = arith.constant 0 : index
    %c0_207 = arith.constant 0 : index
    %457 = vector.load %arg49[%c0_206, %c0_207] : memref<1x12xf32, #tpu.memory_space<vmem>>, vector<1x12xf32>
    %cst_208 = arith.constant dense<0.000000e+00> : vector<8x12xf32>
    %458 = tpu.matmul %455, %456, %cst_208 {dimension_numbers = #tpu.dot_dimension_numbers<[1], [0], [0], [1], [0, 0, 1, 1], [], []>} : vector<8x32xf32>, vector<32x12xf32>, vector<8x12xf32> -> vector<8x12xf32>
    %459 = vector.broadcast %457 : vector<1x12xf32> to vector<8x12xf32>
    %460 = arith.addf %458, %459 : vector<8x12xf32>
    %c0_209 = arith.constant 0 : index
    %c0_210 = arith.constant 0 : index
    %461 = vector.load %arg50[%c0_209, %c0_210] : memref<32x32xf32, #tpu.memory_space<vmem>>, vector<32x32xf32>
    %c0_211 = arith.constant 0 : index
    %c0_212 = arith.constant 0 : index
    %462 = vector.load %arg51[%c0_211, %c0_212] : memref<1x32xf32, #tpu.memory_space<vmem>>, vector<1x32xf32>
    %cst_213 = arith.constant dense<0.000000e+00> : vector<8x32xf32>
    %463 = tpu.matmul %455, %461, %cst_213 {dimension_numbers = #tpu.dot_dimension_numbers<[1], [0], [0], [1], [0, 0, 1, 1], [], []>} : vector<8x32xf32>, vector<32x32xf32>, vector<8x32xf32> -> vector<8x32xf32>
    %464 = vector.broadcast %462 : vector<1x32xf32> to vector<8x32xf32>
    %465 = arith.addf %463, %464 : vector<8x32xf32>
    %cst_214 = arith.constant 0.000000e+00 : f32
    %466 = vector.broadcast %cst_214 : f32 to vector<8x32xf32>
    %467 = arith.maximumf %465, %466 : vector<8x32xf32>
    %c0_215 = arith.constant 0 : index
    %c0_216 = arith.constant 0 : index
    %468 = vector.load %arg52[%c0_215, %c0_216] : memref<32x32xf32, #tpu.memory_space<vmem>>, vector<32x32xf32>
    %c0_217 = arith.constant 0 : index
    %c0_218 = arith.constant 0 : index
    %469 = vector.load %arg53[%c0_217, %c0_218] : memref<1x32xf32, #tpu.memory_space<vmem>>, vector<1x32xf32>
    %cst_219 = arith.constant dense<0.000000e+00> : vector<8x32xf32>
    %470 = tpu.matmul %467, %468, %cst_219 {dimension_numbers = #tpu.dot_dimension_numbers<[1], [0], [0], [1], [0, 0, 1, 1], [], []>} : vector<8x32xf32>, vector<32x32xf32>, vector<8x32xf32> -> vector<8x32xf32>
    %471 = vector.broadcast %469 : vector<1x32xf32> to vector<8x32xf32>
    %472 = arith.addf %470, %471 : vector<8x32xf32>
    %cst_220 = arith.constant 0.000000e+00 : f32
    %473 = vector.broadcast %cst_220 : f32 to vector<8x32xf32>
    %474 = arith.maximumf %472, %473 : vector<8x32xf32>
    %c0_221 = arith.constant 0 : index
    %c0_222 = arith.constant 0 : index
    %475 = vector.load %arg54[%c0_221, %c0_222] : memref<32x4xf32, #tpu.memory_space<vmem>>, vector<32x4xf32>
    %c0_223 = arith.constant 0 : index
    %c0_224 = arith.constant 0 : index
    %476 = vector.load %arg55[%c0_223, %c0_224] : memref<1x4xf32, #tpu.memory_space<vmem>>, vector<1x4xf32>
    %cst_225 = arith.constant dense<0.000000e+00> : vector<8x4xf32>
    %477 = tpu.matmul %474, %475, %cst_225 {dimension_numbers = #tpu.dot_dimension_numbers<[1], [0], [0], [1], [0, 0, 1, 1], [], []>} : vector<8x32xf32>, vector<32x4xf32>, vector<8x4xf32> -> vector<8x4xf32>
    %478 = vector.broadcast %476 : vector<1x4xf32> to vector<8x4xf32>
    %479 = arith.addf %477, %478 : vector<8x4xf32>
    %480 = arith.negf %479 : vector<8x4xf32>
    %481 = math.exp %480 : vector<8x4xf32>
    %cst_226 = arith.constant 1.000000e+00 : f32
    %482 = vector.broadcast %cst_226 : f32 to vector<8x4xf32>
    %483 = arith.addf %482, %481 : vector<8x4xf32>
    %484 = arith.divf %482, %483 : vector<8x4xf32>
    %485 = tpu.concatenate %460, %484 in 1 : vector<8x12xf32>, vector<8x4xf32> -> vector<8x16xf32>
    %c0_227 = arith.constant 0 : index
    %c0_228 = arith.constant 0 : index
    %c0_229 = arith.constant 0 : index
    %486 = vector.load %arg56[%c0_227, %c0_228, %c0_229] : memref<1x8x16xf32, #tpu.memory_space<vmem>>, vector<1x8x16xf32>
    %487 = vector.shape_cast %486 : vector<1x8x16xf32> to vector<8x16xf32>
    %488 = vector.shape_cast %485 : vector<8x16xf32> to vector<1x8x16xf32>
    tpu.vector_store %arg56[%c0_227, %c0_228, %c0_229], %488 {strides = array<i32>} : memref<1x8x16xf32, #tpu.memory_space<vmem>>, vector<1x8x16xf32>,
    return
  }
  func.func @transform_0(%arg0: i32) -> (i32, i32, i32) {
    %c0_i32 = arith.constant 0 : i32
    %c0_i32_0 = arith.constant 0 : i32
    %c0_i32_1 = arith.constant 0 : i32
    return %arg0, %c0_i32, %c0_i32_0 : i32, i32, i32
  }
  func.func @transform_1(%arg0: i32) -> (i32, i32, i32) {
    %c0_i32 = arith.constant 0 : i32
    %c0_i32_0 = arith.constant 0 : i32
    %c0_i32_1 = arith.constant 0 : i32
    return %arg0, %c0_i32, %c0_i32_0 : i32, i32, i32
  }
  func.func @transform_2(%arg0: i32) -> (i32, i32) {
    %c0_i32 = arith.constant 0 : i32
    %c0_i32_0 = arith.constant 0 : i32
    %c0_i32_1 = arith.constant 0 : i32
    return %c0_i32, %c0_i32_0 : i32, i32
  }
  func.func @transform_3(%arg0: i32) -> (i32, i32) {
    %c0_i32 = arith.constant 0 : i32
    %c0_i32_0 = arith.constant 0 : i32
    %c0_i32_1 = arith.constant 0 : i32
    return %c0_i32, %c0_i32_0 : i32, i32
  }
  func.func @transform_4(%arg0: i32) -> (i32, i32) {
    %c0_i32 = arith.constant 0 : i32
    %c0_i32_0 = arith.constant 0 : i32
    %c0_i32_1 = arith.constant 0 : i32
    return %c0_i32, %c0_i32_0 : i32, i32
  }
  func.func @transform_5(%arg0: i32) -> (i32, i32) {
    %c0_i32 = arith.constant 0 : i32
    %c0_i32_0 = arith.constant 0 : i32
    %c0_i32_1 = arith.constant 0 : i32
    return %c0_i32, %c0_i32_0 : i32, i32
  }
  func.func @transform_6(%arg0: i32) -> (i32, i32) {
    %c0_i32 = arith.constant 0 : i32
    %c0_i32_0 = arith.constant 0 : i32
    %c0_i32_1 = arith.constant 0 : i32
    return %c0_i32, %c0_i32_0 : i32, i32
  }
  func.func @transform_7(%arg0: i32) -> (i32, i32) {
    %c0_i32 = arith.constant 0 : i32
    %c0_i32_0 = arith.constant 0 : i32
    %c0_i32_1 = arith.constant 0 : i32
    return %c0_i32, %c0_i32_0 : i32, i32
  }
  func.func @transform_8(%arg0: i32) -> (i32, i32) {
    %c0_i32 = arith.constant 0 : i32
    %c0_i32_0 = arith.constant 0 : i32
    %c0_i32_1 = arith.constant 0 : i32
    return %c0_i32, %c0_i32_0 : i32, i32
  }
  func.func @transform_9(%arg0: i32) -> (i32, i32) {
    %c0_i32 = arith.constant 0 : i32
    %c0_i32_0 = arith.constant 0 : i32
    %c0_i32_1 = arith.constant 0 : i32
    return %c0_i32, %c0_i32_0 : i32, i32
  }
  func.func @transform_10(%arg0: i32) -> (i32, i32) {
    %c0_i32 = arith.constant 0 : i32
    %c0_i32_0 = arith.constant 0 : i32
    %c0_i32_1 = arith.constant 0 : i32
    return %c0_i32, %c0_i32_0 : i32, i32
  }
  func.func @transform_11(%arg0: i32) -> (i32, i32) {
    %c0_i32 = arith.constant 0 : i32
    %c0_i32_0 = arith.constant 0 : i32
    %c0_i32_1 = arith.constant 0 : i32
    return %c0_i32, %c0_i32_0 : i32, i32
  }
  func.func @transform_12(%arg0: i32) -> (i32, i32) {
    %c0_i32 = arith.constant 0 : i32
    %c0_i32_0 = arith.constant 0 : i32
    %c0_i32_1 = arith.constant 0 : i32
    return %c0_i32, %c0_i32_0 : i32, i32
  }
  func.func @transform_13(%arg0: i32) -> (i32, i32) {
    %c0_i32 = arith.constant 0 : i32
    %c0_i32_0 = arith.constant 0 : i32
    %c0_i32_1 = arith.constant 0 : i32
    return %c0_i32, %c0_i32_0 : i32, i32
  }
  func.func @transform_14(%arg0: i32) -> (i32, i32) {
    %c0_i32 = arith.constant 0 : i32
    %c0_i32_0 = arith.constant 0 : i32
    %c0_i32_1 = arith.constant 0 : i32
    return %c0_i32, %c0_i32_0 : i32, i32
  }
  func.func @transform_15(%arg0: i32) -> (i32, i32) {
    %c0_i32 = arith.constant 0 : i32
    %c0_i32_0 = arith.constant 0 : i32
    %c0_i32_1 = arith.constant 0 : i32
    return %c0_i32, %c0_i32_0 : i32, i32
  }
  func.func @transform_16(%arg0: i32) -> (i32, i32) {
    %c0_i32 = arith.constant 0 : i32
    %c0_i32_0 = arith.constant 0 : i32
    %c0_i32_1 = arith.constant 0 : i32
    return %c0_i32, %c0_i32_0 : i32, i32
  }
  func.func @transform_17(%arg0: i32) -> (i32, i32) {
    %c0_i32 = arith.constant 0 : i32
    %c0_i32_0 = arith.constant 0 : i32
    %c0_i32_1 = arith.constant 0 : i32
    return %c0_i32, %c0_i32_0 : i32, i32
  }
  func.func @transform_18(%arg0: i32) -> (i32, i32) {
    %c0_i32 = arith.constant 0 : i32
    %c0_i32_0 = arith.constant 0 : i32
    %c0_i32_1 = arith.constant 0 : i32
    return %c0_i32, %c0_i32_0 : i32, i32
  }
  func.func @transform_19(%arg0: i32) -> (i32, i32) {
    %c0_i32 = arith.constant 0 : i32
    %c0_i32_0 = arith.constant 0 : i32
    %c0_i32_1 = arith.constant 0 : i32
    return %c0_i32, %c0_i32_0 : i32, i32
  }
  func.func @transform_20(%arg0: i32) -> (i32, i32) {
    %c0_i32 = arith.constant 0 : i32
    %c0_i32_0 = arith.constant 0 : i32
    %c0_i32_1 = arith.constant 0 : i32
    return %c0_i32, %c0_i32_0 : i32, i32
  }
  func.func @transform_21(%arg0: i32) -> (i32, i32) {
    %c0_i32 = arith.constant 0 : i32
    %c0_i32_0 = arith.constant 0 : i32
    %c0_i32_1 = arith.constant 0 : i32
    return %c0_i32, %c0_i32_0 : i32, i32
  }
  func.func @transform_22(%arg0: i32) -> (i32, i32) {
    %c0_i32 = arith.constant 0 : i32
    %c0_i32_0 = arith.constant 0 : i32
    %c0_i32_1 = arith.constant 0 : i32
    return %c0_i32, %c0_i32_0 : i32, i32
  }
  func.func @transform_23(%arg0: i32) -> (i32, i32) {
    %c0_i32 = arith.constant 0 : i32
    %c0_i32_0 = arith.constant 0 : i32
    %c0_i32_1 = arith.constant 0 : i32
    return %c0_i32, %c0_i32_0 : i32, i32
  }
  func.func @transform_24(%arg0: i32) -> (i32, i32) {
    %c0_i32 = arith.constant 0 : i32
    %c0_i32_0 = arith.constant 0 : i32
    %c0_i32_1 = arith.constant 0 : i32
    return %c0_i32, %c0_i32_0 : i32, i32
  }
  func.func @transform_25(%arg0: i32) -> (i32, i32) {
    %c0_i32 = arith.constant 0 : i32
    %c0_i32_0 = arith.constant 0 : i32
    %c0_i32_1 = arith.constant 0 : i32
    return %c0_i32, %c0_i32_0 : i32, i32
  }
  func.func @transform_26(%arg0: i32) -> (i32, i32) {
    %c0_i32 = arith.constant 0 : i32
    %c0_i32_0 = arith.constant 0 : i32
    %c0_i32_1 = arith.constant 0 : i32
    return %c0_i32, %c0_i32_0 : i32, i32
  }
  func.func @transform_27(%arg0: i32) -> (i32, i32) {
    %c0_i32 = arith.constant 0 : i32
    %c0_i32_0 = arith.constant 0 : i32
    %c0_i32_1 = arith.constant 0 : i32
    return %c0_i32, %c0_i32_0 : i32, i32
  }
  func.func @transform_28(%arg0: i32) -> (i32, i32) {
    %c0_i32 = arith.constant 0 : i32
    %c0_i32_0 = arith.constant 0 : i32
    %c0_i32_1 = arith.constant 0 : i32
    return %c0_i32, %c0_i32_0 : i32, i32
  }
  func.func @transform_29(%arg0: i32) -> (i32, i32) {
    %c0_i32 = arith.constant 0 : i32
    %c0_i32_0 = arith.constant 0 : i32
    %c0_i32_1 = arith.constant 0 : i32
    return %c0_i32, %c0_i32_0 : i32, i32
  }
  func.func @transform_30(%arg0: i32) -> (i32, i32) {
    %c0_i32 = arith.constant 0 : i32
    %c0_i32_0 = arith.constant 0 : i32
    %c0_i32_1 = arith.constant 0 : i32
    return %c0_i32, %c0_i32_0 : i32, i32
  }
  func.func @transform_31(%arg0: i32) -> (i32, i32) {
    %c0_i32 = arith.constant 0 : i32
    %c0_i32_0 = arith.constant 0 : i32
    %c0_i32_1 = arith.constant 0 : i32
    return %c0_i32, %c0_i32_0 : i32, i32
  }
  func.func @transform_32(%arg0: i32) -> (i32, i32) {
    %c0_i32 = arith.constant 0 : i32
    %c0_i32_0 = arith.constant 0 : i32
    %c0_i32_1 = arith.constant 0 : i32
    return %c0_i32, %c0_i32_0 : i32, i32
  }
  func.func @transform_33(%arg0: i32) -> (i32, i32) {
    %c0_i32 = arith.constant 0 : i32
    %c0_i32_0 = arith.constant 0 : i32
    %c0_i32_1 = arith.constant 0 : i32
    return %c0_i32, %c0_i32_0 : i32, i32
  }
  func.func @transform_34(%arg0: i32) -> (i32, i32) {
    %c0_i32 = arith.constant 0 : i32
    %c0_i32_0 = arith.constant 0 : i32
    %c0_i32_1 = arith.constant 0 : i32
    return %c0_i32, %c0_i32_0 : i32, i32
  }
  func.func @transform_35(%arg0: i32) -> (i32, i32) {
    %c0_i32 = arith.constant 0 : i32
    %c0_i32_0 = arith.constant 0 : i32
    %c0_i32_1 = arith.constant 0 : i32
    return %c0_i32, %c0_i32_0 : i32, i32
  }
  func.func @transform_36(%arg0: i32) -> (i32, i32) {
    %c0_i32 = arith.constant 0 : i32
    %c0_i32_0 = arith.constant 0 : i32
    %c0_i32_1 = arith.constant 0 : i32
    return %c0_i32, %c0_i32_0 : i32, i32
  }
  func.func @transform_37(%arg0: i32) -> (i32, i32) {
    %c0_i32 = arith.constant 0 : i32
    %c0_i32_0 = arith.constant 0 : i32
    %c0_i32_1 = arith.constant 0 : i32
    return %c0_i32, %c0_i32_0 : i32, i32
  }
  func.func @transform_38(%arg0: i32) -> (i32, i32) {
    %c0_i32 = arith.constant 0 : i32
    %c0_i32_0 = arith.constant 0 : i32
    %c0_i32_1 = arith.constant 0 : i32
    return %c0_i32, %c0_i32_0 : i32, i32
  }
  func.func @transform_39(%arg0: i32) -> (i32, i32) {
    %c0_i32 = arith.constant 0 : i32
    %c0_i32_0 = arith.constant 0 : i32
    %c0_i32_1 = arith.constant 0 : i32
    return %c0_i32, %c0_i32_0 : i32, i32
  }
  func.func @transform_40(%arg0: i32) -> (i32, i32) {
    %c0_i32 = arith.constant 0 : i32
    %c0_i32_0 = arith.constant 0 : i32
    %c0_i32_1 = arith.constant 0 : i32
    return %c0_i32, %c0_i32_0 : i32, i32
  }
  func.func @transform_41(%arg0: i32) -> (i32, i32) {
    %c0_i32 = arith.constant 0 : i32
    %c0_i32_0 = arith.constant 0 : i32
    %c0_i32_1 = arith.constant 0 : i32
    return %c0_i32, %c0_i32_0 : i32, i32
  }
  func.func @transform_42(%arg0: i32) -> (i32, i32) {
    %c0_i32 = arith.constant 0 : i32
    %c0_i32_0 = arith.constant 0 : i32
    %c0_i32_1 = arith.constant 0 : i32
    return %c0_i32, %c0_i32_0 : i32, i32
  }
  func.func @transform_43(%arg0: i32) -> (i32, i32) {
    %c0_i32 = arith.constant 0 : i32
    %c0_i32_0 = arith.constant 0 : i32
    %c0_i32_1 = arith.constant 0 : i32
    return %c0_i32, %c0_i32_0 : i32, i32
  }
  func.func @transform_44(%arg0: i32) -> (i32, i32) {
    %c0_i32 = arith.constant 0 : i32
    %c0_i32_0 = arith.constant 0 : i32
    %c0_i32_1 = arith.constant 0 : i32
    return %c0_i32, %c0_i32_0 : i32, i32
  }
  func.func @transform_45(%arg0: i32) -> (i32, i32) {
    %c0_i32 = arith.constant 0 : i32
    %c0_i32_0 = arith.constant 0 : i32
    %c0_i32_1 = arith.constant 0 : i32
    return %c0_i32, %c0_i32_0 : i32, i32
  }
  func.func @transform_46(%arg0: i32) -> (i32, i32) {
    %c0_i32 = arith.constant 0 : i32
    %c0_i32_0 = arith.constant 0 : i32
    %c0_i32_1 = arith.constant 0 : i32
    return %c0_i32, %c0_i32_0 : i32, i32
  }
  func.func @transform_47(%arg0: i32) -> (i32, i32) {
    %c0_i32 = arith.constant 0 : i32
    %c0_i32_0 = arith.constant 0 : i32
    %c0_i32_1 = arith.constant 0 : i32
    return %c0_i32, %c0_i32_0 : i32, i32
  }
  func.func @transform_48(%arg0: i32) -> (i32, i32) {
    %c0_i32 = arith.constant 0 : i32
    %c0_i32_0 = arith.constant 0 : i32
    %c0_i32_1 = arith.constant 0 : i32
    return %c0_i32, %c0_i32_0 : i32, i32
  }
  func.func @transform_49(%arg0: i32) -> (i32, i32) {
    %c0_i32 = arith.constant 0 : i32
    %c0_i32_0 = arith.constant 0 : i32
    %c0_i32_1 = arith.constant 0 : i32
    return %c0_i32, %c0_i32_0 : i32, i32
  }
  func.func @transform_50(%arg0: i32) -> (i32, i32) {
    %c0_i32 = arith.constant 0 : i32
    %c0_i32_0 = arith.constant 0 : i32
    %c0_i32_1 = arith.constant 0 : i32
    return %c0_i32, %c0_i32_0 : i32, i32
  }
  func.func @transform_51(%arg0: i32) -> (i32, i32) {
    %c0_i32 = arith.constant 0 : i32
    %c0_i32_0 = arith.constant 0 : i32
    %c0_i32_1 = arith.constant 0 : i32
    return %c0_i32, %c0_i32_0 : i32, i32
  }
  func.func @transform_52(%arg0: i32) -> (i32, i32) {
    %c0_i32 = arith.constant 0 : i32
    %c0_i32_0 = arith.constant 0 : i32
    %c0_i32_1 = arith.constant 0 : i32
    return %c0_i32, %c0_i32_0 : i32, i32
  }
  func.func @transform_53(%arg0: i32) -> (i32, i32) {
    %c0_i32 = arith.constant 0 : i32
    %c0_i32_0 = arith.constant 0 : i32
    %c0_i32_1 = arith.constant 0 : i32
    return %c0_i32, %c0_i32_0 : i32, i32
  }
  func.func @transform_54(%arg0: i32) -> (i32, i32) {
    %c0_i32 = arith.constant 0 : i32
    %c0_i32_0 = arith.constant 0 : i32
    %c0_i32_1 = arith.constant 0 : i32
    return %c0_i32, %c0_i32_0 : i32, i32
  }
  func.func @transform_55(%arg0: i32) -> (i32, i32, i32) {
    %c0_i32 = arith.constant 0 : i32
    %c0_i32_0 = arith.constant 0 : i32
    %c0_i32_1 = arith.constant 0 : i32
    return %arg0, %c0_i32, %c0_i32_0 : i32, i32, i32
  }
}

</mosaic_0001>

<llo_original>
// kernel: detr_forward.1
$region0: #{detr_forward.1}
  #allocation0 [shape = 'u32[]', space=smem, size = 0x4, offset = 0x4, fixed_abs, tag = 'smem constant byte address 0x4 - core index']
  #allocation1 [shape = 'u32[144,128]{1,0:T(1,128)}', space=vmem, size = 0x12000, scoped, tag = 'internal scratch']
  %s0 = inlined_call_operand.smem [shape: u32[56], index: -1, kind: input, shape index: {}]
  %s1 = sld [smem:[%s0]]
  %s2 = scalar_lea.smem %s0, 1
  %s3 = sld [smem:[%s2]]
  %s4 = scalar_lea.smem %s0, 2
  %s5 = sld [smem:[%s4]]
  %s6 = scalar_lea.smem %s0, 3
  %s7 = sld [smem:[%s6]]
  %s8 = scalar_lea.smem %s0, 4
  %s9 = sld [smem:[%s8]]
  %s10 = scalar_lea.smem %s0, 5
  %s11 = sld [smem:[%s10]]
  %s12 = scalar_lea.smem %s0, 6
  %s13 = sld [smem:[%s12]]
  %s14 = scalar_lea.smem %s0, 7
  %s15 = sld [smem:[%s14]]
  %s16 = scalar_lea.smem %s0, 8
  %s17 = sld [smem:[%s16]]
  %s18 = scalar_lea.smem %s0, 9
  %s19 = sld [smem:[%s18]]
  %s20 = scalar_lea.smem %s0, 10
  %s21 = sld [smem:[%s20]]
  %s22 = scalar_lea.smem %s0, 11
  %s23 = sld [smem:[%s22]]
  %s24 = scalar_lea.smem %s0, 12
  %s25 = sld [smem:[%s24]]
  %s26 = scalar_lea.smem %s0, 13
  %s27 = sld [smem:[%s26]]
  %s28 = scalar_lea.smem %s0, 14
  %s29 = sld [smem:[%s28]]
  %s30 = scalar_lea.smem %s0, 15
  %s31 = sld [smem:[%s30]]
  %s32 = scalar_lea.smem %s0, 16
  %s33 = sld [smem:[%s32]]
  %s34 = scalar_lea.smem %s0, 17
  %s35 = sld [smem:[%s34]]
  %s36 = scalar_lea.smem %s0, 18
  %s37 = sld [smem:[%s36]]
  %s38 = scalar_lea.smem %s0, 19
  %s39 = sld [smem:[%s38]]
  %s40 = scalar_lea.smem %s0, 20
  %s41 = sld [smem:[%s40]]
  %s42 = scalar_lea.smem %s0, 21
  %s43 = sld [smem:[%s42]]
  %s44 = scalar_lea.smem %s0, 22
  %s45 = sld [smem:[%s44]]
  %s46 = scalar_lea.smem %s0, 23
  %s47 = sld [smem:[%s46]]
  %s48 = scalar_lea.smem %s0, 24
  %s49 = sld [smem:[%s48]]
  %s50 = scalar_lea.smem %s0, 25
  %s51 = sld [smem:[%s50]]
  %s52 = scalar_lea.smem %s0, 26
  %s53 = sld [smem:[%s52]]
  %s54 = scalar_lea.smem %s0, 27
  %s55 = sld [smem:[%s54]]
  %s56 = scalar_lea.smem %s0, 28
  %s57 = sld [smem:[%s56]]
  %s58 = scalar_lea.smem %s0, 29
  %s59 = sld [smem:[%s58]]
  %s60 = scalar_lea.smem %s0, 30
  %s61 = sld [smem:[%s60]]
  %s62 = scalar_lea.smem %s0, 31
  %s63 = sld [smem:[%s62]]
  %s64 = scalar_lea.smem %s0, 32
  %s65 = sld [smem:[%s64]]
  %s66 = scalar_lea.smem %s0, 33
  %s67 = sld [smem:[%s66]]
  %s68 = scalar_lea.smem %s0, 34
  %s69 = sld [smem:[%s68]]
  %s70 = scalar_lea.smem %s0, 35
  %s71 = sld [smem:[%s70]]
  %s72 = scalar_lea.smem %s0, 36
  %s73 = sld [smem:[%s72]]
  %s74 = scalar_lea.smem %s0, 37
  %s75 = sld [smem:[%s74]]
  %s76 = scalar_lea.smem %s0, 38
  %s77 = sld [smem:[%s76]]
  %s78 = scalar_lea.smem %s0, 39
  %s79 = sld [smem:[%s78]]
  %s80 = scalar_lea.smem %s0, 40
  %s81 = sld [smem:[%s80]]
  %s82 = scalar_lea.smem %s0, 41
  %s83 = sld [smem:[%s82]]
  %s84 = scalar_lea.smem %s0, 42
  %s85 = sld [smem:[%s84]]
  %s86 = scalar_lea.smem %s0, 43
  %s87 = sld [smem:[%s86]]
  %s88 = scalar_lea.smem %s0, 44
  %s89 = sld [smem:[%s88]]
  %s90 = scalar_lea.smem %s0, 45
  %s91 = sld [smem:[%s90]]
  %s92 = scalar_lea.smem %s0, 46
  %s93 = sld [smem:[%s92]]
  %s94 = scalar_lea.smem %s0, 47
  %s95 = sld [smem:[%s94]]
  %s96 = scalar_lea.smem %s0, 48
  %s97 = sld [smem:[%s96]]
  %s98 = scalar_lea.smem %s0, 49
  %s99 = sld [smem:[%s98]]
  %s100 = scalar_lea.smem %s0, 50
  %s101 = sld [smem:[%s100]]
  %s102 = scalar_lea.smem %s0, 51
  %s103 = sld [smem:[%s102]]
  %s104 = scalar_lea.smem %s0, 52
  %s105 = sld [smem:[%s104]]
  %s106 = scalar_lea.smem %s0, 53
  %s107 = sld [smem:[%s106]]
  %s108 = scalar_lea.smem %s0, 54
  %s109 = sld [smem:[%s108]]
  %s110 = scalar_lea.smem %s0, 55
  %s111 = sld [smem:[%s110]]
  %s112 = sld [smem:[#allocation0]]
  $region253: #{detr_forward.1} parent=0
    _
  %s114 = ssub.s32 1, %s112
  %s115 = scalar_select 0, %s114, %s112
  loop: start=0, step=1, limit=4
  $region2: #{detr_forward.1} parent=0 // loop_pre_header
    _
  $region3: #{detr_forward.1} parent=0 // loop_header
    %s117 = sphi 0, %s121
    %p118 = scmp.ge.s32.totalorder %s117, 4
    %s127 = sphi 0, %s129
    %s130 = sphi 0, %s127
    %s131 = sphi 0, %s130
    %s147 = sphi 0, %s131
    %s153 = sphi 0, %s155
    %s156 = sphi 0, %s153
    %s157 = sphi 0, %s156
    %s173 = sphi 0, %s157
    %s177 = sphi 0, %s177
    %s179 = sphi 0, %s177
    %s180 = sphi 0, %s179
    %s194 = sphi 0, %s180
    %s198 = sphi 0, %s198
    %s200 = sphi 0, %s198
    %s201 = sphi 0, %s200
    %s215 = sphi 0, %s201
    %s219 = sphi 0, %s219
    %s221 = sphi 0, %s219
    %s222 = sphi 0, %s221
    %s236 = sphi 0, %s222
    %s240 = sphi 0, %s240
    %s242 = sphi 0, %s240
    %s243 = sphi 0, %s242
    %s257 = sphi 0, %s243
    %s261 = sphi 0, %s261
    %s263 = sphi 0, %s261
    %s264 = sphi 0, %s263
    %s278 = sphi 0, %s264
    %s282 = sphi 0, %s282
    %s284 = sphi 0, %s282
    %s285 = sphi 0, %s284
    %s299 = sphi 0, %s285
    %s303 = sphi 0, %s303
    %s305 = sphi 0, %s303
    %s306 = sphi 0, %s305
    %s320 = sphi 0, %s306
    %s324 = sphi 0, %s324
    %s326 = sphi 0, %s324
    %s327 = sphi 0, %s326
    %s341 = sphi 0, %s327
    %s345 = sphi 0, %s345
    %s347 = sphi 0, %s345
    %s348 = sphi 0, %s347
    %s362 = sphi 0, %s348
    %s366 = sphi 0, %s366
    %s368 = sphi 0, %s366
    %s369 = sphi 0, %s368
    %s383 = sphi 0, %s369
    %s387 = sphi 0, %s387
    %s389 = sphi 0, %s387
    %s390 = sphi 0, %s389
    %s404 = sphi 0, %s390
    %s408 = sphi 0, %s408
    %s410 = sphi 0, %s408
    %s411 = sphi 0, %s410
    %s425 = sphi 0, %s411
    %s429 = sphi 0, %s429
    %s431 = sphi 0, %s429
    %s432 = sphi 0, %s431
    %s446 = sphi 0, %s432
    %s450 = sphi 0, %s450
    %s452 = sphi 0, %s450
    %s453 = sphi 0, %s452
    %s467 = sphi 0, %s453
    %s471 = sphi 0, %s471
    %s473 = sphi 0, %s471
    %s474 = sphi 0, %s473
    %s488 = sphi 0, %s474
    %s492 = sphi 0, %s492
    %s494 = sphi 0, %s492
    %s495 = sphi 0, %s494
    %s509 = sphi 0, %s495
    %s513 = sphi 0, %s513
    %s515 = sphi 0, %s513
    %s516 = sphi 0, %s515
    %s530 = sphi 0, %s516
    %s534 = sphi 0, %s534
    %s536 = sphi 0, %s534
    %s537 = sphi 0, %s536
    %s551 = sphi 0, %s537
    %s555 = sphi 0, %s555
    %s557 = sphi 0, %s555
    %s558 = sphi 0, %s557
    %s572 = sphi 0, %s558
    %s576 = sphi 0, %s576
    %s578 = sphi 0, %s576
    %s579 = sphi 0, %s578
    %s593 = sphi 0, %s579
    %s597 = sphi 0, %s597
    %s599 = sphi 0, %s597
    %s600 = sphi 0, %s599
    %s614 = sphi 0, %s600
    %s618 = sphi 0, %s618
    %s620 = sphi 0, %s618
    %s621 = sphi 0, %s620
    %s635 = sphi 0, %s621
    %s639 = sphi 0, %s639
    %s641 = sphi 0, %s639
    %s642 = sphi 0, %s641
    %s656 = sphi 0, %s642
    %s660 = sphi 0, %s660
    %s662 = sphi 0, %s660
    %s663 = sphi 0, %s662
    %s677 = sphi 0, %s663
    %s681 = sphi 0, %s681
    %s683 = sphi 0, %s681
    %s684 = sphi 0, %s683
    %s698 = sphi 0, %s684
    %s702 = sphi 0, %s702
    %s704 = sphi 0, %s702
    %s705 = sphi 0, %s704
    %s719 = sphi 0, %s705
    %s723 = sphi 0, %s723
    %s725 = sphi 0, %s723
    %s726 = sphi 0, %s725
    %s740 = sphi 0, %s726
    %s744 = sphi 0, %s744
    %s746 = sphi 0, %s744
    %s747 = sphi 0, %s746
    %s761 = sphi 0, %s747
    %s765 = sphi 0, %s765
    %s767 = sphi 0, %s765
    %s768 = sphi 0, %s767
    %s782 = sphi 0, %s768
    %s786 = sphi 0, %s786
    %s788 = sphi 0, %s786
    %s789 = sphi 0, %s788
    %s803 = sphi 0, %s789
    %s807 = sphi 0, %s807
    %s809 = sphi 0, %s807
    %s810 = sphi 0, %s809
    %s824 = sphi 0, %s810
    %s828 = sphi 0, %s828
    %s830 = sphi 0, %s828
    %s831 = sphi 0, %s830
    %s845 = sphi 0, %s831
    %s849 = sphi 0, %s849
    %s851 = sphi 0, %s849
    %s852 = sphi 0, %s851
    %s866 = sphi 0, %s852
    %s870 = sphi 0, %s870
    %s872 = sphi 0, %s870
    %s873 = sphi 0, %s872
    %s887 = sphi 0, %s873
    %s891 = sphi 0, %s891
    %s893 = sphi 0, %s891
    %s894 = sphi 0, %s893
    %s908 = sphi 0, %s894
    %s912 = sphi 0, %s912
    %s914 = sphi 0, %s912
    %s915 = sphi 0, %s914
    %s929 = sphi 0, %s915
    %s933 = sphi 0, %s933
    %s935 = sphi 0, %s933
    %s936 = sphi 0, %s935
    %s950 = sphi 0, %s936
    %s954 = sphi 0, %s954
    %s956 = sphi 0, %s954
    %s957 = sphi 0, %s956
    %s971 = sphi 0, %s957
    %s975 = sphi 0, %s975
    %s977 = sphi 0, %s975
    %s978 = sphi 0, %s977
    %s992 = sphi 0, %s978
    %s996 = sphi 0, %s996
    %s998 = sphi 0, %s996
    %s999 = sphi 0, %s998
    %s1013 = sphi 0, %s999
    %s1017 = sphi 0, %s1017
    %s1019 = sphi 0, %s1017
    %s1020 = sphi 0, %s1019
    %s1034 = sphi 0, %s1020
    %s1038 = sphi 0, %s1038
    %s1040 = sphi 0, %s1038
    %s1041 = sphi 0, %s1040
    %s1055 = sphi 0, %s1041
    %s1059 = sphi 0, %s1059
    %s1061 = sphi 0, %s1059
    %s1062 = sphi 0, %s1061
    %s1076 = sphi 0, %s1062
    %s1080 = sphi 0, %s1080
    %s1082 = sphi 0, %s1080
    %s1083 = sphi 0, %s1082
    %s1097 = sphi 0, %s1083
    %s1101 = sphi 0, %s1101
    %s1103 = sphi 0, %s1101
    %s1104 = sphi 0, %s1103
    %s1118 = sphi 0, %s1104
    %s1122 = sphi 0, %s1122
    %s1124 = sphi 0, %s1122
    %s1125 = sphi 0, %s1124
    %s1139 = sphi 0, %s1125
    %s1143 = sphi 0, %s1143
    %s1145 = sphi 0, %s1143
    %s1146 = sphi 0, %s1145
    %s1160 = sphi 0, %s1146
    %s1164 = sphi 0, %s1164
    %s1166 = sphi 0, %s1164
    %s1167 = sphi 0, %s1166
    %s1181 = sphi 0, %s1167
    %s1185 = sphi 0, %s1185
    %s1187 = sphi 0, %s1185
    %s1188 = sphi 0, %s1187
    %s1202 = sphi 0, %s1188
    %s1206 = sphi 0, %s1206
    %s1208 = sphi 0, %s1206
    %s1209 = sphi 0, %s1208
    %s1223 = sphi 0, %s1209
    %s1227 = sphi 0, %s1227
    %s1229 = sphi 0, %s1227
    %s1230 = sphi 0, %s1229
    %s1244 = sphi 0, %s1230
    %s1248 = sphi 0, %s1248
    %s1250 = sphi 0, %s1248
    %s1251 = sphi 0, %s1250
    %s1265 = sphi 0, %s1251
    %s1269 = sphi 0, %s1269
    %s1271 = sphi 0, %s1269
    %s1272 = sphi 0, %s1271
    %s1286 = sphi 0, %s1272
    %s1292 = sphi 0, %s1294
    %s1295 = sphi 0, %s1292
    %s1296 = sphi 0, %s1295
    %s1312 = sphi 0, %s1296
  $region4: #{detr_forward.1} parent=0 // loop_header_branch
    %120 = sbr.rel (%p118) target = $region8
  $region5: #{detr_forward.1} parent=0 // loop_body
    %s122 = ssub.s32 %s117, 1
    %s123 = ssub.s32 %s117, 2
    %s124 = sadd.s32 %s117, 1
    %s125 = ssub.s32 %s117, %s124
    %p126 = scmp.eq.s32.totalorder %s125, 0
    %s128 = sadd.s32 %s127, 1
    %s129 = scalar_select %p126, %s127, %s128
    %p132 = pneg %p126
    %p133 = scmp.eq.s32.totalorder %s117, 1
    %p134 = por %p132, %p133
    %p135 = scmp.ne.s32.totalorder %s127, %s130
    %p136 = scmp.eq.s32.totalorder %s117, 0
    %p137 = por %p135, %p136
    %p138 = scmp.ne.s32.totalorder %s127, %s130
    %p139 = scmp.eq.s32.totalorder %s122, 1
    %p140 = por %p138, %p139
    %p141 = scmp.ne.s32.totalorder %s130, %s131
    %p142 = scmp.eq.s32.totalorder %s122, 0
    %p143 = por %p141, %p142
    %p144 = scmp.ne.s32.totalorder %s130, %s131
    %p145 = scmp.eq.s32.totalorder %s123, 1
    %p146 = por %p144, %p145
    %p148 = scmp.ne.s32.totalorder %s131, %s147
    %p149 = scmp.eq.s32.totalorder %s123, 0
    %p150 = por %p148, %p149
    %s151 = ssub.s32 %s117, %s124
    %p152 = scmp.eq.s32.totalorder %s151, 0
    %s154 = sadd.s32 %s153, 1
    %s155 = scalar_select %p152, %s153, %s154
    %p158 = pneg %p152
    %p159 = scmp.eq.s32.totalorder %s117, 1
    %p160 = por %p158, %p159
    %p161 = scmp.ne.s32.totalorder %s153, %s156
    %p162 = scmp.eq.s32.totalorder %s117, 0
    %p163 = por %p161, %p162
    %p164 = scmp.ne.s32.totalorder %s153, %s156
    %p165 = scmp.eq.s32.totalorder %s122, 1
    %p166 = por %p164, %p165
    %p167 = scmp.ne.s32.totalorder %s156, %s157
    %p168 = scmp.eq.s32.totalorder %s122, 0
    %p169 = por %p167, %p168
    %p170 = scmp.ne.s32.totalorder %s156, %s157
    %p171 = scmp.eq.s32.totalorder %s123, 1
    %p172 = por %p170, %p171
    %p174 = scmp.ne.s32.totalorder %s157, %s173
    %p175 = scmp.eq.s32.totalorder %s123, 0
    %p176 = por %p174, %p175
    %s178 = sadd.s32 %s177, 1
    %p181 = scmp.eq.s32.totalorder %s117, 1
    %p182 = scmp.ne.s32.totalorder %s177, %s179
    %p183 = scmp.eq.s32.totalorder %s117, 0
    %p184 = por %p182, %p183
    %p185 = scmp.ne.s32.totalorder %s177, %s179
    %p186 = scmp.eq.s32.totalorder %s122, 1
    %p187 = por %p185, %p186
    %p188 = scmp.ne.s32.totalorder %s179, %s180
    %p189 = scmp.eq.s32.totalorder %s122, 0
    %p190 = por %p188, %p189
    %p191 = scmp.ne.s32.totalorder %s179, %s180
    %p192 = scmp.eq.s32.totalorder %s123, 1
    %p193 = por %p191, %p192
    %p195 = scmp.ne.s32.totalorder %s180, %s194
    %p196 = scmp.eq.s32.totalorder %s123, 0
    %p197 = por %p195, %p196
    %s199 = sadd.s32 %s198, 1
    %p202 = scmp.eq.s32.totalorder %s117, 1
    %p203 = scmp.ne.s32.totalorder %s198, %s200
    %p204 = scmp.eq.s32.totalorder %s117, 0
    %p205 = por %p203, %p204
    %p206 = scmp.ne.s32.totalorder %s198, %s200
    %p207 = scmp.eq.s32.totalorder %s122, 1
    %p208 = por %p206, %p207
    %p209 = scmp.ne.s32.totalorder %s200, %s201
    %p210 = scmp.eq.s32.totalorder %s122, 0
    %p211 = por %p209, %p210
    %p212 = scmp.ne.s32.totalorder %s200, %s201
    %p213 = scmp.eq.s32.totalorder %s123, 1
    %p214 = por %p212, %p213
    %p216 = scmp.ne.s32.totalorder %s201, %s215
    %p217 = scmp.eq.s32.totalorder %s123, 0
    %p218 = por %p216, %p217
    %s220 = sadd.s32 %s219, 1
    %p223 = scmp.eq.s32.totalorder %s117, 1
    %p224 = scmp.ne.s32.totalorder %s219, %s221
    %p225 = scmp.eq.s32.totalorder %s117, 0
    %p226 = por %p224, %p225
    %p227 = scmp.ne.s32.totalorder %s219, %s221
    %p228 = scmp.eq.s32.totalorder %s122, 1
    %p229 = por %p227, %p228
    %p230 = scmp.ne.s32.totalorder %s221, %s222
    %p231 = scmp.eq.s32.totalorder %s122, 0
    %p232 = por %p230, %p231
    %p233 = scmp.ne.s32.totalorder %s221, %s222
    %p234 = scmp.eq.s32.totalorder %s123, 1
    %p235 = por %p233, %p234
    %p237 = scmp.ne.s32.totalorder %s222, %s236
    %p238 = scmp.eq.s32.totalorder %s123, 0
    %p239 = por %p237, %p238
    %s241 = sadd.s32 %s240, 1
    %p244 = scmp.eq.s32.totalorder %s117, 1
    %p245 = scmp.ne.s32.totalorder %s240, %s242
    %p246 = scmp.eq.s32.totalorder %s117, 0
    %p247 = por %p245, %p246
    %p248 = scmp.ne.s32.totalorder %s240, %s242
    %p249 = scmp.eq.s32.totalorder %s122, 1
    %p250 = por %p248, %p249
    %p251 = scmp.ne.s32.totalorder %s242, %s243
    %p252 = scmp.eq.s32.totalorder %s122, 0
    %p253 = por %p251, %p252
    %p254 = scmp.ne.s32.totalorder %s242, %s243
    %p255 = scmp.eq.s32.totalorder %s123, 1
    %p256 = por %p254, %p255
    %p258 = scmp.ne.s32.totalorder %s243, %s257
    %p259 = scmp.eq.s32.totalorder %s123, 0
    %p260 = por %p258, %p259
    %s262 = sadd.s32 %s261, 1
    %p265 = scmp.eq.s32.totalorder %s117, 1
    %p266 = scmp.ne.s32.totalorder %s261, %s263
    %p267 = scmp.eq.s32.totalorder %s117, 0
    %p268 = por %p266, %p267
    %p269 = scmp.ne.s32.totalorder %s261, %s263
    %p270 = scmp.eq.s32.totalorder %s122, 1
    %p271 = por %p269, %p270
    %p272 = scmp.ne.s32.totalorder %s263, %s264
    %p273 = scmp.eq.s32.totalorder %s122, 0
    %p274 = por %p272, %p273
    %p275 = scmp.ne.s32.totalorder %s263, %s264
    %p276 = scmp.eq.s32.totalorder %s123, 1
    %p277 = por %p275, %p276
    %p279 = scmp.ne.s32.totalorder %s264, %s278
    %p280 = scmp.eq.s32.totalorder %s123, 0
    %p281 = por %p279, %p280
    %s283 = sadd.s32 %s282, 1
    %p286 = scmp.eq.s32.totalorder %s117, 1
    %p287 = scmp.ne.s32.totalorder %s282, %s284
    %p288 = scmp.eq.s32.totalorder %s117, 0
    %p289 = por %p287, %p288
    %p290 = scmp.ne.s32.totalorder %s282, %s284
    %p291 = scmp.eq.s32.totalorder %s122, 1
    %p292 = por %p290, %p291
    %p293 = scmp.ne.s32.totalorder %s284, %s285
    %p294 = scmp.eq.s32.totalorder %s122, 0
    %p295 = por %p293, %p294
    %p296 = scmp.ne.s32.totalorder %s284, %s285
    %p297 = scmp.eq.s32.totalorder %s123, 1
    %p298 = por %p296, %p297
    %p300 = scmp.ne.s32.totalorder %s285, %s299
    %p301 = scmp.eq.s32.totalorder %s123, 0
    %p302 = por %p300, %p301
    %s304 = sadd.s32 %s303, 1
    %p307 = scmp.eq.s32.totalorder %s117, 1
    %p308 = scmp.ne.s32.totalorder %s303, %s305
    %p309 = scmp.eq.s32.totalorder %s117, 0
    %p310 = por %p308, %p309
    %p311 = scmp.ne.s32.totalorder %s303, %s305
    %p312 = scmp.eq.s32.totalorder %s122, 1
    %p313 = por %p311, %p312
    %p314 = scmp.ne.s32.totalorder %s305, %s306
    %p315 = scmp.eq.s32.totalorder %s122, 0
    %p316 = por %p314, %p315
    %p317 = scmp.ne.s32.totalorder %s305, %s306
    %p318 = scmp.eq.s32.totalorder %s123, 1
    %p319 = por %p317, %p318
    %p321 = scmp.ne.s32.totalorder %s306, %s320
    %p322 = scmp.eq.s32.totalorder %s123, 0
    %p323 = por %p321, %p322
    %s325 = sadd.s32 %s324, 1
    %p328 = scmp.eq.s32.totalorder %s117, 1
    %p329 = scmp.ne.s32.totalorder %s324, %s326
    %p330 = scmp.eq.s32.totalorder %s117, 0
    %p331 = por %p329, %p330
    %p332 = scmp.ne.s32.totalorder %s324, %s326
    %p333 = scmp.eq.s32.totalorder %s122, 1
    %p334 = por %p332, %p333
    %p335 = scmp.ne.s32.totalorder %s326, %s327
    %p336 = scmp.eq.s32.totalorder %s122, 0
    %p337 = por %p335, %p336
    %p338 = scmp.ne.s32.totalorder %s326, %s327
    %p339 = scmp.eq.s32.totalorder %s123, 1
    %p340 = por %p338, %p339
    %p342 = scmp.ne.s32.totalorder %s327, %s341
    %p343 = scmp.eq.s32.totalorder %s123, 0
    %p344 = por %p342, %p343
    %s346 = sadd.s32 %s345, 1
    %p349 = scmp.eq.s32.totalorder %s117, 1
    %p350 = scmp.ne.s32.totalorder %s345, %s347
    %p351 = scmp.eq.s32.totalorder %s117, 0
    %p352 = por %p350, %p351
    %p353 = scmp.ne.s32.totalorder %s345, %s347
    %p354 = scmp.eq.s32.totalorder %s122, 1
    %p355 = por %p353, %p354
    %p356 = scmp.ne.s32.totalorder %s347, %s348
    %p357 = scmp.eq.s32.totalorder %s122, 0
    %p358 = por %p356, %p357
    %p359 = scmp.ne.s32.totalorder %s347, %s348
    %p360 = scmp.eq.s32.totalorder %s123, 1
    %p361 = por %p359, %p360
    %p363 = scmp.ne.s32.totalorder %s348, %s362
    %p364 = scmp.eq.s32.totalorder %s123, 0
    %p365 = por %p363, %p364
    %s367 = sadd.s32 %s366, 1
    %p370 = scmp.eq.s32.totalorder %s117, 1
    %p371 = scmp.ne.s32.totalorder %s366, %s368
    %p372 = scmp.eq.s32.totalorder %s117, 0
    %p373 = por %p371, %p372
    %p374 = scmp.ne.s32.totalorder %s366, %s368
    %p375 = scmp.eq.s32.totalorder %s122, 1
    %p376 = por %p374, %p375
    %p377 = scmp.ne.s32.totalorder %s368, %s369
    %p378 = scmp.eq.s32.totalorder %s122, 0
    %p379 = por %p377, %p378
    %p380 = scmp.ne.s32.totalorder %s368, %s369
    %p381 = scmp.eq.s32.totalorder %s123, 1
    %p382 = por %p380, %p381
    %p384 = scmp.ne.s32.totalorder %s369, %s383
    %p385 = scmp.eq.s32.totalorder %s123, 0
    %p386 = por %p384, %p385
    %s388 = sadd.s32 %s387, 1
    %p391 = scmp.eq.s32.totalorder %s117, 1
    %p392 = scmp.ne.s32.totalorder %s387, %s389
    %p393 = scmp.eq.s32.totalorder %s117, 0
    %p394 = por %p392, %p393
    %p395 = scmp.ne.s32.totalorder %s387, %s389
    %p396 = scmp.eq.s32.totalorder %s122, 1
    %p397 = por %p395, %p396
    %p398 = scmp.ne.s32.totalorder %s389, %s390
    %p399 = scmp.eq.s32.totalorder %s122, 0
    %p400 = por %p398, %p399
    %p401 = scmp.ne.s32.totalorder %s389, %s390
    %p402 = scmp.eq.s32.totalorder %s123, 1
    %p403 = por %p401, %p402
    %p405 = scmp.ne.s32.totalorder %s390, %s404
    %p406 = scmp.eq.s32.totalorder %s123, 0
    %p407 = por %p405, %p406
    %s409 = sadd.s32 %s408, 1
    %p412 = scmp.eq.s32.totalorder %s117, 1
    %p413 = scmp.ne.s32.totalorder %s408, %s410
    %p414 = scmp.eq.s32.totalorder %s117, 0
    %p415 = por %p413, %p414
    %p416 = scmp.ne.s32.totalorder %s408, %s410
    %p417 = scmp.eq.s32.totalorder %s122, 1
    %p418 = por %p416, %p417
    %p419 = scmp.ne.s32.totalorder %s410, %s411
    %p420 = scmp.eq.s32.totalorder %s122, 0
    %p421 = por %p419, %p420
    %p422 = scmp.ne.s32.totalorder %s410, %s411
    %p423 = scmp.eq.s32.totalorder %s123, 1
    %p424 = por %p422, %p423
    %p426 = scmp.ne.s32.totalorder %s411, %s425
    %p427 = scmp.eq.s32.totalorder %s123, 0
    %p428 = por %p426, %p427
    %s430 = sadd.s32 %s429, 1
    %p433 = scmp.eq.s32.totalorder %s117, 1
    %p434 = scmp.ne.s32.totalorder %s429, %s431
    %p435 = scmp.eq.s32.totalorder %s117, 0
    %p436 = por %p434, %p435
    %p437 = scmp.ne.s32.totalorder %s429, %s431
    %p438 = scmp.eq.s32.totalorder %s122, 1
    %p439 = por %p437, %p438
    %p440 = scmp.ne.s32.totalorder %s431, %s432
    %p441 = scmp.eq.s32.totalorder %s122, 0
    %p442 = por %p440, %p441
    %p443 = scmp.ne.s32.totalorder %s431, %s432
    %p444 = scmp.eq.s32.totalorder %s123, 1
    %p445 = por %p443, %p444
    %p447 = scmp.ne.s32.totalorder %s432, %s446
    %p448 = scmp.eq.s32.totalorder %s123, 0
    %p449 = por %p447, %p448
    %s451 = sadd.s32 %s450, 1
    %p454 = scmp.eq.s32.totalorder %s117, 1
    %p455 = scmp.ne.s32.totalorder %s450, %s452
    %p456 = scmp.eq.s32.totalorder %s117, 0
    %p457 = por %p455, %p456
    %p458 = scmp.ne.s32.totalorder %s450, %s452
    %p459 = scmp.eq.s32.totalorder %s122, 1
    %p460 = por %p458, %p459
    %p461 = scmp.ne.s32.totalorder %s452, %s453
    %p462 = scmp.eq.s32.totalorder %s122, 0
    %p463 = por %p461, %p462
    %p464 = scmp.ne.s32.totalorder %s452, %s453
    %p465 = scmp.eq.s32.totalorder %s123, 1
    %p466 = por %p464, %p465
    %p468 = scmp.ne.s32.totalorder %s453, %s467
    %p469 = scmp.eq.s32.totalorder %s123, 0
    %p470 = por %p468, %p469
    %s472 = sadd.s32 %s471, 1
    %p475 = scmp.eq.s32.totalorder %s117, 1
    %p476 = scmp.ne.s32.totalorder %s471, %s473
    %p477 = scmp.eq.s32.totalorder %s117, 0
    %p478 = por %p476, %p477
    %p479 = scmp.ne.s32.totalorder %s471, %s473
    %p480 = scmp.eq.s32.totalorder %s122, 1
    %p481 = por %p479, %p480
    %p482 = scmp.ne.s32.totalorder %s473, %s474
    %p483 = scmp.eq.s32.totalorder %s122, 0
    %p484 = por %p482, %p483
    %p485 = scmp.ne.s32.totalorder %s473, %s474
    %p486 = scmp.eq.s32.totalorder %s123, 1
    %p487 = por %p485, %p486
    %p489 = scmp.ne.s32.totalorder %s474, %s488
    %p490 = scmp.eq.s32.totalorder %s123, 0
    %p491 = por %p489, %p490
    %s493 = sadd.s32 %s492, 1
    %p496 = scmp.eq.s32.totalorder %s117, 1
    %p497 = scmp.ne.s32.totalorder %s492, %s494
    %p498 = scmp.eq.s32.totalorder %s117, 0
    %p499 = por %p497, %p498
    %p500 = scmp.ne.s32.totalorder %s492, %s494
    %p501 = scmp.eq.s32.totalorder %s122, 1
    %p502 = por %p500, %p501
    %p503 = scmp.ne.s32.totalorder %s494, %s495
    %p504 = scmp.eq.s32.totalorder %s122, 0
    %p505 = por %p503, %p504
    %p506 = scmp.ne.s32.totalorder %s494, %s495
    %p507 = scmp.eq.s32.totalorder %s123, 1
    %p508 = por %p506, %p507
    %p510 = scmp.ne.s32.totalorder %s495, %s509
    %p511 = scmp.eq.s32.totalorder %s123, 0
    %p512 = por %p510, %p511
    %s514 = sadd.s32 %s513, 1
    %p517 = scmp.eq.s32.totalorder %s117, 1
    %p518 = scmp.ne.s32.totalorder %s513, %s515
    %p519 = scmp.eq.s32.totalorder %s117, 0
    %p520 = por %p518, %p519
    %p521 = scmp.ne.s32.totalorder %s513, %s515
    %p522 = scmp.eq.s32.totalorder %s122, 1
    %p523 = por %p521, %p522
    %p524 = scmp.ne.s32.totalorder %s515, %s516
    %p525 = scmp.eq.s32.totalorder %s122, 0
    %p526 = por %p524, %p525
    %p527 = scmp.ne.s32.totalorder %s515, %s516
    %p528 = scmp.eq.s32.totalorder %s123, 1
    %p529 = por %p527, %p528
    %p531 = scmp.ne.s32.totalorder %s516, %s530
    %p532 = scmp.eq.s32.totalorder %s123, 0
    %p533 = por %p531, %p532
    %s535 = sadd.s32 %s534, 1
    %p538 = scmp.eq.s32.totalorder %s117, 1
    %p539 = scmp.ne.s32.totalorder %s534, %s536
    %p540 = scmp.eq.s32.totalorder %s117, 0
    %p541 = por %p539, %p540
    %p542 = scmp.ne.s32.totalorder %s534, %s536
    %p543 = scmp.eq.s32.totalorder %s122, 1
    %p544 = por %p542, %p543
    %p545 = scmp.ne.s32.totalorder %s536, %s537
    %p546 = scmp.eq.s32.totalorder %s122, 0
    %p547 = por %p545, %p546
    %p548 = scmp.ne.s32.totalorder %s536, %s537
    %p549 = scmp.eq.s32.totalorder %s123, 1
    %p550 = por %p548, %p549
    %p552 = scmp.ne.s32.totalorder %s537, %s551
    %p553 = scmp.eq.s32.totalorder %s123, 0
    %p554 = por %p552, %p553
    %s556 = sadd.s32 %s555, 1
    %p559 = scmp.eq.s32.totalorder %s117, 1
    %p560 = scmp.ne.s32.totalorder %s555, %s557
    %p561 = scmp.eq.s32.totalorder %s117, 0
    %p562 = por %p560, %p561
    %p563 = scmp.ne.s32.totalorder %s555, %s557
    %p564 = scmp.eq.s32.totalorder %s122, 1
    %p565 = por %p563, %p564
    %p566 = scmp.ne.s32.totalorder %s557, %s558
    %p567 = scmp.eq.s32.totalorder %s122, 0
    %p568 = por %p566, %p567
    %p569 = scmp.ne.s32.totalorder %s557, %s558
    %p570 = scmp.eq.s32.totalorder %s123, 1
    %p571 = por %p569, %p570
    %p573 = scmp.ne.s32.totalorder %s558, %s572
    %p574 = scmp.eq.s32.totalorder %s123, 0
    %p575 = por %p573, %p574
    %s577 = sadd.s32 %s576, 1
    %p580 = scmp.eq.s32.totalorder %s117, 1
    %p581 = scmp.ne.s32.totalorder %s576, %s578
    %p582 = scmp.eq.s32.totalorder %s117, 0
    %p583 = por %p581, %p582
    %p584 = scmp.ne.s32.totalorder %s576, %s578
    %p585 = scmp.eq.s32.totalorder %s122, 1
    %p586 = por %p584, %p585
    %p587 = scmp.ne.s32.totalorder %s578, %s579
    %p588 = scmp.eq.s32.totalorder %s122, 0
    %p589 = por %p587, %p588
    %p590 = scmp.ne.s32.totalorder %s578, %s579
    %p591 = scmp.eq.s32.totalorder %s123, 1
    %p592 = por %p590, %p591
    %p594 = scmp.ne.s32.totalorder %s579, %s593
    %p595 = scmp.eq.s32.totalorder %s123, 0
    %p596 = por %p594, %p595
    %s598 = sadd.s32 %s597, 1
    %p601 = scmp.eq.s32.totalorder %s117, 1
    %p602 = scmp.ne.s32.totalorder %s597, %s599
    %p603 = scmp.eq.s32.totalorder %s117, 0
    %p604 = por %p602, %p603
    %p605 = scmp.ne.s32.totalorder %s597, %s599
    %p606 = scmp.eq.s32.totalorder %s122, 1
    %p607 = por %p605, %p606
    %p608 = scmp.ne.s32.totalorder %s599, %s600
    %p609 = scmp.eq.s32.totalorder %s122, 0
    %p610 = por %p608, %p609
    %p611 = scmp.ne.s32.totalorder %s599, %s600
    %p612 = scmp.eq.s32.totalorder %s123, 1
    %p613 = por %p611, %p612
    %p615 = scmp.ne.s32.totalorder %s600, %s614
    %p616 = scmp.eq.s32.totalorder %s123, 0
    %p617 = por %p615, %p616
    %s619 = sadd.s32 %s618, 1
    %p622 = scmp.eq.s32.totalorder %s117, 1
    %p623 = scmp.ne.s32.totalorder %s618, %s620
    %p624 = scmp.eq.s32.totalorder %s117, 0
    %p625 = por %p623, %p624
    %p626 = scmp.ne.s32.totalorder %s618, %s620
    %p627 = scmp.eq.s32.totalorder %s122, 1
    %p628 = por %p626, %p627
    %p629 = scmp.ne.s32.totalorder %s620, %s621
    %p630 = scmp.eq.s32.totalorder %s122, 0
    %p631 = por %p629, %p630
    %p632 = scmp.ne.s32.totalorder %s620, %s621
    %p633 = scmp.eq.s32.totalorder %s123, 1
    %p634 = por %p632, %p633
    %p636 = scmp.ne.s32.totalorder %s621, %s635
    %p637 = scmp.eq.s32.totalorder %s123, 0
    %p638 = por %p636, %p637
    %s640 = sadd.s32 %s639, 1
    %p643 = scmp.eq.s32.totalorder %s117, 1
    %p644 = scmp.ne.s32.totalorder %s639, %s641
    %p645 = scmp.eq.s32.totalorder %s117, 0
    %p646 = por %p644, %p645
    %p647 = scmp.ne.s32.totalorder %s639, %s641
    %p648 = scmp.eq.s32.totalorder %s122, 1
    %p649 = por %p647, %p648
    %p650 = scmp.ne.s32.totalorder %s641, %s642
    %p651 = scmp.eq.s32.totalorder %s122, 0
    %p652 = por %p650, %p651
    %p653 = scmp.ne.s32.totalorder %s641, %s642
    %p654 = scmp.eq.s32.totalorder %s123, 1
    %p655 = por %p653, %p654
    %p657 = scmp.ne.s32.totalorder %s642, %s656
    %p658 = scmp.eq.s32.totalorder %s123, 0
    %p659 = por %p657, %p658
    %s661 = sadd.s32 %s660, 1
    %p664 = scmp.eq.s32.totalorder %s117, 1
    %p665 = scmp.ne.s32.totalorder %s660, %s662
    %p666 = scmp.eq.s32.totalorder %s117, 0
    %p667 = por %p665, %p666
    %p668 = scmp.ne.s32.totalorder %s660, %s662
    %p669 = scmp.eq.s32.totalorder %s122, 1
    %p670 = por %p668, %p669
    %p671 = scmp.ne.s32.totalorder %s662, %s663
    %p672 = scmp.eq.s32.totalorder %s122, 0
    %p673 = por %p671, %p672
    %p674 = scmp.ne.s32.totalorder %s662, %s663
    %p675 = scmp.eq.s32.totalorder %s123, 1
    %p676 = por %p674, %p675
    %p678 = scmp.ne.s32.totalorder %s663, %s677
    %p679 = scmp.eq.s32.totalorder %s123, 0
    %p680 = por %p678, %p679
    %s682 = sadd.s32 %s681, 1
    %p685 = scmp.eq.s32.totalorder %s117, 1
    %p686 = scmp.ne.s32.totalorder %s681, %s683
    %p687 = scmp.eq.s32.totalorder %s117, 0
    %p688 = por %p686, %p687
    %p689 = scmp.ne.s32.totalorder %s681, %s683
    %p690 = scmp.eq.s32.totalorder %s122, 1
    %p691 = por %p689, %p690
    %p692 = scmp.ne.s32.totalorder %s683, %s684
    %p693 = scmp.eq.s32.totalorder %s122, 0
    %p694 = por %p692, %p693
    %p695 = scmp.ne.s32.totalorder %s683, %s684
    %p696 = scmp.eq.s32.totalorder %s123, 1
    %p697 = por %p695, %p696
    %p699 = scmp.ne.s32.totalorder %s684, %s698
    %p700 = scmp.eq.s32.totalorder %s123, 0
    %p701 = por %p699, %p700
    %s703 = sadd.s32 %s702, 1
    %p706 = scmp.eq.s32.totalorder %s117, 1
    %p707 = scmp.ne.s32.totalorder %s702, %s704
    %p708 = scmp.eq.s32.totalorder %s117, 0
    %p709 = por %p707, %p708
    %p710 = scmp.ne.s32.totalorder %s702, %s704
    %p711 = scmp.eq.s32.totalorder %s122, 1
    %p712 = por %p710, %p711
    %p713 = scmp.ne.s32.totalorder %s704, %s705
    %p714 = scmp.eq.s32.totalorder %s122, 0
    %p715 = por %p713, %p714
    %p716 = scmp.ne.s32.totalorder %s704, %s705
    %p717 = scmp.eq.s32.totalorder %s123, 1
    %p718 = por %p716, %p717
    %p720 = scmp.ne.s32.totalorder %s705, %s719
    %p721 = scmp.eq.s32.totalorder %s123, 0
    %p722 = por %p720, %p721
    %s724 = sadd.s32 %s723, 1
    %p727 = scmp.eq.s32.totalorder %s117, 1
    %p728 = scmp.ne.s32.totalorder %s723, %s725
    %p729 = scmp.eq.s32.totalorder %s117, 0
    %p730 = por %p728, %p729
    %p731 = scmp.ne.s32.totalorder %s723, %s725
    %p732 = scmp.eq.s32.totalorder %s122, 1
    %p733 = por %p731, %p732
    %p734 = scmp.ne.s32.totalorder %s725, %s726
    %p735 = scmp.eq.s32.totalorder %s122, 0
    %p736 = por %p734, %p735
    %p737 = scmp.ne.s32.totalorder %s725, %s726
    %p738 = scmp.eq.s32.totalorder %s123, 1
    %p739 = por %p737, %p738
    %p741 = scmp.ne.s32.totalorder %s726, %s740
    %p742 = scmp.eq.s32.totalorder %s123, 0
    %p743 = por %p741, %p742
    %s745 = sadd.s32 %s744, 1
    %p748 = scmp.eq.s32.totalorder %s117, 1
    %p749 = scmp.ne.s32.totalorder %s744, %s746
    %p750 = scmp.eq.s32.totalorder %s117, 0
    %p751 = por %p749, %p750
    %p752 = scmp.ne.s32.totalorder %s744, %s746
    %p753 = scmp.eq.s32.totalorder %s122, 1
    %p754 = por %p752, %p753
    %p755 = scmp.ne.s32.totalorder %s746, %s747
    %p756 = scmp.eq.s32.totalorder %s122, 0
    %p757 = por %p755, %p756
    %p758 = scmp.ne.s32.totalorder %s746, %s747
    %p759 = scmp.eq.s32.totalorder %s123, 1
    %p760 = por %p758, %p759
    %p762 = scmp.ne.s32.totalorder %s747, %s761
    %p763 = scmp.eq.s32.totalorder %s123, 0
    %p764 = por %p762, %p763
    %s766 = sadd.s32 %s765, 1
    %p769 = scmp.eq.s32.totalorder %s117, 1
    %p770 = scmp.ne.s32.totalorder %s765, %s767
    %p771 = scmp.eq.s32.totalorder %s117, 0
    %p772 = por %p770, %p771
    %p773 = scmp.ne.s32.totalorder %s765, %s767
    %p774 = scmp.eq.s32.totalorder %s122, 1
    %p775 = por %p773, %p774
    %p776 = scmp.ne.s32.totalorder %s767, %s768
    %p777 = scmp.eq.s32.totalorder %s122, 0
    %p778 = por %p776, %p777
    %p779 = scmp.ne.s32.totalorder %s767, %s768
    %p780 = scmp.eq.s32.totalorder %s123, 1
    %p781 = por %p779, %p780
    %p783 = scmp.ne.s32.totalorder %s768, %s782
    %p784 = scmp.eq.s32.totalorder %s123, 0
    %p785 = por %p783, %p784
    %s787 = sadd.s32 %s786, 1
    %p790 = scmp.eq.s32.totalorder %s117, 1
    %p791 = scmp.ne.s32.totalorder %s786, %s788
    %p792 = scmp.eq.s32.totalorder %s117, 0
    %p793 = por %p791, %p792
    %p794 = scmp.ne.s32.totalorder %s786, %s788
    %p795 = scmp.eq.s32.totalorder %s122, 1
    %p796 = por %p794, %p795
    %p797 = scmp.ne.s32.totalorder %s788, %s789
    %p798 = scmp.eq.s32.totalorder %s122, 0
    %p799 = por %p797, %p798
    %p800 = scmp.ne.s32.totalorder %s788, %s789
    %p801 = scmp.eq.s32.totalorder %s123, 1
    %p802 = por %p800, %p801
    %p804 = scmp.ne.s32.totalorder %s789, %s803
    %p805 = scmp.eq.s32.totalorder %s123, 0
    %p806 = por %p804, %p805
    %s808 = sadd.s32 %s807, 1
    %p811 = scmp.eq.s32.totalorder %s117, 1
    %p812 = scmp.ne.s32.totalorder %s807, %s809
    %p813 = scmp.eq.s32.totalorder %s117, 0
    %p814 = por %p812, %p813
    %p815 = scmp.ne.s32.totalorder %s807, %s809
    %p816 = scmp.eq.s32.totalorder %s122, 1
    %p817 = por %p815, %p816
    %p818 = scmp.ne.s32.totalorder %s809, %s810
    %p819 = scmp.eq.s32.totalorder %s122, 0
    %p820 = por %p818, %p819
    %p821 = scmp.ne.s32.totalorder %s809, %s810
    %p822 = scmp.eq.s32.totalorder %s123, 1
    %p823 = por %p821, %p822
    %p825 = scmp.ne.s32.totalorder %s810, %s824
    %p826 = scmp.eq.s32.totalorder %s123, 0
    %p827 = por %p825, %p826
    %s829 = sadd.s32 %s828, 1
    %p832 = scmp.eq.s32.totalorder %s117, 1
    %p833 = scmp.ne.s32.totalorder %s828, %s830
    %p834 = scmp.eq.s32.totalorder %s117, 0
    %p835 = por %p833, %p834
    %p836 = scmp.ne.s32.totalorder %s828, %s830
    %p837 = scmp.eq.s32.totalorder %s122, 1
    %p838 = por %p836, %p837
    %p839 = scmp.ne.s32.totalorder %s830, %s831
    %p840 = scmp.eq.s32.totalorder %s122, 0
    %p841 = por %p839, %p840
    %p842 = scmp.ne.s32.totalorder %s830, %s831
    %p843 = scmp.eq.s32.totalorder %s123, 1
    %p844 = por %p842, %p843
    %p846 = scmp.ne.s32.totalorder %s831, %s845
    %p847 = scmp.eq.s32.totalorder %s123, 0
    %p848 = por %p846, %p847
    %s850 = sadd.s32 %s849, 1
    %p853 = scmp.eq.s32.totalorder %s117, 1
    %p854 = scmp.ne.s32.totalorder %s849, %s851
    %p855 = scmp.eq.s32.totalorder %s117, 0
    %p856 = por %p854, %p855
    %p857 = scmp.ne.s32.totalorder %s849, %s851
    %p858 = scmp.eq.s32.totalorder %s122, 1
    %p859 = por %p857, %p858
    %p860 = scmp.ne.s32.totalorder %s851, %s852
    %p861 = scmp.eq.s32.totalorder %s122, 0
    %p862 = por %p860, %p861
    %p863 = scmp.ne.s32.totalorder %s851, %s852
    %p864 = scmp.eq.s32.totalorder %s123, 1
    %p865 = por %p863, %p864
    %p867 = scmp.ne.s32.totalorder %s852, %s866
    %p868 = scmp.eq.s32.totalorder %s123, 0
    %p869 = por %p867, %p868
    %s871 = sadd.s32 %s870, 1
    %p874 = scmp.eq.s32.totalorder %s117, 1
    %p875 = scmp.ne.s32.totalorder %s870, %s872
    %p876 = scmp.eq.s32.totalorder %s117, 0
    %p877 = por %p875, %p876
    %p878 = scmp.ne.s32.totalorder %s870, %s872
    %p879 = scmp.eq.s32.totalorder %s122, 1
    %p880 = por %p878, %p879
    %p881 = scmp.ne.s32.totalorder %s872, %s873
    %p882 = scmp.eq.s32.totalorder %s122, 0
    %p883 = por %p881, %p882
    %p884 = scmp.ne.s32.totalorder %s872, %s873
    %p885 = scmp.eq.s32.totalorder %s123, 1
    %p886 = por %p884, %p885
    %p888 = scmp.ne.s32.totalorder %s873, %s887
    %p889 = scmp.eq.s32.totalorder %s123, 0
    %p890 = por %p888, %p889
    %s892 = sadd.s32 %s891, 1
    %p895 = scmp.eq.s32.totalorder %s117, 1
    %p896 = scmp.ne.s32.totalorder %s891, %s893
    %p897 = scmp.eq.s32.totalorder %s117, 0
    %p898 = por %p896, %p897
    %p899 = scmp.ne.s32.totalorder %s891, %s893
    %p900 = scmp.eq.s32.totalorder %s122, 1
    %p901 = por %p899, %p900
    %p902 = scmp.ne.s32.totalorder %s893, %s894
    %p903 = scmp.eq.s32.totalorder %s122, 0
    %p904 = por %p902, %p903
    %p905 = scmp.ne.s32.totalorder %s893, %s894
    %p906 = scmp.eq.s32.totalorder %s123, 1
    %p907 = por %p905, %p906
    %p909 = scmp.ne.s32.totalorder %s894, %s908
    %p910 = scmp.eq.s32.totalorder %s123, 0
    %p911 = por %p909, %p910
    %s913 = sadd.s32 %s912, 1
    %p916 = scmp.eq.s32.totalorder %s117, 1
    %p917 = scmp.ne.s32.totalorder %s912, %s914
    %p918 = scmp.eq.s32.totalorder %s117, 0
    %p919 = por %p917, %p918
    %p920 = scmp.ne.s32.totalorder %s912, %s914
    %p921 = scmp.eq.s32.totalorder %s122, 1
    %p922 = por %p920, %p921
    %p923 = scmp.ne.s32.totalorder %s914, %s915
    %p924 = scmp.eq.s32.totalorder %s122, 0
    %p925 = por %p923, %p924
    %p926 = scmp.ne.s32.totalorder %s914, %s915
    %p927 = scmp.eq.s32.totalorder %s123, 1
    %p928 = por %p926, %p927
    %p930 = scmp.ne.s32.totalorder %s915, %s929
    %p931 = scmp.eq.s32.totalorder %s123, 0
    %p932 = por %p930, %p931
    %s934 = sadd.s32 %s933, 1
    %p937 = scmp.eq.s32.totalorder %s117, 1
    %p938 = scmp.ne.s32.totalorder %s933, %s935
    %p939 = scmp.eq.s32.totalorder %s117, 0
    %p940 = por %p938, %p939
    %p941 = scmp.ne.s32.totalorder %s933, %s935
    %p942 = scmp.eq.s32.totalorder %s122, 1
    %p943 = por %p941, %p942
    %p944 = scmp.ne.s32.totalorder %s935, %s936
    %p945 = scmp.eq.s32.totalorder %s122, 0
    %p946 = por %p944, %p945
    %p947 = scmp.ne.s32.totalorder %s935, %s936
    %p948 = scmp.eq.s32.totalorder %s123, 1
    %p949 = por %p947, %p948
    %p951 = scmp.ne.s32.totalorder %s936, %s950
    %p952 = scmp.eq.s32.totalorder %s123, 0
    %p953 = por %p951, %p952
    %s955 = sadd.s32 %s954, 1
    %p958 = scmp.eq.s32.totalorder %s117, 1
    %p959 = scmp.ne.s32.totalorder %s954, %s956
    %p960 = scmp.eq.s32.totalorder %s117, 0
    %p961 = por %p959, %p960
    %p962 = scmp.ne.s32.totalorder %s954, %s956
    %p963 = scmp.eq.s32.totalorder %s122, 1
    %p964 = por %p962, %p963
    %p965 = scmp.ne.s32.totalorder %s956, %s957
    %p966 = scmp.eq.s32.totalorder %s122, 0
    %p967 = por %p965, %p966
    %p968 = scmp.ne.s32.totalorder %s956, %s957
    %p969 = scmp.eq.s32.totalorder %s123, 1
    %p970 = por %p968, %p969
    %p972 = scmp.ne.s32.totalorder %s957, %s971
    %p973 = scmp.eq.s32.totalorder %s123, 0
    %p974 = por %p972, %p973
    %s976 = sadd.s32 %s975, 1
    %p979 = scmp.eq.s32.totalorder %s117, 1
    %p980 = scmp.ne.s32.totalorder %s975, %s977
    %p981 = scmp.eq.s32.totalorder %s117, 0
    %p982 = por %p980, %p981
    %p983 = scmp.ne.s32.totalorder %s975, %s977
    %p984 = scmp.eq.s32.totalorder %s122, 1
    %p985 = por %p983, %p984
    %p986 = scmp.ne.s32.totalorder %s977, %s978
    %p987 = scmp.eq.s32.totalorder %s122, 0
    %p988 = por %p986, %p987
    %p989 = scmp.ne.s32.totalorder %s977, %s978
    %p990 = scmp.eq.s32.totalorder %s123, 1
    %p991 = por %p989, %p990
    %p993 = scmp.ne.s32.totalorder %s978, %s992
    %p994 = scmp.eq.s32.totalorder %s123, 0
    %p995 = por %p993, %p994
    %s997 = sadd.s32 %s996, 1
    %p1000 = scmp.eq.s32.totalorder %s117, 1
    %p1001 = scmp.ne.s32.totalorder %s996, %s998
    %p1002 = scmp.eq.s32.totalorder %s117, 0
    %p1003 = por %p1001, %p1002
    %p1004 = scmp.ne.s32.totalorder %s996, %s998
    %p1005 = scmp.eq.s32.totalorder %s122, 1
    %p1006 = por %p1004, %p1005
    %p1007 = scmp.ne.s32.totalorder %s998, %s999
    %p1008 = scmp.eq.s32.totalorder %s122, 0
    %p1009 = por %p1007, %p1008
    %p1010 = scmp.ne.s32.totalorder %s998, %s999
    %p1011 = scmp.eq.s32.totalorder %s123, 1
    %p1012 = por %p1010, %p1011
    %p1014 = scmp.ne.s32.totalorder %s999, %s1013
    %p1015 = scmp.eq.s32.totalorder %s123, 0
    %p1016 = por %p1014, %p1015
    %s1018 = sadd.s32 %s1017, 1
    %p1021 = scmp.eq.s32.totalorder %s117, 1
    %p1022 = scmp.ne.s32.totalorder %s1017, %s1019
    %p1023 = scmp.eq.s32.totalorder %s117, 0
    %p1024 = por %p1022, %p1023
    %p1025 = scmp.ne.s32.totalorder %s1017, %s1019
    %p1026 = scmp.eq.s32.totalorder %s122, 1
    %p1027 = por %p1025, %p1026
    %p1028 = scmp.ne.s32.totalorder %s1019, %s1020
    %p1029 = scmp.eq.s32.totalorder %s122, 0
    %p1030 = por %p1028, %p1029
    %p1031 = scmp.ne.s32.totalorder %s1019, %s1020
    %p1032 = scmp.eq.s32.totalorder %s123, 1
    %p1033 = por %p1031, %p1032
    %p1035 = scmp.ne.s32.totalorder %s1020, %s1034
    %p1036 = scmp.eq.s32.totalorder %s123, 0
    %p1037 = por %p1035, %p1036
    %s1039 = sadd.s32 %s1038, 1
    %p1042 = scmp.eq.s32.totalorder %s117, 1
    %p1043 = scmp.ne.s32.totalorder %s1038, %s1040
    %p1044 = scmp.eq.s32.totalorder %s117, 0
    %p1045 = por %p1043, %p1044
    %p1046 = scmp.ne.s32.totalorder %s1038, %s1040
    %p1047 = scmp.eq.s32.totalorder %s122, 1
    %p1048 = por %p1046, %p1047
    %p1049 = scmp.ne.s32.totalorder %s1040, %s1041
    %p1050 = scmp.eq.s32.totalorder %s122, 0
    %p1051 = por %p1049, %p1050
    %p1052 = scmp.ne.s32.totalorder %s1040, %s1041
    %p1053 = scmp.eq.s32.totalorder %s123, 1
    %p1054 = por %p1052, %p1053
    %p1056 = scmp.ne.s32.totalorder %s1041, %s1055
    %p1057 = scmp.eq.s32.totalorder %s123, 0
    %p1058 = por %p1056, %p1057
    %s1060 = sadd.s32 %s1059, 1
    %p1063 = scmp.eq.s32.totalorder %s117, 1
    %p1064 = scmp.ne.s32.totalorder %s1059, %s1061
    %p1065 = scmp.eq.s32.totalorder %s117, 0
    %p1066 = por %p1064, %p1065
    %p1067 = scmp.ne.s32.totalorder %s1059, %s1061
    %p1068 = scmp.eq.s32.totalorder %s122, 1
    %p1069 = por %p1067, %p1068
    %p1070 = scmp.ne.s32.totalorder %s1061, %s1062
    %p1071 = scmp.eq.s32.totalorder %s122, 0
    %p1072 = por %p1070, %p1071
    %p1073 = scmp.ne.s32.totalorder %s1061, %s1062
    %p1074 = scmp.eq.s32.totalorder %s123, 1
    %p1075 = por %p1073, %p1074
    %p1077 = scmp.ne.s32.totalorder %s1062, %s1076
    %p1078 = scmp.eq.s32.totalorder %s123, 0
    %p1079 = por %p1077, %p1078
    %s1081 = sadd.s32 %s1080, 1
    %p1084 = scmp.eq.s32.totalorder %s117, 1
    %p1085 = scmp.ne.s32.totalorder %s1080, %s1082
    %p1086 = scmp.eq.s32.totalorder %s117, 0
    %p1087 = por %p1085, %p1086
    %p1088 = scmp.ne.s32.totalorder %s1080, %s1082
    %p1089 = scmp.eq.s32.totalorder %s122, 1
    %p1090 = por %p1088, %p1089
    %p1091 = scmp.ne.s32.totalorder %s1082, %s1083
    %p1092 = scmp.eq.s32.totalorder %s122, 0
    %p1093 = por %p1091, %p1092
    %p1094 = scmp.ne.s32.totalorder %s1082, %s1083
    %p1095 = scmp.eq.s32.totalorder %s123, 1
    %p1096 = por %p1094, %p1095
    %p1098 = scmp.ne.s32.totalorder %s1083, %s1097
    %p1099 = scmp.eq.s32.totalorder %s123, 0
    %p1100 = por %p1098, %p1099
    %s1102 = sadd.s32 %s1101, 1
    %p1105 = scmp.eq.s32.totalorder %s117, 1
    %p1106 = scmp.ne.s32.totalorder %s1101, %s1103
    %p1107 = scmp.eq.s32.totalorder %s117, 0
    %p1108 = por %p1106, %p1107
    %p1109 = scmp.ne.s32.totalorder %s1101, %s1103
    %p1110 = scmp.eq.s32.totalorder %s122, 1
    %p1111 = por %p1109, %p1110
    %p1112 = scmp.ne.s32.totalorder %s1103, %s1104
    %p1113 = scmp.eq.s32.totalorder %s122, 0
    %p1114 = por %p1112, %p1113
    %p1115 = scmp.ne.s32.totalorder %s1103, %s1104
    %p1116 = scmp.eq.s32.totalorder %s123, 1
    %p1117 = por %p1115, %p1116
    %p1119 = scmp.ne.s32.totalorder %s1104, %s1118
    %p1120 = scmp.eq.s32.totalorder %s123, 0
    %p1121 = por %p1119, %p1120
    %s1123 = sadd.s32 %s1122, 1
    %p1126 = scmp.eq.s32.totalorder %s117, 1
    %p1127 = scmp.ne.s32.totalorder %s1122, %s1124
    %p1128 = scmp.eq.s32.totalorder %s117, 0
    %p1129 = por %p1127, %p1128
    %p1130 = scmp.ne.s32.totalorder %s1122, %s1124
    %p1131 = scmp.eq.s32.totalorder %s122, 1
    %p1132 = por %p1130, %p1131
    %p1133 = scmp.ne.s32.totalorder %s1124, %s1125
    %p1134 = scmp.eq.s32.totalorder %s122, 0
    %p1135 = por %p1133, %p1134
    %p1136 = scmp.ne.s32.totalorder %s1124, %s1125
    %p1137 = scmp.eq.s32.totalorder %s123, 1
    %p1138 = por %p1136, %p1137
    %p1140 = scmp.ne.s32.totalorder %s1125, %s1139
    %p1141 = scmp.eq.s32.totalorder %s123, 0
    %p1142 = por %p1140, %p1141
    %s1144 = sadd.s32 %s1143, 1
    %p1147 = scmp.eq.s32.totalorder %s117, 1
    %p1148 = scmp.ne.s32.totalorder %s1143, %s1145
    %p1149 = scmp.eq.s32.totalorder %s117, 0
    %p1150 = por %p1148, %p1149
    %p1151 = scmp.ne.s32.totalorder %s1143, %s1145
    %p1152 = scmp.eq.s32.totalorder %s122, 1
    %p1153 = por %p1151, %p1152
    %p1154 = scmp.ne.s32.totalorder %s1145, %s1146
    %p1155 = scmp.eq.s32.totalorder %s122, 0
    %p1156 = por %p1154, %p1155
    %p1157 = scmp.ne.s32.totalorder %s1145, %s1146
    %p1158 = scmp.eq.s32.totalorder %s123, 1
    %p1159 = por %p1157, %p1158
    %p1161 = scmp.ne.s32.totalorder %s1146, %s1160
    %p1162 = scmp.eq.s32.totalorder %s123, 0
    %p1163 = por %p1161, %p1162
    %s1165 = sadd.s32 %s1164, 1
    %p1168 = scmp.eq.s32.totalorder %s117, 1
    %p1169 = scmp.ne.s32.totalorder %s1164, %s1166
    %p1170 = scmp.eq.s32.totalorder %s117, 0
    %p1171 = por %p1169, %p1170
    %p1172 = scmp.ne.s32.totalorder %s1164, %s1166
    %p1173 = scmp.eq.s32.totalorder %s122, 1
    %p1174 = por %p1172, %p1173
    %p1175 = scmp.ne.s32.totalorder %s1166, %s1167
    %p1176 = scmp.eq.s32.totalorder %s122, 0
    %p1177 = por %p1175, %p1176
    %p1178 = scmp.ne.s32.totalorder %s1166, %s1167
    %p1179 = scmp.eq.s32.totalorder %s123, 1
    %p1180 = por %p1178, %p1179
    %p1182 = scmp.ne.s32.totalorder %s1167, %s1181
    %p1183 = scmp.eq.s32.totalorder %s123, 0
    %p1184 = por %p1182, %p1183
    %s1186 = sadd.s32 %s1185, 1
    %p1189 = scmp.eq.s32.totalorder %s117, 1
    %p1190 = scmp.ne.s32.totalorder %s1185, %s1187
    %p1191 = scmp.eq.s32.totalorder %s117, 0
    %p1192 = por %p1190, %p1191
    %p1193 = scmp.ne.s32.totalorder %s1185, %s1187
    %p1194 = scmp.eq.s32.totalorder %s122, 1
    %p1195 = por %p1193, %p1194
    %p1196 = scmp.ne.s32.totalorder %s1187, %s1188
    %p1197 = scmp.eq.s32.totalorder %s122, 0
    %p1198 = por %p1196, %p1197
    %p1199 = scmp.ne.s32.totalorder %s1187, %s1188
    %p1200 = scmp.eq.s32.totalorder %s123, 1
    %p1201 = por %p1199, %p1200
    %p1203 = scmp.ne.s32.totalorder %s1188, %s1202
    %p1204 = scmp.eq.s32.totalorder %s123, 0
    %p1205 = por %p1203, %p1204
    %s1207 = sadd.s32 %s1206, 1
    %p1210 = scmp.eq.s32.totalorder %s117, 1
    %p1211 = scmp.ne.s32.totalorder %s1206, %s1208
    %p1212 = scmp.eq.s32.totalorder %s117, 0
    %p1213 = por %p1211, %p1212
    %p1214 = scmp.ne.s32.totalorder %s1206, %s1208
    %p1215 = scmp.eq.s32.totalorder %s122, 1
    %p1216 = por %p1214, %p1215
    %p1217 = scmp.ne.s32.totalorder %s1208, %s1209
    %p1218 = scmp.eq.s32.totalorder %s122, 0
    %p1219 = por %p1217, %p1218
    %p1220 = scmp.ne.s32.totalorder %s1208, %s1209
    %p1221 = scmp.eq.s32.totalorder %s123, 1
    %p1222 = por %p1220, %p1221
    %p1224 = scmp.ne.s32.totalorder %s1209, %s1223
    %p1225 = scmp.eq.s32.totalorder %s123, 0
    %p1226 = por %p1224, %p1225
    %s1228 = sadd.s32 %s1227, 1
    %p1231 = scmp.eq.s32.totalorder %s117, 1
    %p1232 = scmp.ne.s32.totalorder %s1227, %s1229
    %p1233 = scmp.eq.s32.totalorder %s117, 0
    %p1234 = por %p1232, %p1233
    %p1235 = scmp.ne.s32.totalorder %s1227, %s1229
    %p1236 = scmp.eq.s32.totalorder %s122, 1
    %p1237 = por %p1235, %p1236
    %p1238 = scmp.ne.s32.totalorder %s1229, %s1230
    %p1239 = scmp.eq.s32.totalorder %s122, 0
    %p1240 = por %p1238, %p1239
    %p1241 = scmp.ne.s32.totalorder %s1229, %s1230
    %p1242 = scmp.eq.s32.totalorder %s123, 1
    %p1243 = por %p1241, %p1242
    %p1245 = scmp.ne.s32.totalorder %s1230, %s1244
    %p1246 = scmp.eq.s32.totalorder %s123, 0
    %p1247 = por %p1245, %p1246
    %s1249 = sadd.s32 %s1248, 1
    %p1252 = scmp.eq.s32.totalorder %s117, 1
    %p1253 = scmp.ne.s32.totalorder %s1248, %s1250
    %p1254 = scmp.eq.s32.totalorder %s117, 0
    %p1255 = por %p1253, %p1254
    %p1256 = scmp.ne.s32.totalorder %s1248, %s1250
    %p1257 = scmp.eq.s32.totalorder %s122, 1
    %p1258 = por %p1256, %p1257
    %p1259 = scmp.ne.s32.totalorder %s1250, %s1251
    %p1260 = scmp.eq.s32.totalorder %s122, 0
    %p1261 = por %p1259, %p1260
    %p1262 = scmp.ne.s32.totalorder %s1250, %s1251
    %p1263 = scmp.eq.s32.totalorder %s123, 1
    %p1264 = por %p1262, %p1263
    %p1266 = scmp.ne.s32.totalorder %s1251, %s1265
    %p1267 = scmp.eq.s32.totalorder %s123, 0
    %p1268 = por %p1266, %p1267
    %s1270 = sadd.s32 %s1269, 1
    %p1273 = scmp.eq.s32.totalorder %s117, 1
    %p1274 = scmp.ne.s32.totalorder %s1269, %s1271
    %p1275 = scmp.eq.s32.totalorder %s117, 0
    %p1276 = por %p1274, %p1275
    %p1277 = scmp.ne.s32.totalorder %s1269, %s1271
    %p1278 = scmp.eq.s32.totalorder %s122, 1
    %p1279 = por %p1277, %p1278
    %p1280 = scmp.ne.s32.totalorder %s1271, %s1272
    %p1281 = scmp.eq.s32.totalorder %s122, 0
    %p1282 = por %p1280, %p1281
    %p1283 = scmp.ne.s32.totalorder %s1271, %s1272
    %p1284 = scmp.eq.s32.totalorder %s123, 1
    %p1285 = por %p1283, %p1284
    %p1287 = scmp.ne.s32.totalorder %s1272, %s1286
    %p1288 = scmp.eq.s32.totalorder %s123, 0
    %p1289 = por %p1287, %p1288
    %s1290 = ssub.s32 %s117, %s124
    %p1291 = scmp.eq.s32.totalorder %s1290, 0
    %s1293 = sadd.s32 %s1292, 1
    %s1294 = scalar_select %p1291, %s1292, %s1293
    %p1297 = pneg %p1291
    %p1298 = scmp.eq.s32.totalorder %s117, 1
    %p1299 = por %p1297, %p1298
    %p1300 = scmp.ne.s32.totalorder %s1292, %s1295
    %p1301 = scmp.eq.s32.totalorder %s117, 0
    %p1302 = por %p1300, %p1301
    %p1303 = scmp.ne.s32.totalorder %s1292, %s1295
    %p1304 = scmp.eq.s32.totalorder %s122, 1
    %p1305 = por %p1303, %p1304
    %p1306 = scmp.ne.s32.totalorder %s1295, %s1296
    %p1307 = scmp.eq.s32.totalorder %s122, 0
    %p1308 = por %p1306, %p1307
    %p1309 = scmp.ne.s32.totalorder %s1295, %s1296
    %p1310 = scmp.eq.s32.totalorder %s123, 1
    %p1311 = por %p1309, %p1310
    %p1313 = scmp.ne.s32.totalorder %s1296, %s1312
    %p1314 = scmp.eq.s32.totalorder %s123, 0
    %p1315 = por %p1313, %p1314
    %p1316 = scmp.le.s32.totalorder 1, %s117
    %p1317 = scmp.lt.s32.totalorder %s117, 3
    %p1318 = pnand %p1316, %p1317
    %p1319 = pneg %p1318
    // Predicated region
    $region9: #{detr_forward.1} parent=5 // pred_check
      _
    $region10: #{detr_forward.1} parent=5 // pred_check_branch
      %1321 = sbr.rel (%p1318) target = $region12
    $region11: #{detr_forward.1} parent=5 // pred_region
      %s1322 = ssub.s32 %s117, 1
      // Predicated region
      $region13: #{detr_forward.1} parent=11 // pred_check
        %p1323 = pneg %p190
      $region14: #{detr_forward.1} parent=11 // pred_check_branch
        %1325 = sbr.rel (%p1323) target = $region16
      $region15: #{detr_forward.1} parent=11 // pred_region
        _
      $region16: #{detr_forward.1} parent=11 // pred_fallthru
        _
      // Predicated region
      $region17: #{detr_forward.1} parent=11 // pred_check
        %p1326 = pneg %p211
      $region18: #{detr_forward.1} parent=11 // pred_check_branch
        %1328 = sbr.rel (%p1326) target = $region20
      $region19: #{detr_forward.1} parent=11 // pred_region
        _
      $region20: #{detr_forward.1} parent=11 // pred_fallthru
        _
      // Predicated region
      $region21: #{detr_forward.1} parent=11 // pred_check
        %p1329 = pneg %p232
      $region22: #{detr_forward.1} parent=11 // pred_check_branch
        %1331 = sbr.rel (%p1329) target = $region24
      $region23: #{detr_forward.1} parent=11 // pred_region
        _
      $region24: #{detr_forward.1} parent=11 // pred_fallthru
        _
      // Predicated region
      $region25: #{detr_forward.1} parent=11 // pred_check
        %p1332 = pneg %p253
      $region26: #{detr_forward.1} parent=11 // pred_check_branch
        %1334 = sbr.rel (%p1332) target = $region28
      $region27: #{detr_forward.1} parent=11 // pred_region
        _
      $region28: #{detr_forward.1} parent=11 // pred_fallthru
        _
      // Predicated region
      $region29: #{detr_forward.1} parent=11 // pred_check
        %p1335 = pneg %p274
      $region30: #{detr_forward.1} parent=11 // pred_check_branch
        %1337 = sbr.rel (%p1335) target = $region32
      $region31: #{detr_forward.1} parent=11 // pred_region
        _
      $region32: #{detr_forward.1} parent=11 // pred_fallthru
        _
      // Predicated region
      $region33: #{detr_forward.1} parent=11 // pred_check
        %p1338 = pneg %p295
      $region34: #{detr_forward.1} parent=11 // pred_check_branch
        %1340 = sbr.rel (%p1338) target = $region36
      $region35: #{detr_forward.1} parent=11 // pred_region
        _
      $region36: #{detr_forward.1} parent=11 // pred_fallthru
        _
      // Predicated region
      $region37: #{detr_forward.1} parent=11 // pred_check
        %p1341 = pneg %p316
      $region38: #{detr_forward.1} parent=11 // pred_check_branch
        %1343 = sbr.rel (%p1341) target = $region40
      $region39: #{detr_forward.1} parent=11 // pred_region
        _
      $region40: #{detr_forward.1} parent=11 // pred_fallthru
        _
      // Predicated region
      $region41: #{detr_forward.1} parent=11 // pred_check
        %p1344 = pneg %p337
      $region42: #{detr_forward.1} parent=11 // pred_check_branch
        %1346 = sbr.rel (%p1344) target = $region44
      $region43: #{detr_forward.1} parent=11 // pred_region
        _
      $region44: #{detr_forward.1} parent=11 // pred_fallthru
        _
      // Predicated region
      $region45: #{detr_forward.1} parent=11 // pred_check
        %p1347 = pneg %p358
      $region46: #{detr_forward.1} parent=11 // pred_check_branch
        %1349 = sbr.rel (%p1347) target = $region48
      $region47: #{detr_forward.1} parent=11 // pred_region
        _
      $region48: #{detr_forward.1} parent=11 // pred_fallthru
        _
      // Predicated region
      $region49: #{detr_forward.1} parent=11 // pred_check
        %p1350 = pneg %p379
      $region50: #{detr_forward.1} parent=11 // pred_check_branch
        %1352 = sbr.rel (%p1350) target = $region52
      $region51: #{detr_forward.1} parent=11 // pred_region
        _
      $region52: #{detr_forward.1} parent=11 // pred_fallthru
        _
      // Predicated region
      $region53: #{detr_forward.1} parent=11 // pred_check
        %p1353 = pneg %p400
      $region54: #{detr_forward.1} parent=11 // pred_check_branch
        %1355 = sbr.rel (%p1353) target = $region56
      $region55: #{detr_forward.1} parent=11 // pred_region
        _
      $region56: #{detr_forward.1} parent=11 // pred_fallthru
        _
      // Predicated region
      $region57: #{detr_forward.1} parent=11 // pred_check
        %p1356 = pneg %p421
      $region58: #{detr_forward.1} parent=11 // pred_check_branch
        %1358 = sbr.rel (%p1356) target = $region60
      $region59: #{detr_forward.1} parent=11 // pred_region
        _
      $region60: #{detr_forward.1} parent=11 // pred_fallthru
        _
      // Predicated region
      $region61: #{detr_forward.1} parent=11 // pred_check
        %p1359 = pneg %p442
      $region62: #{detr_forward.1} parent=11 // pred_check_branch
        %1361 = sbr.rel (%p1359) target = $region64
      $region63: #{detr_forward.1} parent=11 // pred_region
        _
      $region64: #{detr_forward.1} parent=11 // pred_fallthru
        _
      // Predicated region
      $region65: #{detr_forward.1} parent=11 // pred_check
        %p1362 = pneg %p463
      $region66: #{detr_forward.1} parent=11 // pred_check_branch
        %1364 = sbr.rel (%p1362) target = $region68
      $region67: #{detr_forward.1} parent=11 // pred_region
        _
      $region68: #{detr_forward.1} parent=11 // pred_fallthru
        _
      // Predicated region
      $region69: #{detr_forward.1} parent=11 // pred_check
        %p1365 = pneg %p484
      $region70: #{detr_forward.1} parent=11 // pred_check_branch
        %1367 = sbr.rel (%p1365) target = $region72
      $region71: #{detr_forward.1} parent=11 // pred_region
        _
      $region72: #{detr_forward.1} parent=11 // pred_fallthru
        _
      // Predicated region
      $region73: #{detr_forward.1} parent=11 // pred_check
        %p1368 = pneg %p505
      $region74: #{detr_forward.1} parent=11 // pred_check_branch
        %1370 = sbr.rel (%p1368) target = $region76
      $region75: #{detr_forward.1} parent=11 // pred_region
        _
      $region76: #{detr_forward.1} parent=11 // pred_fallthru
        _
      // Predicated region
      $region77: #{detr_forward.1} parent=11 // pred_check
        %p1371 = pneg %p526
      $region78: #{detr_forward.1} parent=11 // pred_check_branch
        %1373 = sbr.rel (%p1371) target = $region80
      $region79: #{detr_forward.1} parent=11 // pred_region
        _
      $region80: #{detr_forward.1} parent=11 // pred_fallthru
        _
      // Predicated region
      $region81: #{detr_forward.1} parent=11 // pred_check
        %p1374 = pneg %p547
      $region82: #{detr_forward.1} parent=11 // pred_check_branch
        %1376 = sbr.rel (%p1374) target = $region84
      $region83: #{detr_forward.1} parent=11 // pred_region
        _
      $region84: #{detr_forward.1} parent=11 // pred_fallthru
        _
      // Predicated region
      $region85: #{detr_forward.1} parent=11 // pred_check
        %p1377 = pneg %p568
      $region86: #{detr_forward.1} parent=11 // pred_check_branch
        %1379 = sbr.rel (%p1377) target = $region88
      $region87: #{detr_forward.1} parent=11 // pred_region
        _
      $region88: #{detr_forward.1} parent=11 // pred_fallthru
        _
      // Predicated region
      $region89: #{detr_forward.1} parent=11 // pred_check
        %p1380 = pneg %p589
      $region90: #{detr_forward.1} parent=11 // pred_check_branch
        %1382 = sbr.rel (%p1380) target = $region92
      $region91: #{detr_forward.1} parent=11 // pred_region
        _
      $region92: #{detr_forward.1} parent=11 // pred_fallthru
        _
      // Predicated region
      $region93: #{detr_forward.1} parent=11 // pred_check
        %p1383 = pneg %p610
      $region94: #{detr_forward.1} parent=11 // pred_check_branch
        %1385 = sbr.rel (%p1383) target = $region96
      $region95: #{detr_forward.1} parent=11 // pred_region
        _
      $region96: #{detr_forward.1} parent=11 // pred_fallthru
        _
      // Predicated region
      $region97: #{detr_forward.1} parent=11 // pred_check
        %p1386 = pneg %p631
      $region98: #{detr_forward.1} parent=11 // pred_check_branch
        %1388 = sbr.rel (%p1386) target = $region100
      $region99: #{detr_forward.1} parent=11 // pred_region
        _
      $region100: #{detr_forward.1} parent=11 // pred_fallthru
        _
      // Predicated region
      $region101: #{detr_forward.1} parent=11 // pred_check
        %p1389 = pneg %p652
      $region102: #{detr_forward.1} parent=11 // pred_check_branch
        %1391 = sbr.rel (%p1389) target = $region104
      $region103: #{detr_forward.1} parent=11 // pred_region
        _
      $region104: #{detr_forward.1} parent=11 // pred_fallthru
        _
      // Predicated region
      $region105: #{detr_forward.1} parent=11 // pred_check
        %p1392 = pneg %p673
      $region106: #{detr_forward.1} parent=11 // pred_check_branch
        %1394 = sbr.rel (%p1392) target = $region108
      $region107: #{detr_forward.1} parent=11 // pred_region
        _
      $region108: #{detr_forward.1} parent=11 // pred_fallthru
        _
      // Predicated region
      $region109: #{detr_forward.1} parent=11 // pred_check
        %p1395 = pneg %p694
      $region110: #{detr_forward.1} parent=11 // pred_check_branch
        %1397 = sbr.rel (%p1395) target = $region112
      $region111: #{detr_forward.1} parent=11 // pred_region
        _
      $region112: #{detr_forward.1} parent=11 // pred_fallthru
        _
      // Predicated region
      $region113: #{detr_forward.1} parent=11 // pred_check
        %p1398 = pneg %p715
      $region114: #{detr_forward.1} parent=11 // pred_check_branch
        %1400 = sbr.rel (%p1398) target = $region116
      $region115: #{detr_forward.1} parent=11 // pred_region
        _
      $region116: #{detr_forward.1} parent=11 // pred_fallthru
        _
      // Predicated region
      $region117: #{detr_forward.1} parent=11 // pred_check
        %p1401 = pneg %p736
      $region118: #{detr_forward.1} parent=11 // pred_check_branch
        %1403 = sbr.rel (%p1401) target = $region120
      $region119: #{detr_forward.1} parent=11 // pred_region
        _
      $region120: #{detr_forward.1} parent=11 // pred_fallthru
        _
      // Predicated region
      $region121: #{detr_forward.1} parent=11 // pred_check
        %p1404 = pneg %p757
      $region122: #{detr_forward.1} parent=11 // pred_check_branch
        %1406 = sbr.rel (%p1404) target = $region124
      $region123: #{detr_forward.1} parent=11 // pred_region
        _
      $region124: #{detr_forward.1} parent=11 // pred_fallthru
        _
      // Predicated region
      $region125: #{detr_forward.1} parent=11 // pred_check
        %p1407 = pneg %p778
      $region126: #{detr_forward.1} parent=11 // pred_check_branch
        %1409 = sbr.rel (%p1407) target = $region128
      $region127: #{detr_forward.1} parent=11 // pred_region
        _
      $region128: #{detr_forward.1} parent=11 // pred_fallthru
        _
      // Predicated region
      $region129: #{detr_forward.1} parent=11 // pred_check
        %p1410 = pneg %p799
      $region130: #{detr_forward.1} parent=11 // pred_check_branch
        %1412 = sbr.rel (%p1410) target = $region132
      $region131: #{detr_forward.1} parent=11 // pred_region
        _
      $region132: #{detr_forward.1} parent=11 // pred_fallthru
        _
      // Predicated region
      $region133: #{detr_forward.1} parent=11 // pred_check
        %p1413 = pneg %p820
      $region134: #{detr_forward.1} parent=11 // pred_check_branch
        %1415 = sbr.rel (%p1413) target = $region136
      $region135: #{detr_forward.1} parent=11 // pred_region
        _
      $region136: #{detr_forward.1} parent=11 // pred_fallthru
        _
      // Predicated region
      $region137: #{detr_forward.1} parent=11 // pred_check
        %p1416 = pneg %p841
      $region138: #{detr_forward.1} parent=11 // pred_check_branch
        %1418 = sbr.rel (%p1416) target = $region140
      $region139: #{detr_forward.1} parent=11 // pred_region
        _
      $region140: #{detr_forward.1} parent=11 // pred_fallthru
        _
      // Predicated region
      $region141: #{detr_forward.1} parent=11 // pred_check
        %p1419 = pneg %p862
      $region142: #{detr_forward.1} parent=11 // pred_check_branch
        %1421 = sbr.rel (%p1419) target = $region144
      $region143: #{detr_forward.1} parent=11 // pred_region
        _
      $region144: #{detr_forward.1} parent=11 // pred_fallthru
        _
      // Predicated region
      $region145: #{detr_forward.1} parent=11 // pred_check
        %p1422 = pneg %p883
      $region146: #{detr_forward.1} parent=11 // pred_check_branch
        %1424 = sbr.rel (%p1422) target = $region148
      $region147: #{detr_forward.1} parent=11 // pred_region
        _
      $region148: #{detr_forward.1} parent=11 // pred_fallthru
        _
      // Predicated region
      $region149: #{detr_forward.1} parent=11 // pred_check
        %p1425 = pneg %p904
      $region150: #{detr_forward.1} parent=11 // pred_check_branch
        %1427 = sbr.rel (%p1425) target = $region152
      $region151: #{detr_forward.1} parent=11 // pred_region
        _
      $region152: #{detr_forward.1} parent=11 // pred_fallthru
        _
      // Predicated region
      $region153: #{detr_forward.1} parent=11 // pred_check
        %p1428 = pneg %p925
      $region154: #{detr_forward.1} parent=11 // pred_check_branch
        %1430 = sbr.rel (%p1428) target = $region156
      $region155: #{detr_forward.1} parent=11 // pred_region
        _
      $region156: #{detr_forward.1} parent=11 // pred_fallthru
        _
      // Predicated region
      $region157: #{detr_forward.1} parent=11 // pred_check
        %p1431 = pneg %p946
      $region158: #{detr_forward.1} parent=11 // pred_check_branch
        %1433 = sbr.rel (%p1431) target = $region160
      $region159: #{detr_forward.1} parent=11 // pred_region
        _
      $region160: #{detr_forward.1} parent=11 // pred_fallthru
        _
      // Predicated region
      $region161: #{detr_forward.1} parent=11 // pred_check
        %p1434 = pneg %p967
      $region162: #{detr_forward.1} parent=11 // pred_check_branch
        %1436 = sbr.rel (%p1434) target = $region164
      $region163: #{detr_forward.1} parent=11 // pred_region
        _
      $region164: #{detr_forward.1} parent=11 // pred_fallthru
        _
      // Predicated region
      $region165: #{detr_forward.1} parent=11 // pred_check
        %p1437 = pneg %p988
      $region166: #{detr_forward.1} parent=11 // pred_check_branch
        %1439 = sbr.rel (%p1437) target = $region168
      $region167: #{detr_forward.1} parent=11 // pred_region
        _
      $region168: #{detr_forward.1} parent=11 // pred_fallthru
        _
      // Predicated region
      $region169: #{detr_forward.1} parent=11 // pred_check
        %p1440 = pneg %p1009
      $region170: #{detr_forward.1} parent=11 // pred_check_branch
        %1442 = sbr.rel (%p1440) target = $region172
      $region171: #{detr_forward.1} parent=11 // pred_region
        _
      $region172: #{detr_forward.1} parent=11 // pred_fallthru
        _
      // Predicated region
      $region173: #{detr_forward.1} parent=11 // pred_check
        %p1443 = pneg %p1030
      $region174: #{detr_forward.1} parent=11 // pred_check_branch
        %1445 = sbr.rel (%p1443) target = $region176
      $region175: #{detr_forward.1} parent=11 // pred_region
        _
      $region176: #{detr_forward.1} parent=11 // pred_fallthru
        _
      // Predicated region
      $region177: #{detr_forward.1} parent=11 // pred_check
        %p1446 = pneg %p1051
      $region178: #{detr_forward.1} parent=11 // pred_check_branch
        %1448 = sbr.rel (%p1446) target = $region180
      $region179: #{detr_forward.1} parent=11 // pred_region
        _
      $region180: #{detr_forward.1} parent=11 // pred_fallthru
        _
      // Predicated region
      $region181: #{detr_forward.1} parent=11 // pred_check
        %p1449 = pneg %p1072
      $region182: #{detr_forward.1} parent=11 // pred_check_branch
        %1451 = sbr.rel (%p1449) target = $region184
      $region183: #{detr_forward.1} parent=11 // pred_region
        _
      $region184: #{detr_forward.1} parent=11 // pred_fallthru
        _
      // Predicated region
      $region185: #{detr_forward.1} parent=11 // pred_check
        %p1452 = pneg %p1093
      $region186: #{detr_forward.1} parent=11 // pred_check_branch
        %1454 = sbr.rel (%p1452) target = $region188
      $region187: #{detr_forward.1} parent=11 // pred_region
        _
      $region188: #{detr_forward.1} parent=11 // pred_fallthru
        _
      // Predicated region
      $region189: #{detr_forward.1} parent=11 // pred_check
        %p1455 = pneg %p1114
      $region190: #{detr_forward.1} parent=11 // pred_check_branch
        %1457 = sbr.rel (%p1455) target = $region192
      $region191: #{detr_forward.1} parent=11 // pred_region
        _
      $region192: #{detr_forward.1} parent=11 // pred_fallthru
        _
      // Predicated region
      $region193: #{detr_forward.1} parent=11 // pred_check
        %p1458 = pneg %p1135
      $region194: #{detr_forward.1} parent=11 // pred_check_branch
        %1460 = sbr.rel (%p1458) target = $region196
      $region195: #{detr_forward.1} parent=11 // pred_region
        _
      $region196: #{detr_forward.1} parent=11 // pred_fallthru
        _
      // Predicated region
      $region197: #{detr_forward.1} parent=11 // pred_check
        %p1461 = pneg %p1156
      $region198: #{detr_forward.1} parent=11 // pred_check_branch
        %1463 = sbr.rel (%p1461) target = $region200
      $region199: #{detr_forward.1} parent=11 // pred_region
        _
      $region200: #{detr_forward.1} parent=11 // pred_fallthru
        _
      // Predicated region
      $region201: #{detr_forward.1} parent=11 // pred_check
        %p1464 = pneg %p1177
      $region202: #{detr_forward.1} parent=11 // pred_check_branch
        %1466 = sbr.rel (%p1464) target = $region204
      $region203: #{detr_forward.1} parent=11 // pred_region
        _
      $region204: #{detr_forward.1} parent=11 // pred_fallthru
        _
      // Predicated region
      $region205: #{detr_forward.1} parent=11 // pred_check
        %p1467 = pneg %p1198
      $region206: #{detr_forward.1} parent=11 // pred_check_branch
        %1469 = sbr.rel (%p1467) target = $region208
      $region207: #{detr_forward.1} parent=11 // pred_region
        _
      $region208: #{detr_forward.1} parent=11 // pred_fallthru
        _
      // Predicated region
      $region209: #{detr_forward.1} parent=11 // pred_check
        %p1470 = pneg %p1219
      $region210: #{detr_forward.1} parent=11 // pred_check_branch
        %1472 = sbr.rel (%p1470) target = $region212
      $region211: #{detr_forward.1} parent=11 // pred_region
        _
      $region212: #{detr_forward.1} parent=11 // pred_fallthru
        _
      // Predicated region
      $region213: #{detr_forward.1} parent=11 // pred_check
        %p1473 = pneg %p1240
      $region214: #{detr_forward.1} parent=11 // pred_check_branch
        %1475 = sbr.rel (%p1473) target = $region216
      $region215: #{detr_forward.1} parent=11 // pred_region
        _
      $region216: #{detr_forward.1} parent=11 // pred_fallthru
        _
      // Predicated region
      $region217: #{detr_forward.1} parent=11 // pred_check
        %p1476 = pneg %p1261
      $region218: #{detr_forward.1} parent=11 // pred_check_branch
        %1478 = sbr.rel (%p1476) target = $region220
      $region219: #{detr_forward.1} parent=11 // pred_region
        _
      $region220: #{detr_forward.1} parent=11 // pred_fallthru
        _
      // Predicated region
      $region221: #{detr_forward.1} parent=11 // pred_check
        %p1479 = pneg %p1282
      $region222: #{detr_forward.1} parent=11 // pred_check_branch
        %1481 = sbr.rel (%p1479) target = $region224
      $region223: #{detr_forward.1} parent=11 // pred_region
        _
      $region224: #{detr_forward.1} parent=11 // pred_fallthru
        _
    $region12: #{detr_forward.1} parent=5 // pred_fallthru
      _
    %p1482 = scmp.lt.s32.totalorder %s117, 2
    // Predicated region
    $region225: #{detr_forward.1} parent=5 // pred_check
      %p1483 = pneg %p1482
    $region226: #{detr_forward.1} parent=5 // pred_check_branch
      %1485 = sbr.rel (%p1483) target = $region228
    $region227: #{detr_forward.1} parent=5 // pred_region
      // Predicated region
      $region229: #{detr_forward.1} parent=227 // pred_check
        %p1486 = pneg %p137
      $region230: #{detr_forward.1} parent=227 // pred_check_branch
        %1488 = sbr.rel (%p1486) target = $region232
      $region231: #{detr_forward.1} parent=227 // pred_region
        %p1489 = scmp.lt.s32.totalorder %s117, 1
        %s1490 = scalar_select %p1489, %s117, 1
        %s1491 = smul.addr %s1490, 2
        %s1492 = smul.addr %s1491, 8
        %s1493 = scalar_lea.vmem %s1, %s1492
      $region232: #{detr_forward.1} parent=227 // pred_fallthru
        _
      // Predicated region
      $region233: #{detr_forward.1} parent=227 // pred_check
        %p1494 = pneg %p163
      $region234: #{detr_forward.1} parent=227 // pred_check_branch
        %1496 = sbr.rel (%p1494) target = $region236
      $region235: #{detr_forward.1} parent=227 // pred_region
        %p1497 = scmp.lt.s32.totalorder %s117, 1
        %s1498 = scalar_select %p1497, %s117, 1
        %s1499 = smul.addr %s1498, 2
        %s1500 = smul.addr %s1499, 8
        %s1501 = scalar_lea.vmem %s3, %s1500
      $region236: #{detr_forward.1} parent=227 // pred_fallthru
        _
    $region228: #{detr_forward.1} parent=5 // pred_fallthru
      _
    %p1502 = scmp.le.s32.totalorder 1, %s117
    %p1503 = scmp.lt.s32.totalorder %s117, 3
    %p1504 = pnand %p1502, %p1503
    %p1505 = pneg %p1504
    // Predicated region
    $region237: #{detr_forward.1} parent=5 // pred_check
      _
    $region238: #{detr_forward.1} parent=5 // pred_check_branch
      %1507 = sbr.rel (%p1504) target = $region240
    $region239: #{detr_forward.1} parent=5 // pred_region
      %s1508 = ssub.s32 %s117, 1
      %p1509 = scmp.lt.s32.totalorder %s122, 1
      %s1510 = scalar_select %p1509, %s122, 1
      %s1511 = smul.addr %s1510, 2
      %s1512 = smul.addr %s1511, 8
      %s1513 = scalar_lea.vmem %s1, %s1512
      %p1514 = pneg %p143
      %p1515 = pneg %p140
      %p1516 = scmp.lt.s32.totalorder %s122, 1
      %s1517 = scalar_select %p1516, %s122, 1
      %s1518 = smul.addr %s1517, 2
      %s1519 = smul.addr %s1518, 8
      %s1520 = scalar_lea.vmem %s3, %s1519
      %p1521 = pneg %p169
      %p1522 = pneg %p166
      %p1523 = pneg %p190
      %p1524 = pneg %p187
      %p1525 = pneg %p211
      %p1526 = pneg %p208
      %p1527 = pneg %p232
      %p1528 = pneg %p229
      %p1529 = pneg %p253
      %p1530 = pneg %p250
      %p1531 = pneg %p274
      %p1532 = pneg %p271
      %p1533 = pneg %p295
      %p1534 = pneg %p292
      %p1535 = pneg %p316
      %p1536 = pneg %p313
      %p1537 = pneg %p337
      %p1538 = pneg %p334
      %p1539 = pneg %p358
      %p1540 = pneg %p355
      %p1541 = pneg %p379
      %p1542 = pneg %p376
      %p1543 = pneg %p400
      %p1544 = pneg %p397
      %p1545 = pneg %p421
      %p1546 = pneg %p418
      %p1547 = pneg %p442
      %p1548 = pneg %p439
      %p1549 = pneg %p463
      %p1550 = pneg %p460
      %p1551 = pneg %p484
      %p1552 = pneg %p481
      %p1553 = pneg %p505
      %p1554 = pneg %p502
      %p1555 = pneg %p526
      %p1556 = pneg %p523
      %p1557 = pneg %p547
      %p1558 = pneg %p544
      %p1559 = pneg %p568
      %p1560 = pneg %p565
      %p1561 = pneg %p589
      %p1562 = pneg %p586
      %p1563 = pneg %p610
      %p1564 = pneg %p607
      %p1565 = pneg %p631
      %p1566 = pneg %p628
      %p1567 = pneg %p652
      %p1568 = pneg %p649
      %p1569 = pneg %p673
      %p1570 = pneg %p670
      %p1571 = pneg %p694
      %p1572 = pneg %p691
      %p1573 = pneg %p715
      %p1574 = pneg %p712
      %p1575 = pneg %p736
      %p1576 = pneg %p733
      %p1577 = pneg %p757
      %p1578 = pneg %p754
      %p1579 = pneg %p778
      %p1580 = pneg %p775
      %p1581 = pneg %p799
      %p1582 = pneg %p796
      %p1583 = pneg %p820
      %p1584 = pneg %p817
      %p1585 = pneg %p841
      %p1586 = pneg %p838
      %p1587 = pneg %p862
      %p1588 = pneg %p859
      %p1589 = pneg %p883
      %p1590 = pneg %p880
      %p1591 = pneg %p904
      %p1592 = pneg %p901
      %p1593 = pneg %p925
      %p1594 = pneg %p922
      %p1595 = pneg %p946
      %p1596 = pneg %p943
      %p1597 = pneg %p967
      %p1598 = pneg %p964
      %p1599 = pneg %p988
      %p1600 = pneg %p985
      %p1601 = pneg %p1009
      %p1602 = pneg %p1006
      %p1603 = pneg %p1030
      %p1604 = pneg %p1027
      %p1605 = pneg %p1051
      %p1606 = pneg %p1048
      %p1607 = pneg %p1072
      %p1608 = pneg %p1069
      %p1609 = pneg %p1093
      %p1610 = pneg %p1090
      %p1611 = pneg %p1114
      %p1612 = pneg %p1111
      %p1613 = pneg %p1135
      %p1614 = pneg %p1132
      %p1615 = pneg %p1156
      %p1616 = pneg %p1153
      %p1617 = pneg %p1177
      %p1618 = pneg %p1174
      %p1619 = pneg %p1198
      %p1620 = pneg %p1195
      %p1621 = pneg %p1219
      %p1622 = pneg %p1216
      %p1623 = pneg %p1240
      %p1624 = pneg %p1237
      %p1625 = pneg %p1261
      %p1626 = pneg %p1258
      %p1627 = pneg %p1282
      %p1628 = pneg %p1279
      %p1629 = pneg %p1308
      %p1630 = pneg %p1305
      %p1631 = scmp.lt.s32.totalorder %s122, 1
      %s1632 = scalar_select %p1631, %s122, 1
      %s1633 = smul.addr %s1632, 8
      %s1634 = scalar_lea.vmem %s111, %s1633
      %p1635 = scmp.lt.s32.totalorder %s122, 1
      %s1636 = scalar_select %p1635, %s122, 1
      %s1637 = smul.addr %s1636, 2
      %s1638 = smul.addr %s1637, 8
      %s1639 = scalar_lea.vmem %s1, %s1638
      %p1640 = scmp.lt.s32.totalorder %s122, 1
      %s1641 = scalar_select %p1640, %s122, 1
      %s1642 = smul.addr %s1641, 2
      %s1643 = smul.addr %s1642, 8
      %s1644 = scalar_lea.vmem %s3, %s1643
      %p1645 = scmp.lt.s32.totalorder %s122, 1
      %s1646 = scalar_select %p1645, %s122, 1
      %s1647 = smul.addr %s1646, 8
      %s1648 = scalar_lea.vmem %s111, %s1647
      %v1649 = vld [vmem:[%s1639] sm:$0xff]
      %v1650 = vld [vmem:[%s1639 + $0x8] sm:$0xff]
      %v1651 = vld [vmem:[%s7] sm:$0xff]
      %v1652 = vld [vmem:[%s7 + $0x8] sm:$0xff]
      %v1653 = vld [vmem:[%s7 + $0x10] sm:$0xff]
      %v1654 = vld [vmem:[%s7 + $0x18] sm:$0xff]
      %v1655 = vld [vmem:[%s7 + $0x20] sm:$0xff]
      %v1656 = vld [vmem:[%s7 + $0x28] sm:$0xff]
      %v1657 = vld [vmem:[%s9] sm:$0x1]
      %v1659 = vlaneseq
      %v1660 = vshrl.u32 %v1659, 7
      %v1661 = vsub.s32 0, %v1660
      %v1662 = vrot.slane %v1657, %v1661
      %vm1664 = vcmask 392192
      %v1666 = vsel %vm1664, %v1649, 0
      %v1669 = vsel %vm1664, %v1650, 0
      %1671 = vmatprep.subr.mxu0 0.0
      %1672 = vmatpush1.msra.mxu0 0.0
      %1673 = vmatprep.subr.mxu0 0.0
      %1674 = vmatpush1.msra.mxu0 0.0
      %1675 = vmatprep.subr.mxu0 0.0
      %1676 = vmatpush1.msra.mxu0 0.0
      %1677 = vmatprep.subr.mxu0 0.0
      %1678 = vmatpush1.msra.mxu0 0.0
      %1679 = vmatprep.subr.mxu0 0.0
      %1680 = vmatpush1.msra.mxu0 0.0
      %1681 = vmatprep.subr.mxu0 0.0
      %1682 = vmatpush1.msra.mxu0 0.0
      %1683 = vmatprep.subr.mxu0 0.0
      %1684 = vmatpush1.msra.mxu0 0.0
      %1685 = vmatprep.subr.mxu0 0.0
      %1686 = vmatpush1.msra.mxu0 0.0
      %1687 = vmatprep.subr.mxu0 0.0
      %1688 = vmatpush1.msra.mxu0 0.0
      %1689 = vmatprep.subr.mxu0 0.0
      %1690 = vmatpush1.msra.mxu0 0.0
      %1691 = vmatprep.subr.mxu0 0.0
      %1692 = vmatpush1.msra.mxu0 %v1656
      %1693 = vmatprep.subr.mxu0 0.0
      %1694 = vmatpush1.msra.mxu0 %v1655
      %1695 = vmatprep.subr.mxu0 0.0
      %1696 = vmatpush1.msra.mxu0 %v1654
      %1697 = vmatprep.subr.mxu0 0.0
      %1698 = vmatpush1.msra.mxu0 %v1653
      %1699 = vmatprep.subr.mxu0 0.0
      %1700 = vmatpush1.msra.mxu0 %v1652
      %1701 = vmatprep.subr.mxu0 0.0
      %1702 = vmatpush1.msra.mxu0 %v1651
      %1703 = vmatprep.subr.mxu0 0.0
      %1704 = vmatpush2.msra.mxu0 0.0
      %1705 = vmatprep.subr.mxu0 0.0
      %1706 = vmatpush2.msra.mxu0 0.0
      %1707 = vmatprep.subr.mxu0 0.0
      %1708 = vmatpush2.msra.mxu0 0.0
      %1709 = vmatprep.subr.mxu0 0.0
      %1710 = vmatpush2.msra.mxu0 0.0
      %1711 = vmatprep.subr.mxu0 0.0
      %1712 = vmatpush2.msra.mxu0 0.0
      %1713 = vmatprep.subr.mxu0 0.0
      %1714 = vmatpush2.msra.mxu0 0.0
      %1715 = vmatprep.subr.mxu0 0.0
      %1716 = vmatpush2.msra.mxu0 0.0
      %1717 = vmatprep.subr.mxu0 0.0
      %1718 = vmatpush2.msra.mxu0 0.0
      %1719 = vmatprep.subr.mxu0 0.0
      %1720 = vmatpush2.msra.mxu0 0.0
      %1721 = vmatprep.subr.mxu0 0.0
      %1722 = vmatpush2.msra.mxu0 0.0
      %1723 = vmatprep.subr.mxu0 0.0
      %1724 = vmatpush2.msra.mxu0 0.0
      %1725 = vmatprep.subr.mxu0 0.0
      %1726 = vmatpush2.msra.mxu0 0.0
      %1727 = vmatprep.subr.mxu0 0.0
      %1728 = vmatpush2.msra.mxu0 0.0
      %1729 = vmatprep.subr.mxu0 0.0
      %1730 = vmatpush2.msra.mxu0 0.0
      %1731 = vmatprep.subr.mxu0 0.0
      %1732 = vmatpush2.msra.mxu0 0.0
      %1733 = vmatprep.subr.mxu0 0.0
      %1734 = vmatpush2.msra.mxu0 0.0
      %1735 = vmatprep.mubr.f32.mxu0 0.0
      %1736 = vmatmul.mubr.f32.gmra.mxu0 %v1666
      %v1737 = vpop.f32.mrf.mxu0
      %v1738 = vadd.f32 %v1662, %v1737
      %v1739 = vpop.f32.mrf.mxu0
      %1740 = vmatprep.mubr.f32.mxu0 0.0
      %1741 = vmatmul.mubr.f32.gmra.mxu0 %v1669
      %v1742 = vpop.f32.mrf.mxu0
      %v1743 = vadd.f32 %v1662, %v1742
      %v1744 = vpop.f32.mrf.mxu0
      %1745 = vdwg.mxu0
      %v1746 = vmax.f32 %v1738, 0.0
      %v1747 = vmax.f32 %v1743, 0.0
      %v1748 = vld [vmem:[%s11] sm:$0xff]
      %v1749 = vld [vmem:[%s11 + $0x8] sm:$0xff]
      %v1750 = vld [vmem:[%s13] sm:$0x1]
      %v1752 = vlaneseq
      %v1753 = vshrl.u32 %v1752, 7
      %v1754 = vsub.s32 0, %v1753
      %v1755 = vrot.slane %v1750, %v1754
      %vm1757 = vcmask 130048
      %v1759 = vsel %vm1757, %v1746, 0
      %v1762 = vsel %vm1757, %v1747, 0
      %1764 = vmatprep.subr.mxu0 0.0
      %1765 = vmatpush1.msra.mxu0 0.0
      %1766 = vmatprep.subr.mxu0 0.0
      %1767 = vmatpush1.msra.mxu0 0.0
      %1768 = vmatprep.subr.mxu0 0.0
      %1769 = vmatpush1.msra.mxu0 0.0
      %1770 = vmatprep.subr.mxu0 0.0
      %1771 = vmatpush1.msra.mxu0 0.0
      %1772 = vmatprep.subr.mxu0 0.0
      %1773 = vmatpush1.msra.mxu0 0.0
      %1774 = vmatprep.subr.mxu0 0.0
      %1775 = vmatpush1.msra.mxu0 0.0
      %1776 = vmatprep.subr.mxu0 0.0
      %1777 = vmatpush1.msra.mxu0 0.0
      %1778 = vmatprep.subr.mxu0 0.0
      %1779 = vmatpush1.msra.mxu0 0.0
      %1780 = vmatprep.subr.mxu0 0.0
      %1781 = vmatpush1.msra.mxu0 0.0
      %1782 = vmatprep.subr.mxu0 0.0
      %1783 = vmatpush1.msra.mxu0 0.0
      %1784 = vmatprep.subr.mxu0 0.0
      %1785 = vmatpush1.msra.mxu0 0.0
      %1786 = vmatprep.subr.mxu0 0.0
      %1787 = vmatpush1.msra.mxu0 0.0
      %1788 = vmatprep.subr.mxu0 0.0
      %1789 = vmatpush1.msra.mxu0 0.0
      %1790 = vmatprep.subr.mxu0 0.0
      %1791 = vmatpush1.msra.mxu0 0.0
      %1792 = vmatprep.subr.mxu0 0.0
      %1793 = vmatpush1.msra.mxu0 %v1749
      %1794 = vmatprep.subr.mxu0 0.0
      %1795 = vmatpush1.msra.mxu0 %v1748
      %1796 = vmatprep.subr.mxu0 0.0
      %1797 = vmatpush2.msra.mxu0 0.0
      %1798 = vmatprep.subr.mxu0 0.0
      %1799 = vmatpush2.msra.mxu0 0.0
      %1800 = vmatprep.subr.mxu0 0.0
      %1801 = vmatpush2.msra.mxu0 0.0
      %1802 = vmatprep.subr.mxu0 0.0
      %1803 = vmatpush2.msra.mxu0 0.0
      %1804 = vmatprep.subr.mxu0 0.0
      %1805 = vmatpush2.msra.mxu0 0.0
      %1806 = vmatprep.subr.mxu0 0.0
      %1807 = vmatpush2.msra.mxu0 0.0
      %1808 = vmatprep.subr.mxu0 0.0
      %1809 = vmatpush2.msra.mxu0 0.0
      %1810 = vmatprep.subr.mxu0 0.0
      %1811 = vmatpush2.msra.mxu0 0.0
      %1812 = vmatprep.subr.mxu0 0.0
      %1813 = vmatpush2.msra.mxu0 0.0
      %1814 = vmatprep.subr.mxu0 0.0
      %1815 = vmatpush2.msra.mxu0 0.0
      %1816 = vmatprep.subr.mxu0 0.0
      %1817 = vmatpush2.msra.mxu0 0.0
      %1818 = vmatprep.subr.mxu0 0.0
      %1819 = vmatpush2.msra.mxu0 0.0
      %1820 = vmatprep.subr.mxu0 0.0
      %1821 = vmatpush2.msra.mxu0 0.0
      %1822 = vmatprep.subr.mxu0 0.0
      %1823 = vmatpush2.msra.mxu0 0.0
      %1824 = vmatprep.subr.mxu0 0.0
      %1825 = vmatpush2.msra.mxu0 0.0
      %1826 = vmatprep.subr.mxu0 0.0
      %1827 = vmatpush2.msra.mxu0 0.0
      %1828 = vmatprep.mubr.f32.mxu0 0.0
      %1829 = vmatmul.mubr.f32.gmra.mxu0 %v1759
      %v1830 = vpop.f32.mrf.mxu0
      %v1831 = vadd.f32 %v1755, %v1830
      %v1832 = vpop.f32.mrf.mxu0
      %1833 = vmatprep.mubr.f32.mxu0 0.0
      %1834 = vmatmul.mubr.f32.gmra.mxu0 %v1762
      %v1835 = vpop.f32.mrf.mxu0
      %v1836 = vadd.f32 %v1755, %v1835
      %v1837 = vpop.f32.mrf.mxu0
      %1838 = vdwg.mxu0
      %v1839 = vld [vmem:[%s1644] sm:$0xff]
      %v1840 = vld [vmem:[%s1644 + $0x8] sm:$0xff]
      %v1841 = vadd.f32 %v1831, %v1839
      %v1842 = vadd.f32 %v1836, %v1840
      %v1843 = vld [vmem:[%s15] sm:$0xff]
      %v1844 = vld [vmem:[%s15 + $0x8] sm:$0xff]
      %v1845 = vld [vmem:[%s15 + $0x10] sm:$0xff]
      %v1846 = vld [vmem:[%s15 + $0x18] sm:$0xff]
      %v1847 = vld [vmem:[%s17] sm:$0x1]
      %v1849 = vlaneseq
      %v1850 = vshrl.u32 %v1849, 7
      %v1851 = vsub.s32 0, %v1850
      %v1852 = vrot.slane %v1847, %v1851
      %vm1854 = vcmask 261120
      %v1856 = vsel %vm1854, %v1841, 0
      %v1859 = vsel %vm1854, %v1842, 0
      %1861 = vmatprep.subr.mxu0 0.0
      %1862 = vmatpush1.msra.mxu0 0.0
      %1863 = vmatprep.subr.mxu0 0.0
      %1864 = vmatpush1.msra.mxu0 0.0
      %1865 = vmatprep.subr.mxu0 0.0
      %1866 = vmatpush1.msra.mxu0 0.0
      %1867 = vmatprep.subr.mxu0 0.0
      %1868 = vmatpush1.msra.mxu0 0.0
      %1869 = vmatprep.subr.mxu0 0.0
      %1870 = vmatpush1.msra.mxu0 0.0
      %1871 = vmatprep.subr.mxu0 0.0
      %1872 = vmatpush1.msra.mxu0 0.0
      %1873 = vmatprep.subr.mxu0 0.0
      %1874 = vmatpush1.msra.mxu0 0.0
      %1875 = vmatprep.subr.mxu0 0.0
      %1876 = vmatpush1.msra.mxu0 0.0
      %1877 = vmatprep.subr.mxu0 0.0
      %1878 = vmatpush1.msra.mxu0 0.0
      %1879 = vmatprep.subr.mxu0 0.0
      %1880 = vmatpush1.msra.mxu0 0.0
      %1881 = vmatprep.subr.mxu0 0.0
      %1882 = vmatpush1.msra.mxu0 0.0
      %1883 = vmatprep.subr.mxu0 0.0
      %1884 = vmatpush1.msra.mxu0 0.0
      %1885 = vmatprep.subr.mxu0 0.0
      %1886 = vmatpush1.msra.mxu0 %v1846
      %1887 = vmatprep.subr.mxu0 0.0
      %1888 = vmatpush1.msra.mxu0 %v1845
      %1889 = vmatprep.subr.mxu0 0.0
      %1890 = vmatpush1.msra.mxu0 %v1844
      %1891 = vmatprep.subr.mxu0 0.0
      %1892 = vmatpush1.msra.mxu0 %v1843
      %1893 = vmatprep.subr.mxu0 0.0
      %1894 = vmatpush2.msra.mxu0 0.0
      %1895 = vmatprep.subr.mxu0 0.0
      %1896 = vmatpush2.msra.mxu0 0.0
      %1897 = vmatprep.subr.mxu0 0.0
      %1898 = vmatpush2.msra.mxu0 0.0
      %1899 = vmatprep.subr.mxu0 0.0
      %1900 = vmatpush2.msra.mxu0 0.0
      %1901 = vmatprep.subr.mxu0 0.0
      %1902 = vmatpush2.msra.mxu0 0.0
      %1903 = vmatprep.subr.mxu0 0.0
      %1904 = vmatpush2.msra.mxu0 0.0
      %1905 = vmatprep.subr.mxu0 0.0
      %1906 = vmatpush2.msra.mxu0 0.0
      %1907 = vmatprep.subr.mxu0 0.0
      %1908 = vmatpush2.msra.mxu0 0.0
      %1909 = vmatprep.subr.mxu0 0.0
      %1910 = vmatpush2.msra.mxu0 0.0
      %1911 = vmatprep.subr.mxu0 0.0
      %1912 = vmatpush2.msra.mxu0 0.0
      %1913 = vmatprep.subr.mxu0 0.0
      %1914 = vmatpush2.msra.mxu0 0.0
      %1915 = vmatprep.subr.mxu0 0.0
      %1916 = vmatpush2.msra.mxu0 0.0
      %1917 = vmatprep.subr.mxu0 0.0
      %1918 = vmatpush2.msra.mxu0 0.0
      %1919 = vmatprep.subr.mxu0 0.0
      %1920 = vmatpush2.msra.mxu0 0.0
      %1921 = vmatprep.subr.mxu0 0.0
      %1922 = vmatpush2.msra.mxu0 0.0
      %1923 = vmatprep.subr.mxu0 0.0
      %1924 = vmatpush2.msra.mxu0 0.0
      %1925 = vmatprep.mubr.f32.mxu0 0.0
      %1926 = vmatmul.mubr.f32.gmra.mxu0 %v1856
      %v1927 = vpop.f32.mrf.mxu0
      %v1928 = vadd.f32 %v1852, %v1927
      %v1929 = vpop.f32.mrf.mxu0
      %1930 = vmatprep.mubr.f32.mxu0 0.0
      %1931 = vmatmul.mubr.f32.gmra.mxu0 %v1859
      %v1932 = vpop.f32.mrf.mxu0
      %v1933 = vadd.f32 %v1852, %v1932
      %v1934 = vpop.f32.mrf.mxu0
      %1935 = vdwg.mxu0
      %v1936 = vld [vmem:[%s19] sm:$0xff]
      %v1937 = vld [vmem:[%s19 + $0x8] sm:$0xff]
      %v1938 = vld [vmem:[%s19 + $0x10] sm:$0xff]
      %v1939 = vld [vmem:[%s19 + $0x18] sm:$0xff]
      %v1940 = vld [vmem:[%s21] sm:$0x1]
      %v1942 = vlaneseq
      %v1943 = vshrl.u32 %v1942, 7
      %v1944 = vsub.s32 0, %v1943
      %v1945 = vrot.slane %v1940, %v1944
      %v1948 = vsel %vm1854, %v1831, 0
      %v1951 = vsel %vm1854, %v1836, 0
      %1953 = vmatprep.subr.mxu0 0.0
      %1954 = vmatpush1.msra.mxu0 0.0
      %1955 = vmatprep.subr.mxu0 0.0
      %1956 = vmatpush1.msra.mxu0 0.0
      %1957 = vmatprep.subr.mxu0 0.0
      %1958 = vmatpush1.msra.mxu0 0.0
      %1959 = vmatprep.subr.mxu0 0.0
      %1960 = vmatpush1.msra.mxu0 0.0
      %1961 = vmatprep.subr.mxu0 0.0
      %1962 = vmatpush1.msra.mxu0 0.0
      %1963 = vmatprep.subr.mxu0 0.0
      %1964 = vmatpush1.msra.mxu0 0.0
      %1965 = vmatprep.subr.mxu0 0.0
      %1966 = vmatpush1.msra.mxu0 0.0
      %1967 = vmatprep.subr.mxu0 0.0
      %1968 = vmatpush1.msra.mxu0 0.0
      %1969 = vmatprep.subr.mxu0 0.0
      %1970 = vmatpush1.msra.mxu0 0.0
      %1971 = vmatprep.subr.mxu0 0.0
      %1972 = vmatpush1.msra.mxu0 0.0
      %1973 = vmatprep.subr.mxu0 0.0
      %1974 = vmatpush1.msra.mxu0 0.0
      %1975 = vmatprep.subr.mxu0 0.0
      %1976 = vmatpush1.msra.mxu0 0.0
      %1977 = vmatprep.subr.mxu0 0.0
      %1978 = vmatpush1.msra.mxu0 %v1939
      %1979 = vmatprep.subr.mxu0 0.0
      %1980 = vmatpush1.msra.mxu0 %v1938
      %1981 = vmatprep.subr.mxu0 0.0
      %1982 = vmatpush1.msra.mxu0 %v1937
      %1983 = vmatprep.subr.mxu0 0.0
      %1984 = vmatpush1.msra.mxu0 %v1936
      %1985 = vmatprep.subr.mxu0 0.0
      %1986 = vmatpush2.msra.mxu0 0.0
      %1987 = vmatprep.subr.mxu0 0.0
      %1988 = vmatpush2.msra.mxu0 0.0
      %1989 = vmatprep.subr.mxu0 0.0
      %1990 = vmatpush2.msra.mxu0 0.0
      %1991 = vmatprep.subr.mxu0 0.0
      %1992 = vmatpush2.msra.mxu0 0.0
      %1993 = vmatprep.subr.mxu0 0.0
      %1994 = vmatpush2.msra.mxu0 0.0
      %1995 = vmatprep.subr.mxu0 0.0
      %1996 = vmatpush2.msra.mxu0 0.0
      %1997 = vmatprep.subr.mxu0 0.0
      %1998 = vmatpush2.msra.mxu0 0.0
      %1999 = vmatprep.subr.mxu0 0.0
      %2000 = vmatpush2.msra.mxu0 0.0
      %2001 = vmatprep.subr.mxu0 0.0
      %2002 = vmatpush2.msra.mxu0 0.0
      %2003 = vmatprep.subr.mxu0 0.0
      %2004 = vmatpush2.msra.mxu0 0.0
      %2005 = vmatprep.subr.mxu0 0.0
      %2006 = vmatpush2.msra.mxu0 0.0
      %2007 = vmatprep.subr.mxu0 0.0
      %2008 = vmatpush2.msra.mxu0 0.0
      %2009 = vmatprep.subr.mxu0 0.0
      %2010 = vmatpush2.msra.mxu0 0.0
      %2011 = vmatprep.subr.mxu0 0.0
      %2012 = vmatpush2.msra.mxu0 0.0
      %2013 = vmatprep.subr.mxu0 0.0
      %2014 = vmatpush2.msra.mxu0 0.0
      %2015 = vmatprep.subr.mxu0 0.0
      %2016 = vmatpush2.msra.mxu0 0.0
      %2017 = vmatprep.mubr.f32.mxu0 0.0
      %2018 = vmatmul.mubr.f32.gmra.mxu0 %v1948
      %v2019 = vpop.f32.mrf.mxu0
      %v2020 = vadd.f32 %v1945, %v2019
      %v2021 = vpop.f32.mrf.mxu0
      %2022 = vmatprep.mubr.f32.mxu0 0.0
      %2023 = vmatmul.mubr.f32.gmra.mxu0 %v1951
      %v2024 = vpop.f32.mrf.mxu0
      %v2025 = vadd.f32 %v1945, %v2024
      %v2026 = vpop.f32.mrf.mxu0
      %2027 = vdwg.mxu0
      %2030 = vrot.lane.b32.xlu0 %v1928, 96
      %v2031 = vpop.permute.xlu0 %2030
      %2032 = vrot.lane.b32.xlu0 %v1933, 96
      %v2033 = vpop.permute.xlu0 %2032
      %vm2034 = vcmask 64512
      %v2035 = vsel %vm2034, %v1928, 0
      %v2037 = vsel %vm2034, %v1933, 0
      %v2039 = vsel %vm2034, %v2031, 0
      %v2041 = vsel %vm2034, %v2033, 0
      %2043 = vmatprep.subr.mxu0 0.0
      %2044 = vmatpush1.xpose.msra.mxu0 0.0
      %2045 = vmatprep.subr.mxu0 0.0
      %2046 = vmatpush1.xpose.msra.mxu0 0.0
      %2047 = vmatprep.subr.mxu0 0.0
      %2048 = vmatpush1.xpose.msra.mxu0 0.0
      %2049 = vmatprep.subr.mxu0 0.0
      %2050 = vmatpush1.xpose.msra.mxu0 0.0
      %2051 = vmatprep.subr.mxu0 0.0
      %2052 = vmatpush1.xpose.msra.mxu0 0.0
      %2053 = vmatprep.subr.mxu0 0.0
      %2054 = vmatpush1.xpose.msra.mxu0 0.0
      %2055 = vmatprep.subr.mxu0 0.0
      %2056 = vmatpush1.xpose.msra.mxu0 0.0
      %2057 = vmatprep.subr.mxu0 0.0
      %2058 = vmatpush1.xpose.msra.mxu0 0.0
      %2059 = vmatprep.subr.mxu0 0.0
      %2060 = vmatpush1.xpose.msra.mxu0 0.0
      %2061 = vmatprep.subr.mxu0 0.0
      %2062 = vmatpush1.xpose.msra.mxu0 0.0
      %2063 = vmatprep.subr.mxu0 0.0
      %2064 = vmatpush1.xpose.msra.mxu0 0.0
      %2065 = vmatprep.subr.mxu0 0.0
      %2066 = vmatpush1.xpose.msra.mxu0 0.0
      %2067 = vmatprep.subr.mxu0 0.0
      %2068 = vmatpush1.xpose.msra.mxu0 0.0
      %2069 = vmatprep.subr.mxu0 0.0
      %2070 = vmatpush1.xpose.msra.mxu0 0.0
      %2071 = vmatprep.subr.mxu0 0.0
      %2072 = vmatpush1.xpose.msra.mxu0 %v2041
      %2073 = vmatprep.subr.mxu0 0.0
      %2074 = vmatpush1.xpose.msra.mxu0 %v2039
      %2075 = vmatprep.subr.mxu0 0.0
      %2076 = vmatpush2.xpose.msra.mxu0 0.0
      %2077 = vmatprep.subr.mxu0 0.0
      %2078 = vmatpush2.xpose.msra.mxu0 0.0
      %2079 = vmatprep.subr.mxu0 0.0
      %2080 = vmatpush2.xpose.msra.mxu0 0.0
      %2081 = vmatprep.subr.mxu0 0.0
      %2082 = vmatpush2.xpose.msra.mxu0 0.0
      %2083 = vmatprep.subr.mxu0 0.0
      %2084 = vmatpush2.xpose.msra.mxu0 0.0
      %2085 = vmatprep.subr.mxu0 0.0
      %2086 = vmatpush2.xpose.msra.mxu0 0.0
      %2087 = vmatprep.subr.mxu0 0.0
      %2088 = vmatpush2.xpose.msra.mxu0 0.0
      %2089 = vmatprep.subr.mxu0 0.0
      %2090 = vmatpush2.xpose.msra.mxu0 0.0
      %2091 = vmatprep.subr.mxu0 0.0
      %2092 = vmatpush2.xpose.msra.mxu0 0.0
      %2093 = vmatprep.subr.mxu0 0.0
      %2094 = vmatpush2.xpose.msra.mxu0 0.0
      %2095 = vmatprep.subr.mxu0 0.0
      %2096 = vmatpush2.xpose.msra.mxu0 0.0
      %2097 = vmatprep.subr.mxu0 0.0
      %2098 = vmatpush2.xpose.msra.mxu0 0.0
      %2099 = vmatprep.subr.mxu0 0.0
      %2100 = vmatpush2.xpose.msra.mxu0 0.0
      %2101 = vmatprep.subr.mxu0 0.0
      %2102 = vmatpush2.xpose.msra.mxu0 0.0
      %2103 = vmatprep.subr.mxu0 0.0
      %2104 = vmatpush2.xpose.msra.mxu0 0.0
      %2105 = vmatprep.subr.mxu0 0.0
      %2106 = vmatpush2.xpose.msra.mxu0 0.0
      %2107 = vmatprep.mubr.f32.mxu0 0.0
      %2108 = vmatmul.mubr.f32.gmra.mxu0 %v2035
      %v2109 = vpop.f32.mrf.mxu0
      %v2110 = vadd.f32 0.0, %v2109
      %v2111 = vpop.f32.mrf.mxu0
      %2112 = vmatprep.mubr.f32.mxu0 0.0
      %2113 = vmatmul.mubr.f32.gmra.mxu0 %v2037
      %v2114 = vpop.f32.mrf.mxu0
      %v2115 = vadd.f32 0.0, %v2114
      %v2116 = vpop.f32.mrf.mxu0
      %2117 = vdwg.mxu0
      %v2118 = vmul.f32 %v2110, 0.35355338
      %v2119 = vmul.f32 %v2115, 0.35355338
      %v2120 = vsel %vm1757, %v2118, -inf
      %2121 = vmax.xlane.f32.xlu0 %v2120
      %v2122 = vpop.xlane.xlu0 %2121
      %v2123 = vsel %vm1757, %v2119, -inf
      %2124 = vmax.xlane.f32.xlu0 %v2123
      %v2125 = vpop.xlane.xlu0 %2124
      %v2126 = vsub.f32 %v2118, %v2122
      %v2127 = vsub.f32 %v2119, %v2125
      %v2128 = vmul.f32 %v2126, 1.442695
      %v2129 = vpow.pop %v2128
      %v2130 = vmul.f32 %v2127, 1.442695
      %v2131 = vpow.pop %v2130
      %v2132 = vsel %vm1757, %v2129, 0.0
      %2133 = vadd.xlane.f32.xlu0 %v2132
      %v2134 = vpop.xlane.xlu0 %2133
      %v2135 = vsel %vm1757, %v2131, 0.0
      %2136 = vadd.xlane.f32.xlu0 %v2135
      %v2137 = vpop.xlane.xlu0 %2136
      %v2138 = vrcp.pop %v2134
      %v2139 = vrcp.pop %v2137
      %v2140 = vmul.f32 %v2129, %v2138
      %v2141 = vmul.f32 %v2131, %v2139
      %v2143 = vsel %vm1757, %v2140, 0
      %v2146 = vsel %vm1757, %v2141, 0
      %2148 = vmatprep.subr.mxu0 0.0
      %2149 = vmatpush1.msra.mxu0 0.0
      %2150 = vmatprep.subr.mxu0 0.0
      %2151 = vmatpush1.msra.mxu0 0.0
      %2152 = vmatprep.subr.mxu0 0.0
      %2153 = vmatpush1.msra.mxu0 0.0
      %2154 = vmatprep.subr.mxu0 0.0
      %2155 = vmatpush1.msra.mxu0 0.0
      %2156 = vmatprep.subr.mxu0 0.0
      %2157 = vmatpush1.msra.mxu0 0.0
      %2158 = vmatprep.subr.mxu0 0.0
      %2159 = vmatpush1.msra.mxu0 0.0
      %2160 = vmatprep.subr.mxu0 0.0
      %2161 = vmatpush1.msra.mxu0 0.0
      %2162 = vmatprep.subr.mxu0 0.0
      %2163 = vmatpush1.msra.mxu0 0.0
      %2164 = vmatprep.subr.mxu0 0.0
      %2165 = vmatpush1.msra.mxu0 0.0
      %2166 = vmatprep.subr.mxu0 0.0
      %2167 = vmatpush1.msra.mxu0 0.0
      %2168 = vmatprep.subr.mxu0 0.0
      %2169 = vmatpush1.msra.mxu0 0.0
      %2170 = vmatprep.subr.mxu0 0.0
      %2171 = vmatpush1.msra.mxu0 0.0
      %2172 = vmatprep.subr.mxu0 0.0
      %2173 = vmatpush1.msra.mxu0 0.0
      %2174 = vmatprep.subr.mxu0 0.0
      %2175 = vmatpush1.msra.mxu0 0.0
      %2176 = vmatprep.subr.mxu0 0.0
      %2177 = vmatpush1.msra.mxu0 %v2025
      %2178 = vmatprep.subr.mxu0 0.0
      %2179 = vmatpush1.msra.mxu0 %v2020
      %2180 = vmatprep.subr.mxu0 0.0
      %2181 = vmatpush2.msra.mxu0 0.0
      %2182 = vmatprep.subr.mxu0 0.0
      %2183 = vmatpush2.msra.mxu0 0.0
      %2184 = vmatprep.subr.mxu0 0.0
      %2185 = vmatpush2.msra.mxu0 0.0
      %2186 = vmatprep.subr.mxu0 0.0
      %2187 = vmatpush2.msra.mxu0 0.0
      %2188 = vmatprep.subr.mxu0 0.0
      %2189 = vmatpush2.msra.mxu0 0.0
      %2190 = vmatprep.subr.mxu0 0.0
      %2191 = vmatpush2.msra.mxu0 0.0
      %2192 = vmatprep.subr.mxu0 0.0
      %2193 = vmatpush2.msra.mxu0 0.0
      %2194 = vmatprep.subr.mxu0 0.0
      %2195 = vmatpush2.msra.mxu0 0.0
      %2196 = vmatprep.subr.mxu0 0.0
      %2197 = vmatpush2.msra.mxu0 0.0
      %2198 = vmatprep.subr.mxu0 0.0
      %2199 = vmatpush2.msra.mxu0 0.0
      %2200 = vmatprep.subr.mxu0 0.0
      %2201 = vmatpush2.msra.mxu0 0.0
      %2202 = vmatprep.subr.mxu0 0.0
      %2203 = vmatpush2.msra.mxu0 0.0
      %2204 = vmatprep.subr.mxu0 0.0
      %2205 = vmatpush2.msra.mxu0 0.0
      %2206 = vmatprep.subr.mxu0 0.0
      %2207 = vmatpush2.msra.mxu0 0.0
      %2208 = vmatprep.subr.mxu0 0.0
      %2209 = vmatpush2.msra.mxu0 0.0
      %2210 = vmatprep.subr.mxu0 0.0
      %2211 = vmatpush2.msra.mxu0 0.0
      %2212 = vmatprep.mubr.f32.mxu0 0.0
      %2213 = vmatmul.mubr.f32.gmra.mxu0 %v2143
      %v2214 = vpop.f32.mrf.mxu0
      %v2215 = vadd.f32 0.0, %v2214
      %v2216 = vpop.f32.mrf.mxu0
      %2217 = vmatprep.mubr.f32.mxu0 0.0
      %2218 = vmatmul.mubr.f32.gmra.mxu0 %v2146
      %v2219 = vpop.f32.mrf.mxu0
      %v2220 = vadd.f32 0.0, %v2219
      %v2221 = vpop.f32.mrf.mxu0
      %2222 = vdwg.mxu0
      %2223 = vrot.lane.b32.xlu0 %v1928, 120
      %v2224 = vpop.permute.xlu0 %2223
      %2225 = vrot.lane.b32.xlu0 %v1933, 120
      %v2226 = vpop.permute.xlu0 %2225
      %2227 = vrot.lane.b32.xlu0 %v1928, 88
      %v2228 = vpop.permute.xlu0 %2227
      %2229 = vrot.lane.b32.xlu0 %v1933, 88
      %v2230 = vpop.permute.xlu0 %2229
      %v2231 = vsel %vm2034, %v2224, 0
      %v2233 = vsel %vm2034, %v2226, 0
      %v2235 = vsel %vm2034, %v2228, 0
      %v2237 = vsel %vm2034, %v2230, 0
      %2239 = vmatprep.subr.mxu0 0.0
      %2240 = vmatpush1.xpose.msra.mxu0 0.0
      %2241 = vmatprep.subr.mxu0 0.0
      %2242 = vmatpush1.xpose.msra.mxu0 0.0
      %2243 = vmatprep.subr.mxu0 0.0
      %2244 = vmatpush1.xpose.msra.mxu0 0.0
      %2245 = vmatprep.subr.mxu0 0.0
      %2246 = vmatpush1.xpose.msra.mxu0 0.0
      %2247 = vmatprep.subr.mxu0 0.0
      %2248 = vmatpush1.xpose.msra.mxu0 0.0
      %2249 = vmatprep.subr.mxu0 0.0
      %2250 = vmatpush1.xpose.msra.mxu0 0.0
      %2251 = vmatprep.subr.mxu0 0.0
      %2252 = vmatpush1.xpose.msra.mxu0 0.0
      %2253 = vmatprep.subr.mxu0 0.0
      %2254 = vmatpush1.xpose.msra.mxu0 0.0
      %2255 = vmatprep.subr.mxu0 0.0
      %2256 = vmatpush1.xpose.msra.mxu0 0.0
      %2257 = vmatprep.subr.mxu0 0.0
      %2258 = vmatpush1.xpose.msra.mxu0 0.0
      %2259 = vmatprep.subr.mxu0 0.0
      %2260 = vmatpush1.xpose.msra.mxu0 0.0
      %2261 = vmatprep.subr.mxu0 0.0
      %2262 = vmatpush1.xpose.msra.mxu0 0.0
      %2263 = vmatprep.subr.mxu0 0.0
      %2264 = vmatpush1.xpose.msra.mxu0 0.0
      %2265 = vmatprep.subr.mxu0 0.0
      %2266 = vmatpush1.xpose.msra.mxu0 0.0
      %2267 = vmatprep.subr.mxu0 0.0
      %2268 = vmatpush1.xpose.msra.mxu0 %v2237
      %2269 = vmatprep.subr.mxu0 0.0
      %2270 = vmatpush1.xpose.msra.mxu0 %v2235
      %2271 = vmatprep.subr.mxu0 0.0
      %2272 = vmatpush2.xpose.msra.mxu0 0.0
      %2273 = vmatprep.subr.mxu0 0.0
      %2274 = vmatpush2.xpose.msra.mxu0 0.0
      %2275 = vmatprep.subr.mxu0 0.0
      %2276 = vmatpush2.xpose.msra.mxu0 0.0
      %2277 = vmatprep.subr.mxu0 0.0
      %2278 = vmatpush2.xpose.msra.mxu0 0.0
      %2279 = vmatprep.subr.mxu0 0.0
      %2280 = vmatpush2.xpose.msra.mxu0 0.0
      %2281 = vmatprep.subr.mxu0 0.0
      %2282 = vmatpush2.xpose.msra.mxu0 0.0
      %2283 = vmatprep.subr.mxu0 0.0
      %2284 = vmatpush2.xpose.msra.mxu0 0.0
      %2285 = vmatprep.subr.mxu0 0.0
      %2286 = vmatpush2.xpose.msra.mxu0 0.0
      %2287 = vmatprep.subr.mxu0 0.0
      %2288 = vmatpush2.xpose.msra.mxu0 0.0
      %2289 = vmatprep.subr.mxu0 0.0
      %2290 = vmatpush2.xpose.msra.mxu0 0.0
      %2291 = vmatprep.subr.mxu0 0.0
      %2292 = vmatpush2.xpose.msra.mxu0 0.0
      %2293 = vmatprep.subr.mxu0 0.0
      %2294 = vmatpush2.xpose.msra.mxu0 0.0
      %2295 = vmatprep.subr.mxu0 0.0
      %2296 = vmatpush2.xpose.msra.mxu0 0.0
      %2297 = vmatprep.subr.mxu0 0.0
      %2298 = vmatpush2.xpose.msra.mxu0 0.0
      %2299 = vmatprep.subr.mxu0 0.0
      %2300 = vmatpush2.xpose.msra.mxu0 0.0
      %2301 = vmatprep.subr.mxu0 0.0
      %2302 = vmatpush2.xpose.msra.mxu0 0.0
      %2303 = vmatprep.mubr.f32.mxu0 0.0
      %2304 = vmatmul.mubr.f32.gmra.mxu0 %v2231
      %v2305 = vpop.f32.mrf.mxu0
      %v2306 = vadd.f32 0.0, %v2305
      %v2307 = vpop.f32.mrf.mxu0
      %2308 = vmatprep.mubr.f32.mxu0 0.0
      %2309 = vmatmul.mubr.f32.gmra.mxu0 %v2233
      %v2310 = vpop.f32.mrf.mxu0
      %v2311 = vadd.f32 0.0, %v2310
      %v2312 = vpop.f32.mrf.mxu0
      %2313 = vdwg.mxu0
      %v2314 = vmul.f32 %v2306, 0.35355338
      %v2315 = vmul.f32 %v2311, 0.35355338
      %v2316 = vsel %vm1757, %v2314, -inf
      %2317 = vmax.xlane.f32.xlu0 %v2316
      %v2318 = vpop.xlane.xlu0 %2317
      %v2319 = vsel %vm1757, %v2315, -inf
      %2320 = vmax.xlane.f32.xlu0 %v2319
      %v2321 = vpop.xlane.xlu0 %2320
      %v2322 = vsub.f32 %v2314, %v2318
      %v2323 = vsub.f32 %v2315, %v2321
      %v2324 = vmul.f32 %v2322, 1.442695
      %v2325 = vpow.pop %v2324
      %v2326 = vmul.f32 %v2323, 1.442695
      %v2327 = vpow.pop %v2326
      %v2328 = vsel %vm1757, %v2325, 0.0
      %2329 = vadd.xlane.f32.xlu0 %v2328
      %v2330 = vpop.xlane.xlu0 %2329
      %v2331 = vsel %vm1757, %v2327, 0.0
      %2332 = vadd.xlane.f32.xlu0 %v2331
      %v2333 = vpop.xlane.xlu0 %2332
      %v2334 = vrcp.pop %v2330
      %v2335 = vrcp.pop %v2333
      %v2336 = vmul.f32 %v2325, %v2334
      %v2337 = vmul.f32 %v2327, %v2335
      %2340 = vrot.lane.b32.xlu0 %v2020, 120
      %v2341 = vpop.permute.xlu0 %2340
      %2342 = vrot.lane.b32.xlu0 %v2025, 120
      %v2343 = vpop.permute.xlu0 %2342
      %v2347 = vsel %vm1757, %v2336, 0
      %v2350 = vsel %vm1757, %v2337, 0
      %2352 = vmatprep.subr.mxu0 0.0
      %2353 = vmatpush1.msra.mxu0 0.0
      %2354 = vmatprep.subr.mxu0 0.0
      %2355 = vmatpush1.msra.mxu0 0.0
      %2356 = vmatprep.subr.mxu0 0.0
      %2357 = vmatpush1.msra.mxu0 0.0
      %2358 = vmatprep.subr.mxu0 0.0
      %2359 = vmatpush1.msra.mxu0 0.0
      %2360 = vmatprep.subr.mxu0 0.0
      %2361 = vmatpush1.msra.mxu0 0.0
      %2362 = vmatprep.subr.mxu0 0.0
      %2363 = vmatpush1.msra.mxu0 0.0
      %2364 = vmatprep.subr.mxu0 0.0
      %2365 = vmatpush1.msra.mxu0 0.0
      %2366 = vmatprep.subr.mxu0 0.0
      %2367 = vmatpush1.msra.mxu0 0.0
      %2368 = vmatprep.subr.mxu0 0.0
      %2369 = vmatpush1.msra.mxu0 0.0
      %2370 = vmatprep.subr.mxu0 0.0
      %2371 = vmatpush1.msra.mxu0 0.0
      %2372 = vmatprep.subr.mxu0 0.0
      %2373 = vmatpush1.msra.mxu0 0.0
      %2374 = vmatprep.subr.mxu0 0.0
      %2375 = vmatpush1.msra.mxu0 0.0
      %2376 = vmatprep.subr.mxu0 0.0
      %2377 = vmatpush1.msra.mxu0 0.0
      %2378 = vmatprep.subr.mxu0 0.0
      %2379 = vmatpush1.msra.mxu0 0.0
      %2380 = vmatprep.subr.mxu0 0.0
      %2381 = vmatpush1.msra.mxu0 %v2343
      %2382 = vmatprep.subr.mxu0 0.0
      %2383 = vmatpush1.msra.mxu0 %v2341
      %2384 = vmatprep.subr.mxu0 0.0
      %2385 = vmatpush2.msra.mxu0 0.0
      %2386 = vmatprep.subr.mxu0 0.0
      %2387 = vmatpush2.msra.mxu0 0.0
      %2388 = vmatprep.subr.mxu0 0.0
      %2389 = vmatpush2.msra.mxu0 0.0
      %2390 = vmatprep.subr.mxu0 0.0
      %2391 = vmatpush2.msra.mxu0 0.0
      %2392 = vmatprep.subr.mxu0 0.0
      %2393 = vmatpush2.msra.mxu0 0.0
      %2394 = vmatprep.subr.mxu0 0.0
      %2395 = vmatpush2.msra.mxu0 0.0
      %2396 = vmatprep.subr.mxu0 0.0
      %2397 = vmatpush2.msra.mxu0 0.0
      %2398 = vmatprep.subr.mxu0 0.0
      %2399 = vmatpush2.msra.mxu0 0.0
      %2400 = vmatprep.subr.mxu0 0.0
      %2401 = vmatpush2.msra.mxu0 0.0
      %2402 = vmatprep.subr.mxu0 0.0
      %2403 = vmatpush2.msra.mxu0 0.0
      %2404 = vmatprep.subr.mxu0 0.0
      %2405 = vmatpush2.msra.mxu0 0.0
      %2406 = vmatprep.subr.mxu0 0.0
      %2407 = vmatpush2.msra.mxu0 0.0
      %2408 = vmatprep.subr.mxu0 0.0
      %2409 = vmatpush2.msra.mxu0 0.0
      %2410 = vmatprep.subr.mxu0 0.0
      %2411 = vmatpush2.msra.mxu0 0.0
      %2412 = vmatprep.subr.mxu0 0.0
      %2413 = vmatpush2.msra.mxu0 0.0
      %2414 = vmatprep.subr.mxu0 0.0
      %2415 = vmatpush2.msra.mxu0 0.0
      %2416 = vmatprep.mubr.f32.mxu0 0.0
      %2417 = vmatmul.mubr.f32.gmra.mxu0 %v2347
      %v2418 = vpop.f32.mrf.mxu0
      %v2419 = vadd.f32 0.0, %v2418
      %v2420 = vpop.f32.mrf.mxu0
      %2421 = vmatprep.mubr.f32.mxu0 0.0
      %2422 = vmatmul.mubr.f32.gmra.mxu0 %v2350
      %v2423 = vpop.f32.mrf.mxu0
      %v2424 = vadd.f32 0.0, %v2423
      %v2425 = vpop.f32.mrf.mxu0
      %2426 = vdwg.mxu0
      %2427 = vrot.lane.b32.xlu0 %v1928, 112
      %v2428 = vpop.permute.xlu0 %2427
      %2429 = vrot.lane.b32.xlu0 %v1933, 112
      %v2430 = vpop.permute.xlu0 %2429
      %2431 = vrot.lane.b32.xlu0 %v1928, 80
      %v2432 = vpop.permute.xlu0 %2431
      %2433 = vrot.lane.b32.xlu0 %v1933, 80
      %v2434 = vpop.permute.xlu0 %2433
      %v2435 = vsel %vm2034, %v2428, 0
      %v2437 = vsel %vm2034, %v2430, 0
      %v2439 = vsel %vm2034, %v2432, 0
      %v2441 = vsel %vm2034, %v2434, 0
      %2443 = vmatprep.subr.mxu0 0.0
      %2444 = vmatpush1.xpose.msra.mxu0 0.0
      %2445 = vmatprep.subr.mxu0 0.0
      %2446 = vmatpush1.xpose.msra.mxu0 0.0
      %2447 = vmatprep.subr.mxu0 0.0
      %2448 = vmatpush1.xpose.msra.mxu0 0.0
      %2449 = vmatprep.subr.mxu0 0.0
      %2450 = vmatpush1.xpose.msra.mxu0 0.0
      %2451 = vmatprep.subr.mxu0 0.0
      %2452 = vmatpush1.xpose.msra.mxu0 0.0
      %2453 = vmatprep.subr.mxu0 0.0
      %2454 = vmatpush1.xpose.msra.mxu0 0.0
      %2455 = vmatprep.subr.mxu0 0.0
      %2456 = vmatpush1.xpose.msra.mxu0 0.0
      %2457 = vmatprep.subr.mxu0 0.0
      %2458 = vmatpush1.xpose.msra.mxu0 0.0
      %2459 = vmatprep.subr.mxu0 0.0
      %2460 = vmatpush1.xpose.msra.mxu0 0.0
      %2461 = vmatprep.subr.mxu0 0.0
      %2462 = vmatpush1.xpose.msra.mxu0 0.0
      %2463 = vmatprep.subr.mxu0 0.0
      %2464 = vmatpush1.xpose.msra.mxu0 0.0
      %2465 = vmatprep.subr.mxu0 0.0
      %2466 = vmatpush1.xpose.msra.mxu0 0.0
      %2467 = vmatprep.subr.mxu0 0.0
      %2468 = vmatpush1.xpose.msra.mxu0 0.0
      %2469 = vmatprep.subr.mxu0 0.0
      %2470 = vmatpush1.xpose.msra.mxu0 0.0
      %2471 = vmatprep.subr.mxu0 0.0
      %2472 = vmatpush1.xpose.msra.mxu0 %v2441
      %2473 = vmatprep.subr.mxu0 0.0
      %2474 = vmatpush1.xpose.msra.mxu0 %v2439
      %2475 = vmatprep.subr.mxu0 0.0
      %2476 = vmatpush2.xpose.msra.mxu0 0.0
      %2477 = vmatprep.subr.mxu0 0.0
      %2478 = vmatpush2.xpose.msra.mxu0 0.0
      %2479 = vmatprep.subr.mxu0 0.0
      %2480 = vmatpush2.xpose.msra.mxu0 0.0
      %2481 = vmatprep.subr.mxu0 0.0
      %2482 = vmatpush2.xpose.msra.mxu0 0.0
      %2483 = vmatprep.subr.mxu0 0.0
      %2484 = vmatpush2.xpose.msra.mxu0 0.0
      %2485 = vmatprep.subr.mxu0 0.0
      %2486 = vmatpush2.xpose.msra.mxu0 0.0
      %2487 = vmatprep.subr.mxu0 0.0
      %2488 = vmatpush2.xpose.msra.mxu0 0.0
      %2489 = vmatprep.subr.mxu0 0.0
      %2490 = vmatpush2.xpose.msra.mxu0 0.0
      %2491 = vmatprep.subr.mxu0 0.0
      %2492 = vmatpush2.xpose.msra.mxu0 0.0
      %2493 = vmatprep.subr.mxu0 0.0
      %2494 = vmatpush2.xpose.msra.mxu0 0.0
      %2495 = vmatprep.subr.mxu0 0.0
      %2496 = vmatpush2.xpose.msra.mxu0 0.0
      %2497 = vmatprep.subr.mxu0 0.0
      %2498 = vmatpush2.xpose.msra.mxu0 0.0
      %2499 = vmatprep.subr.mxu0 0.0
      %2500 = vmatpush2.xpose.msra.mxu0 0.0
      %2501 = vmatprep.subr.mxu0 0.0
      %2502 = vmatpush2.xpose.msra.mxu0 0.0
      %2503 = vmatprep.subr.mxu0 0.0
      %2504 = vmatpush2.xpose.msra.mxu0 0.0
      %2505 = vmatprep.subr.mxu0 0.0
      %2506 = vmatpush2.xpose.msra.mxu0 0.0
      %2507 = vmatprep.mubr.f32.mxu0 0.0
      %2508 = vmatmul.mubr.f32.gmra.mxu0 %v2435
      %v2509 = vpop.f32.mrf.mxu0
      %v2510 = vadd.f32 0.0, %v2509
      %v2511 = vpop.f32.mrf.mxu0
      %2512 = vmatprep.mubr.f32.mxu0 0.0
      %2513 = vmatmul.mubr.f32.gmra.mxu0 %v2437
      %v2514 = vpop.f32.mrf.mxu0
      %v2515 = vadd.f32 0.0, %v2514
      %v2516 = vpop.f32.mrf.mxu0
      %2517 = vdwg.mxu0
      %v2518 = vmul.f32 %v2510, 0.35355338
      %v2519 = vmul.f32 %v2515, 0.35355338
      %v2520 = vsel %vm1757, %v2518, -inf
      %2521 = vmax.xlane.f32.xlu0 %v2520
      %v2522 = vpop.xlane.xlu0 %2521
      %v2523 = vsel %vm1757, %v2519, -inf
      %2524 = vmax.xlane.f32.xlu0 %v2523
      %v2525 = vpop.xlane.xlu0 %2524
      %v2526 = vsub.f32 %v2518, %v2522
      %v2527 = vsub.f32 %v2519, %v2525
      %v2528 = vmul.f32 %v2526, 1.442695
      %v2529 = vpow.pop %v2528
      %v2530 = vmul.f32 %v2527, 1.442695
      %v2531 = vpow.pop %v2530
      %v2532 = vsel %vm1757, %v2529, 0.0
      %2533 = vadd.xlane.f32.xlu0 %v2532
      %v2534 = vpop.xlane.xlu0 %2533
      %v2535 = vsel %vm1757, %v2531, 0.0
      %2536 = vadd.xlane.f32.xlu0 %v2535
      %v2537 = vpop.xlane.xlu0 %2536
      %v2538 = vrcp.pop %v2534
      %v2539 = vrcp.pop %v2537
      %v2540 = vmul.f32 %v2529, %v2538
      %v2541 = vmul.f32 %v2531, %v2539
      %2542 = vrot.lane.b32.xlu0 %v2020, 112
      %v2543 = vpop.permute.xlu0 %2542
      %2544 = vrot.lane.b32.xlu0 %v2025, 112
      %v2545 = vpop.permute.xlu0 %2544
      %v2549 = vsel %vm1757, %v2540, 0
      %v2552 = vsel %vm1757, %v2541, 0
      %2554 = vmatprep.subr.mxu0 0.0
      %2555 = vmatpush1.msra.mxu0 0.0
      %2556 = vmatprep.subr.mxu0 0.0
      %2557 = vmatpush1.msra.mxu0 0.0
      %2558 = vmatprep.subr.mxu0 0.0
      %2559 = vmatpush1.msra.mxu0 0.0
      %2560 = vmatprep.subr.mxu0 0.0
      %2561 = vmatpush1.msra.mxu0 0.0
      %2562 = vmatprep.subr.mxu0 0.0
      %2563 = vmatpush1.msra.mxu0 0.0
      %2564 = vmatprep.subr.mxu0 0.0
      %2565 = vmatpush1.msra.mxu0 0.0
      %2566 = vmatprep.subr.mxu0 0.0
      %2567 = vmatpush1.msra.mxu0 0.0
      %2568 = vmatprep.subr.mxu0 0.0
      %2569 = vmatpush1.msra.mxu0 0.0
      %2570 = vmatprep.subr.mxu0 0.0
      %2571 = vmatpush1.msra.mxu0 0.0
      %2572 = vmatprep.subr.mxu0 0.0
      %2573 = vmatpush1.msra.mxu0 0.0
      %2574 = vmatprep.subr.mxu0 0.0
      %2575 = vmatpush1.msra.mxu0 0.0
      %2576 = vmatprep.subr.mxu0 0.0
      %2577 = vmatpush1.msra.mxu0 0.0
      %2578 = vmatprep.subr.mxu0 0.0
      %2579 = vmatpush1.msra.mxu0 0.0
      %2580 = vmatprep.subr.mxu0 0.0
      %2581 = vmatpush1.msra.mxu0 0.0
      %2582 = vmatprep.subr.mxu0 0.0
      %2583 = vmatpush1.msra.mxu0 %v2545
      %2584 = vmatprep.subr.mxu0 0.0
      %2585 = vmatpush1.msra.mxu0 %v2543
      %2586 = vmatprep.subr.mxu0 0.0
      %2587 = vmatpush2.msra.mxu0 0.0
      %2588 = vmatprep.subr.mxu0 0.0
      %2589 = vmatpush2.msra.mxu0 0.0
      %2590 = vmatprep.subr.mxu0 0.0
      %2591 = vmatpush2.msra.mxu0 0.0
      %2592 = vmatprep.subr.mxu0 0.0
      %2593 = vmatpush2.msra.mxu0 0.0
      %2594 = vmatprep.subr.mxu0 0.0
      %2595 = vmatpush2.msra.mxu0 0.0
      %2596 = vmatprep.subr.mxu0 0.0
      %2597 = vmatpush2.msra.mxu0 0.0
      %2598 = vmatprep.subr.mxu0 0.0
      %2599 = vmatpush2.msra.mxu0 0.0
      %2600 = vmatprep.subr.mxu0 0.0
      %2601 = vmatpush2.msra.mxu0 0.0
      %2602 = vmatprep.subr.mxu0 0.0
      %2603 = vmatpush2.msra.mxu0 0.0
      %2604 = vmatprep.subr.mxu0 0.0
      %2605 = vmatpush2.msra.mxu0 0.0
      %2606 = vmatprep.subr.mxu0 0.0
      %2607 = vmatpush2.msra.mxu0 0.0
      %2608 = vmatprep.subr.mxu0 0.0
      %2609 = vmatpush2.msra.mxu0 0.0
      %2610 = vmatprep.subr.mxu0 0.0
      %2611 = vmatpush2.msra.mxu0 0.0
      %2612 = vmatprep.subr.mxu0 0.0
      %2613 = vmatpush2.msra.mxu0 0.0
      %2614 = vmatprep.subr.mxu0 0.0
      %2615 = vmatpush2.msra.mxu0 0.0
      %2616 = vmatprep.subr.mxu0 0.0
      %2617 = vmatpush2.msra.mxu0 0.0
      %2618 = vmatprep.mubr.f32.mxu0 0.0
      %2619 = vmatmul.mubr.f32.gmra.mxu0 %v2549
      %v2620 = vpop.f32.mrf.mxu0
      %v2621 = vadd.f32 0.0, %v2620
      %v2622 = vpop.f32.mrf.mxu0
      %2623 = vmatprep.mubr.f32.mxu0 0.0
      %2624 = vmatmul.mubr.f32.gmra.mxu0 %v2552
      %v2625 = vpop.f32.mrf.mxu0
      %v2626 = vadd.f32 0.0, %v2625
      %v2627 = vpop.f32.mrf.mxu0
      %2628 = vdwg.mxu0
      %2629 = vrot.lane.b32.xlu0 %v1928, 104
      %v2630 = vpop.permute.xlu0 %2629
      %2631 = vrot.lane.b32.xlu0 %v1933, 104
      %v2632 = vpop.permute.xlu0 %2631
      %2633 = vrot.lane.b32.xlu0 %v1928, 72
      %v2634 = vpop.permute.xlu0 %2633
      %2635 = vrot.lane.b32.xlu0 %v1933, 72
      %v2636 = vpop.permute.xlu0 %2635
      %v2637 = vsel %vm2034, %v2630, 0
      %v2639 = vsel %vm2034, %v2632, 0
      %v2641 = vsel %vm2034, %v2634, 0
      %v2643 = vsel %vm2034, %v2636, 0
      %2645 = vmatprep.subr.mxu0 0.0
      %2646 = vmatpush1.xpose.msra.mxu0 0.0
      %2647 = vmatprep.subr.mxu0 0.0
      %2648 = vmatpush1.xpose.msra.mxu0 0.0
      %2649 = vmatprep.subr.mxu0 0.0
      %2650 = vmatpush1.xpose.msra.mxu0 0.0
      %2651 = vmatprep.subr.mxu0 0.0
      %2652 = vmatpush1.xpose.msra.mxu0 0.0
      %2653 = vmatprep.subr.mxu0 0.0
      %2654 = vmatpush1.xpose.msra.mxu0 0.0
      %2655 = vmatprep.subr.mxu0 0.0
      %2656 = vmatpush1.xpose.msra.mxu0 0.0
      %2657 = vmatprep.subr.mxu0 0.0
      %2658 = vmatpush1.xpose.msra.mxu0 0.0
      %2659 = vmatprep.subr.mxu0 0.0
      %2660 = vmatpush1.xpose.msra.mxu0 0.0
      %2661 = vmatprep.subr.mxu0 0.0
      %2662 = vmatpush1.xpose.msra.mxu0 0.0
      %2663 = vmatprep.subr.mxu0 0.0
      %2664 = vmatpush1.xpose.msra.mxu0 0.0
      %2665 = vmatprep.subr.mxu0 0.0
      %2666 = vmatpush1.xpose.msra.mxu0 0.0
      %2667 = vmatprep.subr.mxu0 0.0
      %2668 = vmatpush1.xpose.msra.mxu0 0.0
      %2669 = vmatprep.subr.mxu0 0.0
      %2670 = vmatpush1.xpose.msra.mxu0 0.0
      %2671 = vmatprep.subr.mxu0 0.0
      %2672 = vmatpush1.xpose.msra.mxu0 0.0
      %2673 = vmatprep.subr.mxu0 0.0
      %2674 = vmatpush1.xpose.msra.mxu0 %v2643
      %2675 = vmatprep.subr.mxu0 0.0
      %2676 = vmatpush1.xpose.msra.mxu0 %v2641
      %2677 = vmatprep.subr.mxu0 0.0
      %2678 = vmatpush2.xpose.msra.mxu0 0.0
      %2679 = vmatprep.subr.mxu0 0.0
      %2680 = vmatpush2.xpose.msra.mxu0 0.0
      %2681 = vmatprep.subr.mxu0 0.0
      %2682 = vmatpush2.xpose.msra.mxu0 0.0
      %2683 = vmatprep.subr.mxu0 0.0
      %2684 = vmatpush2.xpose.msra.mxu0 0.0
      %2685 = vmatprep.subr.mxu0 0.0
      %2686 = vmatpush2.xpose.msra.mxu0 0.0
      %2687 = vmatprep.subr.mxu0 0.0
      %2688 = vmatpush2.xpose.msra.mxu0 0.0
      %2689 = vmatprep.subr.mxu0 0.0
      %2690 = vmatpush2.xpose.msra.mxu0 0.0
      %2691 = vmatprep.subr.mxu0 0.0
      %2692 = vmatpush2.xpose.msra.mxu0 0.0
      %2693 = vmatprep.subr.mxu0 0.0
      %2694 = vmatpush2.xpose.msra.mxu0 0.0
      %2695 = vmatprep.subr.mxu0 0.0
      %2696 = vmatpush2.xpose.msra.mxu0 0.0
      %2697 = vmatprep.subr.mxu0 0.0
      %2698 = vmatpush2.xpose.msra.mxu0 0.0
      %2699 = vmatprep.subr.mxu0 0.0
      %2700 = vmatpush2.xpose.msra.mxu0 0.0
      %2701 = vmatprep.subr.mxu0 0.0
      %2702 = vmatpush2.xpose.msra.mxu0 0.0
      %2703 = vmatprep.subr.mxu0 0.0
      %2704 = vmatpush2.xpose.msra.mxu0 0.0
      %2705 = vmatprep.subr.mxu0 0.0
      %2706 = vmatpush2.xpose.msra.mxu0 0.0
      %2707 = vmatprep.subr.mxu0 0.0
      %2708 = vmatpush2.xpose.msra.mxu0 0.0
      %2709 = vmatprep.mubr.f32.mxu0 0.0
      %2710 = vmatmul.mubr.f32.gmra.mxu0 %v2637
      %v2711 = vpop.f32.mrf.mxu0
      %v2712 = vadd.f32 0.0, %v2711
      %v2713 = vpop.f32.mrf.mxu0
      %2714 = vmatprep.mubr.f32.mxu0 0.0
      %2715 = vmatmul.mubr.f32.gmra.mxu0 %v2639
      %v2716 = vpop.f32.mrf.mxu0
      %v2717 = vadd.f32 0.0, %v2716
      %v2718 = vpop.f32.mrf.mxu0
      %2719 = vdwg.mxu0
      %v2720 = vmul.f32 %v2712, 0.35355338
      %v2721 = vmul.f32 %v2717, 0.35355338
      %v2722 = vsel %vm1757, %v2720, -inf
      %2723 = vmax.xlane.f32.xlu0 %v2722
      %v2724 = vpop.xlane.xlu0 %2723
      %v2725 = vsel %vm1757, %v2721, -inf
      %2726 = vmax.xlane.f32.xlu0 %v2725
      %v2727 = vpop.xlane.xlu0 %2726
      %v2728 = vsub.f32 %v2720, %v2724
      %v2729 = vsub.f32 %v2721, %v2727
      %v2730 = vmul.f32 %v2728, 1.442695
      %v2731 = vpow.pop %v2730
      %v2732 = vmul.f32 %v2729, 1.442695
      %v2733 = vpow.pop %v2732
      %v2734 = vsel %vm1757, %v2731, 0.0
      %2735 = vadd.xlane.f32.xlu0 %v2734
      %v2736 = vpop.xlane.xlu0 %2735
      %v2737 = vsel %vm1757, %v2733, 0.0
      %2738 = vadd.xlane.f32.xlu0 %v2737
      %v2739 = vpop.xlane.xlu0 %2738
      %v2740 = vrcp.pop %v2736
      %v2741 = vrcp.pop %v2739
      %v2742 = vmul.f32 %v2731, %v2740
      %v2743 = vmul.f32 %v2733, %v2741
      %2744 = vrot.lane.b32.xlu0 %v2020, 104
      %v2745 = vpop.permute.xlu0 %2744
      %2746 = vrot.lane.b32.xlu0 %v2025, 104
      %v2747 = vpop.permute.xlu0 %2746
      %v2751 = vsel %vm1757, %v2742, 0
      %v2754 = vsel %vm1757, %v2743, 0
      %2756 = vmatprep.subr.mxu0 0.0
      %2757 = vmatpush1.msra.mxu0 0.0
      %2758 = vmatprep.subr.mxu0 0.0
      %2759 = vmatpush1.msra.mxu0 0.0
      %2760 = vmatprep.subr.mxu0 0.0
      %2761 = vmatpush1.msra.mxu0 0.0
      %2762 = vmatprep.subr.mxu0 0.0
      %2763 = vmatpush1.msra.mxu0 0.0
      %2764 = vmatprep.subr.mxu0 0.0
      %2765 = vmatpush1.msra.mxu0 0.0
      %2766 = vmatprep.subr.mxu0 0.0
      %2767 = vmatpush1.msra.mxu0 0.0
      %2768 = vmatprep.subr.mxu0 0.0
      %2769 = vmatpush1.msra.mxu0 0.0
      %2770 = vmatprep.subr.mxu0 0.0
      %2771 = vmatpush1.msra.mxu0 0.0
      %2772 = vmatprep.subr.mxu0 0.0
      %2773 = vmatpush1.msra.mxu0 0.0
      %2774 = vmatprep.subr.mxu0 0.0
      %2775 = vmatpush1.msra.mxu0 0.0
      %2776 = vmatprep.subr.mxu0 0.0
      %2777 = vmatpush1.msra.mxu0 0.0
      %2778 = vmatprep.subr.mxu0 0.0
      %2779 = vmatpush1.msra.mxu0 0.0
      %2780 = vmatprep.subr.mxu0 0.0
      %2781 = vmatpush1.msra.mxu0 0.0
      %2782 = vmatprep.subr.mxu0 0.0
      %2783 = vmatpush1.msra.mxu0 0.0
      %2784 = vmatprep.subr.mxu0 0.0
      %2785 = vmatpush1.msra.mxu0 %v2747
      %2786 = vmatprep.subr.mxu0 0.0
      %2787 = vmatpush1.msra.mxu0 %v2745
      %2788 = vmatprep.subr.mxu0 0.0
      %2789 = vmatpush2.msra.mxu0 0.0
      %2790 = vmatprep.subr.mxu0 0.0
      %2791 = vmatpush2.msra.mxu0 0.0
      %2792 = vmatprep.subr.mxu0 0.0
      %2793 = vmatpush2.msra.mxu0 0.0
      %2794 = vmatprep.subr.mxu0 0.0
      %2795 = vmatpush2.msra.mxu0 0.0
      %2796 = vmatprep.subr.mxu0 0.0
      %2797 = vmatpush2.msra.mxu0 0.0
      %2798 = vmatprep.subr.mxu0 0.0
      %2799 = vmatpush2.msra.mxu0 0.0
      %2800 = vmatprep.subr.mxu0 0.0
      %2801 = vmatpush2.msra.mxu0 0.0
      %2802 = vmatprep.subr.mxu0 0.0
      %2803 = vmatpush2.msra.mxu0 0.0
      %2804 = vmatprep.subr.mxu0 0.0
      %2805 = vmatpush2.msra.mxu0 0.0
      %2806 = vmatprep.subr.mxu0 0.0
      %2807 = vmatpush2.msra.mxu0 0.0
      %2808 = vmatprep.subr.mxu0 0.0
      %2809 = vmatpush2.msra.mxu0 0.0
      %2810 = vmatprep.subr.mxu0 0.0
      %2811 = vmatpush2.msra.mxu0 0.0
      %2812 = vmatprep.subr.mxu0 0.0
      %2813 = vmatpush2.msra.mxu0 0.0
      %2814 = vmatprep.subr.mxu0 0.0
      %2815 = vmatpush2.msra.mxu0 0.0
      %2816 = vmatprep.subr.mxu0 0.0
      %2817 = vmatpush2.msra.mxu0 0.0
      %2818 = vmatprep.subr.mxu0 0.0
      %2819 = vmatpush2.msra.mxu0 0.0
      %2820 = vmatprep.mubr.f32.mxu0 0.0
      %2821 = vmatmul.mubr.f32.gmra.mxu0 %v2751
      %v2822 = vpop.f32.mrf.mxu0
      %v2823 = vadd.f32 0.0, %v2822
      %v2824 = vpop.f32.mrf.mxu0
      %2825 = vmatprep.mubr.f32.mxu0 0.0
      %2826 = vmatmul.mubr.f32.gmra.mxu0 %v2754
      %v2827 = vpop.f32.mrf.mxu0
      %v2828 = vadd.f32 0.0, %v2827
      %v2829 = vpop.f32.mrf.mxu0
      %2830 = vdwg.mxu0
      %2833 = vrot.lane.b32.xlu0 %v2419, 8
      %v2834 = vpop.permute.xlu0 %2833
      %2835 = vrot.lane.b32.xlu0 %v2424, 8
      %v2836 = vpop.permute.xlu0 %2835
      %2841 = vrot.lane.b32.xlu0 %v2621, 16
      %v2842 = vpop.permute.xlu0 %2841
      %2843 = vrot.lane.b32.xlu0 %v2626, 16
      %v2844 = vpop.permute.xlu0 %2843
      %2849 = vrot.lane.b32.xlu0 %v2823, 24
      %v2850 = vpop.permute.xlu0 %2849
      %2851 = vrot.lane.b32.xlu0 %v2828, 24
      %v2852 = vpop.permute.xlu0 %2851
      %v2855 = vsel %vm2034, %v2215, %v2834
      %v2856 = vsel %vm2034, %v2220, %v2836
      %v2857 = vsel %vm1757, %v2855, %v2842
      %v2858 = vsel %vm1757, %v2856, %v2844
      %vm2859 = vcmask 195584
      %v2860 = vsel %vm2859, %v2857, %v2850
      %v2861 = vsel %vm2859, %v2858, %v2852
      %v2862 = vld [vmem:[%s23] sm:$0xff]
      %v2863 = vld [vmem:[%s23 + $0x8] sm:$0xff]
      %v2864 = vld [vmem:[%s23 + $0x10] sm:$0xff]
      %v2865 = vld [vmem:[%s23 + $0x18] sm:$0xff]
      %v2866 = vld [vmem:[%s25] sm:$0x1]
      %v2868 = vlaneseq
      %v2869 = vshrl.u32 %v2868, 7
      %v2870 = vsub.s32 0, %v2869
      %v2871 = vrot.slane %v2866, %v2870
      %v2874 = vsel %vm1854, %v2860, 0
      %v2877 = vsel %vm1854, %v2861, 0
      %2879 = vmatprep.subr.mxu0 0.0
      %2880 = vmatpush1.msra.mxu0 0.0
      %2881 = vmatprep.subr.mxu0 0.0
      %2882 = vmatpush1.msra.mxu0 0.0
      %2883 = vmatprep.subr.mxu0 0.0
      %2884 = vmatpush1.msra.mxu0 0.0
      %2885 = vmatprep.subr.mxu0 0.0
      %2886 = vmatpush1.msra.mxu0 0.0
      %2887 = vmatprep.subr.mxu0 0.0
      %2888 = vmatpush1.msra.mxu0 0.0
      %2889 = vmatprep.subr.mxu0 0.0
      %2890 = vmatpush1.msra.mxu0 0.0
      %2891 = vmatprep.subr.mxu0 0.0
      %2892 = vmatpush1.msra.mxu0 0.0
      %2893 = vmatprep.subr.mxu0 0.0
      %2894 = vmatpush1.msra.mxu0 0.0
      %2895 = vmatprep.subr.mxu0 0.0
      %2896 = vmatpush1.msra.mxu0 0.0
      %2897 = vmatprep.subr.mxu0 0.0
      %2898 = vmatpush1.msra.mxu0 0.0
      %2899 = vmatprep.subr.mxu0 0.0
      %2900 = vmatpush1.msra.mxu0 0.0
      %2901 = vmatprep.subr.mxu0 0.0
      %2902 = vmatpush1.msra.mxu0 0.0
      %2903 = vmatprep.subr.mxu0 0.0
      %2904 = vmatpush1.msra.mxu0 %v2865
      %2905 = vmatprep.subr.mxu0 0.0
      %2906 = vmatpush1.msra.mxu0 %v2864
      %2907 = vmatprep.subr.mxu0 0.0
      %2908 = vmatpush1.msra.mxu0 %v2863
      %2909 = vmatprep.subr.mxu0 0.0
      %2910 = vmatpush1.msra.mxu0 %v2862
      %2911 = vmatprep.subr.mxu0 0.0
      %2912 = vmatpush2.msra.mxu0 0.0
      %2913 = vmatprep.subr.mxu0 0.0
      %2914 = vmatpush2.msra.mxu0 0.0
      %2915 = vmatprep.subr.mxu0 0.0
      %2916 = vmatpush2.msra.mxu0 0.0
      %2917 = vmatprep.subr.mxu0 0.0
      %2918 = vmatpush2.msra.mxu0 0.0
      %2919 = vmatprep.subr.mxu0 0.0
      %2920 = vmatpush2.msra.mxu0 0.0
      %2921 = vmatprep.subr.mxu0 0.0
      %2922 = vmatpush2.msra.mxu0 0.0
      %2923 = vmatprep.subr.mxu0 0.0
      %2924 = vmatpush2.msra.mxu0 0.0
      %2925 = vmatprep.subr.mxu0 0.0
      %2926 = vmatpush2.msra.mxu0 0.0
      %2927 = vmatprep.subr.mxu0 0.0
      %2928 = vmatpush2.msra.mxu0 0.0
      %2929 = vmatprep.subr.mxu0 0.0
      %2930 = vmatpush2.msra.mxu0 0.0
      %2931 = vmatprep.subr.mxu0 0.0
      %2932 = vmatpush2.msra.mxu0 0.0
      %2933 = vmatprep.subr.mxu0 0.0
      %2934 = vmatpush2.msra.mxu0 0.0
      %2935 = vmatprep.subr.mxu0 0.0
      %2936 = vmatpush2.msra.mxu0 0.0
      %2937 = vmatprep.subr.mxu0 0.0
      %2938 = vmatpush2.msra.mxu0 0.0
      %2939 = vmatprep.subr.mxu0 0.0
      %2940 = vmatpush2.msra.mxu0 0.0
      %2941 = vmatprep.subr.mxu0 0.0
      %2942 = vmatpush2.msra.mxu0 0.0
      %2943 = vmatprep.mubr.f32.mxu0 0.0
      %2944 = vmatmul.mubr.f32.gmra.mxu0 %v2874
      %v2945 = vpop.f32.mrf.mxu0
      %v2946 = vadd.f32 %v2871, %v2945
      %v2947 = vpop.f32.mrf.mxu0
      %2948 = vmatprep.mubr.f32.mxu0 0.0
      %2949 = vmatmul.mubr.f32.gmra.mxu0 %v2877
      %v2950 = vpop.f32.mrf.mxu0
      %v2951 = vadd.f32 %v2871, %v2950
      %v2952 = vpop.f32.mrf.mxu0
      %2953 = vdwg.mxu0
      %v2954 = vadd.f32 %v1831, %v2946
      %v2955 = vadd.f32 %v1836, %v2951
      %v2956 = vld [vmem:[%s27] sm:$0x1]
      %v2957 = vld [vmem:[%s29] sm:$0x1]
      %v2958 = vsel %vm1854, %v2954, 0.0
      %2959 = vadd.xlane.f32.xlu0 %v2958
      %v2960 = vpop.xlane.xlu0 %2959
      %v2961 = vsel %vm1854, %v2955, 0.0
      %2962 = vadd.xlane.f32.xlu0 %v2961
      %v2963 = vpop.xlane.xlu0 %2962
      %v2964 = vrcp.pop 32.0
      %v2965 = vmul.f32 %v2960, %v2964
      %v2966 = vmul.f32 %v2963, %v2964
      %v2967 = vsub.f32 %v2954, %v2965
      %v2968 = vsub.f32 %v2955, %v2966
      %v2969 = vmul.f32 %v2967, %v2967
      %v2970 = vmul.f32 %v2968, %v2968
      %v2971 = vsel %vm1854, %v2969, 0.0
      %2972 = vadd.xlane.f32.xlu0 %v2971
      %v2973 = vpop.xlane.xlu0 %2972
      %v2974 = vsel %vm1854, %v2970, 0.0
      %2975 = vadd.xlane.f32.xlu0 %v2974
      %v2976 = vpop.xlane.xlu0 %2975
      %v2977 = vmul.f32 %v2973, %v2964
      %v2978 = vmul.f32 %v2976, %v2964
      %v2979 = vadd.f32 %v2977, 1e-05
      %v2980 = vadd.f32 %v2978, 1e-05
      %v2981 = vrsqrt.pop %v2979
      %v2982 = vrsqrt.pop %v2980
      %v2983 = vmul.f32 %v2967, %v2981
      %v2984 = vmul.f32 %v2968, %v2982
      %v2986 = vlaneseq
      %v2987 = vshrl.u32 %v2986, 7
      %v2988 = vsub.s32 0, %v2987
      %v2989 = vrot.slane %v2956, %v2988
      %v2991 = vmul.f32 %v2983, %v2989
      %v2992 = vmul.f32 %v2984, %v2989
      %v2994 = vlaneseq
      %v2995 = vshrl.u32 %v2994, 7
      %v2996 = vsub.s32 0, %v2995
      %v2997 = vrot.slane %v2957, %v2996
      %v2999 = vadd.f32 %v2991, %v2997
      %v3000 = vadd.f32 %v2992, %v2997
      %v3001 = vld [vmem:[%s31] sm:$0xff]
      %v3002 = vld [vmem:[%s31 + $0x8] sm:$0xff]
      %v3003 = vld [vmem:[%s31 + $0x10] sm:$0xff]
      %v3004 = vld [vmem:[%s31 + $0x18] sm:$0xff]
      %v3005 = vld [vmem:[%s33] sm:$0x1]
      %v3007 = vlaneseq
      %v3008 = vshrl.u32 %v3007, 7
      %v3009 = vsub.s32 0, %v3008
      %v3010 = vrot.slane %v3005, %v3009
      %v3013 = vsel %vm1854, %v2999, 0
      %v3016 = vsel %vm1854, %v3000, 0
      %3018 = vmatprep.subr.mxu0 0.0
      %3019 = vmatpush1.msra.mxu0 0.0
      %3020 = vmatprep.subr.mxu0 0.0
      %3021 = vmatpush1.msra.mxu0 0.0
      %3022 = vmatprep.subr.mxu0 0.0
      %3023 = vmatpush1.msra.mxu0 0.0
      %3024 = vmatprep.subr.mxu0 0.0
      %3025 = vmatpush1.msra.mxu0 0.0
      %3026 = vmatprep.subr.mxu0 0.0
      %3027 = vmatpush1.msra.mxu0 0.0
      %3028 = vmatprep.subr.mxu0 0.0
      %3029 = vmatpush1.msra.mxu0 0.0
      %3030 = vmatprep.subr.mxu0 0.0
      %3031 = vmatpush1.msra.mxu0 0.0
      %3032 = vmatprep.subr.mxu0 0.0
      %3033 = vmatpush1.msra.mxu0 0.0
      %3034 = vmatprep.subr.mxu0 0.0
      %3035 = vmatpush1.msra.mxu0 0.0
      %3036 = vmatprep.subr.mxu0 0.0
      %3037 = vmatpush1.msra.mxu0 0.0
      %3038 = vmatprep.subr.mxu0 0.0
      %3039 = vmatpush1.msra.mxu0 0.0
      %3040 = vmatprep.subr.mxu0 0.0
      %3041 = vmatpush1.msra.mxu0 0.0
      %3042 = vmatprep.subr.mxu0 0.0
      %3043 = vmatpush1.msra.mxu0 %v3004
      %3044 = vmatprep.subr.mxu0 0.0
      %3045 = vmatpush1.msra.mxu0 %v3003
      %3046 = vmatprep.subr.mxu0 0.0
      %3047 = vmatpush1.msra.mxu0 %v3002
      %3048 = vmatprep.subr.mxu0 0.0
      %3049 = vmatpush1.msra.mxu0 %v3001
      %3050 = vmatprep.subr.mxu0 0.0
      %3051 = vmatpush2.msra.mxu0 0.0
      %3052 = vmatprep.subr.mxu0 0.0
      %3053 = vmatpush2.msra.mxu0 0.0
      %3054 = vmatprep.subr.mxu0 0.0
      %3055 = vmatpush2.msra.mxu0 0.0
      %3056 = vmatprep.subr.mxu0 0.0
      %3057 = vmatpush2.msra.mxu0 0.0
      %3058 = vmatprep.subr.mxu0 0.0
      %3059 = vmatpush2.msra.mxu0 0.0
      %3060 = vmatprep.subr.mxu0 0.0
      %3061 = vmatpush2.msra.mxu0 0.0
      %3062 = vmatprep.subr.mxu0 0.0
      %3063 = vmatpush2.msra.mxu0 0.0
      %3064 = vmatprep.subr.mxu0 0.0
      %3065 = vmatpush2.msra.mxu0 0.0
      %3066 = vmatprep.subr.mxu0 0.0
      %3067 = vmatpush2.msra.mxu0 0.0
      %3068 = vmatprep.subr.mxu0 0.0
      %3069 = vmatpush2.msra.mxu0 0.0
      %3070 = vmatprep.subr.mxu0 0.0
      %3071 = vmatpush2.msra.mxu0 0.0
      %3072 = vmatprep.subr.mxu0 0.0
      %3073 = vmatpush2.msra.mxu0 0.0
      %3074 = vmatprep.subr.mxu0 0.0
      %3075 = vmatpush2.msra.mxu0 0.0
      %3076 = vmatprep.subr.mxu0 0.0
      %3077 = vmatpush2.msra.mxu0 0.0
      %3078 = vmatprep.subr.mxu0 0.0
      %3079 = vmatpush2.msra.mxu0 0.0
      %3080 = vmatprep.subr.mxu0 0.0
      %3081 = vmatpush2.msra.mxu0 0.0
      %3082 = vmatprep.mubr.f32.mxu0 0.0
      %3083 = vmatmul.mubr.f32.gmra.mxu0 %v3013
      %v3084 = vpop.f32.mrf.mxu0
      %v3085 = vadd.f32 %v3010, %v3084
      %v3086 = vpop.f32.mrf.mxu0
      %3087 = vmatprep.mubr.f32.mxu0 0.0
      %3088 = vmatmul.mubr.f32.gmra.mxu0 %v3016
      %v3089 = vpop.f32.mrf.mxu0
      %v3090 = vadd.f32 %v3010, %v3089
      %v3091 = vpop.f32.mrf.mxu0
      %3092 = vdwg.mxu0
      %v3093 = vmax.f32 %v3085, 0.0
      %v3094 = vmax.f32 %v3090, 0.0
      %v3095 = vld [vmem:[%s35] sm:$0xff]
      %v3096 = vld [vmem:[%s35 + $0x8] sm:$0xff]
      %v3097 = vld [vmem:[%s35 + $0x10] sm:$0xff]
      %v3098 = vld [vmem:[%s35 + $0x18] sm:$0xff]
      %v3099 = vld [vmem:[%s35 + $0x20] sm:$0xff]
      %v3100 = vld [vmem:[%s35 + $0x28] sm:$0xff]
      %v3101 = vld [vmem:[%s35 + $0x30] sm:$0xff]
      %v3102 = vld [vmem:[%s35 + $0x38] sm:$0xff]
      %v3103 = vld [vmem:[%s37] sm:$0x1]
      %v3105 = vlaneseq
      %v3106 = vshrl.u32 %v3105, 7
      %v3107 = vsub.s32 0, %v3106
      %v3108 = vrot.slane %v3103, %v3107
      %vm3110 = vcmask 523264
      %v3112 = vsel %vm3110, %v3093, 0
      %v3115 = vsel %vm3110, %v3094, 0
      %3117 = vmatprep.subr.mxu0 0.0
      %3118 = vmatpush1.msra.mxu0 0.0
      %3119 = vmatprep.subr.mxu0 0.0
      %3120 = vmatpush1.msra.mxu0 0.0
      %3121 = vmatprep.subr.mxu0 0.0
      %3122 = vmatpush1.msra.mxu0 0.0
      %3123 = vmatprep.subr.mxu0 0.0
      %3124 = vmatpush1.msra.mxu0 0.0
      %3125 = vmatprep.subr.mxu0 0.0
      %3126 = vmatpush1.msra.mxu0 0.0
      %3127 = vmatprep.subr.mxu0 0.0
      %3128 = vmatpush1.msra.mxu0 0.0
      %3129 = vmatprep.subr.mxu0 0.0
      %3130 = vmatpush1.msra.mxu0 0.0
      %3131 = vmatprep.subr.mxu0 0.0
      %3132 = vmatpush1.msra.mxu0 0.0
      %3133 = vmatprep.subr.mxu0 0.0
      %3134 = vmatpush1.msra.mxu0 %v3102
      %3135 = vmatprep.subr.mxu0 0.0
      %3136 = vmatpush1.msra.mxu0 %v3101
      %3137 = vmatprep.subr.mxu0 0.0
      %3138 = vmatpush1.msra.mxu0 %v3100
      %3139 = vmatprep.subr.mxu0 0.0
      %3140 = vmatpush1.msra.mxu0 %v3099
      %3141 = vmatprep.subr.mxu0 0.0
      %3142 = vmatpush1.msra.mxu0 %v3098
      %3143 = vmatprep.subr.mxu0 0.0
      %3144 = vmatpush1.msra.mxu0 %v3097
      %3145 = vmatprep.subr.mxu0 0.0
      %3146 = vmatpush1.msra.mxu0 %v3096
      %3147 = vmatprep.subr.mxu0 0.0
      %3148 = vmatpush1.msra.mxu0 %v3095
      %3149 = vmatprep.subr.mxu0 0.0
      %3150 = vmatpush2.msra.mxu0 0.0
      %3151 = vmatprep.subr.mxu0 0.0
      %3152 = vmatpush2.msra.mxu0 0.0
      %3153 = vmatprep.subr.mxu0 0.0
      %3154 = vmatpush2.msra.mxu0 0.0
      %3155 = vmatprep.subr.mxu0 0.0
      %3156 = vmatpush2.msra.mxu0 0.0
      %3157 = vmatprep.subr.mxu0 0.0
      %3158 = vmatpush2.msra.mxu0 0.0
      %3159 = vmatprep.subr.mxu0 0.0
      %3160 = vmatpush2.msra.mxu0 0.0
      %3161 = vmatprep.subr.mxu0 0.0
      %3162 = vmatpush2.msra.mxu0 0.0
      %3163 = vmatprep.subr.mxu0 0.0
      %3164 = vmatpush2.msra.mxu0 0.0
      %3165 = vmatprep.subr.mxu0 0.0
      %3166 = vmatpush2.msra.mxu0 0.0
      %3167 = vmatprep.subr.mxu0 0.0
      %3168 = vmatpush2.msra.mxu0 0.0
      %3169 = vmatprep.subr.mxu0 0.0
      %3170 = vmatpush2.msra.mxu0 0.0
      %3171 = vmatprep.subr.mxu0 0.0
      %3172 = vmatpush2.msra.mxu0 0.0
      %3173 = vmatprep.subr.mxu0 0.0
      %3174 = vmatpush2.msra.mxu0 0.0
      %3175 = vmatprep.subr.mxu0 0.0
      %3176 = vmatpush2.msra.mxu0 0.0
      %3177 = vmatprep.subr.mxu0 0.0
      %3178 = vmatpush2.msra.mxu0 0.0
      %3179 = vmatprep.subr.mxu0 0.0
      %3180 = vmatpush2.msra.mxu0 0.0
      %3181 = vmatprep.mubr.f32.mxu0 0.0
      %3182 = vmatmul.mubr.f32.gmra.mxu0 %v3112
      %v3183 = vpop.f32.mrf.mxu0
      %v3184 = vadd.f32 %v3108, %v3183
      %v3185 = vpop.f32.mrf.mxu0
      %3186 = vmatprep.mubr.f32.mxu0 0.0
      %3187 = vmatmul.mubr.f32.gmra.mxu0 %v3115
      %v3188 = vpop.f32.mrf.mxu0
      %v3189 = vadd.f32 %v3108, %v3188
      %v3190 = vpop.f32.mrf.mxu0
      %3191 = vdwg.mxu0
      %v3192 = vadd.f32 %v2999, %v3184
      %v3193 = vadd.f32 %v3000, %v3189
      %v3194 = vld [vmem:[%s39] sm:$0x1]
      %v3195 = vld [vmem:[%s41] sm:$0x1]
      %v3196 = vsel %vm1854, %v3192, 0.0
      %3197 = vadd.xlane.f32.xlu0 %v3196
      %v3198 = vpop.xlane.xlu0 %3197
      %v3199 = vsel %vm1854, %v3193, 0.0
      %3200 = vadd.xlane.f32.xlu0 %v3199
      %v3201 = vpop.xlane.xlu0 %3200
      %v3202 = vmul.f32 %v3198, %v2964
      %v3203 = vmul.f32 %v3201, %v2964
      %v3204 = vsub.f32 %v3192, %v3202
      %v3205 = vsub.f32 %v3193, %v3203
      %v3206 = vmul.f32 %v3204, %v3204
      %v3207 = vmul.f32 %v3205, %v3205
      %v3208 = vsel %vm1854, %v3206, 0.0
      %3209 = vadd.xlane.f32.xlu0 %v3208
      %v3210 = vpop.xlane.xlu0 %3209
      %v3211 = vsel %vm1854, %v3207, 0.0
      %3212 = vadd.xlane.f32.xlu0 %v3211
      %v3213 = vpop.xlane.xlu0 %3212
      %v3214 = vmul.f32 %v3210, %v2964
      %v3215 = vmul.f32 %v3213, %v2964
      %v3216 = vadd.f32 %v3214, 1e-05
      %v3217 = vadd.f32 %v3215, 1e-05
      %v3218 = vrsqrt.pop %v3216
      %v3219 = vrsqrt.pop %v3217
      %v3220 = vmul.f32 %v3204, %v3218
      %v3221 = vmul.f32 %v3205, %v3219
      %v3223 = vlaneseq
      %v3224 = vshrl.u32 %v3223, 7
      %v3225 = vsub.s32 0, %v3224
      %v3226 = vrot.slane %v3194, %v3225
      %v3228 = vmul.f32 %v3220, %v3226
      %v3229 = vmul.f32 %v3221, %v3226
      %v3231 = vlaneseq
      %v3232 = vshrl.u32 %v3231, 7
      %v3233 = vsub.s32 0, %v3232
      %v3234 = vrot.slane %v3195, %v3233
      %v3236 = vadd.f32 %v3228, %v3234
      %v3237 = vadd.f32 %v3229, %v3234
      %v3238 = vld [vmem:[%s5] sm:$0xff]
      %v3239 = vadd.f32 %v3238, 0.0
      %v3240 = vld [vmem:[%s43] sm:$0xff]
      %v3241 = vld [vmem:[%s43 + $0x8] sm:$0xff]
      %v3242 = vld [vmem:[%s43 + $0x10] sm:$0xff]
      %v3243 = vld [vmem:[%s43 + $0x18] sm:$0xff]
      %v3244 = vld [vmem:[%s45] sm:$0x1]
      %v3246 = vlaneseq
      %v3247 = vshrl.u32 %v3246, 7
      %v3248 = vsub.s32 0, %v3247
      %v3249 = vrot.slane %v3244, %v3248
      %v3252 = vsel %vm1854, %v3239, 0
      %3254 = vmatprep.subr.mxu0 0.0
      %3255 = vmatpush1.msra.mxu0 0.0
      %3256 = vmatprep.subr.mxu0 0.0
      %3257 = vmatpush1.msra.mxu0 0.0
      %3258 = vmatprep.subr.mxu0 0.0
      %3259 = vmatpush1.msra.mxu0 0.0
      %3260 = vmatprep.subr.mxu0 0.0
      %3261 = vmatpush1.msra.mxu0 0.0
      %3262 = vmatprep.subr.mxu0 0.0
      %3263 = vmatpush1.msra.mxu0 0.0
      %3264 = vmatprep.subr.mxu0 0.0
      %3265 = vmatpush1.msra.mxu0 0.0
      %3266 = vmatprep.subr.mxu0 0.0
      %3267 = vmatpush1.msra.mxu0 0.0
      %3268 = vmatprep.subr.mxu0 0.0
      %3269 = vmatpush1.msra.mxu0 0.0
      %3270 = vmatprep.subr.mxu0 0.0
      %3271 = vmatpush1.msra.mxu0 0.0
      %3272 = vmatprep.subr.mxu0 0.0
      %3273 = vmatpush1.msra.mxu0 0.0
      %3274 = vmatprep.subr.mxu0 0.0
      %3275 = vmatpush1.msra.mxu0 0.0
      %3276 = vmatprep.subr.mxu0 0.0
      %3277 = vmatpush1.msra.mxu0 0.0
      %3278 = vmatprep.subr.mxu0 0.0
      %3279 = vmatpush1.msra.mxu0 %v3243
      %3280 = vmatprep.subr.mxu0 0.0
      %3281 = vmatpush1.msra.mxu0 %v3242
      %3282 = vmatprep.subr.mxu0 0.0
      %3283 = vmatpush1.msra.mxu0 %v3241
      %3284 = vmatprep.subr.mxu0 0.0
      %3285 = vmatpush1.msra.mxu0 %v3240
      %3286 = vmatprep.subr.mxu0 0.0
      %3287 = vmatpush2.msra.mxu0 0.0
      %3288 = vmatprep.subr.mxu0 0.0
      %3289 = vmatpush2.msra.mxu0 0.0
      %3290 = vmatprep.subr.mxu0 0.0
      %3291 = vmatpush2.msra.mxu0 0.0
      %3292 = vmatprep.subr.mxu0 0.0
      %3293 = vmatpush2.msra.mxu0 0.0
      %3294 = vmatprep.subr.mxu0 0.0
      %3295 = vmatpush2.msra.mxu0 0.0
      %3296 = vmatprep.subr.mxu0 0.0
      %3297 = vmatpush2.msra.mxu0 0.0
      %3298 = vmatprep.subr.mxu0 0.0
      %3299 = vmatpush2.msra.mxu0 0.0
      %3300 = vmatprep.subr.mxu0 0.0
      %3301 = vmatpush2.msra.mxu0 0.0
      %3302 = vmatprep.subr.mxu0 0.0
      %3303 = vmatpush2.msra.mxu0 0.0
      %3304 = vmatprep.subr.mxu0 0.0
      %3305 = vmatpush2.msra.mxu0 0.0
      %3306 = vmatprep.subr.mxu0 0.0
      %3307 = vmatpush2.msra.mxu0 0.0
      %3308 = vmatprep.subr.mxu0 0.0
      %3309 = vmatpush2.msra.mxu0 0.0
      %3310 = vmatprep.subr.mxu0 0.0
      %3311 = vmatpush2.msra.mxu0 0.0
      %3312 = vmatprep.subr.mxu0 0.0
      %3313 = vmatpush2.msra.mxu0 0.0
      %3314 = vmatprep.subr.mxu0 0.0
      %3315 = vmatpush2.msra.mxu0 0.0
      %3316 = vmatprep.subr.mxu0 0.0
      %3317 = vmatpush2.msra.mxu0 0.0
      %3318 = vmatprep.mubr.f32.mxu0 0.0
      %3319 = vmatmul.mubr.f32.gmra.mxu0 %v3252
      %v3320 = vpop.f32.mrf.mxu0
      %v3321 = vadd.f32 %v3249, %v3320
      %v3322 = vpop.f32.mrf.mxu0
      %3323 = vdwg.mxu0
      %v3324 = vld [vmem:[%s47] sm:$0xff]
      %v3325 = vld [vmem:[%s47 + $0x8] sm:$0xff]
      %v3326 = vld [vmem:[%s47 + $0x10] sm:$0xff]
      %v3327 = vld [vmem:[%s47 + $0x18] sm:$0xff]
      %v3328 = vld [vmem:[%s49] sm:$0x1]
      %v3330 = vlaneseq
      %v3331 = vshrl.u32 %v3330, 7
      %v3332 = vsub.s32 0, %v3331
      %v3333 = vrot.slane %v3328, %v3332
      %v3336 = vsel %vm1854, 0.0, 0
      %3338 = vmatprep.subr.mxu0 0.0
      %3339 = vmatpush1.msra.mxu0 0.0
      %3340 = vmatprep.subr.mxu0 0.0
      %3341 = vmatpush1.msra.mxu0 0.0
      %3342 = vmatprep.subr.mxu0 0.0
      %3343 = vmatpush1.msra.mxu0 0.0
      %3344 = vmatprep.subr.mxu0 0.0
      %3345 = vmatpush1.msra.mxu0 0.0
      %3346 = vmatprep.subr.mxu0 0.0
      %3347 = vmatpush1.msra.mxu0 0.0
      %3348 = vmatprep.subr.mxu0 0.0
      %3349 = vmatpush1.msra.mxu0 0.0
      %3350 = vmatprep.subr.mxu0 0.0
      %3351 = vmatpush1.msra.mxu0 0.0
      %3352 = vmatprep.subr.mxu0 0.0
      %3353 = vmatpush1.msra.mxu0 0.0
      %3354 = vmatprep.subr.mxu0 0.0
      %3355 = vmatpush1.msra.mxu0 0.0
      %3356 = vmatprep.subr.mxu0 0.0
      %3357 = vmatpush1.msra.mxu0 0.0
      %3358 = vmatprep.subr.mxu0 0.0
      %3359 = vmatpush1.msra.mxu0 0.0
      %3360 = vmatprep.subr.mxu0 0.0
      %3361 = vmatpush1.msra.mxu0 0.0
      %3362 = vmatprep.subr.mxu0 0.0
      %3363 = vmatpush1.msra.mxu0 %v3327
      %3364 = vmatprep.subr.mxu0 0.0
      %3365 = vmatpush1.msra.mxu0 %v3326
      %3366 = vmatprep.subr.mxu0 0.0
      %3367 = vmatpush1.msra.mxu0 %v3325
      %3368 = vmatprep.subr.mxu0 0.0
      %3369 = vmatpush1.msra.mxu0 %v3324
      %3370 = vmatprep.subr.mxu0 0.0
      %3371 = vmatpush2.msra.mxu0 0.0
      %3372 = vmatprep.subr.mxu0 0.0
      %3373 = vmatpush2.msra.mxu0 0.0
      %3374 = vmatprep.subr.mxu0 0.0
      %3375 = vmatpush2.msra.mxu0 0.0
      %3376 = vmatprep.subr.mxu0 0.0
      %3377 = vmatpush2.msra.mxu0 0.0
      %3378 = vmatprep.subr.mxu0 0.0
      %3379 = vmatpush2.msra.mxu0 0.0
      %3380 = vmatprep.subr.mxu0 0.0
      %3381 = vmatpush2.msra.mxu0 0.0
      %3382 = vmatprep.subr.mxu0 0.0
      %3383 = vmatpush2.msra.mxu0 0.0
      %3384 = vmatprep.subr.mxu0 0.0
      %3385 = vmatpush2.msra.mxu0 0.0
      %3386 = vmatprep.subr.mxu0 0.0
      %3387 = vmatpush2.msra.mxu0 0.0
      %3388 = vmatprep.subr.mxu0 0.0
      %3389 = vmatpush2.msra.mxu0 0.0
      %3390 = vmatprep.subr.mxu0 0.0
      %3391 = vmatpush2.msra.mxu0 0.0
      %3392 = vmatprep.subr.mxu0 0.0
      %3393 = vmatpush2.msra.mxu0 0.0
      %3394 = vmatprep.subr.mxu0 0.0
      %3395 = vmatpush2.msra.mxu0 0.0
      %3396 = vmatprep.subr.mxu0 0.0
      %3397 = vmatpush2.msra.mxu0 0.0
      %3398 = vmatprep.subr.mxu0 0.0
      %3399 = vmatpush2.msra.mxu0 0.0
      %3400 = vmatprep.subr.mxu0 0.0
      %3401 = vmatpush2.msra.mxu0 0.0
      %3402 = vmatprep.mubr.f32.mxu0 0.0
      %3403 = vmatmul.mubr.f32.gmra.mxu0 %v3336
      %v3404 = vpop.f32.mrf.mxu0
      %v3405 = vadd.f32 %v3333, %v3404
      %v3406 = vpop.f32.mrf.mxu0
      %3407 = vdwg.mxu0
      %3409 = vrot.lane.b32.xlu0 %v3321, 96
      %v3410 = vpop.permute.xlu0 %3409
      %v3411 = vsel %vm2034, %v3321, 0
      %v3413 = vsel %vm2034, %v3410, 0
      %3415 = vmatprep.subr.mxu0 0.0
      %3416 = vmatpush1.xpose.msra.mxu0 0.0
      %3417 = vmatprep.subr.mxu0 0.0
      %3418 = vmatpush1.xpose.msra.mxu0 0.0
      %3419 = vmatprep.subr.mxu0 0.0
      %3420 = vmatpush1.xpose.msra.mxu0 0.0
      %3421 = vmatprep.subr.mxu0 0.0
      %3422 = vmatpush1.xpose.msra.mxu0 0.0
      %3423 = vmatprep.subr.mxu0 0.0
      %3424 = vmatpush1.xpose.msra.mxu0 0.0
      %3425 = vmatprep.subr.mxu0 0.0
      %3426 = vmatpush1.xpose.msra.mxu0 0.0
      %3427 = vmatprep.subr.mxu0 0.0
      %3428 = vmatpush1.xpose.msra.mxu0 0.0
      %3429 = vmatprep.subr.mxu0 0.0
      %3430 = vmatpush1.xpose.msra.mxu0 0.0
      %3431 = vmatprep.subr.mxu0 0.0
      %3432 = vmatpush1.xpose.msra.mxu0 0.0
      %3433 = vmatprep.subr.mxu0 0.0
      %3434 = vmatpush1.xpose.msra.mxu0 0.0
      %3435 = vmatprep.subr.mxu0 0.0
      %3436 = vmatpush1.xpose.msra.mxu0 0.0
      %3437 = vmatprep.subr.mxu0 0.0
      %3438 = vmatpush1.xpose.msra.mxu0 0.0
      %3439 = vmatprep.subr.mxu0 0.0
      %3440 = vmatpush1.xpose.msra.mxu0 0.0
      %3441 = vmatprep.subr.mxu0 0.0
      %3442 = vmatpush1.xpose.msra.mxu0 0.0
      %3443 = vmatprep.subr.mxu0 0.0
      %3444 = vmatpush1.xpose.msra.mxu0 0.0
      %3445 = vmatprep.subr.mxu0 0.0
      %3446 = vmatpush1.xpose.msra.mxu0 %v3413
      %3447 = vmatprep.subr.mxu0 0.0
      %3448 = vmatpush2.xpose.msra.mxu0 0.0
      %3449 = vmatprep.subr.mxu0 0.0
      %3450 = vmatpush2.xpose.msra.mxu0 0.0
      %3451 = vmatprep.subr.mxu0 0.0
      %3452 = vmatpush2.xpose.msra.mxu0 0.0
      %3453 = vmatprep.subr.mxu0 0.0
      %3454 = vmatpush2.xpose.msra.mxu0 0.0
      %3455 = vmatprep.subr.mxu0 0.0
      %3456 = vmatpush2.xpose.msra.mxu0 0.0
      %3457 = vmatprep.subr.mxu0 0.0
      %3458 = vmatpush2.xpose.msra.mxu0 0.0
      %3459 = vmatprep.subr.mxu0 0.0
      %3460 = vmatpush2.xpose.msra.mxu0 0.0
      %3461 = vmatprep.subr.mxu0 0.0
      %3462 = vmatpush2.xpose.msra.mxu0 0.0
      %3463 = vmatprep.subr.mxu0 0.0
      %3464 = vmatpush2.xpose.msra.mxu0 0.0
      %3465 = vmatprep.subr.mxu0 0.0
      %3466 = vmatpush2.xpose.msra.mxu0 0.0
      %3467 = vmatprep.subr.mxu0 0.0
      %3468 = vmatpush2.xpose.msra.mxu0 0.0
      %3469 = vmatprep.subr.mxu0 0.0
      %3470 = vmatpush2.xpose.msra.mxu0 0.0
      %3471 = vmatprep.subr.mxu0 0.0
      %3472 = vmatpush2.xpose.msra.mxu0 0.0
      %3473 = vmatprep.subr.mxu0 0.0
      %3474 = vmatpush2.xpose.msra.mxu0 0.0
      %3475 = vmatprep.subr.mxu0 0.0
      %3476 = vmatpush2.xpose.msra.mxu0 0.0
      %3477 = vmatprep.subr.mxu0 0.0
      %3478 = vmatpush2.xpose.msra.mxu0 0.0
      %3479 = vmatprep.mubr.f32.mxu0 0.0
      %3480 = vmatmul.mubr.f32.gmra.mxu0 %v3411
      %v3481 = vpop.f32.mrf.mxu0
      %v3482 = vadd.f32 0.0, %v3481
      %v3483 = vpop.f32.mrf.mxu0
      %3484 = vdwg.mxu0
      %v3485 = vmul.f32 %v3482, 0.35355338
      %v3486 = vsel %vm2034, %v3485, -inf
      %3487 = vmax.xlane.f32.xlu0 %v3486
      %v3488 = vpop.xlane.xlu0 %3487
      %v3489 = vsub.f32 %v3485, %v3488
      %v3490 = vmul.f32 %v3489, 1.442695
      %v3491 = vpow.pop %v3490
      %v3492 = vsel %vm2034, %v3491, 0.0
      %3493 = vadd.xlane.f32.xlu0 %v3492
      %v3494 = vpop.xlane.xlu0 %3493
      %v3495 = vrcp.pop %v3494
      %v3496 = vmul.f32 %v3491, %v3495
      %v3498 = vsel %vm2034, %v3496, 0
      %3500 = vmatprep.subr.mxu0 0.0
      %3501 = vmatpush1.msra.mxu0 0.0
      %3502 = vmatprep.subr.mxu0 0.0
      %3503 = vmatpush1.msra.mxu0 0.0
      %3504 = vmatprep.subr.mxu0 0.0
      %3505 = vmatpush1.msra.mxu0 0.0
      %3506 = vmatprep.subr.mxu0 0.0
      %3507 = vmatpush1.msra.mxu0 0.0
      %3508 = vmatprep.subr.mxu0 0.0
      %3509 = vmatpush1.msra.mxu0 0.0
      %3510 = vmatprep.subr.mxu0 0.0
      %3511 = vmatpush1.msra.mxu0 0.0
      %3512 = vmatprep.subr.mxu0 0.0
      %3513 = vmatpush1.msra.mxu0 0.0
      %3514 = vmatprep.subr.mxu0 0.0
      %3515 = vmatpush1.msra.mxu0 0.0
      %3516 = vmatprep.subr.mxu0 0.0
      %3517 = vmatpush1.msra.mxu0 0.0
      %3518 = vmatprep.subr.mxu0 0.0
      %3519 = vmatpush1.msra.mxu0 0.0
      %3520 = vmatprep.subr.mxu0 0.0
      %3521 = vmatpush1.msra.mxu0 0.0
      %3522 = vmatprep.subr.mxu0 0.0
      %3523 = vmatpush1.msra.mxu0 0.0
      %3524 = vmatprep.subr.mxu0 0.0
      %3525 = vmatpush1.msra.mxu0 0.0
      %3526 = vmatprep.subr.mxu0 0.0
      %3527 = vmatpush1.msra.mxu0 0.0
      %3528 = vmatprep.subr.mxu0 0.0
      %3529 = vmatpush1.msra.mxu0 0.0
      %3530 = vmatprep.subr.mxu0 0.0
      %3531 = vmatpush1.msra.mxu0 %v3405
      %3532 = vmatprep.subr.mxu0 0.0
      %3533 = vmatpush2.msra.mxu0 0.0
      %3534 = vmatprep.subr.mxu0 0.0
      %3535 = vmatpush2.msra.mxu0 0.0
      %3536 = vmatprep.subr.mxu0 0.0
      %3537 = vmatpush2.msra.mxu0 0.0
      %3538 = vmatprep.subr.mxu0 0.0
      %3539 = vmatpush2.msra.mxu0 0.0
      %3540 = vmatprep.subr.mxu0 0.0
      %3541 = vmatpush2.msra.mxu0 0.0
      %3542 = vmatprep.subr.mxu0 0.0
      %3543 = vmatpush2.msra.mxu0 0.0
      %3544 = vmatprep.subr.mxu0 0.0
      %3545 = vmatpush2.msra.mxu0 0.0
      %3546 = vmatprep.subr.mxu0 0.0
      %3547 = vmatpush2.msra.mxu0 0.0
      %3548 = vmatprep.subr.mxu0 0.0
      %3549 = vmatpush2.msra.mxu0 0.0
      %3550 = vmatprep.subr.mxu0 0.0
      %3551 = vmatpush2.msra.mxu0 0.0
      %3552 = vmatprep.subr.mxu0 0.0
      %3553 = vmatpush2.msra.mxu0 0.0
      %3554 = vmatprep.subr.mxu0 0.0
      %3555 = vmatpush2.msra.mxu0 0.0
      %3556 = vmatprep.subr.mxu0 0.0
      %3557 = vmatpush2.msra.mxu0 0.0
      %3558 = vmatprep.subr.mxu0 0.0
      %3559 = vmatpush2.msra.mxu0 0.0
      %3560 = vmatprep.subr.mxu0 0.0
      %3561 = vmatpush2.msra.mxu0 0.0
      %3562 = vmatprep.subr.mxu0 0.0
      %3563 = vmatpush2.msra.mxu0 0.0
      %3564 = vmatprep.mubr.f32.mxu0 0.0
      %3565 = vmatmul.mubr.f32.gmra.mxu0 %v3498
      %v3566 = vpop.f32.mrf.mxu0
      %v3567 = vadd.f32 0.0, %v3566
      %v3568 = vpop.f32.mrf.mxu0
      %3569 = vdwg.mxu0
      %3570 = vrot.lane.b32.xlu0 %v3321, 120
      %v3571 = vpop.permute.xlu0 %3570
      %3572 = vrot.lane.b32.xlu0 %v3321, 88
      %v3573 = vpop.permute.xlu0 %3572
      %v3574 = vsel %vm2034, %v3571, 0
      %v3576 = vsel %vm2034, %v3573, 0
      %3578 = vmatprep.subr.mxu0 0.0
      %3579 = vmatpush1.xpose.msra.mxu0 0.0
      %3580 = vmatprep.subr.mxu0 0.0
      %3581 = vmatpush1.xpose.msra.mxu0 0.0
      %3582 = vmatprep.subr.mxu0 0.0
      %3583 = vmatpush1.xpose.msra.mxu0 0.0
      %3584 = vmatprep.subr.mxu0 0.0
      %3585 = vmatpush1.xpose.msra.mxu0 0.0
      %3586 = vmatprep.subr.mxu0 0.0
      %3587 = vmatpush1.xpose.msra.mxu0 0.0
      %3588 = vmatprep.subr.mxu0 0.0
      %3589 = vmatpush1.xpose.msra.mxu0 0.0
      %3590 = vmatprep.subr.mxu0 0.0
      %3591 = vmatpush1.xpose.msra.mxu0 0.0
      %3592 = vmatprep.subr.mxu0 0.0
      %3593 = vmatpush1.xpose.msra.mxu0 0.0
      %3594 = vmatprep.subr.mxu0 0.0
      %3595 = vmatpush1.xpose.msra.mxu0 0.0
      %3596 = vmatprep.subr.mxu0 0.0
      %3597 = vmatpush1.xpose.msra.mxu0 0.0
      %3598 = vmatprep.subr.mxu0 0.0
      %3599 = vmatpush1.xpose.msra.mxu0 0.0
      %3600 = vmatprep.subr.mxu0 0.0
      %3601 = vmatpush1.xpose.msra.mxu0 0.0
      %3602 = vmatprep.subr.mxu0 0.0
      %3603 = vmatpush1.xpose.msra.mxu0 0.0
      %3604 = vmatprep.subr.mxu0 0.0
      %3605 = vmatpush1.xpose.msra.mxu0 0.0
      %3606 = vmatprep.subr.mxu0 0.0
      %3607 = vmatpush1.xpose.msra.mxu0 0.0
      %3608 = vmatprep.subr.mxu0 0.0
      %3609 = vmatpush1.xpose.msra.mxu0 %v3576
      %3610 = vmatprep.subr.mxu0 0.0
      %3611 = vmatpush2.xpose.msra.mxu0 0.0
      %3612 = vmatprep.subr.mxu0 0.0
      %3613 = vmatpush2.xpose.msra.mxu0 0.0
      %3614 = vmatprep.subr.mxu0 0.0
      %3615 = vmatpush2.xpose.msra.mxu0 0.0
      %3616 = vmatprep.subr.mxu0 0.0
      %3617 = vmatpush2.xpose.msra.mxu0 0.0
      %3618 = vmatprep.subr.mxu0 0.0
      %3619 = vmatpush2.xpose.msra.mxu0 0.0
      %3620 = vmatprep.subr.mxu0 0.0
      %3621 = vmatpush2.xpose.msra.mxu0 0.0
      %3622 = vmatprep.subr.mxu0 0.0
      %3623 = vmatpush2.xpose.msra.mxu0 0.0
      %3624 = vmatprep.subr.mxu0 0.0
      %3625 = vmatpush2.xpose.msra.mxu0 0.0
      %3626 = vmatprep.subr.mxu0 0.0
      %3627 = vmatpush2.xpose.msra.mxu0 0.0
      %3628 = vmatprep.subr.mxu0 0.0
      %3629 = vmatpush2.xpose.msra.mxu0 0.0
      %3630 = vmatprep.subr.mxu0 0.0
      %3631 = vmatpush2.xpose.msra.mxu0 0.0
      %3632 = vmatprep.subr.mxu0 0.0
      %3633 = vmatpush2.xpose.msra.mxu0 0.0
      %3634 = vmatprep.subr.mxu0 0.0
      %3635 = vmatpush2.xpose.msra.mxu0 0.0
      %3636 = vmatprep.subr.mxu0 0.0
      %3637 = vmatpush2.xpose.msra.mxu0 0.0
      %3638 = vmatprep.subr.mxu0 0.0
      %3639 = vmatpush2.xpose.msra.mxu0 0.0
      %3640 = vmatprep.subr.mxu0 0.0
      %3641 = vmatpush2.xpose.msra.mxu0 0.0
      %3642 = vmatprep.mubr.f32.mxu0 0.0
      %3643 = vmatmul.mubr.f32.gmra.mxu0 %v3574
      %v3644 = vpop.f32.mrf.mxu0
      %v3645 = vadd.f32 0.0, %v3644
      %v3646 = vpop.f32.mrf.mxu0
      %3647 = vdwg.mxu0
      %v3648 = vmul.f32 %v3645, 0.35355338
      %v3649 = vsel %vm2034, %v3648, -inf
      %3650 = vmax.xlane.f32.xlu0 %v3649
      %v3651 = vpop.xlane.xlu0 %3650
      %v3652 = vsub.f32 %v3648, %v3651
      %v3653 = vmul.f32 %v3652, 1.442695
      %v3654 = vpow.pop %v3653
      %v3655 = vsel %vm2034, %v3654, 0.0
      %3656 = vadd.xlane.f32.xlu0 %v3655
      %v3657 = vpop.xlane.xlu0 %3656
      %v3658 = vrcp.pop %v3657
      %v3659 = vmul.f32 %v3654, %v3658
      %3661 = vrot.lane.b32.xlu0 %v3405, 120
      %v3662 = vpop.permute.xlu0 %3661
      %v3665 = vsel %vm2034, %v3659, 0
      %3667 = vmatprep.subr.mxu0 0.0
      %3668 = vmatpush1.msra.mxu0 0.0
      %3669 = vmatprep.subr.mxu0 0.0
      %3670 = vmatpush1.msra.mxu0 0.0
      %3671 = vmatprep.subr.mxu0 0.0
      %3672 = vmatpush1.msra.mxu0 0.0
      %3673 = vmatprep.subr.mxu0 0.0
      %3674 = vmatpush1.msra.mxu0 0.0
      %3675 = vmatprep.subr.mxu0 0.0
      %3676 = vmatpush1.msra.mxu0 0.0
      %3677 = vmatprep.subr.mxu0 0.0
      %3678 = vmatpush1.msra.mxu0 0.0
      %3679 = vmatprep.subr.mxu0 0.0
      %3680 = vmatpush1.msra.mxu0 0.0
      %3681 = vmatprep.subr.mxu0 0.0
      %3682 = vmatpush1.msra.mxu0 0.0
      %3683 = vmatprep.subr.mxu0 0.0
      %3684 = vmatpush1.msra.mxu0 0.0
      %3685 = vmatprep.subr.mxu0 0.0
      %3686 = vmatpush1.msra.mxu0 0.0
      %3687 = vmatprep.subr.mxu0 0.0
      %3688 = vmatpush1.msra.mxu0 0.0
      %3689 = vmatprep.subr.mxu0 0.0
      %3690 = vmatpush1.msra.mxu0 0.0
      %3691 = vmatprep.subr.mxu0 0.0
      %3692 = vmatpush1.msra.mxu0 0.0
      %3693 = vmatprep.subr.mxu0 0.0
      %3694 = vmatpush1.msra.mxu0 0.0
      %3695 = vmatprep.subr.mxu0 0.0
      %3696 = vmatpush1.msra.mxu0 0.0
      %3697 = vmatprep.subr.mxu0 0.0
      %3698 = vmatpush1.msra.mxu0 %v3662
      %3699 = vmatprep.subr.mxu0 0.0
      %3700 = vmatpush2.msra.mxu0 0.0
      %3701 = vmatprep.subr.mxu0 0.0
      %3702 = vmatpush2.msra.mxu0 0.0
      %3703 = vmatprep.subr.mxu0 0.0
      %3704 = vmatpush2.msra.mxu0 0.0
      %3705 = vmatprep.subr.mxu0 0.0
      %3706 = vmatpush2.msra.mxu0 0.0
      %3707 = vmatprep.subr.mxu0 0.0
      %3708 = vmatpush2.msra.mxu0 0.0
      %3709 = vmatprep.subr.mxu0 0.0
      %3710 = vmatpush2.msra.mxu0 0.0
      %3711 = vmatprep.subr.mxu0 0.0
      %3712 = vmatpush2.msra.mxu0 0.0
      %3713 = vmatprep.subr.mxu0 0.0
      %3714 = vmatpush2.msra.mxu0 0.0
      %3715 = vmatprep.subr.mxu0 0.0
      %3716 = vmatpush2.msra.mxu0 0.0
      %3717 = vmatprep.subr.mxu0 0.0
      %3718 = vmatpush2.msra.mxu0 0.0
      %3719 = vmatprep.subr.mxu0 0.0
      %3720 = vmatpush2.msra.mxu0 0.0
      %3721 = vmatprep.subr.mxu0 0.0
      %3722 = vmatpush2.msra.mxu0 0.0
      %3723 = vmatprep.subr.mxu0 0.0
      %3724 = vmatpush2.msra.mxu0 0.0
      %3725 = vmatprep.subr.mxu0 0.0
      %3726 = vmatpush2.msra.mxu0 0.0
      %3727 = vmatprep.subr.mxu0 0.0
      %3728 = vmatpush2.msra.mxu0 0.0
      %3729 = vmatprep.subr.mxu0 0.0
      %3730 = vmatpush2.msra.mxu0 0.0
      %3731 = vmatprep.mubr.f32.mxu0 0.0
      %3732 = vmatmul.mubr.f32.gmra.mxu0 %v3665
      %v3733 = vpop.f32.mrf.mxu0
      %v3734 = vadd.f32 0.0, %v3733
      %v3735 = vpop.f32.mrf.mxu0
      %3736 = vdwg.mxu0
      %3737 = vrot.lane.b32.xlu0 %v3321, 112
      %v3738 = vpop.permute.xlu0 %3737
      %3739 = vrot.lane.b32.xlu0 %v3321, 80
      %v3740 = vpop.permute.xlu0 %3739
      %v3741 = vsel %vm2034, %v3738, 0
      %v3743 = vsel %vm2034, %v3740, 0
      %3745 = vmatprep.subr.mxu0 0.0
      %3746 = vmatpush1.xpose.msra.mxu0 0.0
      %3747 = vmatprep.subr.mxu0 0.0
      %3748 = vmatpush1.xpose.msra.mxu0 0.0
      %3749 = vmatprep.subr.mxu0 0.0
      %3750 = vmatpush1.xpose.msra.mxu0 0.0
      %3751 = vmatprep.subr.mxu0 0.0
      %3752 = vmatpush1.xpose.msra.mxu0 0.0
      %3753 = vmatprep.subr.mxu0 0.0
      %3754 = vmatpush1.xpose.msra.mxu0 0.0
      %3755 = vmatprep.subr.mxu0 0.0
      %3756 = vmatpush1.xpose.msra.mxu0 0.0
      %3757 = vmatprep.subr.mxu0 0.0
      %3758 = vmatpush1.xpose.msra.mxu0 0.0
      %3759 = vmatprep.subr.mxu0 0.0
      %3760 = vmatpush1.xpose.msra.mxu0 0.0
      %3761 = vmatprep.subr.mxu0 0.0
      %3762 = vmatpush1.xpose.msra.mxu0 0.0
      %3763 = vmatprep.subr.mxu0 0.0
      %3764 = vmatpush1.xpose.msra.mxu0 0.0
      %3765 = vmatprep.subr.mxu0 0.0
      %3766 = vmatpush1.xpose.msra.mxu0 0.0
      %3767 = vmatprep.subr.mxu0 0.0
      %3768 = vmatpush1.xpose.msra.mxu0 0.0
      %3769 = vmatprep.subr.mxu0 0.0
      %3770 = vmatpush1.xpose.msra.mxu0 0.0
      %3771 = vmatprep.subr.mxu0 0.0
      %3772 = vmatpush1.xpose.msra.mxu0 0.0
      %3773 = vmatprep.subr.mxu0 0.0
      %3774 = vmatpush1.xpose.msra.mxu0 0.0
      %3775 = vmatprep.subr.mxu0 0.0
      %3776 = vmatpush1.xpose.msra.mxu0 %v3743
      %3777 = vmatprep.subr.mxu0 0.0
      %3778 = vmatpush2.xpose.msra.mxu0 0.0
      %3779 = vmatprep.subr.mxu0 0.0
      %3780 = vmatpush2.xpose.msra.mxu0 0.0
      %3781 = vmatprep.subr.mxu0 0.0
      %3782 = vmatpush2.xpose.msra.mxu0 0.0
      %3783 = vmatprep.subr.mxu0 0.0
      %3784 = vmatpush2.xpose.msra.mxu0 0.0
      %3785 = vmatprep.subr.mxu0 0.0
      %3786 = vmatpush2.xpose.msra.mxu0 0.0
      %3787 = vmatprep.subr.mxu0 0.0
      %3788 = vmatpush2.xpose.msra.mxu0 0.0
      %3789 = vmatprep.subr.mxu0 0.0
      %3790 = vmatpush2.xpose.msra.mxu0 0.0
      %3791 = vmatprep.subr.mxu0 0.0
      %3792 = vmatpush2.xpose.msra.mxu0 0.0
      %3793 = vmatprep.subr.mxu0 0.0
      %3794 = vmatpush2.xpose.msra.mxu0 0.0
      %3795 = vmatprep.subr.mxu0 0.0
      %3796 = vmatpush2.xpose.msra.mxu0 0.0
      %3797 = vmatprep.subr.mxu0 0.0
      %3798 = vmatpush2.xpose.msra.mxu0 0.0
      %3799 = vmatprep.subr.mxu0 0.0
      %3800 = vmatpush2.xpose.msra.mxu0 0.0
      %3801 = vmatprep.subr.mxu0 0.0
      %3802 = vmatpush2.xpose.msra.mxu0 0.0
      %3803 = vmatprep.subr.mxu0 0.0
      %3804 = vmatpush2.xpose.msra.mxu0 0.0
      %3805 = vmatprep.subr.mxu0 0.0
      %3806 = vmatpush2.xpose.msra.mxu0 0.0
      %3807 = vmatprep.subr.mxu0 0.0
      %3808 = vmatpush2.xpose.msra.mxu0 0.0
      %3809 = vmatprep.mubr.f32.mxu0 0.0
      %3810 = vmatmul.mubr.f32.gmra.mxu0 %v3741
      %v3811 = vpop.f32.mrf.mxu0
      %v3812 = vadd.f32 0.0, %v3811
      %v3813 = vpop.f32.mrf.mxu0
      %3814 = vdwg.mxu0
      %v3815 = vmul.f32 %v3812, 0.35355338
      %v3816 = vsel %vm2034, %v3815, -inf
      %3817 = vmax.xlane.f32.xlu0 %v3816
      %v3818 = vpop.xlane.xlu0 %3817
      %v3819 = vsub.f32 %v3815, %v3818
      %v3820 = vmul.f32 %v3819, 1.442695
      %v3821 = vpow.pop %v3820
      %v3822 = vsel %vm2034, %v3821, 0.0
      %3823 = vadd.xlane.f32.xlu0 %v3822
      %v3824 = vpop.xlane.xlu0 %3823
      %v3825 = vrcp.pop %v3824
      %v3826 = vmul.f32 %v3821, %v3825
      %3827 = vrot.lane.b32.xlu0 %v3405, 112
      %v3828 = vpop.permute.xlu0 %3827
      %v3831 = vsel %vm2034, %v3826, 0
      %3833 = vmatprep.subr.mxu0 0.0
      %3834 = vmatpush1.msra.mxu0 0.0
      %3835 = vmatprep.subr.mxu0 0.0
      %3836 = vmatpush1.msra.mxu0 0.0
      %3837 = vmatprep.subr.mxu0 0.0
      %3838 = vmatpush1.msra.mxu0 0.0
      %3839 = vmatprep.subr.mxu0 0.0
      %3840 = vmatpush1.msra.mxu0 0.0
      %3841 = vmatprep.subr.mxu0 0.0
      %3842 = vmatpush1.msra.mxu0 0.0
      %3843 = vmatprep.subr.mxu0 0.0
      %3844 = vmatpush1.msra.mxu0 0.0
      %3845 = vmatprep.subr.mxu0 0.0
      %3846 = vmatpush1.msra.mxu0 0.0
      %3847 = vmatprep.subr.mxu0 0.0
      %3848 = vmatpush1.msra.mxu0 0.0
      %3849 = vmatprep.subr.mxu0 0.0
      %3850 = vmatpush1.msra.mxu0 0.0
      %3851 = vmatprep.subr.mxu0 0.0
      %3852 = vmatpush1.msra.mxu0 0.0
      %3853 = vmatprep.subr.mxu0 0.0
      %3854 = vmatpush1.msra.mxu0 0.0
      %3855 = vmatprep.subr.mxu0 0.0
      %3856 = vmatpush1.msra.mxu0 0.0
      %3857 = vmatprep.subr.mxu0 0.0
      %3858 = vmatpush1.msra.mxu0 0.0
      %3859 = vmatprep.subr.mxu0 0.0
      %3860 = vmatpush1.msra.mxu0 0.0
      %3861 = vmatprep.subr.mxu0 0.0
      %3862 = vmatpush1.msra.mxu0 0.0
      %3863 = vmatprep.subr.mxu0 0.0
      %3864 = vmatpush1.msra.mxu0 %v3828
      %3865 = vmatprep.subr.mxu0 0.0
      %3866 = vmatpush2.msra.mxu0 0.0
      %3867 = vmatprep.subr.mxu0 0.0
      %3868 = vmatpush2.msra.mxu0 0.0
      %3869 = vmatprep.subr.mxu0 0.0
      %3870 = vmatpush2.msra.mxu0 0.0
      %3871 = vmatprep.subr.mxu0 0.0
      %3872 = vmatpush2.msra.mxu0 0.0
      %3873 = vmatprep.subr.mxu0 0.0
      %3874 = vmatpush2.msra.mxu0 0.0
      %3875 = vmatprep.subr.mxu0 0.0
      %3876 = vmatpush2.msra.mxu0 0.0
      %3877 = vmatprep.subr.mxu0 0.0
      %3878 = vmatpush2.msra.mxu0 0.0
      %3879 = vmatprep.subr.mxu0 0.0
      %3880 = vmatpush2.msra.mxu0 0.0
      %3881 = vmatprep.subr.mxu0 0.0
      %3882 = vmatpush2.msra.mxu0 0.0
      %3883 = vmatprep.subr.mxu0 0.0
      %3884 = vmatpush2.msra.mxu0 0.0
      %3885 = vmatprep.subr.mxu0 0.0
      %3886 = vmatpush2.msra.mxu0 0.0
      %3887 = vmatprep.subr.mxu0 0.0
      %3888 = vmatpush2.msra.mxu0 0.0
      %3889 = vmatprep.subr.mxu0 0.0
      %3890 = vmatpush2.msra.mxu0 0.0
      %3891 = vmatprep.subr.mxu0 0.0
      %3892 = vmatpush2.msra.mxu0 0.0
      %3893 = vmatprep.subr.mxu0 0.0
      %3894 = vmatpush2.msra.mxu0 0.0
      %3895 = vmatprep.subr.mxu0 0.0
      %3896 = vmatpush2.msra.mxu0 0.0
      %3897 = vmatprep.mubr.f32.mxu0 0.0
      %3898 = vmatmul.mubr.f32.gmra.mxu0 %v3831
      %v3899 = vpop.f32.mrf.mxu0
      %v3900 = vadd.f32 0.0, %v3899
      %v3901 = vpop.f32.mrf.mxu0
      %3902 = vdwg.mxu0
      %3903 = vrot.lane.b32.xlu0 %v3321, 104
      %v3904 = vpop.permute.xlu0 %3903
      %3905 = vrot.lane.b32.xlu0 %v3321, 72
      %v3906 = vpop.permute.xlu0 %3905
      %v3907 = vsel %vm2034, %v3904, 0
      %v3909 = vsel %vm2034, %v3906, 0
      %3911 = vmatprep.subr.mxu0 0.0
      %3912 = vmatpush1.xpose.msra.mxu0 0.0
      %3913 = vmatprep.subr.mxu0 0.0
      %3914 = vmatpush1.xpose.msra.mxu0 0.0
      %3915 = vmatprep.subr.mxu0 0.0
      %3916 = vmatpush1.xpose.msra.mxu0 0.0
      %3917 = vmatprep.subr.mxu0 0.0
      %3918 = vmatpush1.xpose.msra.mxu0 0.0
      %3919 = vmatprep.subr.mxu0 0.0
      %3920 = vmatpush1.xpose.msra.mxu0 0.0
      %3921 = vmatprep.subr.mxu0 0.0
      %3922 = vmatpush1.xpose.msra.mxu0 0.0
      %3923 = vmatprep.subr.mxu0 0.0
      %3924 = vmatpush1.xpose.msra.mxu0 0.0
      %3925 = vmatprep.subr.mxu0 0.0
      %3926 = vmatpush1.xpose.msra.mxu0 0.0
      %3927 = vmatprep.subr.mxu0 0.0
      %3928 = vmatpush1.xpose.msra.mxu0 0.0
      %3929 = vmatprep.subr.mxu0 0.0
      %3930 = vmatpush1.xpose.msra.mxu0 0.0
      %3931 = vmatprep.subr.mxu0 0.0
      %3932 = vmatpush1.xpose.msra.mxu0 0.0
      %3933 = vmatprep.subr.mxu0 0.0
      %3934 = vmatpush1.xpose.msra.mxu0 0.0
      %3935 = vmatprep.subr.mxu0 0.0
      %3936 = vmatpush1.xpose.msra.mxu0 0.0
      %3937 = vmatprep.subr.mxu0 0.0
      %3938 = vmatpush1.xpose.msra.mxu0 0.0
      %3939 = vmatprep.subr.mxu0 0.0
      %3940 = vmatpush1.xpose.msra.mxu0 0.0
      %3941 = vmatprep.subr.mxu0 0.0
      %3942 = vmatpush1.xpose.msra.mxu0 %v3909
      %3943 = vmatprep.subr.mxu0 0.0
      %3944 = vmatpush2.xpose.msra.mxu0 0.0
      %3945 = vmatprep.subr.mxu0 0.0
      %3946 = vmatpush2.xpose.msra.mxu0 0.0
      %3947 = vmatprep.subr.mxu0 0.0
      %3948 = vmatpush2.xpose.msra.mxu0 0.0
      %3949 = vmatprep.subr.mxu0 0.0
      %3950 = vmatpush2.xpose.msra.mxu0 0.0
      %3951 = vmatprep.subr.mxu0 0.0
      %3952 = vmatpush2.xpose.msra.mxu0 0.0
      %3953 = vmatprep.subr.mxu0 0.0
      %3954 = vmatpush2.xpose.msra.mxu0 0.0
      %3955 = vmatprep.subr.mxu0 0.0
      %3956 = vmatpush2.xpose.msra.mxu0 0.0
      %3957 = vmatprep.subr.mxu0 0.0
      %3958 = vmatpush2.xpose.msra.mxu0 0.0
      %3959 = vmatprep.subr.mxu0 0.0
      %3960 = vmatpush2.xpose.msra.mxu0 0.0
      %3961 = vmatprep.subr.mxu0 0.0
      %3962 = vmatpush2.xpose.msra.mxu0 0.0
      %3963 = vmatprep.subr.mxu0 0.0
      %3964 = vmatpush2.xpose.msra.mxu0 0.0
      %3965 = vmatprep.subr.mxu0 0.0
      %3966 = vmatpush2.xpose.msra.mxu0 0.0
      %3967 = vmatprep.subr.mxu0 0.0
      %3968 = vmatpush2.xpose.msra.mxu0 0.0
      %3969 = vmatprep.subr.mxu0 0.0
      %3970 = vmatpush2.xpose.msra.mxu0 0.0
      %3971 = vmatprep.subr.mxu0 0.0
      %3972 = vmatpush2.xpose.msra.mxu0 0.0
      %3973 = vmatprep.subr.mxu0 0.0
      %3974 = vmatpush2.xpose.msra.mxu0 0.0
      %3975 = vmatprep.mubr.f32.mxu0 0.0
      %3976 = vmatmul.mubr.f32.gmra.mxu0 %v3907
      %v3977 = vpop.f32.mrf.mxu0
      %v3978 = vadd.f32 0.0, %v3977
      %v3979 = vpop.f32.mrf.mxu0
      %3980 = vdwg.mxu0
      %v3981 = vmul.f32 %v3978, 0.35355338
      %v3982 = vsel %vm2034, %v3981, -inf
      %3983 = vmax.xlane.f32.xlu0 %v3982
      %v3984 = vpop.xlane.xlu0 %3983
      %v3985 = vsub.f32 %v3981, %v3984
      %v3986 = vmul.f32 %v3985, 1.442695
      %v3987 = vpow.pop %v3986
      %v3988 = vsel %vm2034, %v3987, 0.0
      %3989 = vadd.xlane.f32.xlu0 %v3988
      %v3990 = vpop.xlane.xlu0 %3989
      %v3991 = vrcp.pop %v3990
      %v3992 = vmul.f32 %v3987, %v3991
      %3993 = vrot.lane.b32.xlu0 %v3405, 104
      %v3994 = vpop.permute.xlu0 %3993
      %v3997 = vsel %vm2034, %v3992, 0
      %3999 = vmatprep.subr.mxu0 0.0
      %4000 = vmatpush1.msra.mxu0 0.0
      %4001 = vmatprep.subr.mxu0 0.0
      %4002 = vmatpush1.msra.mxu0 0.0
      %4003 = vmatprep.subr.mxu0 0.0
      %4004 = vmatpush1.msra.mxu0 0.0
      %4005 = vmatprep.subr.mxu0 0.0
      %4006 = vmatpush1.msra.mxu0 0.0
      %4007 = vmatprep.subr.mxu0 0.0
      %4008 = vmatpush1.msra.mxu0 0.0
      %4009 = vmatprep.subr.mxu0 0.0
      %4010 = vmatpush1.msra.mxu0 0.0
      %4011 = vmatprep.subr.mxu0 0.0
      %4012 = vmatpush1.msra.mxu0 0.0
      %4013 = vmatprep.subr.mxu0 0.0
      %4014 = vmatpush1.msra.mxu0 0.0
      %4015 = vmatprep.subr.mxu0 0.0
      %4016 = vmatpush1.msra.mxu0 0.0
      %4017 = vmatprep.subr.mxu0 0.0
      %4018 = vmatpush1.msra.mxu0 0.0
      %4019 = vmatprep.subr.mxu0 0.0
      %4020 = vmatpush1.msra.mxu0 0.0
      %4021 = vmatprep.subr.mxu0 0.0
      %4022 = vmatpush1.msra.mxu0 0.0
      %4023 = vmatprep.subr.mxu0 0.0
      %4024 = vmatpush1.msra.mxu0 0.0
      %4025 = vmatprep.subr.mxu0 0.0
      %4026 = vmatpush1.msra.mxu0 0.0
      %4027 = vmatprep.subr.mxu0 0.0
      %4028 = vmatpush1.msra.mxu0 0.0
      %4029 = vmatprep.subr.mxu0 0.0
      %4030 = vmatpush1.msra.mxu0 %v3994
      %4031 = vmatprep.subr.mxu0 0.0
      %4032 = vmatpush2.msra.mxu0 0.0
      %4033 = vmatprep.subr.mxu0 0.0
      %4034 = vmatpush2.msra.mxu0 0.0
      %4035 = vmatprep.subr.mxu0 0.0
      %4036 = vmatpush2.msra.mxu0 0.0
      %4037 = vmatprep.subr.mxu0 0.0
      %4038 = vmatpush2.msra.mxu0 0.0
      %4039 = vmatprep.subr.mxu0 0.0
      %4040 = vmatpush2.msra.mxu0 0.0
      %4041 = vmatprep.subr.mxu0 0.0
      %4042 = vmatpush2.msra.mxu0 0.0
      %4043 = vmatprep.subr.mxu0 0.0
      %4044 = vmatpush2.msra.mxu0 0.0
      %4045 = vmatprep.subr.mxu0 0.0
      %4046 = vmatpush2.msra.mxu0 0.0
      %4047 = vmatprep.subr.mxu0 0.0
      %4048 = vmatpush2.msra.mxu0 0.0
      %4049 = vmatprep.subr.mxu0 0.0
      %4050 = vmatpush2.msra.mxu0 0.0
      %4051 = vmatprep.subr.mxu0 0.0
      %4052 = vmatpush2.msra.mxu0 0.0
      %4053 = vmatprep.subr.mxu0 0.0
      %4054 = vmatpush2.msra.mxu0 0.0
      %4055 = vmatprep.subr.mxu0 0.0
      %4056 = vmatpush2.msra.mxu0 0.0
      %4057 = vmatprep.subr.mxu0 0.0
      %4058 = vmatpush2.msra.mxu0 0.0
      %4059 = vmatprep.subr.mxu0 0.0
      %4060 = vmatpush2.msra.mxu0 0.0
      %4061 = vmatprep.subr.mxu0 0.0
      %4062 = vmatpush2.msra.mxu0 0.0
      %4063 = vmatprep.mubr.f32.mxu0 0.0
      %4064 = vmatmul.mubr.f32.gmra.mxu0 %v3997
      %v4065 = vpop.f32.mrf.mxu0
      %v4066 = vadd.f32 0.0, %v4065
      %v4067 = vpop.f32.mrf.mxu0
      %4068 = vdwg.mxu0
      %4070 = vrot.lane.b32.xlu0 %v3734, 8
      %v4071 = vpop.permute.xlu0 %4070
      %4074 = vrot.lane.b32.xlu0 %v3900, 16
      %v4075 = vpop.permute.xlu0 %4074
      %4078 = vrot.lane.b32.xlu0 %v4066, 24
      %v4079 = vpop.permute.xlu0 %4078
      %v4081 = vsel %vm2034, %v3567, %v4071
      %v4082 = vsel %vm1757, %v4081, %v4075
      %v4083 = vsel %vm2859, %v4082, %v4079
      %v4084 = vld [vmem:[%s51] sm:$0xff]
      %v4085 = vld [vmem:[%s51 + $0x8] sm:$0xff]
      %v4086 = vld [vmem:[%s51 + $0x10] sm:$0xff]
      %v4087 = vld [vmem:[%s51 + $0x18] sm:$0xff]
      %v4088 = vld [vmem:[%s53] sm:$0x1]
      %v4090 = vlaneseq
      %v4091 = vshrl.u32 %v4090, 7
      %v4092 = vsub.s32 0, %v4091
      %v4093 = vrot.slane %v4088, %v4092
      %v4096 = vsel %vm1854, %v4083, 0
      %4098 = vmatprep.subr.mxu0 0.0
      %4099 = vmatpush1.msra.mxu0 0.0
      %4100 = vmatprep.subr.mxu0 0.0
      %4101 = vmatpush1.msra.mxu0 0.0
      %4102 = vmatprep.subr.mxu0 0.0
      %4103 = vmatpush1.msra.mxu0 0.0
      %4104 = vmatprep.subr.mxu0 0.0
      %4105 = vmatpush1.msra.mxu0 0.0
      %4106 = vmatprep.subr.mxu0 0.0
      %4107 = vmatpush1.msra.mxu0 0.0
      %4108 = vmatprep.subr.mxu0 0.0
      %4109 = vmatpush1.msra.mxu0 0.0
      %4110 = vmatprep.subr.mxu0 0.0
      %4111 = vmatpush1.msra.mxu0 0.0
      %4112 = vmatprep.subr.mxu0 0.0
      %4113 = vmatpush1.msra.mxu0 0.0
      %4114 = vmatprep.subr.mxu0 0.0
      %4115 = vmatpush1.msra.mxu0 0.0
      %4116 = vmatprep.subr.mxu0 0.0
      %4117 = vmatpush1.msra.mxu0 0.0
      %4118 = vmatprep.subr.mxu0 0.0
      %4119 = vmatpush1.msra.mxu0 0.0
      %4120 = vmatprep.subr.mxu0 0.0
      %4121 = vmatpush1.msra.mxu0 0.0
      %4122 = vmatprep.subr.mxu0 0.0
      %4123 = vmatpush1.msra.mxu0 %v4087
      %4124 = vmatprep.subr.mxu0 0.0
      %4125 = vmatpush1.msra.mxu0 %v4086
      %4126 = vmatprep.subr.mxu0 0.0
      %4127 = vmatpush1.msra.mxu0 %v4085
      %4128 = vmatprep.subr.mxu0 0.0
      %4129 = vmatpush1.msra.mxu0 %v4084
      %4130 = vmatprep.subr.mxu0 0.0
      %4131 = vmatpush2.msra.mxu0 0.0
      %4132 = vmatprep.subr.mxu0 0.0
      %4133 = vmatpush2.msra.mxu0 0.0
      %4134 = vmatprep.subr.mxu0 0.0
      %4135 = vmatpush2.msra.mxu0 0.0
      %4136 = vmatprep.subr.mxu0 0.0
      %4137 = vmatpush2.msra.mxu0 0.0
      %4138 = vmatprep.subr.mxu0 0.0
      %4139 = vmatpush2.msra.mxu0 0.0
      %4140 = vmatprep.subr.mxu0 0.0
      %4141 = vmatpush2.msra.mxu0 0.0
      %4142 = vmatprep.subr.mxu0 0.0
      %4143 = vmatpush2.msra.mxu0 0.0
      %4144 = vmatprep.subr.mxu0 0.0
      %4145 = vmatpush2.msra.mxu0 0.0
      %4146 = vmatprep.subr.mxu0 0.0
      %4147 = vmatpush2.msra.mxu0 0.0
      %4148 = vmatprep.subr.mxu0 0.0
      %4149 = vmatpush2.msra.mxu0 0.0
      %4150 = vmatprep.subr.mxu0 0.0
      %4151 = vmatpush2.msra.mxu0 0.0
      %4152 = vmatprep.subr.mxu0 0.0
      %4153 = vmatpush2.msra.mxu0 0.0
      %4154 = vmatprep.subr.mxu0 0.0
      %4155 = vmatpush2.msra.mxu0 0.0
      %4156 = vmatprep.subr.mxu0 0.0
      %4157 = vmatpush2.msra.mxu0 0.0
      %4158 = vmatprep.subr.mxu0 0.0
      %4159 = vmatpush2.msra.mxu0 0.0
      %4160 = vmatprep.subr.mxu0 0.0
      %4161 = vmatpush2.msra.mxu0 0.0
      %4162 = vmatprep.mubr.f32.mxu0 0.0
      %4163 = vmatmul.mubr.f32.gmra.mxu0 %v4096
      %v4164 = vpop.f32.mrf.mxu0
      %v4165 = vadd.f32 %v4093, %v4164
      %v4166 = vpop.f32.mrf.mxu0
      %4167 = vdwg.mxu0
      %v4168 = vadd.f32 %v4165, 0.0
      %v4169 = vld [vmem:[%s55] sm:$0x1]
      %v4170 = vld [vmem:[%s57] sm:$0x1]
      %v4171 = vsel %vm1854, %v4168, 0.0
      %4172 = vadd.xlane.f32.xlu0 %v4171
      %v4173 = vpop.xlane.xlu0 %4172
      %v4174 = vmul.f32 %v4173, %v2964
      %v4175 = vsub.f32 %v4168, %v4174
      %v4176 = vmul.f32 %v4175, %v4175
      %v4177 = vsel %vm1854, %v4176, 0.0
      %4178 = vadd.xlane.f32.xlu0 %v4177
      %v4179 = vpop.xlane.xlu0 %4178
      %v4180 = vmul.f32 %v4179, %v2964
      %v4181 = vadd.f32 %v4180, 1e-05
      %v4182 = vrsqrt.pop %v4181
      %v4183 = vmul.f32 %v4175, %v4182
      %v4185 = vlaneseq
      %v4186 = vshrl.u32 %v4185, 7
      %v4187 = vsub.s32 0, %v4186
      %v4188 = vrot.slane %v4169, %v4187
      %v4190 = vmul.f32 %v4183, %v4188
      %v4192 = vlaneseq
      %v4193 = vshrl.u32 %v4192, 7
      %v4194 = vsub.s32 0, %v4193
      %v4195 = vrot.slane %v4170, %v4194
      %v4197 = vadd.f32 %v4190, %v4195
      %v4198 = vadd.f32 %v4197, %v3238
      %v4199 = vld [vmem:[%s59] sm:$0xff]
      %v4200 = vld [vmem:[%s59 + $0x8] sm:$0xff]
      %v4201 = vld [vmem:[%s59 + $0x10] sm:$0xff]
      %v4202 = vld [vmem:[%s59 + $0x18] sm:$0xff]
      %v4203 = vld [vmem:[%s61] sm:$0x1]
      %v4205 = vlaneseq
      %v4206 = vshrl.u32 %v4205, 7
      %v4207 = vsub.s32 0, %v4206
      %v4208 = vrot.slane %v4203, %v4207
      %v4211 = vsel %vm1854, %v4198, 0
      %4213 = vmatprep.subr.mxu0 0.0
      %4214 = vmatpush1.msra.mxu0 0.0
      %4215 = vmatprep.subr.mxu0 0.0
      %4216 = vmatpush1.msra.mxu0 0.0
      %4217 = vmatprep.subr.mxu0 0.0
      %4218 = vmatpush1.msra.mxu0 0.0
      %4219 = vmatprep.subr.mxu0 0.0
      %4220 = vmatpush1.msra.mxu0 0.0
      %4221 = vmatprep.subr.mxu0 0.0
      %4222 = vmatpush1.msra.mxu0 0.0
      %4223 = vmatprep.subr.mxu0 0.0
      %4224 = vmatpush1.msra.mxu0 0.0
      %4225 = vmatprep.subr.mxu0 0.0
      %4226 = vmatpush1.msra.mxu0 0.0
      %4227 = vmatprep.subr.mxu0 0.0
      %4228 = vmatpush1.msra.mxu0 0.0
      %4229 = vmatprep.subr.mxu0 0.0
      %4230 = vmatpush1.msra.mxu0 0.0
      %4231 = vmatprep.subr.mxu0 0.0
      %4232 = vmatpush1.msra.mxu0 0.0
      %4233 = vmatprep.subr.mxu0 0.0
      %4234 = vmatpush1.msra.mxu0 0.0
      %4235 = vmatprep.subr.mxu0 0.0
      %4236 = vmatpush1.msra.mxu0 0.0
      %4237 = vmatprep.subr.mxu0 0.0
      %4238 = vmatpush1.msra.mxu0 %v4202
      %4239 = vmatprep.subr.mxu0 0.0
      %4240 = vmatpush1.msra.mxu0 %v4201
      %4241 = vmatprep.subr.mxu0 0.0
      %4242 = vmatpush1.msra.mxu0 %v4200
      %4243 = vmatprep.subr.mxu0 0.0
      %4244 = vmatpush1.msra.mxu0 %v4199
      %4245 = vmatprep.subr.mxu0 0.0
      %4246 = vmatpush2.msra.mxu0 0.0
      %4247 = vmatprep.subr.mxu0 0.0
      %4248 = vmatpush2.msra.mxu0 0.0
      %4249 = vmatprep.subr.mxu0 0.0
      %4250 = vmatpush2.msra.mxu0 0.0
      %4251 = vmatprep.subr.mxu0 0.0
      %4252 = vmatpush2.msra.mxu0 0.0
      %4253 = vmatprep.subr.mxu0 0.0
      %4254 = vmatpush2.msra.mxu0 0.0
      %4255 = vmatprep.subr.mxu0 0.0
      %4256 = vmatpush2.msra.mxu0 0.0
      %4257 = vmatprep.subr.mxu0 0.0
      %4258 = vmatpush2.msra.mxu0 0.0
      %4259 = vmatprep.subr.mxu0 0.0
      %4260 = vmatpush2.msra.mxu0 0.0
      %4261 = vmatprep.subr.mxu0 0.0
      %4262 = vmatpush2.msra.mxu0 0.0
      %4263 = vmatprep.subr.mxu0 0.0
      %4264 = vmatpush2.msra.mxu0 0.0
      %4265 = vmatprep.subr.mxu0 0.0
      %4266 = vmatpush2.msra.mxu0 0.0
      %4267 = vmatprep.subr.mxu0 0.0
      %4268 = vmatpush2.msra.mxu0 0.0
      %4269 = vmatprep.subr.mxu0 0.0
      %4270 = vmatpush2.msra.mxu0 0.0
      %4271 = vmatprep.subr.mxu0 0.0
      %4272 = vmatpush2.msra.mxu0 0.0
      %4273 = vmatprep.subr.mxu0 0.0
      %4274 = vmatpush2.msra.mxu0 0.0
      %4275 = vmatprep.subr.mxu0 0.0
      %4276 = vmatpush2.msra.mxu0 0.0
      %4277 = vmatprep.mubr.f32.mxu0 0.0
      %4278 = vmatmul.mubr.f32.gmra.mxu0 %v4211
      %v4279 = vpop.f32.mrf.mxu0
      %v4280 = vadd.f32 %v4208, %v4279
      %v4281 = vpop.f32.mrf.mxu0
      %4282 = vdwg.mxu0
      %v4283 = vadd.f32 %v3236, %v1839
      %v4284 = vadd.f32 %v3237, %v1840
      %v4285 = vld [vmem:[%s63] sm:$0xff]
      %v4286 = vld [vmem:[%s63 + $0x8] sm:$0xff]
      %v4287 = vld [vmem:[%s63 + $0x10] sm:$0xff]
      %v4288 = vld [vmem:[%s63 + $0x18] sm:$0xff]
      %v4289 = vld [vmem:[%s65] sm:$0x1]
      %v4291 = vlaneseq
      %v4292 = vshrl.u32 %v4291, 7
      %v4293 = vsub.s32 0, %v4292
      %v4294 = vrot.slane %v4289, %v4293
      %v4297 = vsel %vm1854, %v4283, 0
      %v4300 = vsel %vm1854, %v4284, 0
      %4302 = vmatprep.subr.mxu0 0.0
      %4303 = vmatpush1.msra.mxu0 0.0
      %4304 = vmatprep.subr.mxu0 0.0
      %4305 = vmatpush1.msra.mxu0 0.0
      %4306 = vmatprep.subr.mxu0 0.0
      %4307 = vmatpush1.msra.mxu0 0.0
      %4308 = vmatprep.subr.mxu0 0.0
      %4309 = vmatpush1.msra.mxu0 0.0
      %4310 = vmatprep.subr.mxu0 0.0
      %4311 = vmatpush1.msra.mxu0 0.0
      %4312 = vmatprep.subr.mxu0 0.0
      %4313 = vmatpush1.msra.mxu0 0.0
      %4314 = vmatprep.subr.mxu0 0.0
      %4315 = vmatpush1.msra.mxu0 0.0
      %4316 = vmatprep.subr.mxu0 0.0
      %4317 = vmatpush1.msra.mxu0 0.0
      %4318 = vmatprep.subr.mxu0 0.0
      %4319 = vmatpush1.msra.mxu0 0.0
      %4320 = vmatprep.subr.mxu0 0.0
      %4321 = vmatpush1.msra.mxu0 0.0
      %4322 = vmatprep.subr.mxu0 0.0
      %4323 = vmatpush1.msra.mxu0 0.0
      %4324 = vmatprep.subr.mxu0 0.0
      %4325 = vmatpush1.msra.mxu0 0.0
      %4326 = vmatprep.subr.mxu0 0.0
      %4327 = vmatpush1.msra.mxu0 %v4288
      %4328 = vmatprep.subr.mxu0 0.0
      %4329 = vmatpush1.msra.mxu0 %v4287
      %4330 = vmatprep.subr.mxu0 0.0
      %4331 = vmatpush1.msra.mxu0 %v4286
      %4332 = vmatprep.subr.mxu0 0.0
      %4333 = vmatpush1.msra.mxu0 %v4285
      %4334 = vmatprep.subr.mxu0 0.0
      %4335 = vmatpush2.msra.mxu0 0.0
      %4336 = vmatprep.subr.mxu0 0.0
      %4337 = vmatpush2.msra.mxu0 0.0
      %4338 = vmatprep.subr.mxu0 0.0
      %4339 = vmatpush2.msra.mxu0 0.0
      %4340 = vmatprep.subr.mxu0 0.0
      %4341 = vmatpush2.msra.mxu0 0.0
      %4342 = vmatprep.subr.mxu0 0.0
      %4343 = vmatpush2.msra.mxu0 0.0
      %4344 = vmatprep.subr.mxu0 0.0
      %4345 = vmatpush2.msra.mxu0 0.0
      %4346 = vmatprep.subr.mxu0 0.0
      %4347 = vmatpush2.msra.mxu0 0.0
      %4348 = vmatprep.subr.mxu0 0.0
      %4349 = vmatpush2.msra.mxu0 0.0
      %4350 = vmatprep.subr.mxu0 0.0
      %4351 = vmatpush2.msra.mxu0 0.0
      %4352 = vmatprep.subr.mxu0 0.0
      %4353 = vmatpush2.msra.mxu0 0.0
      %4354 = vmatprep.subr.mxu0 0.0
      %4355 = vmatpush2.msra.mxu0 0.0
      %4356 = vmatprep.subr.mxu0 0.0
      %4357 = vmatpush2.msra.mxu0 0.0
      %4358 = vmatprep.subr.mxu0 0.0
      %4359 = vmatpush2.msra.mxu0 0.0
      %4360 = vmatprep.subr.mxu0 0.0
      %4361 = vmatpush2.msra.mxu0 0.0
      %4362 = vmatprep.subr.mxu0 0.0
      %4363 = vmatpush2.msra.mxu0 0.0
      %4364 = vmatprep.subr.mxu0 0.0
      %4365 = vmatpush2.msra.mxu0 0.0
      %4366 = vmatprep.mubr.f32.mxu0 0.0
      %4367 = vmatmul.mubr.f32.gmra.mxu0 %v4297
      %v4368 = vpop.f32.mrf.mxu0
      %v4369 = vadd.f32 %v4294, %v4368
      %v4370 = vpop.f32.mrf.mxu0
      %4371 = vmatprep.mubr.f32.mxu0 0.0
      %4372 = vmatmul.mubr.f32.gmra.mxu0 %v4300
      %v4373 = vpop.f32.mrf.mxu0
      %v4374 = vadd.f32 %v4294, %v4373
      %v4375 = vpop.f32.mrf.mxu0
      %4376 = vdwg.mxu0
      %v4377 = vld [vmem:[%s67] sm:$0xff]
      %v4378 = vld [vmem:[%s67 + $0x8] sm:$0xff]
      %v4379 = vld [vmem:[%s67 + $0x10] sm:$0xff]
      %v4380 = vld [vmem:[%s67 + $0x18] sm:$0xff]
      %v4381 = vld [vmem:[%s69] sm:$0x1]
      %v4383 = vlaneseq
      %v4384 = vshrl.u32 %v4383, 7
      %v4385 = vsub.s32 0, %v4384
      %v4386 = vrot.slane %v4381, %v4385
      %v4389 = vsel %vm1854, %v3236, 0
      %v4392 = vsel %vm1854, %v3237, 0
      %4394 = vmatprep.subr.mxu0 0.0
      %4395 = vmatpush1.msra.mxu0 0.0
      %4396 = vmatprep.subr.mxu0 0.0
      %4397 = vmatpush1.msra.mxu0 0.0
      %4398 = vmatprep.subr.mxu0 0.0
      %4399 = vmatpush1.msra.mxu0 0.0
      %4400 = vmatprep.subr.mxu0 0.0
      %4401 = vmatpush1.msra.mxu0 0.0
      %4402 = vmatprep.subr.mxu0 0.0
      %4403 = vmatpush1.msra.mxu0 0.0
      %4404 = vmatprep.subr.mxu0 0.0
      %4405 = vmatpush1.msra.mxu0 0.0
      %4406 = vmatprep.subr.mxu0 0.0
      %4407 = vmatpush1.msra.mxu0 0.0
      %4408 = vmatprep.subr.mxu0 0.0
      %4409 = vmatpush1.msra.mxu0 0.0
      %4410 = vmatprep.subr.mxu0 0.0
      %4411 = vmatpush1.msra.mxu0 0.0
      %4412 = vmatprep.subr.mxu0 0.0
      %4413 = vmatpush1.msra.mxu0 0.0
      %4414 = vmatprep.subr.mxu0 0.0
      %4415 = vmatpush1.msra.mxu0 0.0
      %4416 = vmatprep.subr.mxu0 0.0
      %4417 = vmatpush1.msra.mxu0 0.0
      %4418 = vmatprep.subr.mxu0 0.0
      %4419 = vmatpush1.msra.mxu0 %v4380
      %4420 = vmatprep.subr.mxu0 0.0
      %4421 = vmatpush1.msra.mxu0 %v4379
      %4422 = vmatprep.subr.mxu0 0.0
      %4423 = vmatpush1.msra.mxu0 %v4378
      %4424 = vmatprep.subr.mxu0 0.0
      %4425 = vmatpush1.msra.mxu0 %v4377
      %4426 = vmatprep.subr.mxu0 0.0
      %4427 = vmatpush2.msra.mxu0 0.0
      %4428 = vmatprep.subr.mxu0 0.0
      %4429 = vmatpush2.msra.mxu0 0.0
      %4430 = vmatprep.subr.mxu0 0.0
      %4431 = vmatpush2.msra.mxu0 0.0
      %4432 = vmatprep.subr.mxu0 0.0
      %4433 = vmatpush2.msra.mxu0 0.0
      %4434 = vmatprep.subr.mxu0 0.0
      %4435 = vmatpush2.msra.mxu0 0.0
      %4436 = vmatprep.subr.mxu0 0.0
      %4437 = vmatpush2.msra.mxu0 0.0
      %4438 = vmatprep.subr.mxu0 0.0
      %4439 = vmatpush2.msra.mxu0 0.0
      %4440 = vmatprep.subr.mxu0 0.0
      %4441 = vmatpush2.msra.mxu0 0.0
      %4442 = vmatprep.subr.mxu0 0.0
      %4443 = vmatpush2.msra.mxu0 0.0
      %4444 = vmatprep.subr.mxu0 0.0
      %4445 = vmatpush2.msra.mxu0 0.0
      %4446 = vmatprep.subr.mxu0 0.0
      %4447 = vmatpush2.msra.mxu0 0.0
      %4448 = vmatprep.subr.mxu0 0.0
      %4449 = vmatpush2.msra.mxu0 0.0
      %4450 = vmatprep.subr.mxu0 0.0
      %4451 = vmatpush2.msra.mxu0 0.0
      %4452 = vmatprep.subr.mxu0 0.0
      %4453 = vmatpush2.msra.mxu0 0.0
      %4454 = vmatprep.subr.mxu0 0.0
      %4455 = vmatpush2.msra.mxu0 0.0
      %4456 = vmatprep.subr.mxu0 0.0
      %4457 = vmatpush2.msra.mxu0 0.0
      %4458 = vmatprep.mubr.f32.mxu0 0.0
      %4459 = vmatmul.mubr.f32.gmra.mxu0 %v4389
      %v4460 = vpop.f32.mrf.mxu0
      %v4461 = vadd.f32 %v4386, %v4460
      %v4462 = vpop.f32.mrf.mxu0
      %4463 = vmatprep.mubr.f32.mxu0 0.0
      %4464 = vmatmul.mubr.f32.gmra.mxu0 %v4392
      %v4465 = vpop.f32.mrf.mxu0
      %v4466 = vadd.f32 %v4386, %v4465
      %v4467 = vpop.f32.mrf.mxu0
      %4468 = vdwg.mxu0
      %v4470 = vsel %vm2034, %v4280, 0
      %v4473 = vsel %vm2034, %v4369, 0
      %v4476 = vsel %vm2034, %v4374, 0
      %4478 = vmatprep.subr.mxu0 0.0
      %4479 = vmatpush1.xpose.msra.mxu0 0.0
      %4480 = vmatprep.subr.mxu0 0.0
      %4481 = vmatpush1.xpose.msra.mxu0 0.0
      %4482 = vmatprep.subr.mxu0 0.0
      %4483 = vmatpush1.xpose.msra.mxu0 0.0
      %4484 = vmatprep.subr.mxu0 0.0
      %4485 = vmatpush1.xpose.msra.mxu0 0.0
      %4486 = vmatprep.subr.mxu0 0.0
      %4487 = vmatpush1.xpose.msra.mxu0 0.0
      %4488 = vmatprep.subr.mxu0 0.0
      %4489 = vmatpush1.xpose.msra.mxu0 0.0
      %4490 = vmatprep.subr.mxu0 0.0
      %4491 = vmatpush1.xpose.msra.mxu0 0.0
      %4492 = vmatprep.subr.mxu0 0.0
      %4493 = vmatpush1.xpose.msra.mxu0 0.0
      %4494 = vmatprep.subr.mxu0 0.0
      %4495 = vmatpush1.xpose.msra.mxu0 0.0
      %4496 = vmatprep.subr.mxu0 0.0
      %4497 = vmatpush1.xpose.msra.mxu0 0.0
      %4498 = vmatprep.subr.mxu0 0.0
      %4499 = vmatpush1.xpose.msra.mxu0 0.0
      %4500 = vmatprep.subr.mxu0 0.0
      %4501 = vmatpush1.xpose.msra.mxu0 0.0
      %4502 = vmatprep.subr.mxu0 0.0
      %4503 = vmatpush1.xpose.msra.mxu0 0.0
      %4504 = vmatprep.subr.mxu0 0.0
      %4505 = vmatpush1.xpose.msra.mxu0 0.0
      %4506 = vmatprep.subr.mxu0 0.0
      %4507 = vmatpush1.xpose.msra.mxu0 %v4476
      %4508 = vmatprep.subr.mxu0 0.0
      %4509 = vmatpush1.xpose.msra.mxu0 %v4473
      %4510 = vmatprep.subr.mxu0 0.0
      %4511 = vmatpush2.xpose.msra.mxu0 0.0
      %4512 = vmatprep.subr.mxu0 0.0
      %4513 = vmatpush2.xpose.msra.mxu0 0.0
      %4514 = vmatprep.subr.mxu0 0.0
      %4515 = vmatpush2.xpose.msra.mxu0 0.0
      %4516 = vmatprep.subr.mxu0 0.0
      %4517 = vmatpush2.xpose.msra.mxu0 0.0
      %4518 = vmatprep.subr.mxu0 0.0
      %4519 = vmatpush2.xpose.msra.mxu0 0.0
      %4520 = vmatprep.subr.mxu0 0.0
      %4521 = vmatpush2.xpose.msra.mxu0 0.0
      %4522 = vmatprep.subr.mxu0 0.0
      %4523 = vmatpush2.xpose.msra.mxu0 0.0
      %4524 = vmatprep.subr.mxu0 0.0
      %4525 = vmatpush2.xpose.msra.mxu0 0.0
      %4526 = vmatprep.subr.mxu0 0.0
      %4527 = vmatpush2.xpose.msra.mxu0 0.0
      %4528 = vmatprep.subr.mxu0 0.0
      %4529 = vmatpush2.xpose.msra.mxu0 0.0
      %4530 = vmatprep.subr.mxu0 0.0
      %4531 = vmatpush2.xpose.msra.mxu0 0.0
      %4532 = vmatprep.subr.mxu0 0.0
      %4533 = vmatpush2.xpose.msra.mxu0 0.0
      %4534 = vmatprep.subr.mxu0 0.0
      %4535 = vmatpush2.xpose.msra.mxu0 0.0
      %4536 = vmatprep.subr.mxu0 0.0
      %4537 = vmatpush2.xpose.msra.mxu0 0.0
      %4538 = vmatprep.subr.mxu0 0.0
      %4539 = vmatpush2.xpose.msra.mxu0 0.0
      %4540 = vmatprep.subr.mxu0 0.0
      %4541 = vmatpush2.xpose.msra.mxu0 0.0
      %4542 = vmatprep.mubr.f32.mxu0 0.0
      %4543 = vmatmul.mubr.f32.gmra.mxu0 %v4470
      %v4544 = vpop.f32.mrf.mxu0
      %v4545 = vadd.f32 0.0, %v4544
      %v4546 = vpop.f32.mrf.mxu0
      %4547 = vdwg.mxu0
      %v4548 = vmul.f32 %v4545, 0.35355338
      %v4549 = vsel %vm1757, %v4548, -inf
      %4550 = vmax.xlane.f32.xlu0 %v4549
      %v4551 = vpop.xlane.xlu0 %4550
      %v4552 = vsub.f32 %v4548, %v4551
      %v4553 = vmul.f32 %v4552, 1.442695
      %v4554 = vpow.pop %v4553
      %v4555 = vsel %vm1757, %v4554, 0.0
      %4556 = vadd.xlane.f32.xlu0 %v4555
      %v4557 = vpop.xlane.xlu0 %4556
      %v4558 = vrcp.pop %v4557
      %v4559 = vmul.f32 %v4554, %v4558
      %v4561 = vsel %vm1757, %v4559, 0
      %4563 = vmatprep.subr.mxu0 0.0
      %4564 = vmatpush1.msra.mxu0 0.0
      %4565 = vmatprep.subr.mxu0 0.0
      %4566 = vmatpush1.msra.mxu0 0.0
      %4567 = vmatprep.subr.mxu0 0.0
      %4568 = vmatpush1.msra.mxu0 0.0
      %4569 = vmatprep.subr.mxu0 0.0
      %4570 = vmatpush1.msra.mxu0 0.0
      %4571 = vmatprep.subr.mxu0 0.0
      %4572 = vmatpush1.msra.mxu0 0.0
      %4573 = vmatprep.subr.mxu0 0.0
      %4574 = vmatpush1.msra.mxu0 0.0
      %4575 = vmatprep.subr.mxu0 0.0
      %4576 = vmatpush1.msra.mxu0 0.0
      %4577 = vmatprep.subr.mxu0 0.0
      %4578 = vmatpush1.msra.mxu0 0.0
      %4579 = vmatprep.subr.mxu0 0.0
      %4580 = vmatpush1.msra.mxu0 0.0
      %4581 = vmatprep.subr.mxu0 0.0
      %4582 = vmatpush1.msra.mxu0 0.0
      %4583 = vmatprep.subr.mxu0 0.0
      %4584 = vmatpush1.msra.mxu0 0.0
      %4585 = vmatprep.subr.mxu0 0.0
      %4586 = vmatpush1.msra.mxu0 0.0
      %4587 = vmatprep.subr.mxu0 0.0
      %4588 = vmatpush1.msra.mxu0 0.0
      %4589 = vmatprep.subr.mxu0 0.0
      %4590 = vmatpush1.msra.mxu0 0.0
      %4591 = vmatprep.subr.mxu0 0.0
      %4592 = vmatpush1.msra.mxu0 %v4466
      %4593 = vmatprep.subr.mxu0 0.0
      %4594 = vmatpush1.msra.mxu0 %v4461
      %4595 = vmatprep.subr.mxu0 0.0
      %4596 = vmatpush2.msra.mxu0 0.0
      %4597 = vmatprep.subr.mxu0 0.0
      %4598 = vmatpush2.msra.mxu0 0.0
      %4599 = vmatprep.subr.mxu0 0.0
      %4600 = vmatpush2.msra.mxu0 0.0
      %4601 = vmatprep.subr.mxu0 0.0
      %4602 = vmatpush2.msra.mxu0 0.0
      %4603 = vmatprep.subr.mxu0 0.0
      %4604 = vmatpush2.msra.mxu0 0.0
      %4605 = vmatprep.subr.mxu0 0.0
      %4606 = vmatpush2.msra.mxu0 0.0
      %4607 = vmatprep.subr.mxu0 0.0
      %4608 = vmatpush2.msra.mxu0 0.0
      %4609 = vmatprep.subr.mxu0 0.0
      %4610 = vmatpush2.msra.mxu0 0.0
      %4611 = vmatprep.subr.mxu0 0.0
      %4612 = vmatpush2.msra.mxu0 0.0
      %4613 = vmatprep.subr.mxu0 0.0
      %4614 = vmatpush2.msra.mxu0 0.0
      %4615 = vmatprep.subr.mxu0 0.0
      %4616 = vmatpush2.msra.mxu0 0.0
      %4617 = vmatprep.subr.mxu0 0.0
      %4618 = vmatpush2.msra.mxu0 0.0
      %4619 = vmatprep.subr.mxu0 0.0
      %4620 = vmatpush2.msra.mxu0 0.0
      %4621 = vmatprep.subr.mxu0 0.0
      %4622 = vmatpush2.msra.mxu0 0.0
      %4623 = vmatprep.subr.mxu0 0.0
      %4624 = vmatpush2.msra.mxu0 0.0
      %4625 = vmatprep.subr.mxu0 0.0
      %4626 = vmatpush2.msra.mxu0 0.0
      %4627 = vmatprep.mubr.f32.mxu0 0.0
      %4628 = vmatmul.mubr.f32.gmra.mxu0 %v4561
      %v4629 = vpop.f32.mrf.mxu0
      %v4630 = vadd.f32 0.0, %v4629
      %v4631 = vpop.f32.mrf.mxu0
      %4632 = vdwg.mxu0
      %4633 = vrot.lane.b32.xlu0 %v4280, 120
      %v4634 = vpop.permute.xlu0 %4633
      %4635 = vrot.lane.b32.xlu0 %v4369, 120
      %v4636 = vpop.permute.xlu0 %4635
      %4637 = vrot.lane.b32.xlu0 %v4374, 120
      %v4638 = vpop.permute.xlu0 %4637
      %v4639 = vsel %vm2034, %v4634, 0
      %v4641 = vsel %vm2034, %v4636, 0
      %v4643 = vsel %vm2034, %v4638, 0
      %4645 = vmatprep.subr.mxu0 0.0
      %4646 = vmatpush1.xpose.msra.mxu0 0.0
      %4647 = vmatprep.subr.mxu0 0.0
      %4648 = vmatpush1.xpose.msra.mxu0 0.0
      %4649 = vmatprep.subr.mxu0 0.0
      %4650 = vmatpush1.xpose.msra.mxu0 0.0
      %4651 = vmatprep.subr.mxu0 0.0
      %4652 = vmatpush1.xpose.msra.mxu0 0.0
      %4653 = vmatprep.subr.mxu0 0.0
      %4654 = vmatpush1.xpose.msra.mxu0 0.0
      %4655 = vmatprep.subr.mxu0 0.0
      %4656 = vmatpush1.xpose.msra.mxu0 0.0
      %4657 = vmatprep.subr.mxu0 0.0
      %4658 = vmatpush1.xpose.msra.mxu0 0.0
      %4659 = vmatprep.subr.mxu0 0.0
      %4660 = vmatpush1.xpose.msra.mxu0 0.0
      %4661 = vmatprep.subr.mxu0 0.0
      %4662 = vmatpush1.xpose.msra.mxu0 0.0
      %4663 = vmatprep.subr.mxu0 0.0
      %4664 = vmatpush1.xpose.msra.mxu0 0.0
      %4665 = vmatprep.subr.mxu0 0.0
      %4666 = vmatpush1.xpose.msra.mxu0 0.0
      %4667 = vmatprep.subr.mxu0 0.0
      %4668 = vmatpush1.xpose.msra.mxu0 0.0
      %4669 = vmatprep.subr.mxu0 0.0
      %4670 = vmatpush1.xpose.msra.mxu0 0.0
      %4671 = vmatprep.subr.mxu0 0.0
      %4672 = vmatpush1.xpose.msra.mxu0 0.0
      %4673 = vmatprep.subr.mxu0 0.0
      %4674 = vmatpush1.xpose.msra.mxu0 %v4643
      %4675 = vmatprep.subr.mxu0 0.0
      %4676 = vmatpush1.xpose.msra.mxu0 %v4641
      %4677 = vmatprep.subr.mxu0 0.0
      %4678 = vmatpush2.xpose.msra.mxu0 0.0
      %4679 = vmatprep.subr.mxu0 0.0
      %4680 = vmatpush2.xpose.msra.mxu0 0.0
      %4681 = vmatprep.subr.mxu0 0.0
      %4682 = vmatpush2.xpose.msra.mxu0 0.0
      %4683 = vmatprep.subr.mxu0 0.0
      %4684 = vmatpush2.xpose.msra.mxu0 0.0
      %4685 = vmatprep.subr.mxu0 0.0
      %4686 = vmatpush2.xpose.msra.mxu0 0.0
      %4687 = vmatprep.subr.mxu0 0.0
      %4688 = vmatpush2.xpose.msra.mxu0 0.0
      %4689 = vmatprep.subr.mxu0 0.0
      %4690 = vmatpush2.xpose.msra.mxu0 0.0
      %4691 = vmatprep.subr.mxu0 0.0
      %4692 = vmatpush2.xpose.msra.mxu0 0.0
      %4693 = vmatprep.subr.mxu0 0.0
      %4694 = vmatpush2.xpose.msra.mxu0 0.0
      %4695 = vmatprep.subr.mxu0 0.0
      %4696 = vmatpush2.xpose.msra.mxu0 0.0
      %4697 = vmatprep.subr.mxu0 0.0
      %4698 = vmatpush2.xpose.msra.mxu0 0.0
      %4699 = vmatprep.subr.mxu0 0.0
      %4700 = vmatpush2.xpose.msra.mxu0 0.0
      %4701 = vmatprep.subr.mxu0 0.0
      %4702 = vmatpush2.xpose.msra.mxu0 0.0
      %4703 = vmatprep.subr.mxu0 0.0
      %4704 = vmatpush2.xpose.msra.mxu0 0.0
      %4705 = vmatprep.subr.mxu0 0.0
      %4706 = vmatpush2.xpose.msra.mxu0 0.0
      %4707 = vmatprep.subr.mxu0 0.0
      %4708 = vmatpush2.xpose.msra.mxu0 0.0
      %4709 = vmatprep.mubr.f32.mxu0 0.0
      %4710 = vmatmul.mubr.f32.gmra.mxu0 %v4639
      %v4711 = vpop.f32.mrf.mxu0
      %v4712 = vadd.f32 0.0, %v4711
      %v4713 = vpop.f32.mrf.mxu0
      %4714 = vdwg.mxu0
      %v4715 = vmul.f32 %v4712, 0.35355338
      %v4716 = vsel %vm1757, %v4715, -inf
      %4717 = vmax.xlane.f32.xlu0 %v4716
      %v4718 = vpop.xlane.xlu0 %4717
      %v4719 = vsub.f32 %v4715, %v4718
      %v4720 = vmul.f32 %v4719, 1.442695
      %v4721 = vpow.pop %v4720
      %v4722 = vsel %vm1757, %v4721, 0.0
      %4723 = vadd.xlane.f32.xlu0 %v4722
      %v4724 = vpop.xlane.xlu0 %4723
      %v4725 = vrcp.pop %v4724
      %v4726 = vmul.f32 %v4721, %v4725
      %4729 = vrot.lane.b32.xlu0 %v4461, 120
      %v4730 = vpop.permute.xlu0 %4729
      %4731 = vrot.lane.b32.xlu0 %v4466, 120
      %v4732 = vpop.permute.xlu0 %4731
      %v4736 = vsel %vm1757, %v4726, 0
      %4738 = vmatprep.subr.mxu0 0.0
      %4739 = vmatpush1.msra.mxu0 0.0
      %4740 = vmatprep.subr.mxu0 0.0
      %4741 = vmatpush1.msra.mxu0 0.0
      %4742 = vmatprep.subr.mxu0 0.0
      %4743 = vmatpush1.msra.mxu0 0.0
      %4744 = vmatprep.subr.mxu0 0.0
      %4745 = vmatpush1.msra.mxu0 0.0
      %4746 = vmatprep.subr.mxu0 0.0
      %4747 = vmatpush1.msra.mxu0 0.0
      %4748 = vmatprep.subr.mxu0 0.0
      %4749 = vmatpush1.msra.mxu0 0.0
      %4750 = vmatprep.subr.mxu0 0.0
      %4751 = vmatpush1.msra.mxu0 0.0
      %4752 = vmatprep.subr.mxu0 0.0
      %4753 = vmatpush1.msra.mxu0 0.0
      %4754 = vmatprep.subr.mxu0 0.0
      %4755 = vmatpush1.msra.mxu0 0.0
      %4756 = vmatprep.subr.mxu0 0.0
      %4757 = vmatpush1.msra.mxu0 0.0
      %4758 = vmatprep.subr.mxu0 0.0
      %4759 = vmatpush1.msra.mxu0 0.0
      %4760 = vmatprep.subr.mxu0 0.0
      %4761 = vmatpush1.msra.mxu0 0.0
      %4762 = vmatprep.subr.mxu0 0.0
      %4763 = vmatpush1.msra.mxu0 0.0
      %4764 = vmatprep.subr.mxu0 0.0
      %4765 = vmatpush1.msra.mxu0 0.0
      %4766 = vmatprep.subr.mxu0 0.0
      %4767 = vmatpush1.msra.mxu0 %v4732
      %4768 = vmatprep.subr.mxu0 0.0
      %4769 = vmatpush1.msra.mxu0 %v4730
      %4770 = vmatprep.subr.mxu0 0.0
      %4771 = vmatpush2.msra.mxu0 0.0
      %4772 = vmatprep.subr.mxu0 0.0
      %4773 = vmatpush2.msra.mxu0 0.0
      %4774 = vmatprep.subr.mxu0 0.0
      %4775 = vmatpush2.msra.mxu0 0.0
      %4776 = vmatprep.subr.mxu0 0.0
      %4777 = vmatpush2.msra.mxu0 0.0
      %4778 = vmatprep.subr.mxu0 0.0
      %4779 = vmatpush2.msra.mxu0 0.0
      %4780 = vmatprep.subr.mxu0 0.0
      %4781 = vmatpush2.msra.mxu0 0.0
      %4782 = vmatprep.subr.mxu0 0.0
      %4783 = vmatpush2.msra.mxu0 0.0
      %4784 = vmatprep.subr.mxu0 0.0
      %4785 = vmatpush2.msra.mxu0 0.0
      %4786 = vmatprep.subr.mxu0 0.0
      %4787 = vmatpush2.msra.mxu0 0.0
      %4788 = vmatprep.subr.mxu0 0.0
      %4789 = vmatpush2.msra.mxu0 0.0
      %4790 = vmatprep.subr.mxu0 0.0
      %4791 = vmatpush2.msra.mxu0 0.0
      %4792 = vmatprep.subr.mxu0 0.0
      %4793 = vmatpush2.msra.mxu0 0.0
      %4794 = vmatprep.subr.mxu0 0.0
      %4795 = vmatpush2.msra.mxu0 0.0
      %4796 = vmatprep.subr.mxu0 0.0
      %4797 = vmatpush2.msra.mxu0 0.0
      %4798 = vmatprep.subr.mxu0 0.0
      %4799 = vmatpush2.msra.mxu0 0.0
      %4800 = vmatprep.subr.mxu0 0.0
      %4801 = vmatpush2.msra.mxu0 0.0
      %4802 = vmatprep.mubr.f32.mxu0 0.0
      %4803 = vmatmul.mubr.f32.gmra.mxu0 %v4736
      %v4804 = vpop.f32.mrf.mxu0
      %v4805 = vadd.f32 0.0, %v4804
      %v4806 = vpop.f32.mrf.mxu0
      %4807 = vdwg.mxu0
      %4808 = vrot.lane.b32.xlu0 %v4280, 112
      %v4809 = vpop.permute.xlu0 %4808
      %4810 = vrot.lane.b32.xlu0 %v4369, 112
      %v4811 = vpop.permute.xlu0 %4810
      %4812 = vrot.lane.b32.xlu0 %v4374, 112
      %v4813 = vpop.permute.xlu0 %4812
      %v4814 = vsel %vm2034, %v4809, 0
      %v4816 = vsel %vm2034, %v4811, 0
      %v4818 = vsel %vm2034, %v4813, 0
      %4820 = vmatprep.subr.mxu0 0.0
      %4821 = vmatpush1.xpose.msra.mxu0 0.0
      %4822 = vmatprep.subr.mxu0 0.0
      %4823 = vmatpush1.xpose.msra.mxu0 0.0
      %4824 = vmatprep.subr.mxu0 0.0
      %4825 = vmatpush1.xpose.msra.mxu0 0.0
      %4826 = vmatprep.subr.mxu0 0.0
      %4827 = vmatpush1.xpose.msra.mxu0 0.0
      %4828 = vmatprep.subr.mxu0 0.0
      %4829 = vmatpush1.xpose.msra.mxu0 0.0
      %4830 = vmatprep.subr.mxu0 0.0
      %4831 = vmatpush1.xpose.msra.mxu0 0.0
      %4832 = vmatprep.subr.mxu0 0.0
      %4833 = vmatpush1.xpose.msra.mxu0 0.0
      %4834 = vmatprep.subr.mxu0 0.0
      %4835 = vmatpush1.xpose.msra.mxu0 0.0
      %4836 = vmatprep.subr.mxu0 0.0
      %4837 = vmatpush1.xpose.msra.mxu0 0.0
      %4838 = vmatprep.subr.mxu0 0.0
      %4839 = vmatpush1.xpose.msra.mxu0 0.0
      %4840 = vmatprep.subr.mxu0 0.0
      %4841 = vmatpush1.xpose.msra.mxu0 0.0
      %4842 = vmatprep.subr.mxu0 0.0
      %4843 = vmatpush1.xpose.msra.mxu0 0.0
      %4844 = vmatprep.subr.mxu0 0.0
      %4845 = vmatpush1.xpose.msra.mxu0 0.0
      %4846 = vmatprep.subr.mxu0 0.0
      %4847 = vmatpush1.xpose.msra.mxu0 0.0
      %4848 = vmatprep.subr.mxu0 0.0
      %4849 = vmatpush1.xpose.msra.mxu0 %v4818
      %4850 = vmatprep.subr.mxu0 0.0
      %4851 = vmatpush1.xpose.msra.mxu0 %v4816
      %4852 = vmatprep.subr.mxu0 0.0
      %4853 = vmatpush2.xpose.msra.mxu0 0.0
      %4854 = vmatprep.subr.mxu0 0.0
      %4855 = vmatpush2.xpose.msra.mxu0 0.0
      %4856 = vmatprep.subr.mxu0 0.0
      %4857 = vmatpush2.xpose.msra.mxu0 0.0
      %4858 = vmatprep.subr.mxu0 0.0
      %4859 = vmatpush2.xpose.msra.mxu0 0.0
      %4860 = vmatprep.subr.mxu0 0.0
      %4861 = vmatpush2.xpose.msra.mxu0 0.0
      %4862 = vmatprep.subr.mxu0 0.0
      %4863 = vmatpush2.xpose.msra.mxu0 0.0
      %4864 = vmatprep.subr.mxu0 0.0
      %4865 = vmatpush2.xpose.msra.mxu0 0.0
      %4866 = vmatprep.subr.mxu0 0.0
      %4867 = vmatpush2.xpose.msra.mxu0 0.0
      %4868 = vmatprep.subr.mxu0 0.0
      %4869 = vmatpush2.xpose.msra.mxu0 0.0
      %4870 = vmatprep.subr.mxu0 0.0
      %4871 = vmatpush2.xpose.msra.mxu0 0.0
      %4872 = vmatprep.subr.mxu0 0.0
      %4873 = vmatpush2.xpose.msra.mxu0 0.0
      %4874 = vmatprep.subr.mxu0 0.0
      %4875 = vmatpush2.xpose.msra.mxu0 0.0
      %4876 = vmatprep.subr.mxu0 0.0
      %4877 = vmatpush2.xpose.msra.mxu0 0.0
      %4878 = vmatprep.subr.mxu0 0.0
      %4879 = vmatpush2.xpose.msra.mxu0 0.0
      %4880 = vmatprep.subr.mxu0 0.0
      %4881 = vmatpush2.xpose.msra.mxu0 0.0
      %4882 = vmatprep.subr.mxu0 0.0
      %4883 = vmatpush2.xpose.msra.mxu0 0.0
      %4884 = vmatprep.mubr.f32.mxu0 0.0
      %4885 = vmatmul.mubr.f32.gmra.mxu0 %v4814
      %v4886 = vpop.f32.mrf.mxu0
      %v4887 = vadd.f32 0.0, %v4886
      %v4888 = vpop.f32.mrf.mxu0
      %4889 = vdwg.mxu0
      %v4890 = vmul.f32 %v4887, 0.35355338
      %v4891 = vsel %vm1757, %v4890, -inf
      %4892 = vmax.xlane.f32.xlu0 %v4891
      %v4893 = vpop.xlane.xlu0 %4892
      %v4894 = vsub.f32 %v4890, %v4893
      %v4895 = vmul.f32 %v4894, 1.442695
      %v4896 = vpow.pop %v4895
      %v4897 = vsel %vm1757, %v4896, 0.0
      %4898 = vadd.xlane.f32.xlu0 %v4897
      %v4899 = vpop.xlane.xlu0 %4898
      %v4900 = vrcp.pop %v4899
      %v4901 = vmul.f32 %v4896, %v4900
      %4902 = vrot.lane.b32.xlu0 %v4461, 112
      %v4903 = vpop.permute.xlu0 %4902
      %4904 = vrot.lane.b32.xlu0 %v4466, 112
      %v4905 = vpop.permute.xlu0 %4904
      %v4909 = vsel %vm1757, %v4901, 0
      %4911 = vmatprep.subr.mxu0 0.0
      %4912 = vmatpush1.msra.mxu0 0.0
      %4913 = vmatprep.subr.mxu0 0.0
      %4914 = vmatpush1.msra.mxu0 0.0
      %4915 = vmatprep.subr.mxu0 0.0
      %4916 = vmatpush1.msra.mxu0 0.0
      %4917 = vmatprep.subr.mxu0 0.0
      %4918 = vmatpush1.msra.mxu0 0.0
      %4919 = vmatprep.subr.mxu0 0.0
      %4920 = vmatpush1.msra.mxu0 0.0
      %4921 = vmatprep.subr.mxu0 0.0
      %4922 = vmatpush1.msra.mxu0 0.0
      %4923 = vmatprep.subr.mxu0 0.0
      %4924 = vmatpush1.msra.mxu0 0.0
      %4925 = vmatprep.subr.mxu0 0.0
      %4926 = vmatpush1.msra.mxu0 0.0
      %4927 = vmatprep.subr.mxu0 0.0
      %4928 = vmatpush1.msra.mxu0 0.0
      %4929 = vmatprep.subr.mxu0 0.0
      %4930 = vmatpush1.msra.mxu0 0.0
      %4931 = vmatprep.subr.mxu0 0.0
      %4932 = vmatpush1.msra.mxu0 0.0
      %4933 = vmatprep.subr.mxu0 0.0
      %4934 = vmatpush1.msra.mxu0 0.0
      %4935 = vmatprep.subr.mxu0 0.0
      %4936 = vmatpush1.msra.mxu0 0.0
      %4937 = vmatprep.subr.mxu0 0.0
      %4938 = vmatpush1.msra.mxu0 0.0
      %4939 = vmatprep.subr.mxu0 0.0
      %4940 = vmatpush1.msra.mxu0 %v4905
      %4941 = vmatprep.subr.mxu0 0.0
      %4942 = vmatpush1.msra.mxu0 %v4903
      %4943 = vmatprep.subr.mxu0 0.0
      %4944 = vmatpush2.msra.mxu0 0.0
      %4945 = vmatprep.subr.mxu0 0.0
      %4946 = vmatpush2.msra.mxu0 0.0
      %4947 = vmatprep.subr.mxu0 0.0
      %4948 = vmatpush2.msra.mxu0 0.0
      %4949 = vmatprep.subr.mxu0 0.0
      %4950 = vmatpush2.msra.mxu0 0.0
      %4951 = vmatprep.subr.mxu0 0.0
      %4952 = vmatpush2.msra.mxu0 0.0
      %4953 = vmatprep.subr.mxu0 0.0
      %4954 = vmatpush2.msra.mxu0 0.0
      %4955 = vmatprep.subr.mxu0 0.0
      %4956 = vmatpush2.msra.mxu0 0.0
      %4957 = vmatprep.subr.mxu0 0.0
      %4958 = vmatpush2.msra.mxu0 0.0
      %4959 = vmatprep.subr.mxu0 0.0
      %4960 = vmatpush2.msra.mxu0 0.0
      %4961 = vmatprep.subr.mxu0 0.0
      %4962 = vmatpush2.msra.mxu0 0.0
      %4963 = vmatprep.subr.mxu0 0.0
      %4964 = vmatpush2.msra.mxu0 0.0
      %4965 = vmatprep.subr.mxu0 0.0
      %4966 = vmatpush2.msra.mxu0 0.0
      %4967 = vmatprep.subr.mxu0 0.0
      %4968 = vmatpush2.msra.mxu0 0.0
      %4969 = vmatprep.subr.mxu0 0.0
      %4970 = vmatpush2.msra.mxu0 0.0
      %4971 = vmatprep.subr.mxu0 0.0
      %4972 = vmatpush2.msra.mxu0 0.0
      %4973 = vmatprep.subr.mxu0 0.0
      %4974 = vmatpush2.msra.mxu0 0.0
      %4975 = vmatprep.mubr.f32.mxu0 0.0
      %4976 = vmatmul.mubr.f32.gmra.mxu0 %v4909
      %v4977 = vpop.f32.mrf.mxu0
      %v4978 = vadd.f32 0.0, %v4977
      %v4979 = vpop.f32.mrf.mxu0
      %4980 = vdwg.mxu0
      %4981 = vrot.lane.b32.xlu0 %v4280, 104
      %v4982 = vpop.permute.xlu0 %4981
      %4983 = vrot.lane.b32.xlu0 %v4369, 104
      %v4984 = vpop.permute.xlu0 %4983
      %4985 = vrot.lane.b32.xlu0 %v4374, 104
      %v4986 = vpop.permute.xlu0 %4985
      %v4987 = vsel %vm2034, %v4982, 0
      %v4989 = vsel %vm2034, %v4984, 0
      %v4991 = vsel %vm2034, %v4986, 0
      %4993 = vmatprep.subr.mxu0 0.0
      %4994 = vmatpush1.xpose.msra.mxu0 0.0
      %4995 = vmatprep.subr.mxu0 0.0
      %4996 = vmatpush1.xpose.msra.mxu0 0.0
      %4997 = vmatprep.subr.mxu0 0.0
      %4998 = vmatpush1.xpose.msra.mxu0 0.0
      %4999 = vmatprep.subr.mxu0 0.0
      %5000 = vmatpush1.xpose.msra.mxu0 0.0
      %5001 = vmatprep.subr.mxu0 0.0
      %5002 = vmatpush1.xpose.msra.mxu0 0.0
      %5003 = vmatprep.subr.mxu0 0.0
      %5004 = vmatpush1.xpose.msra.mxu0 0.0
      %5005 = vmatprep.subr.mxu0 0.0
      %5006 = vmatpush1.xpose.msra.mxu0 0.0
      %5007 = vmatprep.subr.mxu0 0.0
      %5008 = vmatpush1.xpose.msra.mxu0 0.0
      %5009 = vmatprep.subr.mxu0 0.0
      %5010 = vmatpush1.xpose.msra.mxu0 0.0
      %5011 = vmatprep.subr.mxu0 0.0
      %5012 = vmatpush1.xpose.msra.mxu0 0.0
      %5013 = vmatprep.subr.mxu0 0.0
      %5014 = vmatpush1.xpose.msra.mxu0 0.0
      %5015 = vmatprep.subr.mxu0 0.0
      %5016 = vmatpush1.xpose.msra.mxu0 0.0
      %5017 = vmatprep.subr.mxu0 0.0
      %5018 = vmatpush1.xpose.msra.mxu0 0.0
      %5019 = vmatprep.subr.mxu0 0.0
      %5020 = vmatpush1.xpose.msra.mxu0 0.0
      %5021 = vmatprep.subr.mxu0 0.0
      %5022 = vmatpush1.xpose.msra.mxu0 %v4991
      %5023 = vmatprep.subr.mxu0 0.0
      %5024 = vmatpush1.xpose.msra.mxu0 %v4989
      %5025 = vmatprep.subr.mxu0 0.0
      %5026 = vmatpush2.xpose.msra.mxu0 0.0
      %5027 = vmatprep.subr.mxu0 0.0
      %5028 = vmatpush2.xpose.msra.mxu0 0.0
      %5029 = vmatprep.subr.mxu0 0.0
      %5030 = vmatpush2.xpose.msra.mxu0 0.0
      %5031 = vmatprep.subr.mxu0 0.0
      %5032 = vmatpush2.xpose.msra.mxu0 0.0
      %5033 = vmatprep.subr.mxu0 0.0
      %5034 = vmatpush2.xpose.msra.mxu0 0.0
      %5035 = vmatprep.subr.mxu0 0.0
      %5036 = vmatpush2.xpose.msra.mxu0 0.0
      %5037 = vmatprep.subr.mxu0 0.0
      %5038 = vmatpush2.xpose.msra.mxu0 0.0
      %5039 = vmatprep.subr.mxu0 0.0
      %5040 = vmatpush2.xpose.msra.mxu0 0.0
      %5041 = vmatprep.subr.mxu0 0.0
      %5042 = vmatpush2.xpose.msra.mxu0 0.0
      %5043 = vmatprep.subr.mxu0 0.0
      %5044 = vmatpush2.xpose.msra.mxu0 0.0
      %5045 = vmatprep.subr.mxu0 0.0
      %5046 = vmatpush2.xpose.msra.mxu0 0.0
      %5047 = vmatprep.subr.mxu0 0.0
      %5048 = vmatpush2.xpose.msra.mxu0 0.0
      %5049 = vmatprep.subr.mxu0 0.0
      %5050 = vmatpush2.xpose.msra.mxu0 0.0
      %5051 = vmatprep.subr.mxu0 0.0
      %5052 = vmatpush2.xpose.msra.mxu0 0.0
      %5053 = vmatprep.subr.mxu0 0.0
      %5054 = vmatpush2.xpose.msra.mxu0 0.0
      %5055 = vmatprep.subr.mxu0 0.0
      %5056 = vmatpush2.xpose.msra.mxu0 0.0
      %5057 = vmatprep.mubr.f32.mxu0 0.0
      %5058 = vmatmul.mubr.f32.gmra.mxu0 %v4987
      %v5059 = vpop.f32.mrf.mxu0
      %v5060 = vadd.f32 0.0, %v5059
      %v5061 = vpop.f32.mrf.mxu0
      %5062 = vdwg.mxu0
      %v5063 = vmul.f32 %v5060, 0.35355338
      %v5064 = vsel %vm1757, %v5063, -inf
      %5065 = vmax.xlane.f32.xlu0 %v5064
      %v5066 = vpop.xlane.xlu0 %5065
      %v5067 = vsub.f32 %v5063, %v5066
      %v5068 = vmul.f32 %v5067, 1.442695
      %v5069 = vpow.pop %v5068
      %v5070 = vsel %vm1757, %v5069, 0.0
      %5071 = vadd.xlane.f32.xlu0 %v5070
      %v5072 = vpop.xlane.xlu0 %5071
      %v5073 = vrcp.pop %v5072
      %v5074 = vmul.f32 %v5069, %v5073
      %5075 = vrot.lane.b32.xlu0 %v4461, 104
      %v5076 = vpop.permute.xlu0 %5075
      %5077 = vrot.lane.b32.xlu0 %v4466, 104
      %v5078 = vpop.permute.xlu0 %5077
      %v5082 = vsel %vm1757, %v5074, 0
      %5084 = vmatprep.subr.mxu0 0.0
      %5085 = vmatpush1.msra.mxu0 0.0
      %5086 = vmatprep.subr.mxu0 0.0
      %5087 = vmatpush1.msra.mxu0 0.0
      %5088 = vmatprep.subr.mxu0 0.0
      %5089 = vmatpush1.msra.mxu0 0.0
      %5090 = vmatprep.subr.mxu0 0.0
      %5091 = vmatpush1.msra.mxu0 0.0
      %5092 = vmatprep.subr.mxu0 0.0
      %5093 = vmatpush1.msra.mxu0 0.0
      %5094 = vmatprep.subr.mxu0 0.0
      %5095 = vmatpush1.msra.mxu0 0.0
      %5096 = vmatprep.subr.mxu0 0.0
      %5097 = vmatpush1.msra.mxu0 0.0
      %5098 = vmatprep.subr.mxu0 0.0
      %5099 = vmatpush1.msra.mxu0 0.0
      %5100 = vmatprep.subr.mxu0 0.0
      %5101 = vmatpush1.msra.mxu0 0.0
      %5102 = vmatprep.subr.mxu0 0.0
      %5103 = vmatpush1.msra.mxu0 0.0
      %5104 = vmatprep.subr.mxu0 0.0
      %5105 = vmatpush1.msra.mxu0 0.0
      %5106 = vmatprep.subr.mxu0 0.0
      %5107 = vmatpush1.msra.mxu0 0.0
      %5108 = vmatprep.subr.mxu0 0.0
      %5109 = vmatpush1.msra.mxu0 0.0
      %5110 = vmatprep.subr.mxu0 0.0
      %5111 = vmatpush1.msra.mxu0 0.0
      %5112 = vmatprep.subr.mxu0 0.0
      %5113 = vmatpush1.msra.mxu0 %v5078
      %5114 = vmatprep.subr.mxu0 0.0
      %5115 = vmatpush1.msra.mxu0 %v5076
      %5116 = vmatprep.subr.mxu0 0.0
      %5117 = vmatpush2.msra.mxu0 0.0
      %5118 = vmatprep.subr.mxu0 0.0
      %5119 = vmatpush2.msra.mxu0 0.0
      %5120 = vmatprep.subr.mxu0 0.0
      %5121 = vmatpush2.msra.mxu0 0.0
      %5122 = vmatprep.subr.mxu0 0.0
      %5123 = vmatpush2.msra.mxu0 0.0
      %5124 = vmatprep.subr.mxu0 0.0
      %5125 = vmatpush2.msra.mxu0 0.0
      %5126 = vmatprep.subr.mxu0 0.0
      %5127 = vmatpush2.msra.mxu0 0.0
      %5128 = vmatprep.subr.mxu0 0.0
      %5129 = vmatpush2.msra.mxu0 0.0
      %5130 = vmatprep.subr.mxu0 0.0
      %5131 = vmatpush2.msra.mxu0 0.0
      %5132 = vmatprep.subr.mxu0 0.0
      %5133 = vmatpush2.msra.mxu0 0.0
      %5134 = vmatprep.subr.mxu0 0.0
      %5135 = vmatpush2.msra.mxu0 0.0
      %5136 = vmatprep.subr.mxu0 0.0
      %5137 = vmatpush2.msra.mxu0 0.0
      %5138 = vmatprep.subr.mxu0 0.0
      %5139 = vmatpush2.msra.mxu0 0.0
      %5140 = vmatprep.subr.mxu0 0.0
      %5141 = vmatpush2.msra.mxu0 0.0
      %5142 = vmatprep.subr.mxu0 0.0
      %5143 = vmatpush2.msra.mxu0 0.0
      %5144 = vmatprep.subr.mxu0 0.0
      %5145 = vmatpush2.msra.mxu0 0.0
      %5146 = vmatprep.subr.mxu0 0.0
      %5147 = vmatpush2.msra.mxu0 0.0
      %5148 = vmatprep.mubr.f32.mxu0 0.0
      %5149 = vmatmul.mubr.f32.gmra.mxu0 %v5082
      %v5150 = vpop.f32.mrf.mxu0
      %v5151 = vadd.f32 0.0, %v5150
      %v5152 = vpop.f32.mrf.mxu0
      %5153 = vdwg.mxu0
      %5155 = vrot.lane.b32.xlu0 %v4805, 8
      %v5156 = vpop.permute.xlu0 %5155
      %5159 = vrot.lane.b32.xlu0 %v4978, 16
      %v5160 = vpop.permute.xlu0 %5159
      %5163 = vrot.lane.b32.xlu0 %v5151, 24
      %v5164 = vpop.permute.xlu0 %5163
      %v5166 = vsel %vm2034, %v4630, %v5156
      %v5167 = vsel %vm1757, %v5166, %v5160
      %v5168 = vsel %vm2859, %v5167, %v5164
      %v5169 = vld [vmem:[%s71] sm:$0xff]
      %v5170 = vld [vmem:[%s71 + $0x8] sm:$0xff]
      %v5171 = vld [vmem:[%s71 + $0x10] sm:$0xff]
      %v5172 = vld [vmem:[%s71 + $0x18] sm:$0xff]
      %v5173 = vld [vmem:[%s73] sm:$0x1]
      %v5175 = vlaneseq
      %v5176 = vshrl.u32 %v5175, 7
      %v5177 = vsub.s32 0, %v5176
      %v5178 = vrot.slane %v5173, %v5177
      %v5181 = vsel %vm1854, %v5168, 0
      %5183 = vmatprep.subr.mxu0 0.0
      %5184 = vmatpush1.msra.mxu0 0.0
      %5185 = vmatprep.subr.mxu0 0.0
      %5186 = vmatpush1.msra.mxu0 0.0
      %5187 = vmatprep.subr.mxu0 0.0
      %5188 = vmatpush1.msra.mxu0 0.0
      %5189 = vmatprep.subr.mxu0 0.0
      %5190 = vmatpush1.msra.mxu0 0.0
      %5191 = vmatprep.subr.mxu0 0.0
      %5192 = vmatpush1.msra.mxu0 0.0
      %5193 = vmatprep.subr.mxu0 0.0
      %5194 = vmatpush1.msra.mxu0 0.0
      %5195 = vmatprep.subr.mxu0 0.0
      %5196 = vmatpush1.msra.mxu0 0.0
      %5197 = vmatprep.subr.mxu0 0.0
      %5198 = vmatpush1.msra.mxu0 0.0
      %5199 = vmatprep.subr.mxu0 0.0
      %5200 = vmatpush1.msra.mxu0 0.0
      %5201 = vmatprep.subr.mxu0 0.0
      %5202 = vmatpush1.msra.mxu0 0.0
      %5203 = vmatprep.subr.mxu0 0.0
      %5204 = vmatpush1.msra.mxu0 0.0
      %5205 = vmatprep.subr.mxu0 0.0
      %5206 = vmatpush1.msra.mxu0 0.0
      %5207 = vmatprep.subr.mxu0 0.0
      %5208 = vmatpush1.msra.mxu0 %v5172
      %5209 = vmatprep.subr.mxu0 0.0
      %5210 = vmatpush1.msra.mxu0 %v5171
      %5211 = vmatprep.subr.mxu0 0.0
      %5212 = vmatpush1.msra.mxu0 %v5170
      %5213 = vmatprep.subr.mxu0 0.0
      %5214 = vmatpush1.msra.mxu0 %v5169
      %5215 = vmatprep.subr.mxu0 0.0
      %5216 = vmatpush2.msra.mxu0 0.0
      %5217 = vmatprep.subr.mxu0 0.0
      %5218 = vmatpush2.msra.mxu0 0.0
      %5219 = vmatprep.subr.mxu0 0.0
      %5220 = vmatpush2.msra.mxu0 0.0
      %5221 = vmatprep.subr.mxu0 0.0
      %5222 = vmatpush2.msra.mxu0 0.0
      %5223 = vmatprep.subr.mxu0 0.0
      %5224 = vmatpush2.msra.mxu0 0.0
      %5225 = vmatprep.subr.mxu0 0.0
      %5226 = vmatpush2.msra.mxu0 0.0
      %5227 = vmatprep.subr.mxu0 0.0
      %5228 = vmatpush2.msra.mxu0 0.0
      %5229 = vmatprep.subr.mxu0 0.0
      %5230 = vmatpush2.msra.mxu0 0.0
      %5231 = vmatprep.subr.mxu0 0.0
      %5232 = vmatpush2.msra.mxu0 0.0
      %5233 = vmatprep.subr.mxu0 0.0
      %5234 = vmatpush2.msra.mxu0 0.0
      %5235 = vmatprep.subr.mxu0 0.0
      %5236 = vmatpush2.msra.mxu0 0.0
      %5237 = vmatprep.subr.mxu0 0.0
      %5238 = vmatpush2.msra.mxu0 0.0
      %5239 = vmatprep.subr.mxu0 0.0
      %5240 = vmatpush2.msra.mxu0 0.0
      %5241 = vmatprep.subr.mxu0 0.0
      %5242 = vmatpush2.msra.mxu0 0.0
      %5243 = vmatprep.subr.mxu0 0.0
      %5244 = vmatpush2.msra.mxu0 0.0
      %5245 = vmatprep.subr.mxu0 0.0
      %5246 = vmatpush2.msra.mxu0 0.0
      %5247 = vmatprep.mubr.f32.mxu0 0.0
      %5248 = vmatmul.mubr.f32.gmra.mxu0 %v5181
      %v5249 = vpop.f32.mrf.mxu0
      %v5250 = vadd.f32 %v5178, %v5249
      %v5251 = vpop.f32.mrf.mxu0
      %5252 = vdwg.mxu0
      %v5253 = vadd.f32 %v4197, %v5250
      %v5254 = vld [vmem:[%s75] sm:$0x1]
      %v5255 = vld [vmem:[%s77] sm:$0x1]
      %v5256 = vsel %vm1854, %v5253, 0.0
      %5257 = vadd.xlane.f32.xlu0 %v5256
      %v5258 = vpop.xlane.xlu0 %5257
      %v5259 = vmul.f32 %v5258, %v2964
      %v5260 = vsub.f32 %v5253, %v5259
      %v5261 = vmul.f32 %v5260, %v5260
      %v5262 = vsel %vm1854, %v5261, 0.0
      %5263 = vadd.xlane.f32.xlu0 %v5262
      %v5264 = vpop.xlane.xlu0 %5263
      %v5265 = vmul.f32 %v5264, %v2964
      %v5266 = vadd.f32 %v5265, 1e-05
      %v5267 = vrsqrt.pop %v5266
      %v5268 = vmul.f32 %v5260, %v5267
      %v5270 = vlaneseq
      %v5271 = vshrl.u32 %v5270, 7
      %v5272 = vsub.s32 0, %v5271
      %v5273 = vrot.slane %v5254, %v5272
      %v5275 = vmul.f32 %v5268, %v5273
      %v5277 = vlaneseq
      %v5278 = vshrl.u32 %v5277, 7
      %v5279 = vsub.s32 0, %v5278
      %v5280 = vrot.slane %v5255, %v5279
      %v5282 = vadd.f32 %v5275, %v5280
      %v5283 = vld [vmem:[%s79] sm:$0xff]
      %v5284 = vld [vmem:[%s79 + $0x8] sm:$0xff]
      %v5285 = vld [vmem:[%s79 + $0x10] sm:$0xff]
      %v5286 = vld [vmem:[%s79 + $0x18] sm:$0xff]
      %v5287 = vld [vmem:[%s81] sm:$0x1]
      %v5289 = vlaneseq
      %v5290 = vshrl.u32 %v5289, 7
      %v5291 = vsub.s32 0, %v5290
      %v5292 = vrot.slane %v5287, %v5291
      %v5295 = vsel %vm1854, %v5282, 0
      %5297 = vmatprep.subr.mxu0 0.0
      %5298 = vmatpush1.msra.mxu0 0.0
      %5299 = vmatprep.subr.mxu0 0.0
      %5300 = vmatpush1.msra.mxu0 0.0
      %5301 = vmatprep.subr.mxu0 0.0
      %5302 = vmatpush1.msra.mxu0 0.0
      %5303 = vmatprep.subr.mxu0 0.0
      %5304 = vmatpush1.msra.mxu0 0.0
      %5305 = vmatprep.subr.mxu0 0.0
      %5306 = vmatpush1.msra.mxu0 0.0
      %5307 = vmatprep.subr.mxu0 0.0
      %5308 = vmatpush1.msra.mxu0 0.0
      %5309 = vmatprep.subr.mxu0 0.0
      %5310 = vmatpush1.msra.mxu0 0.0
      %5311 = vmatprep.subr.mxu0 0.0
      %5312 = vmatpush1.msra.mxu0 0.0
      %5313 = vmatprep.subr.mxu0 0.0
      %5314 = vmatpush1.msra.mxu0 0.0
      %5315 = vmatprep.subr.mxu0 0.0
      %5316 = vmatpush1.msra.mxu0 0.0
      %5317 = vmatprep.subr.mxu0 0.0
      %5318 = vmatpush1.msra.mxu0 0.0
      %5319 = vmatprep.subr.mxu0 0.0
      %5320 = vmatpush1.msra.mxu0 0.0
      %5321 = vmatprep.subr.mxu0 0.0
      %5322 = vmatpush1.msra.mxu0 %v5286
      %5323 = vmatprep.subr.mxu0 0.0
      %5324 = vmatpush1.msra.mxu0 %v5285
      %5325 = vmatprep.subr.mxu0 0.0
      %5326 = vmatpush1.msra.mxu0 %v5284
      %5327 = vmatprep.subr.mxu0 0.0
      %5328 = vmatpush1.msra.mxu0 %v5283
      %5329 = vmatprep.subr.mxu0 0.0
      %5330 = vmatpush2.msra.mxu0 0.0
      %5331 = vmatprep.subr.mxu0 0.0
      %5332 = vmatpush2.msra.mxu0 0.0
      %5333 = vmatprep.subr.mxu0 0.0
      %5334 = vmatpush2.msra.mxu0 0.0
      %5335 = vmatprep.subr.mxu0 0.0
      %5336 = vmatpush2.msra.mxu0 0.0
      %5337 = vmatprep.subr.mxu0 0.0
      %5338 = vmatpush2.msra.mxu0 0.0
      %5339 = vmatprep.subr.mxu0 0.0
      %5340 = vmatpush2.msra.mxu0 0.0
      %5341 = vmatprep.subr.mxu0 0.0
      %5342 = vmatpush2.msra.mxu0 0.0
      %5343 = vmatprep.subr.mxu0 0.0
      %5344 = vmatpush2.msra.mxu0 0.0
      %5345 = vmatprep.subr.mxu0 0.0
      %5346 = vmatpush2.msra.mxu0 0.0
      %5347 = vmatprep.subr.mxu0 0.0
      %5348 = vmatpush2.msra.mxu0 0.0
      %5349 = vmatprep.subr.mxu0 0.0
      %5350 = vmatpush2.msra.mxu0 0.0
      %5351 = vmatprep.subr.mxu0 0.0
      %5352 = vmatpush2.msra.mxu0 0.0
      %5353 = vmatprep.subr.mxu0 0.0
      %5354 = vmatpush2.msra.mxu0 0.0
      %5355 = vmatprep.subr.mxu0 0.0
      %5356 = vmatpush2.msra.mxu0 0.0
      %5357 = vmatprep.subr.mxu0 0.0
      %5358 = vmatpush2.msra.mxu0 0.0
      %5359 = vmatprep.subr.mxu0 0.0
      %5360 = vmatpush2.msra.mxu0 0.0
      %5361 = vmatprep.mubr.f32.mxu0 0.0
      %5362 = vmatmul.mubr.f32.gmra.mxu0 %v5295
      %v5363 = vpop.f32.mrf.mxu0
      %v5364 = vadd.f32 %v5292, %v5363
      %v5365 = vpop.f32.mrf.mxu0
      %5366 = vdwg.mxu0
      %v5367 = vmax.f32 %v5364, 0.0
      %v5368 = vld [vmem:[%s83] sm:$0xff]
      %v5369 = vld [vmem:[%s83 + $0x8] sm:$0xff]
      %v5370 = vld [vmem:[%s83 + $0x10] sm:$0xff]
      %v5371 = vld [vmem:[%s83 + $0x18] sm:$0xff]
      %v5372 = vld [vmem:[%s83 + $0x20] sm:$0xff]
      %v5373 = vld [vmem:[%s83 + $0x28] sm:$0xff]
      %v5374 = vld [vmem:[%s83 + $0x30] sm:$0xff]
      %v5375 = vld [vmem:[%s83 + $0x38] sm:$0xff]
      %v5376 = vld [vmem:[%s85] sm:$0x1]
      %v5378 = vlaneseq
      %v5379 = vshrl.u32 %v5378, 7
      %v5380 = vsub.s32 0, %v5379
      %v5381 = vrot.slane %v5376, %v5380
      %v5384 = vsel %vm3110, %v5367, 0
      %5386 = vmatprep.subr.mxu0 0.0
      %5387 = vmatpush1.msra.mxu0 0.0
      %5388 = vmatprep.subr.mxu0 0.0
      %5389 = vmatpush1.msra.mxu0 0.0
      %5390 = vmatprep.subr.mxu0 0.0
      %5391 = vmatpush1.msra.mxu0 0.0
      %5392 = vmatprep.subr.mxu0 0.0
      %5393 = vmatpush1.msra.mxu0 0.0
      %5394 = vmatprep.subr.mxu0 0.0
      %5395 = vmatpush1.msra.mxu0 0.0
      %5396 = vmatprep.subr.mxu0 0.0
      %5397 = vmatpush1.msra.mxu0 0.0
      %5398 = vmatprep.subr.mxu0 0.0
      %5399 = vmatpush1.msra.mxu0 0.0
      %5400 = vmatprep.subr.mxu0 0.0
      %5401 = vmatpush1.msra.mxu0 0.0
      %5402 = vmatprep.subr.mxu0 0.0
      %5403 = vmatpush1.msra.mxu0 %v5375
      %5404 = vmatprep.subr.mxu0 0.0
      %5405 = vmatpush1.msra.mxu0 %v5374
      %5406 = vmatprep.subr.mxu0 0.0
      %5407 = vmatpush1.msra.mxu0 %v5373
      %5408 = vmatprep.subr.mxu0 0.0
      %5409 = vmatpush1.msra.mxu0 %v5372
      %5410 = vmatprep.subr.mxu0 0.0
      %5411 = vmatpush1.msra.mxu0 %v5371
      %5412 = vmatprep.subr.mxu0 0.0
      %5413 = vmatpush1.msra.mxu0 %v5370
      %5414 = vmatprep.subr.mxu0 0.0
      %5415 = vmatpush1.msra.mxu0 %v5369
      %5416 = vmatprep.subr.mxu0 0.0
      %5417 = vmatpush1.msra.mxu0 %v5368
      %5418 = vmatprep.subr.mxu0 0.0
      %5419 = vmatpush2.msra.mxu0 0.0
      %5420 = vmatprep.subr.mxu0 0.0
      %5421 = vmatpush2.msra.mxu0 0.0
      %5422 = vmatprep.subr.mxu0 0.0
      %5423 = vmatpush2.msra.mxu0 0.0
      %5424 = vmatprep.subr.mxu0 0.0
      %5425 = vmatpush2.msra.mxu0 0.0
      %5426 = vmatprep.subr.mxu0 0.0
      %5427 = vmatpush2.msra.mxu0 0.0
      %5428 = vmatprep.subr.mxu0 0.0
      %5429 = vmatpush2.msra.mxu0 0.0
      %5430 = vmatprep.subr.mxu0 0.0
      %5431 = vmatpush2.msra.mxu0 0.0
      %5432 = vmatprep.subr.mxu0 0.0
      %5433 = vmatpush2.msra.mxu0 0.0
      %5434 = vmatprep.subr.mxu0 0.0
      %5435 = vmatpush2.msra.mxu0 0.0
      %5436 = vmatprep.subr.mxu0 0.0
      %5437 = vmatpush2.msra.mxu0 0.0
      %5438 = vmatprep.subr.mxu0 0.0
      %5439 = vmatpush2.msra.mxu0 0.0
      %5440 = vmatprep.subr.mxu0 0.0
      %5441 = vmatpush2.msra.mxu0 0.0
      %5442 = vmatprep.subr.mxu0 0.0
      %5443 = vmatpush2.msra.mxu0 0.0
      %5444 = vmatprep.subr.mxu0 0.0
      %5445 = vmatpush2.msra.mxu0 0.0
      %5446 = vmatprep.subr.mxu0 0.0
      %5447 = vmatpush2.msra.mxu0 0.0
      %5448 = vmatprep.subr.mxu0 0.0
      %5449 = vmatpush2.msra.mxu0 0.0
      %5450 = vmatprep.mubr.f32.mxu0 0.0
      %5451 = vmatmul.mubr.f32.gmra.mxu0 %v5384
      %v5452 = vpop.f32.mrf.mxu0
      %v5453 = vadd.f32 %v5381, %v5452
      %v5454 = vpop.f32.mrf.mxu0
      %5455 = vdwg.mxu0
      %v5456 = vadd.f32 %v5282, %v5453
      %v5457 = vld [vmem:[%s87] sm:$0x1]
      %v5458 = vld [vmem:[%s89] sm:$0x1]
      %v5459 = vsel %vm1854, %v5456, 0.0
      %5460 = vadd.xlane.f32.xlu0 %v5459
      %v5461 = vpop.xlane.xlu0 %5460
      %v5462 = vmul.f32 %v5461, %v2964
      %v5463 = vsub.f32 %v5456, %v5462
      %v5464 = vmul.f32 %v5463, %v5463
      %v5465 = vsel %vm1854, %v5464, 0.0
      %5466 = vadd.xlane.f32.xlu0 %v5465
      %v5467 = vpop.xlane.xlu0 %5466
      %v5468 = vmul.f32 %v5467, %v2964
      %v5469 = vadd.f32 %v5468, 1e-05
      %v5470 = vrsqrt.pop %v5469
      %v5471 = vmul.f32 %v5463, %v5470
      %v5473 = vlaneseq
      %v5474 = vshrl.u32 %v5473, 7
      %v5475 = vsub.s32 0, %v5474
      %v5476 = vrot.slane %v5457, %v5475
      %v5478 = vmul.f32 %v5471, %v5476
      %v5480 = vlaneseq
      %v5481 = vshrl.u32 %v5480, 7
      %v5482 = vsub.s32 0, %v5481
      %v5483 = vrot.slane %v5458, %v5482
      %v5485 = vadd.f32 %v5478, %v5483
      %v5486 = vld [vmem:[%s91] sm:$0x1]
      %v5487 = vld [vmem:[%s93] sm:$0x1]
      %v5488 = vsel %vm1854, %v5485, 0.0
      %5489 = vadd.xlane.f32.xlu0 %v5488
      %v5490 = vpop.xlane.xlu0 %5489
      %v5491 = vmul.f32 %v5490, %v2964
      %v5492 = vsub.f32 %v5485, %v5491
      %v5493 = vmul.f32 %v5492, %v5492
      %v5494 = vsel %vm1854, %v5493, 0.0
      %5495 = vadd.xlane.f32.xlu0 %v5494
      %v5496 = vpop.xlane.xlu0 %5495
      %v5497 = vmul.f32 %v5496, %v2964
      %v5498 = vadd.f32 %v5497, 1e-05
      %v5499 = vrsqrt.pop %v5498
      %v5500 = vmul.f32 %v5492, %v5499
      %v5502 = vlaneseq
      %v5503 = vshrl.u32 %v5502, 7
      %v5504 = vsub.s32 0, %v5503
      %v5505 = vrot.slane %v5486, %v5504
      %v5507 = vmul.f32 %v5500, %v5505
      %v5509 = vlaneseq
      %v5510 = vshrl.u32 %v5509, 7
      %v5511 = vsub.s32 0, %v5510
      %v5512 = vrot.slane %v5487, %v5511
      %v5514 = vadd.f32 %v5507, %v5512
      %v5515 = vld [vmem:[%s95] sm:$0xff]
      %v5516 = vld [vmem:[%s95 + $0x8] sm:$0xff]
      %v5517 = vld [vmem:[%s95 + $0x10] sm:$0xff]
      %v5518 = vld [vmem:[%s95 + $0x18] sm:$0xff]
      %v5519 = vld [vmem:[%s97] sm:$0x1]
      %v5521 = vlaneseq
      %v5522 = vshrl.u32 %v5521, 7
      %v5523 = vsub.s32 0, %v5522
      %v5524 = vrot.slane %v5519, %v5523
      %v5527 = vsel %vm1854, %v5514, 0
      %5529 = vmatprep.subr.mxu0 0.0
      %5530 = vmatpush1.msra.mxu0 0.0
      %5531 = vmatprep.subr.mxu0 0.0
      %5532 = vmatpush1.msra.mxu0 0.0
      %5533 = vmatprep.subr.mxu0 0.0
      %5534 = vmatpush1.msra.mxu0 0.0
      %5535 = vmatprep.subr.mxu0 0.0
      %5536 = vmatpush1.msra.mxu0 0.0
      %5537 = vmatprep.subr.mxu0 0.0
      %5538 = vmatpush1.msra.mxu0 0.0
      %5539 = vmatprep.subr.mxu0 0.0
      %5540 = vmatpush1.msra.mxu0 0.0
      %5541 = vmatprep.subr.mxu0 0.0
      %5542 = vmatpush1.msra.mxu0 0.0
      %5543 = vmatprep.subr.mxu0 0.0
      %5544 = vmatpush1.msra.mxu0 0.0
      %5545 = vmatprep.subr.mxu0 0.0
      %5546 = vmatpush1.msra.mxu0 0.0
      %5547 = vmatprep.subr.mxu0 0.0
      %5548 = vmatpush1.msra.mxu0 0.0
      %5549 = vmatprep.subr.mxu0 0.0
      %5550 = vmatpush1.msra.mxu0 0.0
      %5551 = vmatprep.subr.mxu0 0.0
      %5552 = vmatpush1.msra.mxu0 0.0
      %5553 = vmatprep.subr.mxu0 0.0
      %5554 = vmatpush1.msra.mxu0 %v5518
      %5555 = vmatprep.subr.mxu0 0.0
      %5556 = vmatpush1.msra.mxu0 %v5517
      %5557 = vmatprep.subr.mxu0 0.0
      %5558 = vmatpush1.msra.mxu0 %v5516
      %5559 = vmatprep.subr.mxu0 0.0
      %5560 = vmatpush1.msra.mxu0 %v5515
      %5561 = vmatprep.subr.mxu0 0.0
      %5562 = vmatpush2.msra.mxu0 0.0
      %5563 = vmatprep.subr.mxu0 0.0
      %5564 = vmatpush2.msra.mxu0 0.0
      %5565 = vmatprep.subr.mxu0 0.0
      %5566 = vmatpush2.msra.mxu0 0.0
      %5567 = vmatprep.subr.mxu0 0.0
      %5568 = vmatpush2.msra.mxu0 0.0
      %5569 = vmatprep.subr.mxu0 0.0
      %5570 = vmatpush2.msra.mxu0 0.0
      %5571 = vmatprep.subr.mxu0 0.0
      %5572 = vmatpush2.msra.mxu0 0.0
      %5573 = vmatprep.subr.mxu0 0.0
      %5574 = vmatpush2.msra.mxu0 0.0
      %5575 = vmatprep.subr.mxu0 0.0
      %5576 = vmatpush2.msra.mxu0 0.0
      %5577 = vmatprep.subr.mxu0 0.0
      %5578 = vmatpush2.msra.mxu0 0.0
      %5579 = vmatprep.subr.mxu0 0.0
      %5580 = vmatpush2.msra.mxu0 0.0
      %5581 = vmatprep.subr.mxu0 0.0
      %5582 = vmatpush2.msra.mxu0 0.0
      %5583 = vmatprep.subr.mxu0 0.0
      %5584 = vmatpush2.msra.mxu0 0.0
      %5585 = vmatprep.subr.mxu0 0.0
      %5586 = vmatpush2.msra.mxu0 0.0
      %5587 = vmatprep.subr.mxu0 0.0
      %5588 = vmatpush2.msra.mxu0 0.0
      %5589 = vmatprep.subr.mxu0 0.0
      %5590 = vmatpush2.msra.mxu0 0.0
      %5591 = vmatprep.subr.mxu0 0.0
      %5592 = vmatpush2.msra.mxu0 0.0
      %5593 = vmatprep.mubr.f32.mxu0 0.0
      %5594 = vmatmul.mubr.f32.gmra.mxu0 %v5527
      %v5595 = vpop.f32.mrf.mxu0
      %v5596 = vadd.f32 %v5524, %v5595
      %v5597 = vpop.f32.mrf.mxu0
      %5598 = vdwg.mxu0
      %v5599 = vld [vmem:[%s99] sm:$0xff]
      %v5600 = vld [vmem:[%s99 + $0x8] sm:$0xff]
      %v5601 = vld [vmem:[%s99 + $0x10] sm:$0xff]
      %v5602 = vld [vmem:[%s99 + $0x18] sm:$0xff]
      %v5603 = vld [vmem:[%s101] sm:$0x1]
      %v5605 = vlaneseq
      %v5606 = vshrl.u32 %v5605, 7
      %v5607 = vsub.s32 0, %v5606
      %v5608 = vrot.slane %v5603, %v5607
      %5610 = vmatprep.subr.mxu0 0.0
      %5611 = vmatpush1.msra.mxu0 0.0
      %5612 = vmatprep.subr.mxu0 0.0
      %5613 = vmatpush1.msra.mxu0 0.0
      %5614 = vmatprep.subr.mxu0 0.0
      %5615 = vmatpush1.msra.mxu0 0.0
      %5616 = vmatprep.subr.mxu0 0.0
      %5617 = vmatpush1.msra.mxu0 0.0
      %5618 = vmatprep.subr.mxu0 0.0
      %5619 = vmatpush1.msra.mxu0 0.0
      %5620 = vmatprep.subr.mxu0 0.0
      %5621 = vmatpush1.msra.mxu0 0.0
      %5622 = vmatprep.subr.mxu0 0.0
      %5623 = vmatpush1.msra.mxu0 0.0
      %5624 = vmatprep.subr.mxu0 0.0
      %5625 = vmatpush1.msra.mxu0 0.0
      %5626 = vmatprep.subr.mxu0 0.0
      %5627 = vmatpush1.msra.mxu0 0.0
      %5628 = vmatprep.subr.mxu0 0.0
      %5629 = vmatpush1.msra.mxu0 0.0
      %5630 = vmatprep.subr.mxu0 0.0
      %5631 = vmatpush1.msra.mxu0 0.0
      %5632 = vmatprep.subr.mxu0 0.0
      %5633 = vmatpush1.msra.mxu0 0.0
      %5634 = vmatprep.subr.mxu0 0.0
      %5635 = vmatpush1.msra.mxu0 %v5602
      %5636 = vmatprep.subr.mxu0 0.0
      %5637 = vmatpush1.msra.mxu0 %v5601
      %5638 = vmatprep.subr.mxu0 0.0
      %5639 = vmatpush1.msra.mxu0 %v5600
      %5640 = vmatprep.subr.mxu0 0.0
      %5641 = vmatpush1.msra.mxu0 %v5599
      %5642 = vmatprep.subr.mxu0 0.0
      %5643 = vmatpush2.msra.mxu0 0.0
      %5644 = vmatprep.subr.mxu0 0.0
      %5645 = vmatpush2.msra.mxu0 0.0
      %5646 = vmatprep.subr.mxu0 0.0
      %5647 = vmatpush2.msra.mxu0 0.0
      %5648 = vmatprep.subr.mxu0 0.0
      %5649 = vmatpush2.msra.mxu0 0.0
      %5650 = vmatprep.subr.mxu0 0.0
      %5651 = vmatpush2.msra.mxu0 0.0
      %5652 = vmatprep.subr.mxu0 0.0
      %5653 = vmatpush2.msra.mxu0 0.0
      %5654 = vmatprep.subr.mxu0 0.0
      %5655 = vmatpush2.msra.mxu0 0.0
      %5656 = vmatprep.subr.mxu0 0.0
      %5657 = vmatpush2.msra.mxu0 0.0
      %5658 = vmatprep.subr.mxu0 0.0
      %5659 = vmatpush2.msra.mxu0 0.0
      %5660 = vmatprep.subr.mxu0 0.0
      %5661 = vmatpush2.msra.mxu0 0.0
      %5662 = vmatprep.subr.mxu0 0.0
      %5663 = vmatpush2.msra.mxu0 0.0
      %5664 = vmatprep.subr.mxu0 0.0
      %5665 = vmatpush2.msra.mxu0 0.0
      %5666 = vmatprep.subr.mxu0 0.0
      %5667 = vmatpush2.msra.mxu0 0.0
      %5668 = vmatprep.subr.mxu0 0.0
      %5669 = vmatpush2.msra.mxu0 0.0
      %5670 = vmatprep.subr.mxu0 0.0
      %5671 = vmatpush2.msra.mxu0 0.0
      %5672 = vmatprep.subr.mxu0 0.0
      %5673 = vmatpush2.msra.mxu0 0.0
      %5674 = vmatprep.mubr.f32.mxu0 0.0
      %5675 = vmatmul.mubr.f32.gmra.mxu0 %v5527
      %v5676 = vpop.f32.mrf.mxu0
      %v5677 = vadd.f32 %v5608, %v5676
      %v5678 = vpop.f32.mrf.mxu0
      %5679 = vdwg.mxu0
      %v5680 = vmax.f32 %v5677, 0.0
      %v5681 = vld [vmem:[%s103] sm:$0xff]
      %v5682 = vld [vmem:[%s103 + $0x8] sm:$0xff]
      %v5683 = vld [vmem:[%s103 + $0x10] sm:$0xff]
      %v5684 = vld [vmem:[%s103 + $0x18] sm:$0xff]
      %v5685 = vld [vmem:[%s105] sm:$0x1]
      %v5687 = vlaneseq
      %v5688 = vshrl.u32 %v5687, 7
      %v5689 = vsub.s32 0, %v5688
      %v5690 = vrot.slane %v5685, %v5689
      %v5693 = vsel %vm1854, %v5680, 0
      %5695 = vmatprep.subr.mxu0 0.0
      %5696 = vmatpush1.msra.mxu0 0.0
      %5697 = vmatprep.subr.mxu0 0.0
      %5698 = vmatpush1.msra.mxu0 0.0
      %5699 = vmatprep.subr.mxu0 0.0
      %5700 = vmatpush1.msra.mxu0 0.0
      %5701 = vmatprep.subr.mxu0 0.0
      %5702 = vmatpush1.msra.mxu0 0.0
      %5703 = vmatprep.subr.mxu0 0.0
      %5704 = vmatpush1.msra.mxu0 0.0
      %5705 = vmatprep.subr.mxu0 0.0
      %5706 = vmatpush1.msra.mxu0 0.0
      %5707 = vmatprep.subr.mxu0 0.0
      %5708 = vmatpush1.msra.mxu0 0.0
      %5709 = vmatprep.subr.mxu0 0.0
      %5710 = vmatpush1.msra.mxu0 0.0
      %5711 = vmatprep.subr.mxu0 0.0
      %5712 = vmatpush1.msra.mxu0 0.0
      %5713 = vmatprep.subr.mxu0 0.0
      %5714 = vmatpush1.msra.mxu0 0.0
      %5715 = vmatprep.subr.mxu0 0.0
      %5716 = vmatpush1.msra.mxu0 0.0
      %5717 = vmatprep.subr.mxu0 0.0
      %5718 = vmatpush1.msra.mxu0 0.0
      %5719 = vmatprep.subr.mxu0 0.0
      %5720 = vmatpush1.msra.mxu0 %v5684
      %5721 = vmatprep.subr.mxu0 0.0
      %5722 = vmatpush1.msra.mxu0 %v5683
      %5723 = vmatprep.subr.mxu0 0.0
      %5724 = vmatpush1.msra.mxu0 %v5682
      %5725 = vmatprep.subr.mxu0 0.0
      %5726 = vmatpush1.msra.mxu0 %v5681
      %5727 = vmatprep.subr.mxu0 0.0
      %5728 = vmatpush2.msra.mxu0 0.0
      %5729 = vmatprep.subr.mxu0 0.0
      %5730 = vmatpush2.msra.mxu0 0.0
      %5731 = vmatprep.subr.mxu0 0.0
      %5732 = vmatpush2.msra.mxu0 0.0
      %5733 = vmatprep.subr.mxu0 0.0
      %5734 = vmatpush2.msra.mxu0 0.0
      %5735 = vmatprep.subr.mxu0 0.0
      %5736 = vmatpush2.msra.mxu0 0.0
      %5737 = vmatprep.subr.mxu0 0.0
      %5738 = vmatpush2.msra.mxu0 0.0
      %5739 = vmatprep.subr.mxu0 0.0
      %5740 = vmatpush2.msra.mxu0 0.0
      %5741 = vmatprep.subr.mxu0 0.0
      %5742 = vmatpush2.msra.mxu0 0.0
      %5743 = vmatprep.subr.mxu0 0.0
      %5744 = vmatpush2.msra.mxu0 0.0
      %5745 = vmatprep.subr.mxu0 0.0
      %5746 = vmatpush2.msra.mxu0 0.0
      %5747 = vmatprep.subr.mxu0 0.0
      %5748 = vmatpush2.msra.mxu0 0.0
      %5749 = vmatprep.subr.mxu0 0.0
      %5750 = vmatpush2.msra.mxu0 0.0
      %5751 = vmatprep.subr.mxu0 0.0
      %5752 = vmatpush2.msra.mxu0 0.0
      %5753 = vmatprep.subr.mxu0 0.0
      %5754 = vmatpush2.msra.mxu0 0.0
      %5755 = vmatprep.subr.mxu0 0.0
      %5756 = vmatpush2.msra.mxu0 0.0
      %5757 = vmatprep.subr.mxu0 0.0
      %5758 = vmatpush2.msra.mxu0 0.0
      %5759 = vmatprep.mubr.f32.mxu0 0.0
      %5760 = vmatmul.mubr.f32.gmra.mxu0 %v5693
      %v5761 = vpop.f32.mrf.mxu0
      %v5762 = vadd.f32 %v5690, %v5761
      %v5763 = vpop.f32.mrf.mxu0
      %5764 = vdwg.mxu0
      %v5765 = vmax.f32 %v5762, 0.0
      %v5766 = vld [vmem:[%s107] sm:$0xff]
      %v5767 = vld [vmem:[%s107 + $0x8] sm:$0xff]
      %v5768 = vld [vmem:[%s107 + $0x10] sm:$0xff]
      %v5769 = vld [vmem:[%s107 + $0x18] sm:$0xff]
      %v5770 = vld [vmem:[%s109] sm:$0x1]
      %v5772 = vlaneseq
      %v5773 = vshrl.u32 %v5772, 7
      %v5774 = vsub.s32 0, %v5773
      %v5775 = vrot.slane %v5770, %v5774
      %v5778 = vsel %vm1854, %v5765, 0
      %5780 = vmatprep.subr.mxu0 0.0
      %5781 = vmatpush1.msra.mxu0 0.0
      %5782 = vmatprep.subr.mxu0 0.0
      %5783 = vmatpush1.msra.mxu0 0.0
      %5784 = vmatprep.subr.mxu0 0.0
      %5785 = vmatpush1.msra.mxu0 0.0
      %5786 = vmatprep.subr.mxu0 0.0
      %5787 = vmatpush1.msra.mxu0 0.0
      %5788 = vmatprep.subr.mxu0 0.0
      %5789 = vmatpush1.msra.mxu0 0.0
      %5790 = vmatprep.subr.mxu0 0.0
      %5791 = vmatpush1.msra.mxu0 0.0
      %5792 = vmatprep.subr.mxu0 0.0
      %5793 = vmatpush1.msra.mxu0 0.0
      %5794 = vmatprep.subr.mxu0 0.0
      %5795 = vmatpush1.msra.mxu0 0.0
      %5796 = vmatprep.subr.mxu0 0.0
      %5797 = vmatpush1.msra.mxu0 0.0
      %5798 = vmatprep.subr.mxu0 0.0
      %5799 = vmatpush1.msra.mxu0 0.0
      %5800 = vmatprep.subr.mxu0 0.0
      %5801 = vmatpush1.msra.mxu0 0.0
      %5802 = vmatprep.subr.mxu0 0.0
      %5803 = vmatpush1.msra.mxu0 0.0
      %5804 = vmatprep.subr.mxu0 0.0
      %5805 = vmatpush1.msra.mxu0 %v5769
      %5806 = vmatprep.subr.mxu0 0.0
      %5807 = vmatpush1.msra.mxu0 %v5768
      %5808 = vmatprep.subr.mxu0 0.0
      %5809 = vmatpush1.msra.mxu0 %v5767
      %5810 = vmatprep.subr.mxu0 0.0
      %5811 = vmatpush1.msra.mxu0 %v5766
      %5812 = vmatprep.subr.mxu0 0.0
      %5813 = vmatpush2.msra.mxu0 0.0
      %5814 = vmatprep.subr.mxu0 0.0
      %5815 = vmatpush2.msra.mxu0 0.0
      %5816 = vmatprep.subr.mxu0 0.0
      %5817 = vmatpush2.msra.mxu0 0.0
      %5818 = vmatprep.subr.mxu0 0.0
      %5819 = vmatpush2.msra.mxu0 0.0
      %5820 = vmatprep.subr.mxu0 0.0
      %5821 = vmatpush2.msra.mxu0 0.0
      %5822 = vmatprep.subr.mxu0 0.0
      %5823 = vmatpush2.msra.mxu0 0.0
      %5824 = vmatprep.subr.mxu0 0.0
      %5825 = vmatpush2.msra.mxu0 0.0
      %5826 = vmatprep.subr.mxu0 0.0
      %5827 = vmatpush2.msra.mxu0 0.0
      %5828 = vmatprep.subr.mxu0 0.0
      %5829 = vmatpush2.msra.mxu0 0.0
      %5830 = vmatprep.subr.mxu0 0.0
      %5831 = vmatpush2.msra.mxu0 0.0
      %5832 = vmatprep.subr.mxu0 0.0
      %5833 = vmatpush2.msra.mxu0 0.0
      %5834 = vmatprep.subr.mxu0 0.0
      %5835 = vmatpush2.msra.mxu0 0.0
      %5836 = vmatprep.subr.mxu0 0.0
      %5837 = vmatpush2.msra.mxu0 0.0
      %5838 = vmatprep.subr.mxu0 0.0
      %5839 = vmatpush2.msra.mxu0 0.0
      %5840 = vmatprep.subr.mxu0 0.0
      %5841 = vmatpush2.msra.mxu0 0.0
      %5842 = vmatprep.subr.mxu0 0.0
      %5843 = vmatpush2.msra.mxu0 0.0
      %5844 = vmatprep.mubr.f32.mxu0 0.0
      %5845 = vmatmul.mubr.f32.gmra.mxu0 %v5778
      %v5846 = vpop.f32.mrf.mxu0
      %v5847 = vadd.f32 %v5775, %v5846
      %v5848 = vpop.f32.mrf.mxu0
      %5849 = vdwg.mxu0
      %v5850 = vxor.u32 %v5847, 2147483648
      %v5851 = vmul.f32 %v5850, 1.442695
      %v5852 = vpow.pop %v5851
      %v5853 = vadd.f32 %v5852, 1.0
      %v5854 = vrcp.pop %v5853
      %v5855 = vmul.f32 1.0, %v5854
      %5857 = vrot.lane.b32.xlu0 %v5855, 12
      %v5858 = vpop.permute.xlu0 %5857
      %vm5860 = vcmask 97280
      %v5861 = vsel %vm5860, %v5596, %v5858
      %5862 = vst.msk [vmem:[%s1648] sm:$0xff] %vm1757, %v5861
      %p5863 = scmp.lt.s32.totalorder %s122, 1
      %s5864 = scalar_select %p5863, %s122, 1
      %s5865 = smul.addr %s5864, 8
      %s5866 = scalar_lea.vmem %s111, %s5865
      // Predicated region
      $region241: #{detr_forward.1} parent=239 // pred_check
        %p5867 = pneg %p1305
      $region242: #{detr_forward.1} parent=239 // pred_check_branch
        %5869 = sbr.rel (%p5867) target = $region244
      $region243: #{detr_forward.1} parent=239 // pred_region
        _
      $region244: #{detr_forward.1} parent=239 // pred_fallthru
        _
    $region240: #{detr_forward.1} parent=5 // pred_fallthru
      _
    %p5870 = scmp.le.s32.totalorder 2, %s117
    // Predicated region
    $region245: #{detr_forward.1} parent=5 // pred_check
      %p5871 = pneg %p5870
    $region246: #{detr_forward.1} parent=5 // pred_check_branch
      %5873 = sbr.rel (%p5871) target = $region248
    $region247: #{detr_forward.1} parent=5 // pred_region
      %s5874 = ssub.s32 %s117, 2
      // Predicated region
      $region249: #{detr_forward.1} parent=247 // pred_check
        %p5875 = pneg %p1311
      $region250: #{detr_forward.1} parent=247 // pred_check_branch
        %5877 = sbr.rel (%p5875) target = $region252
      $region251: #{detr_forward.1} parent=247 // pred_region
        %p5878 = scmp.lt.s32.totalorder %s123, 1
        %s5879 = scalar_select %p5878, %s123, 1
        %s5880 = smul.addr %s5879, 8
        %s5881 = scalar_lea.vmem %s111, %s5880
      $region252: #{detr_forward.1} parent=247 // pred_fallthru
        _
    $region248: #{detr_forward.1} parent=5 // pred_fallthru
      _
  $region6: #{detr_forward.1} parent=0 // loop_footer
    %s121 = sadd.s32 1, %s117
  $region7: #{detr_forward.1} parent=0 // loop_footer_branch
    %116 = sbr.rel target = $region3
  $region8: #{detr_forward.1} parent=0 // loop_exit
    _

</llo_original>
